<compile_context>
chip_gen: v7x
topology: tpu7x:2x2x1
jax: 0.10.0
libtpu: 0.0.40
codegen_flags: <defaults>
</compile_context>

<pallas_src>
import jax
import jax.numpy as jnp
from jax.experimental import pallas as pl
from jax.experimental.pallas import tpu as pltpu


_VMEM_LIMIT = 48 * 1024 * 1024   # safe vs v7x's 64 MiB physical VMEM


def _round_up(x, m):
    return ((x + m - 1) // m) * m


def _max_point_tile():
    """Pick the max point-tile; larger on 128 MiB-VMEM parts (v5e/v6e)."""
    try:
        info = pltpu.get_tpu_info()
        cap = int(getattr(info, "vmem_capacity_bytes", 0) or 0)
        if cap >= 100 * 1024 * 1024:
            return 4096
    except Exception:
        pass
    return 2048


def _choose_tile(n, max_tile):
    """Point tile: multiple of 16 (bf16 sublane tiling), capped at max_tile."""
    return min(max_tile, _round_up(n, 16))


# ----------------------------------------------------------------------------
# Pallas kernels (grid = (branch, batch, point-tile))
# ----------------------------------------------------------------------------
def _enc12_kernel(x_ref, w1_ref, w2_ref, y2_ref, p1_ref, p2_ref):
    """Fused b1+b2: ReLU(ReLU(x@W1)@W2), per-layer running max-pool.

    Zero-padded point rows yield exactly 0 after ReLU, and real ReLU outputs
    are >= 0, so no masking is needed here.
    """
    n = pl.program_id(2)
    x = x_ref[0].astype(jnp.bfloat16)                                    # [TN, 3]
    h1 = jnp.maximum(
        jnp.dot(x, w1_ref[0], preferred_element_type=jnp.float32), 0.0)      # [TN, 64]
    h2 = jnp.maximum(
        jnp.dot(h1.astype(jnp.bfloat16), w2_ref[0],
                preferred_element_type=jnp.float32), 0.0)                     # [TN, 128]
    y2_ref[0, 0] = h2.astype(y2_ref.dtype)
    m1 = jnp.max(h1, axis=0, keepdims=True)
    m2 = jnp.max(h2, axis=0, keepdims=True)

    @pl.when(n == 0)
    def _():
        p1_ref[0, 0] = m1
        p2_ref[0, 0] = m2

    @pl.when(n > 0)
    def _():
        p1_ref[0, 0] = jnp.maximum(p1_ref[0, 0], m1)
        p2_ref[0, 0] = jnp.maximum(p2_ref[0, 0], m2)


def _make_enc34_kernel(tn, n_real, padded):
    """Pass A: h3 = ReLU(y2@W3l + g3) -> write y3(bf16), pool3; h4 = ReLU(h3@W4)
    -> pool4 only (y4 never leaves VMEM)."""
    def kernel(y2_ref, w3_ref, g3_ref, w4_ref, y3_ref, p3_ref, p4_ref):
        n = pl.program_id(2)
        x = y2_ref[0, 0]                                                 # [TN,128] bf16
        h3 = jnp.maximum(
            jnp.dot(x, w3_ref[0], preferred_element_type=jnp.float32)
            + g3_ref[0, 0], 0.0)                                         # [TN,256]
        if padded:
            row = n * tn + jax.lax.broadcasted_iota(jnp.int32, (tn, 1), 0)
            h3 = jnp.where(row < n_real, h3, 0.0)
        y3_ref[0, 0] = h3.astype(y3_ref.dtype)
        h4 = jnp.maximum(
            jnp.dot(h3.astype(jnp.bfloat16), w4_ref[0],
                    preferred_element_type=jnp.float32), 0.0)            # [TN,512]
        m3 = jnp.max(h3, axis=0, keepdims=True)
        m4 = jnp.max(h4, axis=0, keepdims=True)

        @pl.when(n == 0)
        def _():
            p3_ref[0, 0] = m3
            p4_ref[0, 0] = m4

        @pl.when(n > 0)
        def _():
            p3_ref[0, 0] = jnp.maximum(p3_ref[0, 0], m3)
            p4_ref[0, 0] = jnp.maximum(p4_ref[0, 0], m4)
    return kernel


def _make_enc45_kernel(tn, n_real, padded):
    """Pass B: recompute h4 = ReLU(y3@W4) in VMEM, h5 = ReLU(h4@W5l + g5),
    emit pool5 only (no per-point writeback)."""
    def kernel(y3_ref, w4_ref, w5_ref, g5_ref, p5_ref):
        n = pl.program_id(2)
        x = y3_ref[0, 0]                                                 # [TN,256] bf16
        h4 = jnp.maximum(
            jnp.dot(x, w4_ref[0], preferred_element_type=jnp.float32), 0.0)
        h5 = jnp.maximum(
            jnp.dot(h4.astype(jnp.bfloat16), w5_ref[0],
                    preferred_element_type=jnp.float32) + g5_ref[0, 0], 0.0)
        if padded:
            row = n * tn + jax.lax.broadcasted_iota(jnp.int32, (tn, 1), 0)
            h5 = jnp.where(row < n_real, h5, 0.0)
        m5 = jnp.max(h5, axis=0, keepdims=True)

        @pl.when(n == 0)
        def _():
            p5_ref[0, 0] = m5

        @pl.when(n > 0)
        def _():
            p5_ref[0, 0] = jnp.maximum(p5_ref[0, 0], m5)
    return kernel


def _chain_kernel_factory(n_layers):
    def kernel(*refs):
        x_ref = refs[0]
        w_refs = refs[1:1 + n_layers]
        o_ref = refs[1 + n_layers]
        h = x_ref[...].astype(jnp.bfloat16)
        for i, w_ref in enumerate(w_refs):
            h = jnp.maximum(
                jnp.dot(h, w_ref[...], preferred_element_type=jnp.float32), 0.0)
            if i + 1 < n_layers:
                h = h.astype(jnp.bfloat16)
        o_ref[...] = h.astype(o_ref.dtype)
    return kernel


# ----------------------------------------------------------------------------
# Pallas wrappers
# ----------------------------------------------------------------------------
def encoder_forward(params, x_stack):
    """Both branches (r, t) and both clouds (src, ref) in stacked grids.

    x_stack: [2B, N, 3] (source; reference).  Returns glob [2, 2B, 1, 1472].
    """
    BB, N, _ = x_stack.shape
    B = BB // 2
    max_tile = _max_point_tile()
    TN = _choose_tile(N, max_tile)
    N_pad = _round_up(N, TN)
    padded = N_pad != N
    if padded:
        x_stack = jnp.pad(x_stack, ((0, 0), (0, N_pad - N), (0, 0)))
    NT = N_pad // TN

    cp = pltpu.CompilerParams(
        dimension_semantics=("parallel", "parallel", "arbitrary"),
        vmem_limit_bytes=_VMEM_LIMIT)

    # ---- stage 1: b1+b2 fused ------------------------------------------------
    y2, pool1, pool2 = pl.pallas_call(
        _enc12_kernel,
        out_shape=(jax.ShapeDtypeStruct((2, BB, N_pad, 128), jnp.bfloat16),
                   jax.ShapeDtypeStruct((2, BB, 1, 64), jnp.float32),
                   jax.ShapeDtypeStruct((2, BB, 1, 128), jnp.float32)),
        grid=(2, BB, NT),
        in_specs=[pl.BlockSpec((1, TN, 3), lambda r, b, n: (b, n, 0)),
                  pl.BlockSpec((1, 3, 64), lambda r, b, n: (r, 0, 0)),
                  pl.BlockSpec((1, 64, 128), lambda r, b, n: (r, 0, 0))],
        out_specs=(pl.BlockSpec((1, 1, TN, 128), lambda r, b, n: (r, b, n, 0)),
                   pl.BlockSpec((1, 1, 1, 64), lambda r, b, n: (r, b, 0, 0)),
                   pl.BlockSpec((1, 1, 1, 128), lambda r, b, n: (r, b, 0, 0))),
        compiler_params=cp,
    )(x_stack, params["b1"], params["b2"])

    # PFI-1 concat elimination: g3 = other_cloud_pool2 @ W3_global (tiny dot).
    other2 = jnp.concatenate([pool2[:, B:], pool2[:, :B]], axis=1)       # [2,BB,1,128]
    g3 = jnp.einsum("rbol,rlc->rboc", other2.astype(jnp.bfloat16),
                    params["b3g"], preferred_element_type=jnp.float32)   # [2,BB,1,256]

    # ---- stage 2 (pass A): b3+b4 fused, y4 never written ----------------------
    y3, pool3, pool4 = pl.pallas_call(
        _make_enc34_kernel(TN, N, padded),
        out_shape=(jax.ShapeDtypeStruct((2, BB, N_pad, 256), jnp.bfloat16),
                   jax.ShapeDtypeStruct((2, BB, 1, 256), jnp.float32),
                   jax.ShapeDtypeStruct((2, BB, 1, 512), jnp.float32)),
        grid=(2, BB, NT),
        in_specs=[pl.BlockSpec((1, 1, TN, 128), lambda r, b, n: (r, b, n, 0)),
                  pl.BlockSpec((1, 128, 256), lambda r, b, n: (r, 0, 0)),
                  pl.BlockSpec((1, 1, 1, 256), lambda r, b, n: (r, b, 0, 0)),
                  pl.BlockSpec((1, 256, 512), lambda r, b, n: (r, 0, 0))],
        out_specs=(pl.BlockSpec((1, 1, TN, 256), lambda r, b, n: (r, b, n, 0)),
                   pl.BlockSpec((1, 1, 1, 256), lambda r, b, n: (r, b, 0, 0)),
                   pl.BlockSpec((1, 1, 1, 512), lambda r, b, n: (r, b, 0, 0))),
        compiler_params=cp,
    )(y2, params["b3l"], g3, params["b4"])

    # PFI-2 concat elimination.
    other4 = jnp.concatenate([pool4[:, B:], pool4[:, :B]], axis=1)       # [2,BB,1,512]
    g5 = jnp.einsum("rbol,rlc->rboc", other4.astype(jnp.bfloat16),
                    params["b5g"], preferred_element_type=jnp.float32)   # [2,BB,1,512]

    # ---- stage 3 (pass B): recompute b4 from y3, then b5; pool5 only ----------
    pool5 = pl.pallas_call(
        _make_enc45_kernel(TN, N, padded),
        out_shape=jax.ShapeDtypeStruct((2, BB, 1, 512), jnp.float32),
        grid=(2, BB, NT),
        in_specs=[pl.BlockSpec((1, 1, TN, 256), lambda r, b, n: (r, b, n, 0)),
                  pl.BlockSpec((1, 256, 512), lambda r, b, n: (r, 0, 0)),
                  pl.BlockSpec((1, 512, 512), lambda r, b, n: (r, 0, 0)),
                  pl.BlockSpec((1, 1, 1, 512), lambda r, b, n: (r, b, 0, 0))],
        out_specs=pl.BlockSpec((1, 1, 1, 512), lambda r, b, n: (r, b, 0, 0)),
        compiler_params=cp,
    )(y3, params["b4"], params["b5l"], g5)

    # Global feature: max over points of cat(layer outputs) == cat of per-layer
    # pooled maxes (max commutes with the channel concat) -> [2, 2B, 1, 1472].
    return jnp.concatenate([pool1, pool2, pool3, pool4, pool5], axis=3)


def mlp_chain(x2d, weights):
    """Whole small MLP chain (Linear(bias=False)+ReLU per layer) in ONE call."""
    M = x2d.shape[0]
    Cout = weights[-1].shape[1]
    in_specs = [pl.BlockSpec(x2d.shape, lambda: (0, 0))]
    in_specs += [pl.BlockSpec(w.shape, lambda: (0, 0)) for w in weights]
    return pl.pallas_call(
        _chain_kernel_factory(len(weights)),
        out_shape=jax.ShapeDtypeStruct((M, Cout), jnp.float32),
        in_specs=in_specs,
        out_specs=pl.BlockSpec((M, Cout), lambda: (0, 0)),
        compiler_params=pltpu.CompilerParams(vmem_limit_bytes=_VMEM_LIMIT),
    )(x2d, *weights)


# ----------------------------------------------------------------------------
# Model
# ----------------------------------------------------------------------------
def finet_forward(params, source, reference):
    B = source.shape[0]
    # b1..b5 / GFI weights are shared between source and reference within a
    # branch, and the r/t branches are grid-stacked -> every encoder layer runs
    # exactly once.
    x_stack = jnp.concatenate([source, reference], axis=0)               # [2B, N, 3]
    glob = encoder_forward(params, x_stack)                              # [2,2B,1,1472]

    src_glob, ref_glob = glob[:, :B], glob[:, B:]                        # [2,B,1,1472]

    # GFI: shared 3-layer MLP on [src||ref] and [ref||src]; one call per branch.
    sr = jnp.concatenate([src_glob, ref_glob], axis=3)                   # [2,B,1,2944]
    rs = jnp.concatenate([ref_glob, src_glob], axis=3)
    gfi_in = jnp.concatenate([sr, rs], axis=1)                           # [2,2B,1,2944]
    H_r = mlp_chain(gfi_in[0, :, 0, :], params["gfi_r"])                 # [2B,256]
    H_t = mlp_chain(gfi_in[1, :, 0, :], params["gfi_t"])
    r_Hx, r_Hy = H_r[:B], H_r[B:]
    t_Hx, t_Hy = H_t[:B], H_t[B:]

    # RotRegBranch: cat order is [r_src, t_src, r_ref, t_ref].
    rot_in = jnp.concatenate([r_Hx, t_Hx, r_Hy, t_Hy], axis=1)           # [B,1024]
    rot_param = mlp_chain(rot_in, params["rot"])[:, None, :]             # [B,1,4]
    rot_param = rot_param / jnp.linalg.norm(rot_param, axis=2, keepdims=True)

    # TransRegBranch: up/bottom share weights -> one stacked chain call.
    up = jnp.concatenate([r_Hx, t_Hx, t_Hy], axis=1)                     # [B,768]
    bottom = jnp.concatenate([r_Hy, t_Hy, r_Hy], axis=1)                 # [B,768]
    c = mlp_chain(jnp.concatenate([up, bottom], axis=0), params["trans"])
    t_vec = (c[B:] - c[:B])[:, None, :]                                  # cy - cx

    r_sg, r_rg = src_glob[0], ref_glob[0]                                # [B,1,1472]
    t_sg, t_rg = src_glob[1], ref_glob[1]
    # Eval-mode dropout mask is all ones -> dropout globals are bit-identical
    # to the plain globals; no recomputation.
    # TODO(synk): training-mode random point-dropout (numpy RNG in the torch
    # reference) is not implemented; eval path only.
    return (rot_param, t_vec, r_sg, r_rg, t_sg, t_rg,
            r_sg, r_rg, t_sg, t_rg)


# ----------------------------------------------------------------------------
# Deterministic parameter init (weights stored [in, out], bf16 for the MXU,
# branch weights stacked along a leading axis of size 2 = (r, t)).
# ----------------------------------------------------------------------------
def _linear_w(key, fan_in, fan_out):
    bound = 1.0 / float(fan_in) ** 0.5
    w = jax.random.uniform(key, (fan_in, fan_out), jnp.float32, -bound, bound)
    return w.astype(jnp.bfloat16)


def init_params(key):
    gfi_in = (64 + 128 + 256 + 512 + 512) * 2   # 2944

    def branch(k):
        ks = jax.random.split(k, 8)
        w3 = _linear_w(ks[2], 256, 256)          # PFI-1 layer: split local/global
        w5 = _linear_w(ks[4], 512 * 2, 512)      # PFI-2 layer: split local/global
        return {
            "b1": _linear_w(ks[0], 3, 64),
            "b2": _linear_w(ks[1], 64, 128),
            "b3l": w3[:128], "b3g": w3[128:],
            "b4": _linear_w(ks[3], 256, 512),
            "b5l": w5[:512], "b5g": w5[512:],
            "gfi": [
                _linear_w(ks[5], gfi_in, 128),
                _linear_w(ks[6], 128, 128),
                _linear_w(ks[7], 128, 256),
            ],
        }

    kr, kt, krot, ktrans = jax.random.split(key, 4)
    r, t = branch(kr), branch(kt)
    rk = jax.random.split(krot, 4)
    tk = jax.random.split(ktrans, 4)
    stack = lambda name: jnp.stack([r[name], t[name]], axis=0)
    return {
        "b1": stack("b1"), "b2": stack("b2"),
        "b3l": stack("b3l"), "b3g": stack("b3g"),
        "b4": stack("b4"),
        "b5l": stack("b5l"), "b5g": stack("b5g"),
        "gfi_r": r["gfi"], "gfi_t": t["gfi"],
        "rot": [
            _linear_w(rk[0], 256 * 4, 32),
            _linear_w(rk[1], 32, 64),
            _linear_w(rk[2], 64, 128),
            _linear_w(rk[3], 128, 4),
        ],
        "trans": [
            _linear_w(tk[0], 256 * 3, 32),
            _linear_w(tk[1], 32, 64),
            _linear_w(tk[2], 64, 128),
            _linear_w(tk[3], 128, 3),
        ],
    }


# ----------------------------------------------------------------------------
if __name__ == "__main__":
    key = jax.random.PRNGKey(0)
    kp, ks, kr = jax.random.split(key, 3)

    B, N = 2, 16
    params = init_params(kp)
    source = jax.random.normal(ks, (B, N, 3), jnp.float32)
    reference = jax.random.normal(kr, (B, N, 3), jnp.float32)

    fwd = jax.jit(finet_forward)
    outs = jax.block_until_ready(fwd(params, source, reference))

    # Sanity: expected output shapes.
    assert outs[0].shape == (B, 1, 4)        # rot_param
    assert outs[1].shape == (B, 1, 3)        # t_vec
    for o in outs[2:]:
        assert o.shape == (B, 1, 1472)       # global / dropout-global features

    print("KERNEL_OK")
</pallas_src>

<mosaic_0001>
module attributes {stable_mosaic.version = 11 : i64} {
  func.func @_enc12_kernel(%arg0: i32, %arg1: i32, %arg2: i32, %arg3: memref<1x16x3xf32, #tpu.memory_space<vmem>>, %arg4: memref<1x3x64xbf16, #tpu.memory_space<vmem>>, %arg5: memref<1x64x128xbf16, #tpu.memory_space<vmem>>, %arg6: memref<1x1x16x128xbf16, #tpu.memory_space<vmem>>, %arg7: memref<1x1x1x64xf32, #tpu.memory_space<vmem>>, %arg8: memref<1x1x1x128xf32, #tpu.memory_space<vmem>>) attributes {dimension_semantics = [#tpu.dimension_semantics<parallel>, #tpu.dimension_semantics<parallel>, #tpu.dimension_semantics<arbitrary>], iteration_bounds = array<i64: 2, 4, 1>, scalar_prefetch = 0 : i64, scratch_operands = 0 : i64, tpu.core_type = #tpu.core_type<tc>, window_params = [{transform_indices = @transform_0, window_bounds = array<i64: 1, 16, 3>}, {transform_indices = @transform_1, window_bounds = array<i64: 1, 3, 64>}, {transform_indices = @transform_2, window_bounds = array<i64: 1, 64, 128>}, {transform_indices = @transform_3, window_bounds = array<i64: 1, 1, 16, 128>}, {transform_indices = @transform_4, window_bounds = array<i64: 1, 1, 1, 64>}, {transform_indices = @transform_5, window_bounds = array<i64: 1, 1, 1, 128>}]} {
    %c0 = arith.constant 0 : index
    %c0_0 = arith.constant 0 : index
    %c0_1 = arith.constant 0 : index
    %0 = vector.load %arg3[%c0, %c0_0, %c0_1] : memref<1x16x3xf32, #tpu.memory_space<vmem>>, vector<1x16x3xf32>
    %1 = vector.shape_cast %0 : vector<1x16x3xf32> to vector<16x3xf32>
    %2 = arith.truncf %1 : vector<16x3xf32> to vector<16x3xbf16>
    %c0_2 = arith.constant 0 : index
    %c0_3 = arith.constant 0 : index
    %c0_4 = arith.constant 0 : index
    %3 = vector.load %arg4[%c0_2, %c0_3, %c0_4] : memref<1x3x64xbf16, #tpu.memory_space<vmem>>, vector<1x3x64xbf16>
    %4 = vector.shape_cast %3 : vector<1x3x64xbf16> to vector<3x64xbf16>
    %cst = arith.constant dense<0.000000e+00> : vector<16x64xf32>
    %5 = tpu.matmul %2, %4, %cst {dimension_numbers = #tpu.dot_dimension_numbers<[1], [0], [0], [1], [0, 0, 1, 1], [], []>} : vector<16x3xbf16>, vector<3x64xbf16>, vector<16x64xf32> -> vector<16x64xf32>
    %cst_5 = arith.constant 0.000000e+00 : f32
    %6 = vector.broadcast %cst_5 : f32 to vector<16x64xf32>
    %7 = arith.maximumf %5, %6 : vector<16x64xf32>
    %8 = arith.truncf %7 : vector<16x64xf32> to vector<16x64xbf16>
    %c0_6 = arith.constant 0 : index
    %c0_7 = arith.constant 0 : index
    %c0_8 = arith.constant 0 : index
    %9 = vector.load %arg5[%c0_6, %c0_7, %c0_8] : memref<1x64x128xbf16, #tpu.memory_space<vmem>>, vector<1x64x128xbf16>
    %10 = vector.shape_cast %9 : vector<1x64x128xbf16> to vector<64x128xbf16>
    %cst_9 = arith.constant dense<0.000000e+00> : vector<16x128xf32>
    %11 = tpu.matmul %8, %10, %cst_9 {dimension_numbers = #tpu.dot_dimension_numbers<[1], [0], [0], [1], [0, 0, 1, 1], [], []>} : vector<16x64xbf16>, vector<64x128xbf16>, vector<16x128xf32> -> vector<16x128xf32>
    %cst_10 = arith.constant 0.000000e+00 : f32
    %12 = vector.broadcast %cst_10 : f32 to vector<16x128xf32>
    %13 = arith.maximumf %11, %12 : vector<16x128xf32>
    %14 = arith.truncf %13 : vector<16x128xf32> to vector<16x128xbf16>
    %c0_11 = arith.constant 0 : index
    %c0_12 = arith.constant 0 : index
    %c0_13 = arith.constant 0 : index
    %c0_14 = arith.constant 0 : index
    %15 = vector.load %arg6[%c0_11, %c0_12, %c0_13, %c0_14] : memref<1x1x16x128xbf16, #tpu.memory_space<vmem>>, vector<1x1x16x128xbf16>
    %16 = vector.shape_cast %15 : vector<1x1x16x128xbf16> to vector<16x128xbf16>
    %17 = vector.shape_cast %14 : vector<16x128xbf16> to vector<1x1x16x128xbf16>
    tpu.vector_store %arg6[%c0_11, %c0_12, %c0_13, %c0_14], %17 {strides = array<i32>} : memref<1x1x16x128xbf16, #tpu.memory_space<vmem>>, vector<1x1x16x128xbf16>,
    %cst_15 = arith.constant dense<0xFF800000> : vector<64xf32>
    %18 = vector.multi_reduction <maximumf>, %7, %cst_15 [0] : vector<16x64xf32> to vector<64xf32>
    %19 = vector.shape_cast %18 : vector<64xf32> to vector<1x64xf32>
    %cst_16 = arith.constant dense<0xFF800000> : vector<128xf32>
    %20 = vector.multi_reduction <maximumf>, %13, %cst_16 [0] : vector<16x128xf32> to vector<128xf32>
    %21 = vector.shape_cast %20 : vector<128xf32> to vector<1x128xf32>
    %c0_i32 = arith.constant 0 : i32
    %22 = arith.cmpi eq, %arg2, %c0_i32 : i32
    %23 = arith.extui %22 : i1 to i32
    %c0_i32_17 = arith.constant 0 : i32
    %24 = arith.cmpi ne, %23, %c0_i32_17 : i32
    scf.if %24 {
      %c0_20 = arith.constant 0 : index
      %c0_21 = arith.constant 0 : index
      %c0_22 = arith.constant 0 : index
      %c0_23 = arith.constant 0 : index
      %28 = vector.load %arg7[%c0_20, %c0_21, %c0_22, %c0_23] : memref<1x1x1x64xf32, #tpu.memory_space<vmem>>, vector<1x1x1x64xf32>
      %29 = vector.shape_cast %28 : vector<1x1x1x64xf32> to vector<1x64xf32>
      %30 = vector.shape_cast %19 : vector<1x64xf32> to vector<1x1x1x64xf32>
      tpu.vector_store %arg7[%c0_20, %c0_21, %c0_22, %c0_23], %30 {strides = array<i32>} : memref<1x1x1x64xf32, #tpu.memory_space<vmem>>, vector<1x1x1x64xf32>,
      %c0_24 = arith.constant 0 : index
      %c0_25 = arith.constant 0 : index
      %c0_26 = arith.constant 0 : index
      %c0_27 = arith.constant 0 : index
      %31 = vector.load %arg8[%c0_24, %c0_25, %c0_26, %c0_27] : memref<1x1x1x128xf32, #tpu.memory_space<vmem>>, vector<1x1x1x128xf32>
      %32 = vector.shape_cast %31 : vector<1x1x1x128xf32> to vector<1x128xf32>
      %33 = vector.shape_cast %21 : vector<1x128xf32> to vector<1x1x1x128xf32>
      tpu.vector_store %arg8[%c0_24, %c0_25, %c0_26, %c0_27], %33 {strides = array<i32>} : memref<1x1x1x128xf32, #tpu.memory_space<vmem>>, vector<1x1x1x128xf32>,
    } else {
    }
    %c0_i32_18 = arith.constant 0 : i32
    %25 = arith.cmpi sgt, %arg2, %c0_i32_18 : i32
    %26 = arith.extui %25 : i1 to i32
    %c0_i32_19 = arith.constant 0 : i32
    %27 = arith.cmpi ne, %26, %c0_i32_19 : i32
    scf.if %27 {
      %c0_20 = arith.constant 0 : index
      %c0_21 = arith.constant 0 : index
      %c0_22 = arith.constant 0 : index
      %c0_23 = arith.constant 0 : index
      %28 = vector.load %arg7[%c0_20, %c0_21, %c0_22, %c0_23] : memref<1x1x1x64xf32, #tpu.memory_space<vmem>>, vector<1x1x1x64xf32>
      %29 = vector.shape_cast %28 : vector<1x1x1x64xf32> to vector<1x64xf32>
      %30 = arith.maximumf %29, %19 : vector<1x64xf32>
      %c0_24 = arith.constant 0 : index
      %c0_25 = arith.constant 0 : index
      %c0_26 = arith.constant 0 : index
      %c0_27 = arith.constant 0 : index
      %31 = vector.load %arg7[%c0_24, %c0_25, %c0_26, %c0_27] : memref<1x1x1x64xf32, #tpu.memory_space<vmem>>, vector<1x1x1x64xf32>
      %32 = vector.shape_cast %31 : vector<1x1x1x64xf32> to vector<1x64xf32>
      %33 = vector.shape_cast %30 : vector<1x64xf32> to vector<1x1x1x64xf32>
      tpu.vector_store %arg7[%c0_24, %c0_25, %c0_26, %c0_27], %33 {strides = array<i32>} : memref<1x1x1x64xf32, #tpu.memory_space<vmem>>, vector<1x1x1x64xf32>,
      %c0_28 = arith.constant 0 : index
      %c0_29 = arith.constant 0 : index
      %c0_30 = arith.constant 0 : index
      %c0_31 = arith.constant 0 : index
      %34 = vector.load %arg8[%c0_28, %c0_29, %c0_30, %c0_31] : memref<1x1x1x128xf32, #tpu.memory_space<vmem>>, vector<1x1x1x128xf32>
      %35 = vector.shape_cast %34 : vector<1x1x1x128xf32> to vector<1x128xf32>
      %36 = arith.maximumf %35, %21 : vector<1x128xf32>
      %c0_32 = arith.constant 0 : index
      %c0_33 = arith.constant 0 : index
      %c0_34 = arith.constant 0 : index
      %c0_35 = arith.constant 0 : index
      %37 = vector.load %arg8[%c0_32, %c0_33, %c0_34, %c0_35] : memref<1x1x1x128xf32, #tpu.memory_space<vmem>>, vector<1x1x1x128xf32>
      %38 = vector.shape_cast %37 : vector<1x1x1x128xf32> to vector<1x128xf32>
      %39 = vector.shape_cast %36 : vector<1x128xf32> to vector<1x1x1x128xf32>
      tpu.vector_store %arg8[%c0_32, %c0_33, %c0_34, %c0_35], %39 {strides = array<i32>} : memref<1x1x1x128xf32, #tpu.memory_space<vmem>>, vector<1x1x1x128xf32>,
    } else {
    }
    return
  }
  func.func @transform_0(%arg0: i32, %arg1: i32, %arg2: i32) -> (i32, i32, i32) {
    %c0_i32 = arith.constant 0 : i32
    %c0_i32_0 = arith.constant 0 : i32
    return %arg1, %arg2, %c0_i32 : i32, i32, i32
  }
  func.func @transform_1(%arg0: i32, %arg1: i32, %arg2: i32) -> (i32, i32, i32) {
    %c0_i32 = arith.constant 0 : i32
    %c0_i32_0 = arith.constant 0 : i32
    %c0_i32_1 = arith.constant 0 : i32
    return %arg0, %c0_i32, %c0_i32_0 : i32, i32, i32
  }
  func.func @transform_2(%arg0: i32, %arg1: i32, %arg2: i32) -> (i32, i32, i32) {
    %c0_i32 = arith.constant 0 : i32
    %c0_i32_0 = arith.constant 0 : i32
    %c0_i32_1 = arith.constant 0 : i32
    return %arg0, %c0_i32, %c0_i32_0 : i32, i32, i32
  }
  func.func @transform_3(%arg0: i32, %arg1: i32, %arg2: i32) -> (i32, i32, i32, i32) {
    %c0_i32 = arith.constant 0 : i32
    %c0_i32_0 = arith.constant 0 : i32
    return %arg0, %arg1, %arg2, %c0_i32 : i32, i32, i32, i32
  }
  func.func @transform_4(%arg0: i32, %arg1: i32, %arg2: i32) -> (i32, i32, i32, i32) {
    %c0_i32 = arith.constant 0 : i32
    %c0_i32_0 = arith.constant 0 : i32
    %c0_i32_1 = arith.constant 0 : i32
    return %arg0, %arg1, %c0_i32, %c0_i32_0 : i32, i32, i32, i32
  }
  func.func @transform_5(%arg0: i32, %arg1: i32, %arg2: i32) -> (i32, i32, i32, i32) {
    %c0_i32 = arith.constant 0 : i32
    %c0_i32_0 = arith.constant 0 : i32
    %c0_i32_1 = arith.constant 0 : i32
    return %arg0, %arg1, %c0_i32, %c0_i32_0 : i32, i32, i32, i32
  }
}

module attributes {stable_mosaic.version = 11 : i64} {
  func.func @kernel(%arg0: i32, %arg1: i32, %arg2: i32, %arg3: memref<1x1x16x128xbf16, #tpu.memory_space<vmem>>, %arg4: memref<1x128x256xbf16, #tpu.memory_space<vmem>>, %arg5: memref<1x1x1x256xf32, #tpu.memory_space<vmem>>, %arg6: memref<1x256x512xbf16, #tpu.memory_space<vmem>>, %arg7: memref<1x1x16x256xbf16, #tpu.memory_space<vmem>>, %arg8: memref<1x1x1x256xf32, #tpu.memory_space<vmem>>, %arg9: memref<1x1x1x512xf32, #tpu.memory_space<vmem>>) attributes {dimension_semantics = [#tpu.dimension_semantics<parallel>, #tpu.dimension_semantics<parallel>, #tpu.dimension_semantics<arbitrary>], iteration_bounds = array<i64: 2, 4, 1>, scalar_prefetch = 0 : i64, scratch_operands = 0 : i64, tpu.core_type = #tpu.core_type<tc>, window_params = [{transform_indices = @transform_0, window_bounds = array<i64: 1, 1, 16, 128>}, {transform_indices = @transform_1, window_bounds = array<i64: 1, 128, 256>}, {transform_indices = @transform_2, window_bounds = array<i64: 1, 1, 1, 256>}, {transform_indices = @transform_3, window_bounds = array<i64: 1, 256, 512>}, {transform_indices = @transform_4, window_bounds = array<i64: 1, 1, 16, 256>}, {transform_indices = @transform_5, window_bounds = array<i64: 1, 1, 1, 256>}, {transform_indices = @transform_6, window_bounds = array<i64: 1, 1, 1, 512>}]} {
    %c0 = arith.constant 0 : index
    %c0_0 = arith.constant 0 : index
    %c0_1 = arith.constant 0 : index
    %c0_2 = arith.constant 0 : index
    %0 = vector.load %arg3[%c0, %c0_0, %c0_1, %c0_2] : memref<1x1x16x128xbf16, #tpu.memory_space<vmem>>, vector<1x1x16x128xbf16>
    %1 = vector.shape_cast %0 : vector<1x1x16x128xbf16> to vector<16x128xbf16>
    %c0_3 = arith.constant 0 : index
    %c0_4 = arith.constant 0 : index
    %c0_5 = arith.constant 0 : index
    %2 = vector.load %arg4[%c0_3, %c0_4, %c0_5] : memref<1x128x256xbf16, #tpu.memory_space<vmem>>, vector<1x128x256xbf16>
    %3 = vector.shape_cast %2 : vector<1x128x256xbf16> to vector<128x256xbf16>
    %cst = arith.constant dense<0.000000e+00> : vector<16x256xf32>
    %4 = tpu.matmul %1, %3, %cst {dimension_numbers = #tpu.dot_dimension_numbers<[1], [0], [0], [1], [0, 0, 1, 1], [], []>} : vector<16x128xbf16>, vector<128x256xbf16>, vector<16x256xf32> -> vector<16x256xf32>
    %c0_6 = arith.constant 0 : index
    %c0_7 = arith.constant 0 : index
    %c0_8 = arith.constant 0 : index
    %c0_9 = arith.constant 0 : index
    %5 = vector.load %arg5[%c0_6, %c0_7, %c0_8, %c0_9] : memref<1x1x1x256xf32, #tpu.memory_space<vmem>>, vector<1x1x1x256xf32>
    %6 = vector.shape_cast %5 : vector<1x1x1x256xf32> to vector<1x256xf32>
    %7 = vector.broadcast %6 : vector<1x256xf32> to vector<16x256xf32>
    %8 = arith.addf %4, %7 : vector<16x256xf32>
    %cst_10 = arith.constant 0.000000e+00 : f32
    %9 = vector.broadcast %cst_10 : f32 to vector<16x256xf32>
    %10 = arith.maximumf %8, %9 : vector<16x256xf32>
    %11 = arith.truncf %10 : vector<16x256xf32> to vector<16x256xbf16>
    %c0_11 = arith.constant 0 : index
    %c0_12 = arith.constant 0 : index
    %c0_13 = arith.constant 0 : index
    %c0_14 = arith.constant 0 : index
    %12 = vector.load %arg7[%c0_11, %c0_12, %c0_13, %c0_14] : memref<1x1x16x256xbf16, #tpu.memory_space<vmem>>, vector<1x1x16x256xbf16>
    %13 = vector.shape_cast %12 : vector<1x1x16x256xbf16> to vector<16x256xbf16>
    %14 = vector.shape_cast %11 : vector<16x256xbf16> to vector<1x1x16x256xbf16>
    tpu.vector_store %arg7[%c0_11, %c0_12, %c0_13, %c0_14], %14 {strides = array<i32>} : memref<1x1x16x256xbf16, #tpu.memory_space<vmem>>, vector<1x1x16x256xbf16>,
    %15 = arith.truncf %10 : vector<16x256xf32> to vector<16x256xbf16>
    %c0_15 = arith.constant 0 : index
    %c0_16 = arith.constant 0 : index
    %c0_17 = arith.constant 0 : index
    %16 = vector.load %arg6[%c0_15, %c0_16, %c0_17] : memref<1x256x512xbf16, #tpu.memory_space<vmem>>, vector<1x256x512xbf16>
    %17 = vector.shape_cast %16 : vector<1x256x512xbf16> to vector<256x512xbf16>
    %cst_18 = arith.constant dense<0.000000e+00> : vector<16x512xf32>
    %18 = tpu.matmul %15, %17, %cst_18 {dimension_numbers = #tpu.dot_dimension_numbers<[1], [0], [0], [1], [0, 0, 1, 1], [], []>} : vector<16x256xbf16>, vector<256x512xbf16>, vector<16x512xf32> -> vector<16x512xf32>
    %cst_19 = arith.constant 0.000000e+00 : f32
    %19 = vector.broadcast %cst_19 : f32 to vector<16x512xf32>
    %20 = arith.maximumf %18, %19 : vector<16x512xf32>
    %cst_20 = arith.constant dense<0xFF800000> : vector<256xf32>
    %21 = vector.multi_reduction <maximumf>, %10, %cst_20 [0] : vector<16x256xf32> to vector<256xf32>
    %22 = vector.shape_cast %21 : vector<256xf32> to vector<1x256xf32>
    %cst_21 = arith.constant dense<0xFF800000> : vector<512xf32>
    %23 = vector.multi_reduction <maximumf>, %20, %cst_21 [0] : vector<16x512xf32> to vector<512xf32>
    %24 = vector.shape_cast %23 : vector<512xf32> to vector<1x512xf32>
    %c0_i32 = arith.constant 0 : i32
    %25 = arith.cmpi eq, %arg2, %c0_i32 : i32
    %26 = arith.extui %25 : i1 to i32
    %c0_i32_22 = arith.constant 0 : i32
    %27 = arith.cmpi ne, %26, %c0_i32_22 : i32
    scf.if %27 {
      %c0_25 = arith.constant 0 : index
      %c0_26 = arith.constant 0 : index
      %c0_27 = arith.constant 0 : index
      %c0_28 = arith.constant 0 : index
      %31 = vector.load %arg8[%c0_25, %c0_26, %c0_27, %c0_28] : memref<1x1x1x256xf32, #tpu.memory_space<vmem>>, vector<1x1x1x256xf32>
      %32 = vector.shape_cast %31 : vector<1x1x1x256xf32> to vector<1x256xf32>
      %33 = vector.shape_cast %22 : vector<1x256xf32> to vector<1x1x1x256xf32>
      tpu.vector_store %arg8[%c0_25, %c0_26, %c0_27, %c0_28], %33 {strides = array<i32>} : memref<1x1x1x256xf32, #tpu.memory_space<vmem>>, vector<1x1x1x256xf32>,
      %c0_29 = arith.constant 0 : index
      %c0_30 = arith.constant 0 : index
      %c0_31 = arith.constant 0 : index
      %c0_32 = arith.constant 0 : index
      %34 = vector.load %arg9[%c0_29, %c0_30, %c0_31, %c0_32] : memref<1x1x1x512xf32, #tpu.memory_space<vmem>>, vector<1x1x1x512xf32>
      %35 = vector.shape_cast %34 : vector<1x1x1x512xf32> to vector<1x512xf32>
      %36 = vector.shape_cast %24 : vector<1x512xf32> to vector<1x1x1x512xf32>
      tpu.vector_store %arg9[%c0_29, %c0_30, %c0_31, %c0_32], %36 {strides = array<i32>} : memref<1x1x1x512xf32, #tpu.memory_space<vmem>>, vector<1x1x1x512xf32>,
    } else {
    }
    %c0_i32_23 = arith.constant 0 : i32
    %28 = arith.cmpi sgt, %arg2, %c0_i32_23 : i32
    %29 = arith.extui %28 : i1 to i32
    %c0_i32_24 = arith.constant 0 : i32
    %30 = arith.cmpi ne, %29, %c0_i32_24 : i32
    scf.if %30 {
      %c0_25 = arith.constant 0 : index
      %c0_26 = arith.constant 0 : index
      %c0_27 = arith.constant 0 : index
      %c0_28 = arith.constant 0 : index
      %31 = vector.load %arg8[%c0_25, %c0_26, %c0_27, %c0_28] : memref<1x1x1x256xf32, #tpu.memory_space<vmem>>, vector<1x1x1x256xf32>
      %32 = vector.shape_cast %31 : vector<1x1x1x256xf32> to vector<1x256xf32>
      %33 = arith.maximumf %32, %22 : vector<1x256xf32>
      %c0_29 = arith.constant 0 : index
      %c0_30 = arith.constant 0 : index
      %c0_31 = arith.constant 0 : index
      %c0_32 = arith.constant 0 : index
      %34 = vector.load %arg8[%c0_29, %c0_30, %c0_31, %c0_32] : memref<1x1x1x256xf32, #tpu.memory_space<vmem>>, vector<1x1x1x256xf32>
      %35 = vector.shape_cast %34 : vector<1x1x1x256xf32> to vector<1x256xf32>
      %36 = vector.shape_cast %33 : vector<1x256xf32> to vector<1x1x1x256xf32>
      tpu.vector_store %arg8[%c0_29, %c0_30, %c0_31, %c0_32], %36 {strides = array<i32>} : memref<1x1x1x256xf32, #tpu.memory_space<vmem>>, vector<1x1x1x256xf32>,
      %c0_33 = arith.constant 0 : index
      %c0_34 = arith.constant 0 : index
      %c0_35 = arith.constant 0 : index
      %c0_36 = arith.constant 0 : index
      %37 = vector.load %arg9[%c0_33, %c0_34, %c0_35, %c0_36] : memref<1x1x1x512xf32, #tpu.memory_space<vmem>>, vector<1x1x1x512xf32>
      %38 = vector.shape_cast %37 : vector<1x1x1x512xf32> to vector<1x512xf32>
      %39 = arith.maximumf %38, %24 : vector<1x512xf32>
      %c0_37 = arith.constant 0 : index
      %c0_38 = arith.constant 0 : index
      %c0_39 = arith.constant 0 : index
      %c0_40 = arith.constant 0 : index
      %40 = vector.load %arg9[%c0_37, %c0_38, %c0_39, %c0_40] : memref<1x1x1x512xf32, #tpu.memory_space<vmem>>, vector<1x1x1x512xf32>
      %41 = vector.shape_cast %40 : vector<1x1x1x512xf32> to vector<1x512xf32>
      %42 = vector.shape_cast %39 : vector<1x512xf32> to vector<1x1x1x512xf32>
      tpu.vector_store %arg9[%c0_37, %c0_38, %c0_39, %c0_40], %42 {strides = array<i32>} : memref<1x1x1x512xf32, #tpu.memory_space<vmem>>, vector<1x1x1x512xf32>,
    } else {
    }
    return
  }
  func.func @transform_0(%arg0: i32, %arg1: i32, %arg2: i32) -> (i32, i32, i32, i32) {
    %c0_i32 = arith.constant 0 : i32
    %c0_i32_0 = arith.constant 0 : i32
    return %arg0, %arg1, %arg2, %c0_i32 : i32, i32, i32, i32
  }
  func.func @transform_1(%arg0: i32, %arg1: i32, %arg2: i32) -> (i32, i32, i32) {
    %c0_i32 = arith.constant 0 : i32
    %c0_i32_0 = arith.constant 0 : i32
    %c0_i32_1 = arith.constant 0 : i32
    return %arg0, %c0_i32, %c0_i32_0 : i32, i32, i32
  }
  func.func @transform_2(%arg0: i32, %arg1: i32, %arg2: i32) -> (i32, i32, i32, i32) {
    %c0_i32 = arith.constant 0 : i32
    %c0_i32_0 = arith.constant 0 : i32
    %c0_i32_1 = arith.constant 0 : i32
    return %arg0, %arg1, %c0_i32, %c0_i32_0 : i32, i32, i32, i32
  }
  func.func @transform_3(%arg0: i32, %arg1: i32, %arg2: i32) -> (i32, i32, i32) {
    %c0_i32 = arith.constant 0 : i32
    %c0_i32_0 = arith.constant 0 : i32
    %c0_i32_1 = arith.constant 0 : i32
    return %arg0, %c0_i32, %c0_i32_0 : i32, i32, i32
  }
  func.func @transform_4(%arg0: i32, %arg1: i32, %arg2: i32) -> (i32, i32, i32, i32) {
    %c0_i32 = arith.constant 0 : i32
    %c0_i32_0 = arith.constant 0 : i32
    return %arg0, %arg1, %arg2, %c0_i32 : i32, i32, i32, i32
  }
  func.func @transform_5(%arg0: i32, %arg1: i32, %arg2: i32) -> (i32, i32, i32, i32) {
    %c0_i32 = arith.constant 0 : i32
    %c0_i32_0 = arith.constant 0 : i32
    %c0_i32_1 = arith.constant 0 : i32
    return %arg0, %arg1, %c0_i32, %c0_i32_0 : i32, i32, i32, i32
  }
  func.func @transform_6(%arg0: i32, %arg1: i32, %arg2: i32) -> (i32, i32, i32, i32) {
    %c0_i32 = arith.constant 0 : i32
    %c0_i32_0 = arith.constant 0 : i32
    %c0_i32_1 = arith.constant 0 : i32
    return %arg0, %arg1, %c0_i32, %c0_i32_0 : i32, i32, i32, i32
  }
}

module attributes {stable_mosaic.version = 11 : i64} {
  func.func @kernel(%arg0: i32, %arg1: i32, %arg2: i32, %arg3: memref<1x1x16x256xbf16, #tpu.memory_space<vmem>>, %arg4: memref<1x256x512xbf16, #tpu.memory_space<vmem>>, %arg5: memref<1x512x512xbf16, #tpu.memory_space<vmem>>, %arg6: memref<1x1x1x512xf32, #tpu.memory_space<vmem>>, %arg7: memref<1x1x1x512xf32, #tpu.memory_space<vmem>>) attributes {dimension_semantics = [#tpu.dimension_semantics<parallel>, #tpu.dimension_semantics<parallel>, #tpu.dimension_semantics<arbitrary>], iteration_bounds = array<i64: 2, 4, 1>, scalar_prefetch = 0 : i64, scratch_operands = 0 : i64, tpu.core_type = #tpu.core_type<tc>, window_params = [{transform_indices = @transform_0, window_bounds = array<i64: 1, 1, 16, 256>}, {transform_indices = @transform_1, window_bounds = array<i64: 1, 256, 512>}, {transform_indices = @transform_2, window_bounds = array<i64: 1, 512, 512>}, {transform_indices = @transform_3, window_bounds = array<i64: 1, 1, 1, 512>}, {transform_indices = @transform_4, window_bounds = array<i64: 1, 1, 1, 512>}]} {
    %c0 = arith.constant 0 : index
    %c0_0 = arith.constant 0 : index
    %c0_1 = arith.constant 0 : index
    %c0_2 = arith.constant 0 : index
    %0 = vector.load %arg3[%c0, %c0_0, %c0_1, %c0_2] : memref<1x1x16x256xbf16, #tpu.memory_space<vmem>>, vector<1x1x16x256xbf16>
    %1 = vector.shape_cast %0 : vector<1x1x16x256xbf16> to vector<16x256xbf16>
    %c0_3 = arith.constant 0 : index
    %c0_4 = arith.constant 0 : index
    %c0_5 = arith.constant 0 : index
    %2 = vector.load %arg4[%c0_3, %c0_4, %c0_5] : memref<1x256x512xbf16, #tpu.memory_space<vmem>>, vector<1x256x512xbf16>
    %3 = vector.shape_cast %2 : vector<1x256x512xbf16> to vector<256x512xbf16>
    %cst = arith.constant dense<0.000000e+00> : vector<16x512xf32>
    %4 = tpu.matmul %1, %3, %cst {dimension_numbers = #tpu.dot_dimension_numbers<[1], [0], [0], [1], [0, 0, 1, 1], [], []>} : vector<16x256xbf16>, vector<256x512xbf16>, vector<16x512xf32> -> vector<16x512xf32>
    %cst_6 = arith.constant 0.000000e+00 : f32
    %5 = vector.broadcast %cst_6 : f32 to vector<16x512xf32>
    %6 = arith.maximumf %4, %5 : vector<16x512xf32>
    %7 = arith.truncf %6 : vector<16x512xf32> to vector<16x512xbf16>
    %c0_7 = arith.constant 0 : index
    %c0_8 = arith.constant 0 : index
    %c0_9 = arith.constant 0 : index
    %8 = vector.load %arg5[%c0_7, %c0_8, %c0_9] : memref<1x512x512xbf16, #tpu.memory_space<vmem>>, vector<1x512x512xbf16>
    %9 = vector.shape_cast %8 : vector<1x512x512xbf16> to vector<512x512xbf16>
    %cst_10 = arith.constant dense<0.000000e+00> : vector<16x512xf32>
    %10 = tpu.matmul %7, %9, %cst_10 {dimension_numbers = #tpu.dot_dimension_numbers<[1], [0], [0], [1], [0, 0, 1, 1], [], []>} : vector<16x512xbf16>, vector<512x512xbf16>, vector<16x512xf32> -> vector<16x512xf32>
    %c0_11 = arith.constant 0 : index
    %c0_12 = arith.constant 0 : index
    %c0_13 = arith.constant 0 : index
    %c0_14 = arith.constant 0 : index
    %11 = vector.load %arg6[%c0_11, %c0_12, %c0_13, %c0_14] : memref<1x1x1x512xf32, #tpu.memory_space<vmem>>, vector<1x1x1x512xf32>
    %12 = vector.shape_cast %11 : vector<1x1x1x512xf32> to vector<1x512xf32>
    %13 = vector.broadcast %12 : vector<1x512xf32> to vector<16x512xf32>
    %14 = arith.addf %10, %13 : vector<16x512xf32>
    %cst_15 = arith.constant 0.000000e+00 : f32
    %15 = vector.broadcast %cst_15 : f32 to vector<16x512xf32>
    %16 = arith.maximumf %14, %15 : vector<16x512xf32>
    %cst_16 = arith.constant dense<0xFF800000> : vector<512xf32>
    %17 = vector.multi_reduction <maximumf>, %16, %cst_16 [0] : vector<16x512xf32> to vector<512xf32>
    %18 = vector.shape_cast %17 : vector<512xf32> to vector<1x512xf32>
    %c0_i32 = arith.constant 0 : i32
    %19 = arith.cmpi eq, %arg2, %c0_i32 : i32
    %20 = arith.extui %19 : i1 to i32
    %c0_i32_17 = arith.constant 0 : i32
    %21 = arith.cmpi ne, %20, %c0_i32_17 : i32
    scf.if %21 {
      %c0_20 = arith.constant 0 : index
      %c0_21 = arith.constant 0 : index
      %c0_22 = arith.constant 0 : index
      %c0_23 = arith.constant 0 : index
      %25 = vector.load %arg7[%c0_20, %c0_21, %c0_22, %c0_23] : memref<1x1x1x512xf32, #tpu.memory_space<vmem>>, vector<1x1x1x512xf32>
      %26 = vector.shape_cast %25 : vector<1x1x1x512xf32> to vector<1x512xf32>
      %27 = vector.shape_cast %18 : vector<1x512xf32> to vector<1x1x1x512xf32>
      tpu.vector_store %arg7[%c0_20, %c0_21, %c0_22, %c0_23], %27 {strides = array<i32>} : memref<1x1x1x512xf32, #tpu.memory_space<vmem>>, vector<1x1x1x512xf32>,
    } else {
    }
    %c0_i32_18 = arith.constant 0 : i32
    %22 = arith.cmpi sgt, %arg2, %c0_i32_18 : i32
    %23 = arith.extui %22 : i1 to i32
    %c0_i32_19 = arith.constant 0 : i32
    %24 = arith.cmpi ne, %23, %c0_i32_19 : i32
    scf.if %24 {
      %c0_20 = arith.constant 0 : index
      %c0_21 = arith.constant 0 : index
      %c0_22 = arith.constant 0 : index
      %c0_23 = arith.constant 0 : index
      %25 = vector.load %arg7[%c0_20, %c0_21, %c0_22, %c0_23] : memref<1x1x1x512xf32, #tpu.memory_space<vmem>>, vector<1x1x1x512xf32>
      %26 = vector.shape_cast %25 : vector<1x1x1x512xf32> to vector<1x512xf32>
      %27 = arith.maximumf %26, %18 : vector<1x512xf32>
      %c0_24 = arith.constant 0 : index
      %c0_25 = arith.constant 0 : index
      %c0_26 = arith.constant 0 : index
      %c0_27 = arith.constant 0 : index
      %28 = vector.load %arg7[%c0_24, %c0_25, %c0_26, %c0_27] : memref<1x1x1x512xf32, #tpu.memory_space<vmem>>, vector<1x1x1x512xf32>
      %29 = vector.shape_cast %28 : vector<1x1x1x512xf32> to vector<1x512xf32>
      %30 = vector.shape_cast %27 : vector<1x512xf32> to vector<1x1x1x512xf32>
      tpu.vector_store %arg7[%c0_24, %c0_25, %c0_26, %c0_27], %30 {strides = array<i32>} : memref<1x1x1x512xf32, #tpu.memory_space<vmem>>, vector<1x1x1x512xf32>,
    } else {
    }
    return
  }
  func.func @transform_0(%arg0: i32, %arg1: i32, %arg2: i32) -> (i32, i32, i32, i32) {
    %c0_i32 = arith.constant 0 : i32
    %c0_i32_0 = arith.constant 0 : i32
    return %arg0, %arg1, %arg2, %c0_i32 : i32, i32, i32, i32
  }
  func.func @transform_1(%arg0: i32, %arg1: i32, %arg2: i32) -> (i32, i32, i32) {
    %c0_i32 = arith.constant 0 : i32
    %c0_i32_0 = arith.constant 0 : i32
    %c0_i32_1 = arith.constant 0 : i32
    return %arg0, %c0_i32, %c0_i32_0 : i32, i32, i32
  }
  func.func @transform_2(%arg0: i32, %arg1: i32, %arg2: i32) -> (i32, i32, i32) {
    %c0_i32 = arith.constant 0 : i32
    %c0_i32_0 = arith.constant 0 : i32
    %c0_i32_1 = arith.constant 0 : i32
    return %arg0, %c0_i32, %c0_i32_0 : i32, i32, i32
  }
  func.func @transform_3(%arg0: i32, %arg1: i32, %arg2: i32) -> (i32, i32, i32, i32) {
    %c0_i32 = arith.constant 0 : i32
    %c0_i32_0 = arith.constant 0 : i32
    %c0_i32_1 = arith.constant 0 : i32
    return %arg0, %arg1, %c0_i32, %c0_i32_0 : i32, i32, i32, i32
  }
  func.func @transform_4(%arg0: i32, %arg1: i32, %arg2: i32) -> (i32, i32, i32, i32) {
    %c0_i32 = arith.constant 0 : i32
    %c0_i32_0 = arith.constant 0 : i32
    %c0_i32_1 = arith.constant 0 : i32
    return %arg0, %arg1, %c0_i32, %c0_i32_0 : i32, i32, i32, i32
  }
}

module attributes {stable_mosaic.version = 11 : i64} {
  func.func @kernel(%arg0: memref<4x2944xf32, #tpu.memory_space<vmem>>, %arg1: memref<2944x128xbf16, #tpu.memory_space<vmem>>, %arg2: memref<128x128xbf16, #tpu.memory_space<vmem>>, %arg3: memref<128x256xbf16, #tpu.memory_space<vmem>>, %arg4: memref<4x256xf32, #tpu.memory_space<vmem>>) attributes {dimension_semantics = [], scalar_prefetch = 0 : i64, scratch_operands = 0 : i64, tpu.core_type = #tpu.core_type<tc>} {
    %c0 = arith.constant 0 : index
    %c0_0 = arith.constant 0 : index
    %0 = vector.load %arg0[%c0, %c0_0] : memref<4x2944xf32, #tpu.memory_space<vmem>>, vector<4x2944xf32>
    %1 = arith.truncf %0 : vector<4x2944xf32> to vector<4x2944xbf16>
    %c0_1 = arith.constant 0 : index
    %c0_2 = arith.constant 0 : index
    %2 = vector.load %arg1[%c0_1, %c0_2] : memref<2944x128xbf16, #tpu.memory_space<vmem>>, vector<2944x128xbf16>
    %cst = arith.constant dense<0.000000e+00> : vector<4x128xf32>
    %3 = tpu.matmul %1, %2, %cst {dimension_numbers = #tpu.dot_dimension_numbers<[1], [0], [0], [1], [0, 0, 1, 1], [], []>} : vector<4x2944xbf16>, vector<2944x128xbf16>, vector<4x128xf32> -> vector<4x128xf32>
    %cst_3 = arith.constant 0.000000e+00 : f32
    %4 = vector.broadcast %cst_3 : f32 to vector<4x128xf32>
    %5 = arith.maximumf %3, %4 : vector<4x128xf32>
    %6 = arith.truncf %5 : vector<4x128xf32> to vector<4x128xbf16>
    %c0_4 = arith.constant 0 : index
    %c0_5 = arith.constant 0 : index
    %7 = vector.load %arg2[%c0_4, %c0_5] : memref<128x128xbf16, #tpu.memory_space<vmem>>, vector<128x128xbf16>
    %cst_6 = arith.constant dense<0.000000e+00> : vector<4x128xf32>
    %8 = tpu.matmul %6, %7, %cst_6 {dimension_numbers = #tpu.dot_dimension_numbers<[1], [0], [0], [1], [0, 0, 1, 1], [], []>} : vector<4x128xbf16>, vector<128x128xbf16>, vector<4x128xf32> -> vector<4x128xf32>
    %cst_7 = arith.constant 0.000000e+00 : f32
    %9 = vector.broadcast %cst_7 : f32 to vector<4x128xf32>
    %10 = arith.maximumf %8, %9 : vector<4x128xf32>
    %11 = arith.truncf %10 : vector<4x128xf32> to vector<4x128xbf16>
    %c0_8 = arith.constant 0 : index
    %c0_9 = arith.constant 0 : index
    %12 = vector.load %arg3[%c0_8, %c0_9] : memref<128x256xbf16, #tpu.memory_space<vmem>>, vector<128x256xbf16>
    %cst_10 = arith.constant dense<0.000000e+00> : vector<4x256xf32>
    %13 = tpu.matmul %11, %12, %cst_10 {dimension_numbers = #tpu.dot_dimension_numbers<[1], [0], [0], [1], [0, 0, 1, 1], [], []>} : vector<4x128xbf16>, vector<128x256xbf16>, vector<4x256xf32> -> vector<4x256xf32>
    %cst_11 = arith.constant 0.000000e+00 : f32
    %14 = vector.broadcast %cst_11 : f32 to vector<4x256xf32>
    %15 = arith.maximumf %13, %14 : vector<4x256xf32>
    %c0_12 = arith.constant 0 : index
    %c0_13 = arith.constant 0 : index
    %16 = vector.load %arg4[%c0_12, %c0_13] : memref<4x256xf32, #tpu.memory_space<vmem>>, vector<4x256xf32>
    tpu.vector_store %arg4[%c0_12, %c0_13], %15 {strides = array<i32>} : memref<4x256xf32, #tpu.memory_space<vmem>>, vector<4x256xf32>,
    return
  }
}

module attributes {stable_mosaic.version = 11 : i64} {
  func.func @kernel(%arg0: memref<4x768xf32, #tpu.memory_space<vmem>>, %arg1: memref<768x32xbf16, #tpu.memory_space<vmem>>, %arg2: memref<32x64xbf16, #tpu.memory_space<vmem>>, %arg3: memref<64x128xbf16, #tpu.memory_space<vmem>>, %arg4: memref<128x3xbf16, #tpu.memory_space<vmem>>, %arg5: memref<4x3xf32, #tpu.memory_space<vmem>>) attributes {dimension_semantics = [], scalar_prefetch = 0 : i64, scratch_operands = 0 : i64, tpu.core_type = #tpu.core_type<tc>} {
    %c0 = arith.constant 0 : index
    %c0_0 = arith.constant 0 : index
    %0 = vector.load %arg0[%c0, %c0_0] : memref<4x768xf32, #tpu.memory_space<vmem>>, vector<4x768xf32>
    %1 = arith.truncf %0 : vector<4x768xf32> to vector<4x768xbf16>
    %c0_1 = arith.constant 0 : index
    %c0_2 = arith.constant 0 : index
    %2 = vector.load %arg1[%c0_1, %c0_2] : memref<768x32xbf16, #tpu.memory_space<vmem>>, vector<768x32xbf16>
    %cst = arith.constant dense<0.000000e+00> : vector<4x32xf32>
    %3 = tpu.matmul %1, %2, %cst {dimension_numbers = #tpu.dot_dimension_numbers<[1], [0], [0], [1], [0, 0, 1, 1], [], []>} : vector<4x768xbf16>, vector<768x32xbf16>, vector<4x32xf32> -> vector<4x32xf32>
    %cst_3 = arith.constant 0.000000e+00 : f32
    %4 = vector.broadcast %cst_3 : f32 to vector<4x32xf32>
    %5 = arith.maximumf %3, %4 : vector<4x32xf32>
    %6 = arith.truncf %5 : vector<4x32xf32> to vector<4x32xbf16>
    %c0_4 = arith.constant 0 : index
    %c0_5 = arith.constant 0 : index
    %7 = vector.load %arg2[%c0_4, %c0_5] : memref<32x64xbf16, #tpu.memory_space<vmem>>, vector<32x64xbf16>
    %cst_6 = arith.constant dense<0.000000e+00> : vector<4x64xf32>
    %8 = tpu.matmul %6, %7, %cst_6 {dimension_numbers = #tpu.dot_dimension_numbers<[1], [0], [0], [1], [0, 0, 1, 1], [], []>} : vector<4x32xbf16>, vector<32x64xbf16>, vector<4x64xf32> -> vector<4x64xf32>
    %cst_7 = arith.constant 0.000000e+00 : f32
    %9 = vector.broadcast %cst_7 : f32 to vector<4x64xf32>
    %10 = arith.maximumf %8, %9 : vector<4x64xf32>
    %11 = arith.truncf %10 : vector<4x64xf32> to vector<4x64xbf16>
    %c0_8 = arith.constant 0 : index
    %c0_9 = arith.constant 0 : index
    %12 = vector.load %arg3[%c0_8, %c0_9] : memref<64x128xbf16, #tpu.memory_space<vmem>>, vector<64x128xbf16>
    %cst_10 = arith.constant dense<0.000000e+00> : vector<4x128xf32>
    %13 = tpu.matmul %11, %12, %cst_10 {dimension_numbers = #tpu.dot_dimension_numbers<[1], [0], [0], [1], [0, 0, 1, 1], [], []>} : vector<4x64xbf16>, vector<64x128xbf16>, vector<4x128xf32> -> vector<4x128xf32>
    %cst_11 = arith.constant 0.000000e+00 : f32
    %14 = vector.broadcast %cst_11 : f32 to vector<4x128xf32>
    %15 = arith.maximumf %13, %14 : vector<4x128xf32>
    %16 = arith.truncf %15 : vector<4x128xf32> to vector<4x128xbf16>
    %c0_12 = arith.constant 0 : index
    %c0_13 = arith.constant 0 : index
    %17 = vector.load %arg4[%c0_12, %c0_13] : memref<128x3xbf16, #tpu.memory_space<vmem>>, vector<128x3xbf16>
    %cst_14 = arith.constant dense<0.000000e+00> : vector<4x3xf32>
    %18 = tpu.matmul %16, %17, %cst_14 {dimension_numbers = #tpu.dot_dimension_numbers<[1], [0], [0], [1], [0, 0, 1, 1], [], []>} : vector<4x128xbf16>, vector<128x3xbf16>, vector<4x3xf32> -> vector<4x3xf32>
    %cst_15 = arith.constant 0.000000e+00 : f32
    %19 = vector.broadcast %cst_15 : f32 to vector<4x3xf32>
    %20 = arith.maximumf %18, %19 : vector<4x3xf32>
    %c0_16 = arith.constant 0 : index
    %c0_17 = arith.constant 0 : index
    %21 = vector.load %arg5[%c0_16, %c0_17] : memref<4x3xf32, #tpu.memory_space<vmem>>, vector<4x3xf32>
    tpu.vector_store %arg5[%c0_16, %c0_17], %20 {strides = array<i32>} : memref<4x3xf32, #tpu.memory_space<vmem>>, vector<4x3xf32>,
    return
  }
}

module attributes {stable_mosaic.version = 11 : i64} {
  func.func @kernel(%arg0: memref<2x1024xf32, #tpu.memory_space<vmem>>, %arg1: memref<1024x32xbf16, #tpu.memory_space<vmem>>, %arg2: memref<32x64xbf16, #tpu.memory_space<vmem>>, %arg3: memref<64x128xbf16, #tpu.memory_space<vmem>>, %arg4: memref<128x4xbf16, #tpu.memory_space<vmem>>, %arg5: memref<2x4xf32, #tpu.memory_space<vmem>>) attributes {dimension_semantics = [], scalar_prefetch = 0 : i64, scratch_operands = 0 : i64, tpu.core_type = #tpu.core_type<tc>} {
    %c0 = arith.constant 0 : index
    %c0_0 = arith.constant 0 : index
    %0 = vector.load %arg0[%c0, %c0_0] : memref<2x1024xf32, #tpu.memory_space<vmem>>, vector<2x1024xf32>
    %1 = arith.truncf %0 : vector<2x1024xf32> to vector<2x1024xbf16>
    %c0_1 = arith.constant 0 : index
    %c0_2 = arith.constant 0 : index
    %2 = vector.load %arg1[%c0_1, %c0_2] : memref<1024x32xbf16, #tpu.memory_space<vmem>>, vector<1024x32xbf16>
    %cst = arith.constant dense<0.000000e+00> : vector<2x32xf32>
    %3 = tpu.matmul %1, %2, %cst {dimension_numbers = #tpu.dot_dimension_numbers<[1], [0], [0], [1], [0, 0, 1, 1], [], []>} : vector<2x1024xbf16>, vector<1024x32xbf16>, vector<2x32xf32> -> vector<2x32xf32>
    %cst_3 = arith.constant 0.000000e+00 : f32
    %4 = vector.broadcast %cst_3 : f32 to vector<2x32xf32>
    %5 = arith.maximumf %3, %4 : vector<2x32xf32>
    %6 = arith.truncf %5 : vector<2x32xf32> to vector<2x32xbf16>
    %c0_4 = arith.constant 0 : index
    %c0_5 = arith.constant 0 : index
    %7 = vector.load %arg2[%c0_4, %c0_5] : memref<32x64xbf16, #tpu.memory_space<vmem>>, vector<32x64xbf16>
    %cst_6 = arith.constant dense<0.000000e+00> : vector<2x64xf32>
    %8 = tpu.matmul %6, %7, %cst_6 {dimension_numbers = #tpu.dot_dimension_numbers<[1], [0], [0], [1], [0, 0, 1, 1], [], []>} : vector<2x32xbf16>, vector<32x64xbf16>, vector<2x64xf32> -> vector<2x64xf32>
    %cst_7 = arith.constant 0.000000e+00 : f32
    %9 = vector.broadcast %cst_7 : f32 to vector<2x64xf32>
    %10 = arith.maximumf %8, %9 : vector<2x64xf32>
    %11 = arith.truncf %10 : vector<2x64xf32> to vector<2x64xbf16>
    %c0_8 = arith.constant 0 : index
    %c0_9 = arith.constant 0 : index
    %12 = vector.load %arg3[%c0_8, %c0_9] : memref<64x128xbf16, #tpu.memory_space<vmem>>, vector<64x128xbf16>
    %cst_10 = arith.constant dense<0.000000e+00> : vector<2x128xf32>
    %13 = tpu.matmul %11, %12, %cst_10 {dimension_numbers = #tpu.dot_dimension_numbers<[1], [0], [0], [1], [0, 0, 1, 1], [], []>} : vector<2x64xbf16>, vector<64x128xbf16>, vector<2x128xf32> -> vector<2x128xf32>
    %cst_11 = arith.constant 0.000000e+00 : f32
    %14 = vector.broadcast %cst_11 : f32 to vector<2x128xf32>
    %15 = arith.maximumf %13, %14 : vector<2x128xf32>
    %16 = arith.truncf %15 : vector<2x128xf32> to vector<2x128xbf16>
    %c0_12 = arith.constant 0 : index
    %c0_13 = arith.constant 0 : index
    %17 = vector.load %arg4[%c0_12, %c0_13] : memref<128x4xbf16, #tpu.memory_space<vmem>>, vector<128x4xbf16>
    %cst_14 = arith.constant dense<0.000000e+00> : vector<2x4xf32>
    %18 = tpu.matmul %16, %17, %cst_14 {dimension_numbers = #tpu.dot_dimension_numbers<[1], [0], [0], [1], [0, 0, 1, 1], [], []>} : vector<2x128xbf16>, vector<128x4xbf16>, vector<2x4xf32> -> vector<2x4xf32>
    %cst_15 = arith.constant 0.000000e+00 : f32
    %19 = vector.broadcast %cst_15 : f32 to vector<2x4xf32>
    %20 = arith.maximumf %18, %19 : vector<2x4xf32>
    %c0_16 = arith.constant 0 : index
    %c0_17 = arith.constant 0 : index
    %21 = vector.load %arg5[%c0_16, %c0_17] : memref<2x4xf32, #tpu.memory_space<vmem>>, vector<2x4xf32>
    tpu.vector_store %arg5[%c0_16, %c0_17], %20 {strides = array<i32>} : memref<2x4xf32, #tpu.memory_space<vmem>>, vector<2x4xf32>,
    return
  }
}

</mosaic_0001>

<llo_original>
// kernel: finet_forward.7
$region0: #{finet_forward.7}
  #allocation0 [shape = 'u32[]', space=smem, size = 0x4, offset = 0x4, fixed_abs, tag = 'smem constant byte address 0x4 - core index']
  #allocation1 [shape = 'u32[144,128]{1,0:T(1,128)}', space=vmem, size = 0x12000, scoped, tag = 'internal scratch']
  %s0 = inlined_call_operand.vmem [shape: f32[4,16,3], index: 0, kind: input, shape index: {}]
  %s1 = inlined_call_operand.vmem [shape: bf16[2,3,64], index: 1, kind: input, shape index: {}]
  %s2 = inlined_call_operand.vmem [shape: bf16[2,64,128], index: 2, kind: input, shape index: {}]
  %s3 = inlined_call_operand.vmem [shape: bf16[2,4,16,128], index: 3, kind: output, shape index: {0}]
  %s4 = inlined_call_operand.vmem [shape: f32[2,4,1,64], index: 4, kind: output, shape index: {1}]
  %s5 = inlined_call_operand.vmem [shape: f32[2,4,1,128], index: 5, kind: output, shape index: {2}]
  %6 = xla_tuple %s3, %s4, %s5
  %s7 = sld [smem:[#allocation0]]
  $region69: #{finet_forward.7} parent=0
    _
  %s9 = ssub.s32 1, %s7
  %s10 = scalar_select 0, %s9, %s7
  loop: start=0, step=1, limit=10
  $region2: #{finet_forward.7} parent=0 // loop_pre_header
    _
  $region3: #{finet_forward.7} parent=0 // loop_header
    %s12 = sphi 0, %s16
    %p13 = scmp.ge.s32.totalorder %s12, 10
    %s19 = sphi 0, %s38
    %s20 = sphi 0, %s34
    %s21 = sphi 0, %s30
    %s22 = sphi 0, %s19
    %s23 = sphi 0, %s20
    %s24 = sphi 0, %s21
    %s25 = sphi 0, %s22
    %s26 = sphi 0, %s23
    %s27 = sphi 0, %s24
    %s43 = sphi 0, %s45
    %s46 = sphi 0, %s43
    %s47 = sphi 0, %s46
    %s63 = sphi 0, %s47
    %s69 = sphi 0, %s71
    %s72 = sphi 0, %s69
    %s73 = sphi 0, %s72
    %s89 = sphi 0, %s73
    %s95 = sphi 0, %s97
    %s98 = sphi 0, %s95
    %s99 = sphi 0, %s98
    %s115 = sphi 0, %s99
    %s125 = sphi 0, %s127
    %s128 = sphi 0, %s125
    %s129 = sphi 0, %s128
    %s145 = sphi 0, %s129
    %s153 = sphi 0, %s155
    %s156 = sphi 0, %s153
    %s157 = sphi 0, %s156
    %s173 = sphi 0, %s157
    %s181 = sphi 0, %s183
    %s184 = sphi 0, %s181
    %s185 = sphi 0, %s184
    %s201 = sphi 0, %s185
  $region4: #{finet_forward.7} parent=0 // loop_header_branch
    %15 = sbr.rel (%p13) target = $region8
  $region5: #{finet_forward.7} parent=0 // loop_body
    %s17 = ssub.s32 %s12, 1
    %s18 = ssub.s32 %s12, 2
    %s28 = sadd.s32 1, %s21
    %p29 = scmp.ge.s32.totalorder %s28, 1
    %s30 = scalar_select %p29, 0, %s28
    %s31 = sadd.s32 1, %s20
    %s32 = scalar_select %p29, %s31, %s20
    %p33 = scmp.ge.s32.totalorder %s32, 4
    %s34 = scalar_select %p33, 0, %s32
    %s35 = sadd.s32 1, %s19
    %s36 = scalar_select %p33, %s35, %s19
    %p37 = scmp.ge.s32.totalorder %s36, 2
    %s38 = scalar_select %p37, 0, %s36
    %s39 = ssub.s32 %s20, %s34
    %s40 = ssub.s32 %s21, %s30
    %s41 = sor.u32 %s39, %s40
    %p42 = scmp.eq.s32.totalorder %s41, 0
    %s44 = sadd.s32 %s43, 1
    %s45 = scalar_select %p42, %s43, %s44
    %p48 = pneg %p42
    %p49 = scmp.eq.s32.totalorder %s12, 7
    %p50 = por %p48, %p49
    %p51 = scmp.ne.s32.totalorder %s43, %s46
    %p52 = scmp.eq.s32.totalorder %s12, 0
    %p53 = por %p51, %p52
    %p54 = scmp.ne.s32.totalorder %s43, %s46
    %p55 = scmp.eq.s32.totalorder %s17, 7
    %p56 = por %p54, %p55
    %p57 = scmp.ne.s32.totalorder %s46, %s47
    %p58 = scmp.eq.s32.totalorder %s17, 0
    %p59 = por %p57, %p58
    %p60 = scmp.ne.s32.totalorder %s46, %s47
    %p61 = scmp.eq.s32.totalorder %s18, 7
    %p62 = por %p60, %p61
    %p64 = scmp.ne.s32.totalorder %s47, %s63
    %p65 = scmp.eq.s32.totalorder %s18, 0
    %p66 = por %p64, %p65
    %s67 = ssub.s32 %s19, %s38
    %p68 = scmp.eq.s32.totalorder %s67, 0
    %s70 = sadd.s32 %s69, 1
    %s71 = scalar_select %p68, %s69, %s70
    %p74 = pneg %p68
    %p75 = scmp.eq.s32.totalorder %s12, 7
    %p76 = por %p74, %p75
    %p77 = scmp.ne.s32.totalorder %s69, %s72
    %p78 = scmp.eq.s32.totalorder %s12, 0
    %p79 = por %p77, %p78
    %p80 = scmp.ne.s32.totalorder %s69, %s72
    %p81 = scmp.eq.s32.totalorder %s17, 7
    %p82 = por %p80, %p81
    %p83 = scmp.ne.s32.totalorder %s72, %s73
    %p84 = scmp.eq.s32.totalorder %s17, 0
    %p85 = por %p83, %p84
    %p86 = scmp.ne.s32.totalorder %s72, %s73
    %p87 = scmp.eq.s32.totalorder %s18, 7
    %p88 = por %p86, %p87
    %p90 = scmp.ne.s32.totalorder %s73, %s89
    %p91 = scmp.eq.s32.totalorder %s18, 0
    %p92 = por %p90, %p91
    %s93 = ssub.s32 %s19, %s38
    %p94 = scmp.eq.s32.totalorder %s93, 0
    %s96 = sadd.s32 %s95, 1
    %s97 = scalar_select %p94, %s95, %s96
    %p100 = pneg %p94
    %p101 = scmp.eq.s32.totalorder %s12, 7
    %p102 = por %p100, %p101
    %p103 = scmp.ne.s32.totalorder %s95, %s98
    %p104 = scmp.eq.s32.totalorder %s12, 0
    %p105 = por %p103, %p104
    %p106 = scmp.ne.s32.totalorder %s95, %s98
    %p107 = scmp.eq.s32.totalorder %s17, 7
    %p108 = por %p106, %p107
    %p109 = scmp.ne.s32.totalorder %s98, %s99
    %p110 = scmp.eq.s32.totalorder %s17, 0
    %p111 = por %p109, %p110
    %p112 = scmp.ne.s32.totalorder %s98, %s99
    %p113 = scmp.eq.s32.totalorder %s18, 7
    %p114 = por %p112, %p113
    %p116 = scmp.ne.s32.totalorder %s99, %s115
    %p117 = scmp.eq.s32.totalorder %s18, 0
    %p118 = por %p116, %p117
    %s119 = ssub.s32 %s19, %s38
    %s120 = ssub.s32 %s20, %s34
    %s121 = sor.u32 %s119, %s120
    %s122 = ssub.s32 %s21, %s30
    %s123 = sor.u32 %s121, %s122
    %p124 = scmp.eq.s32.totalorder %s123, 0
    %s126 = sadd.s32 %s125, 1
    %s127 = scalar_select %p124, %s125, %s126
    %p130 = pneg %p124
    %p131 = scmp.eq.s32.totalorder %s12, 7
    %p132 = por %p130, %p131
    %p133 = scmp.ne.s32.totalorder %s125, %s128
    %p134 = scmp.eq.s32.totalorder %s12, 0
    %p135 = por %p133, %p134
    %p136 = scmp.ne.s32.totalorder %s125, %s128
    %p137 = scmp.eq.s32.totalorder %s17, 7
    %p138 = por %p136, %p137
    %p139 = scmp.ne.s32.totalorder %s128, %s129
    %p140 = scmp.eq.s32.totalorder %s17, 0
    %p141 = por %p139, %p140
    %p142 = scmp.ne.s32.totalorder %s128, %s129
    %p143 = scmp.eq.s32.totalorder %s18, 7
    %p144 = por %p142, %p143
    %p146 = scmp.ne.s32.totalorder %s129, %s145
    %p147 = scmp.eq.s32.totalorder %s18, 0
    %p148 = por %p146, %p147
    %s149 = ssub.s32 %s19, %s38
    %s150 = ssub.s32 %s20, %s34
    %s151 = sor.u32 %s149, %s150
    %p152 = scmp.eq.s32.totalorder %s151, 0
    %s154 = sadd.s32 %s153, 1
    %s155 = scalar_select %p152, %s153, %s154
    %p158 = pneg %p152
    %p159 = scmp.eq.s32.totalorder %s12, 7
    %p160 = por %p158, %p159
    %p161 = scmp.ne.s32.totalorder %s153, %s156
    %p162 = scmp.eq.s32.totalorder %s12, 0
    %p163 = por %p161, %p162
    %p164 = scmp.ne.s32.totalorder %s153, %s156
    %p165 = scmp.eq.s32.totalorder %s17, 7
    %p166 = por %p164, %p165
    %p167 = scmp.ne.s32.totalorder %s156, %s157
    %p168 = scmp.eq.s32.totalorder %s17, 0
    %p169 = por %p167, %p168
    %p170 = scmp.ne.s32.totalorder %s156, %s157
    %p171 = scmp.eq.s32.totalorder %s18, 7
    %p172 = por %p170, %p171
    %p174 = scmp.ne.s32.totalorder %s157, %s173
    %p175 = scmp.eq.s32.totalorder %s18, 0
    %p176 = por %p174, %p175
    %s177 = ssub.s32 %s19, %s38
    %s178 = ssub.s32 %s20, %s34
    %s179 = sor.u32 %s177, %s178
    %p180 = scmp.eq.s32.totalorder %s179, 0
    %s182 = sadd.s32 %s181, 1
    %s183 = scalar_select %p180, %s181, %s182
    %p186 = pneg %p180
    %p187 = scmp.eq.s32.totalorder %s12, 7
    %p188 = por %p186, %p187
    %p189 = scmp.ne.s32.totalorder %s181, %s184
    %p190 = scmp.eq.s32.totalorder %s12, 0
    %p191 = por %p189, %p190
    %p192 = scmp.ne.s32.totalorder %s181, %s184
    %p193 = scmp.eq.s32.totalorder %s17, 7
    %p194 = por %p192, %p193
    %p195 = scmp.ne.s32.totalorder %s184, %s185
    %p196 = scmp.eq.s32.totalorder %s17, 0
    %p197 = por %p195, %p196
    %p198 = scmp.ne.s32.totalorder %s184, %s185
    %p199 = scmp.eq.s32.totalorder %s18, 7
    %p200 = por %p198, %p199
    %p202 = scmp.ne.s32.totalorder %s185, %s201
    %p203 = scmp.eq.s32.totalorder %s18, 0
    %p204 = por %p202, %p203
    %p205 = scmp.le.s32.totalorder 1, %s12
    %p206 = scmp.lt.s32.totalorder %s12, 9
    %p207 = pnand %p205, %p206
    %p208 = pneg %p207
    // Predicated region
    $region9: #{finet_forward.7} parent=5 // pred_check
      _
    $region10: #{finet_forward.7} parent=5 // pred_check_branch
      %210 = sbr.rel (%p207) target = $region12
    $region11: #{finet_forward.7} parent=5 // pred_region
      %s211 = ssub.s32 %s12, 1
    $region12: #{finet_forward.7} parent=5 // pred_fallthru
      _
    %p212 = scmp.lt.s32.totalorder %s12, 8
    // Predicated region
    $region13: #{finet_forward.7} parent=5 // pred_check
      %p213 = pneg %p212
    $region14: #{finet_forward.7} parent=5 // pred_check_branch
      %215 = sbr.rel (%p213) target = $region16
    $region15: #{finet_forward.7} parent=5 // pred_region
      // Predicated region
      $region17: #{finet_forward.7} parent=15 // pred_check
        %p216 = pneg %p53
      $region18: #{finet_forward.7} parent=15 // pred_check_branch
        %218 = sbr.rel (%p216) target = $region20
      $region19: #{finet_forward.7} parent=15 // pred_region
        %s219 = smul.u32 2, %s21
        %p220 = scmp.lt.s32.totalorder %s20, 3
        %s221 = scalar_select %p220, %s20, 3
        %p222 = scmp.lt.s32.totalorder %s219, 1
        %s223 = scalar_select %p222, %s219, 1
        %s224 = smul.addr %s221, 2
        %s225 = sadd.s32 %s223, %s224
        %s226 = smul.addr %s225, 8
        %s227 = scalar_lea.vmem %s0, %s226
        %s228 = smul.u32 2, %s21
      $region20: #{finet_forward.7} parent=15 // pred_fallthru
        _
      // Predicated region
      $region21: #{finet_forward.7} parent=15 // pred_check
        %p229 = pneg %p79
      $region22: #{finet_forward.7} parent=15 // pred_check_branch
        %231 = sbr.rel (%p229) target = $region24
      $region23: #{finet_forward.7} parent=15 // pred_region
        %p232 = scmp.lt.s32.totalorder %s19, 1
        %s233 = scalar_select %p232, %s19, 1
        %s234 = smul.addr %s233, 2
        %s235 = scalar_lea.vmem %s1, %s234
      $region24: #{finet_forward.7} parent=15 // pred_fallthru
        _
      // Predicated region
      $region25: #{finet_forward.7} parent=15 // pred_check
        %p236 = pneg %p105
      $region26: #{finet_forward.7} parent=15 // pred_check_branch
        %238 = sbr.rel (%p236) target = $region28
      $region27: #{finet_forward.7} parent=15 // pred_region
        %p239 = scmp.lt.s32.totalorder %s19, 1
        %s240 = scalar_select %p239, %s19, 1
        %s241 = smul.addr %s240, 8
        %s242 = smul.addr %s241, 4
        %s243 = scalar_lea.vmem %s2, %s242
      $region28: #{finet_forward.7} parent=15 // pred_fallthru
        _
    $region16: #{finet_forward.7} parent=5 // pred_fallthru
      _
    %p244 = scmp.le.s32.totalorder 1, %s12
    %p245 = scmp.lt.s32.totalorder %s12, 9
    %p246 = pnand %p244, %p245
    %p247 = pneg %p246
    // Predicated region
    $region29: #{finet_forward.7} parent=5 // pred_check
      _
    $region30: #{finet_forward.7} parent=5 // pred_check_branch
      %249 = sbr.rel (%p246) target = $region32
    $region31: #{finet_forward.7} parent=5 // pred_region
      %s250 = ssub.s32 %s12, 1
      %s251 = smul.u32 2, %s24
      %p252 = scmp.lt.s32.totalorder %s23, 3
      %s253 = scalar_select %p252, %s23, 3
      %p254 = scmp.lt.s32.totalorder %s251, 1
      %s255 = scalar_select %p254, %s251, 1
      %s256 = smul.addr %s253, 2
      %s257 = sadd.s32 %s255, %s256
      %s258 = smul.addr %s257, 8
      %s259 = scalar_lea.vmem %s0, %s258
      %p260 = pneg %p59
      %p261 = pneg %p56
      %p262 = scmp.lt.s32.totalorder %s22, 1
      %s263 = scalar_select %p262, %s22, 1
      %s264 = smul.addr %s263, 2
      %s265 = scalar_lea.vmem %s1, %s264
      %p266 = pneg %p85
      %p267 = pneg %p82
      %p268 = scmp.lt.s32.totalorder %s22, 1
      %s269 = scalar_select %p268, %s22, 1
      %s270 = smul.addr %s269, 8
      %s271 = smul.addr %s270, 4
      %s272 = scalar_lea.vmem %s2, %s271
      %p273 = pneg %p111
      %p274 = pneg %p108
      %p275 = pneg %p141
      %p276 = pneg %p138
      %s277 = smul.u32 2, %s24
      %p278 = scmp.lt.s32.totalorder %s22, 1
      %s279 = scalar_select %p278, %s22, 1
      %p280 = scmp.lt.s32.totalorder %s23, 3
      %s281 = scalar_select %p280, %s23, 3
      %p282 = scmp.lt.s32.totalorder %s277, 1
      %s283 = scalar_select %p282, %s277, 1
      %s284 = smul.addr %s281, 2
      %s285 = sadd.s32 %s283, %s284
      %s286 = smul.addr %s279, 8
      %s287 = sadd.s32 %s285, %s286
      %s288 = smul.addr %s287, 4
      %s289 = scalar_lea.vmem %s3, %s288
      %p290 = pneg %p169
      %p291 = pneg %p166
      %p292 = scmp.lt.s32.totalorder %s22, 1
      %s293 = scalar_select %p292, %s22, 1
      %p294 = scmp.lt.s32.totalorder %s23, 3
      %s295 = scalar_select %p294, %s23, 3
      %s296 = smul.addr %s293, 4
      %s297 = sadd.s32 %s295, %s296
      %s298 = scalar_lea.vmem %s4, %s297
      %p299 = pneg %p197
      %p300 = pneg %p194
      %p301 = scmp.lt.s32.totalorder %s22, 1
      %s302 = scalar_select %p301, %s22, 1
      %p303 = scmp.lt.s32.totalorder %s23, 3
      %s304 = scalar_select %p303, %s23, 3
      %s305 = smul.addr %s302, 4
      %s306 = sadd.s32 %s304, %s305
      %s307 = scalar_lea.vmem %s5, %s306
      %s308 = smul.u32 2, %s24
      %p309 = scmp.lt.s32.totalorder %s23, 3
      %s310 = scalar_select %p309, %s23, 3
      %p311 = scmp.lt.s32.totalorder %s308, 1
      %s312 = scalar_select %p311, %s308, 1
      %s313 = smul.addr %s310, 2
      %s314 = sadd.s32 %s312, %s313
      %s315 = smul.addr %s314, 8
      %s316 = scalar_lea.vmem %s0, %s315
      %s317 = smul.u32 2, %s24
      %p318 = scmp.lt.s32.totalorder %s22, 1
      %s319 = scalar_select %p318, %s22, 1
      %s320 = smul.addr %s319, 2
      %s321 = scalar_lea.vmem %s1, %s320
      %p322 = scmp.lt.s32.totalorder %s22, 1
      %s323 = scalar_select %p322, %s22, 1
      %s324 = smul.addr %s323, 8
      %s325 = smul.addr %s324, 4
      %s326 = scalar_lea.vmem %s2, %s325
      %s327 = smul.u32 2, %s24
      %p328 = scmp.lt.s32.totalorder %s22, 1
      %s329 = scalar_select %p328, %s22, 1
      %p330 = scmp.lt.s32.totalorder %s23, 3
      %s331 = scalar_select %p330, %s23, 3
      %p332 = scmp.lt.s32.totalorder %s327, 1
      %s333 = scalar_select %p332, %s327, 1
      %s334 = smul.addr %s331, 2
      %s335 = sadd.s32 %s333, %s334
      %s336 = smul.addr %s329, 8
      %s337 = sadd.s32 %s335, %s336
      %s338 = smul.addr %s337, 4
      %s339 = scalar_lea.vmem %s3, %s338
      %s340 = smul.u32 2, %s24
      %p341 = scmp.lt.s32.totalorder %s22, 1
      %s342 = scalar_select %p341, %s22, 1
      %p343 = scmp.lt.s32.totalorder %s23, 3
      %s344 = scalar_select %p343, %s23, 3
      %s345 = smul.addr %s342, 4
      %s346 = sadd.s32 %s344, %s345
      %s347 = scalar_lea.vmem %s4, %s346
      %p348 = scmp.lt.s32.totalorder %s22, 1
      %s349 = scalar_select %p348, %s22, 1
      %p350 = scmp.lt.s32.totalorder %s23, 3
      %s351 = scalar_select %p350, %s23, 3
      %s352 = smul.addr %s349, 4
      %s353 = sadd.s32 %s351, %s352
      %s354 = scalar_lea.vmem %s5, %s353
      %v356 = vld [vmem:[%s316] sm:$0xff]
      %v357 = vld [vmem:[%s316 + $0x8] sm:$0xff]
      %v358 = vpack.c.bf16 %v357, %v356
      %v359 = vld [vmem:[%s321] sm:$0x3]
      %vm360 = vcmask 23552
      %v362 = vsel %vm360, %v358, 0
      %vm364 = vcmask 1040384
      %vm365 = vcmask 1041408
      %v366 = vsel %vm364, 4294967295, 65535
      %v367 = vsel %vm365, %v366, 0
      %v369 = vand.u32 %v359, %v367
      %371 = vmatprep.subr.bf16.mxu0 0
      %372 = vmatpush1.bf16.msra.mxu0 %v369
      %373 = vmatprep.subr.bf16.mxu0 0
      %374 = vmatpush1.bf16.msra.mxu0 0
      %375 = vmatprep.subr.bf16.mxu0 0
      %376 = vmatpush1.bf16.msra.mxu0 0
      %377 = vmatprep.subr.bf16.mxu0 0
      %378 = vmatpush1.bf16.msra.mxu0 0
      %379 = vmatprep.subr.bf16.mxu0 0
      %380 = vmatpush1.bf16.msra.mxu0 0
      %381 = vmatprep.subr.bf16.mxu0 0
      %382 = vmatpush1.bf16.msra.mxu0 0
      %383 = vmatprep.subr.bf16.mxu0 0
      %384 = vmatpush1.bf16.msra.mxu0 0
      %385 = vmatprep.subr.bf16.mxu0 0
      %386 = vmatpush1.bf16.msra.mxu0 0
      %387 = vmatprep.subr.bf16.mxu0 0
      %388 = vmatpush1.bf16.msra.mxu0 0
      %389 = vmatprep.subr.bf16.mxu0 0
      %390 = vmatpush1.bf16.msra.mxu0 0
      %391 = vmatprep.subr.bf16.mxu0 0
      %392 = vmatpush1.bf16.msra.mxu0 0
      %393 = vmatprep.subr.bf16.mxu0 0
      %394 = vmatpush1.bf16.msra.mxu0 0
      %395 = vmatprep.subr.bf16.mxu0 0
      %396 = vmatpush1.bf16.msra.mxu0 0
      %397 = vmatprep.subr.bf16.mxu0 0
      %398 = vmatpush1.bf16.msra.mxu0 0
      %399 = vmatprep.subr.bf16.mxu0 0
      %400 = vmatpush1.bf16.msra.mxu0 0
      %401 = vmatprep.subr.bf16.mxu0 0
      %402 = vmatpush1.bf16.msra.mxu0 0
      %403 = vmatprep.mubr.bf16.mxu0 0
      %404 = vmatmul.mubr.bf16.gmra.mrb[0].mxu0 %v362
      %v405 = vpop.f32.mrb[0].mxu0
      %v406 = vadd.f32 0.0, %v405
      %v407 = vpop.f32.mrb[0].mxu0
      %v408 = vpop.f32.mrb[0].mxu0
      %v409 = vadd.f32 0.0, %v408
      %v410 = vpop.f32.mrb[0].mxu0
      %411 = vdwg.mxu0
      %v412 = vmax.f32 %v406, 0.0
      %v413 = vmax.f32 %v409, 0.0
      %v414 = vpack.c.bf16 %v413, %v412
      %v415 = vld [vmem:[%s326] sm:$0xf]
      %v416 = vld [vmem:[%s326 + $0x4] sm:$0xf]
      %v417 = vld [vmem:[%s326 + $0x8] sm:$0xf]
      %v418 = vld [vmem:[%s326 + $0xc] sm:$0xf]
      %v419 = vld [vmem:[%s326 + $0x10] sm:$0xf]
      %v420 = vld [vmem:[%s326 + $0x14] sm:$0xf]
      %v421 = vld [vmem:[%s326 + $0x18] sm:$0xf]
      %v422 = vld [vmem:[%s326 + $0x1c] sm:$0xf]
      %v431 = vunpack.c.l.b16 %v415
      %v432 = vunpack.c.l.b16 %v416
      %v433 = vunpack.c.l.b16 %v417
      %v434 = vunpack.c.l.b16 %v418
      %v435 = vunpack.c.l.b16 %v419
      %v436 = vunpack.c.l.b16 %v420
      %v437 = vunpack.c.l.b16 %v421
      %v438 = vunpack.c.l.b16 %v422
      %v439 = vpack.c.b16 %v432, %v431
      %v440 = vpack.c.b16 %v434, %v433
      %v441 = vpack.c.b16 %v436, %v435
      %v442 = vpack.c.b16 %v438, %v437
      %vm447 = vcmask 523264
      %v449 = vsel %vm447, %v414, 0
      %451 = vmatprep.subr.bf16.mxu0 0
      %452 = vmatpush1.bf16.msra.mxu0 %v439
      %453 = vmatprep.subr.bf16.mxu0 0
      %454 = vmatpush1.bf16.msra.mxu0 %v440
      %455 = vmatprep.subr.bf16.mxu0 0
      %456 = vmatpush1.bf16.msra.mxu0 %v441
      %457 = vmatprep.subr.bf16.mxu0 0
      %458 = vmatpush1.bf16.msra.mxu0 %v442
      %459 = vmatprep.subr.bf16.mxu0 0
      %460 = vmatpush1.bf16.msra.mxu0 0
      %461 = vmatprep.subr.bf16.mxu0 0
      %462 = vmatpush1.bf16.msra.mxu0 0
      %463 = vmatprep.subr.bf16.mxu0 0
      %464 = vmatpush1.bf16.msra.mxu0 0
      %465 = vmatprep.subr.bf16.mxu0 0
      %466 = vmatpush1.bf16.msra.mxu0 0
      %467 = vmatprep.subr.bf16.mxu0 0
      %468 = vmatpush1.bf16.msra.mxu0 0
      %469 = vmatprep.subr.bf16.mxu0 0
      %470 = vmatpush1.bf16.msra.mxu0 0
      %471 = vmatprep.subr.bf16.mxu0 0
      %472 = vmatpush1.bf16.msra.mxu0 0
      %473 = vmatprep.subr.bf16.mxu0 0
      %474 = vmatpush1.bf16.msra.mxu0 0
      %475 = vmatprep.subr.bf16.mxu0 0
      %476 = vmatpush1.bf16.msra.mxu0 0
      %477 = vmatprep.subr.bf16.mxu0 0
      %478 = vmatpush1.bf16.msra.mxu0 0
      %479 = vmatprep.subr.bf16.mxu0 0
      %480 = vmatpush1.bf16.msra.mxu0 0
      %481 = vmatprep.subr.bf16.mxu0 0
      %482 = vmatpush1.bf16.msra.mxu0 0
      %483 = vmatprep.mubr.bf16.mxu0 0
      %484 = vmatmul.mubr.bf16.gmra.mrb[0].mxu0 %v449
      %v485 = vpop.f32.mrb[0].mxu0
      %v486 = vadd.f32 0.0, %v485
      %v487 = vpop.f32.mrb[0].mxu0
      %v488 = vpop.f32.mrb[0].mxu0
      %v489 = vadd.f32 0.0, %v488
      %v490 = vpop.f32.mrb[0].mxu0
      %491 = vdwg.mxu0
      %v492 = vmax.f32 %v486, 0.0
      %v493 = vmax.f32 %v489, 0.0
      %v494 = vpack.c.bf16 %v493, %v492
      %v496 = vunpack.c.l.b16 %v494
      %v497 = vunpack.c.h.b16 %v494
      %v498 = vpack.c.b16 %v496, %v496
      %v499 = vpack.c.b16 %v497, %v497
      %502 = vst [vmem:[%s339] sm:$0xf] %v498
      %503 = vst [vmem:[%s339 + $0x4] sm:$0xf] %v499
      %v504 = vsel %vm447, %v412, -inf
      %v505 = vsel %vm447, %v413, -inf
      %v506 = vmax.f32 %v504, %v505
      %v507 = vrot.slane %v506, 4
      %v508 = vmax.f32 %v506, %v507
      %v509 = vrot.slane %v508, 2
      %v510 = vmax.f32 %v508, %v509
      %v511 = vrot.slane %v510, 1
      %v512 = vmax.f32 %v510, %v511
      %v513 = vmax.f32 %v492, %v493
      %v514 = vrot.slane %v513, 4
      %v515 = vmax.f32 %v513, %v514
      %v516 = vrot.slane %v515, 2
      %v517 = vmax.f32 %v515, %v516
      %v518 = vrot.slane %v517, 1
      %v519 = vmax.f32 %v517, %v518
      %p520 = scmp.eq.s32.totalorder %s24, 0
      // Predicated region
      $region33: #{finet_forward.7} parent=31 // pred_check
        %p521 = pneg %p520
      $region34: #{finet_forward.7} parent=31 // pred_check_branch
        %523 = sbr.rel (%p521) target = $region36
      $region35: #{finet_forward.7} parent=31 // pred_region
        %vm524 = vcmask 516096
        %525 = vst.msk [vmem:[%s347] sm:$0x1] %vm524, %v512
        %526 = vst [vmem:[%s354] sm:$0x1] %v519
      $region36: #{finet_forward.7} parent=31 // pred_fallthru
        _
      %p527 = scmp.gt.s32.totalorder %s24, 0
      // Predicated region
      $region37: #{finet_forward.7} parent=31 // pred_check
        %p528 = pneg %p527
      $region38: #{finet_forward.7} parent=31 // pred_check_branch
        %530 = sbr.rel (%p528) target = $region40
      $region39: #{finet_forward.7} parent=31 // pred_region
        %v531 = vld [vmem:[%s347] sm:$0x1]
        %v532 = vmax.f32 %v531, %v512
        %vm533 = vcmask 516096
        %534 = vst.msk [vmem:[%s347] sm:$0x1] %vm533, %v532
        %v535 = vld [vmem:[%s354] sm:$0x1]
        %v536 = vmax.f32 %v535, %v519
        %537 = vst [vmem:[%s354] sm:$0x1] %v536
      $region40: #{finet_forward.7} parent=31 // pred_fallthru
        _
      %s538 = smul.u32 2, %s24
      %p539 = scmp.lt.s32.totalorder %s22, 1
      %s540 = scalar_select %p539, %s22, 1
      %p541 = scmp.lt.s32.totalorder %s23, 3
      %s542 = scalar_select %p541, %s23, 3
      %p543 = scmp.lt.s32.totalorder %s538, 1
      %s544 = scalar_select %p543, %s538, 1
      %s545 = smul.addr %s542, 2
      %s546 = sadd.s32 %s544, %s545
      %s547 = smul.addr %s540, 8
      %s548 = sadd.s32 %s546, %s547
      %s549 = smul.addr %s548, 4
      %s550 = scalar_lea.vmem %s3, %s549
      %p551 = scmp.lt.s32.totalorder %s22, 1
      %s552 = scalar_select %p551, %s22, 1
      %p553 = scmp.lt.s32.totalorder %s23, 3
      %s554 = scalar_select %p553, %s23, 3
      %s555 = smul.addr %s552, 4
      %s556 = sadd.s32 %s554, %s555
      %s557 = scalar_lea.vmem %s4, %s556
      %p558 = scmp.lt.s32.totalorder %s22, 1
      %s559 = scalar_select %p558, %s22, 1
      %p560 = scmp.lt.s32.totalorder %s23, 3
      %s561 = scalar_select %p560, %s23, 3
      %s562 = smul.addr %s559, 4
      %s563 = sadd.s32 %s561, %s562
      %s564 = scalar_lea.vmem %s5, %s563
      // Predicated region
      $region41: #{finet_forward.7} parent=31 // pred_check
        %p565 = pneg %p138
      $region42: #{finet_forward.7} parent=31 // pred_check_branch
        %567 = sbr.rel (%p565) target = $region44
      $region43: #{finet_forward.7} parent=31 // pred_region
        %s568 = smul.u32 2, %s24
      $region44: #{finet_forward.7} parent=31 // pred_fallthru
        _
      // Predicated region
      $region45: #{finet_forward.7} parent=31 // pred_check
        %p569 = pneg %p166
      $region46: #{finet_forward.7} parent=31 // pred_check_branch
        %571 = sbr.rel (%p569) target = $region48
      $region47: #{finet_forward.7} parent=31 // pred_region
        _
      $region48: #{finet_forward.7} parent=31 // pred_fallthru
        _
      // Predicated region
      $region49: #{finet_forward.7} parent=31 // pred_check
        %p572 = pneg %p194
      $region50: #{finet_forward.7} parent=31 // pred_check_branch
        %574 = sbr.rel (%p572) target = $region52
      $region51: #{finet_forward.7} parent=31 // pred_region
        _
      $region52: #{finet_forward.7} parent=31 // pred_fallthru
        _
    $region32: #{finet_forward.7} parent=5 // pred_fallthru
      _
    %p575 = scmp.le.s32.totalorder 2, %s12
    // Predicated region
    $region53: #{finet_forward.7} parent=5 // pred_check
      %p576 = pneg %p575
    $region54: #{finet_forward.7} parent=5 // pred_check_branch
      %578 = sbr.rel (%p576) target = $region56
    $region55: #{finet_forward.7} parent=5 // pred_region
      %s579 = ssub.s32 %s12, 2
      // Predicated region
      $region57: #{finet_forward.7} parent=55 // pred_check
        %p580 = pneg %p144
      $region58: #{finet_forward.7} parent=55 // pred_check_branch
        %582 = sbr.rel (%p580) target = $region60
      $region59: #{finet_forward.7} parent=55 // pred_region
        %s583 = smul.u32 2, %s27
        %p584 = scmp.lt.s32.totalorder %s25, 1
        %s585 = scalar_select %p584, %s25, 1
        %p586 = scmp.lt.s32.totalorder %s26, 3
        %s587 = scalar_select %p586, %s26, 3
        %p588 = scmp.lt.s32.totalorder %s583, 1
        %s589 = scalar_select %p588, %s583, 1
        %s590 = smul.addr %s587, 2
        %s591 = sadd.s32 %s589, %s590
        %s592 = smul.addr %s585, 8
        %s593 = sadd.s32 %s591, %s592
        %s594 = smul.addr %s593, 4
        %s595 = scalar_lea.vmem %s3, %s594
      $region60: #{finet_forward.7} parent=55 // pred_fallthru
        _
      // Predicated region
      $region61: #{finet_forward.7} parent=55 // pred_check
        %p596 = pneg %p172
      $region62: #{finet_forward.7} parent=55 // pred_check_branch
        %598 = sbr.rel (%p596) target = $region64
      $region63: #{finet_forward.7} parent=55 // pred_region
        %p599 = scmp.lt.s32.totalorder %s25, 1
        %s600 = scalar_select %p599, %s25, 1
        %p601 = scmp.lt.s32.totalorder %s26, 3
        %s602 = scalar_select %p601, %s26, 3
        %s603 = smul.addr %s600, 4
        %s604 = sadd.s32 %s602, %s603
        %s605 = scalar_lea.vmem %s4, %s604
      $region64: #{finet_forward.7} parent=55 // pred_fallthru
        _
      // Predicated region
      $region65: #{finet_forward.7} parent=55 // pred_check
        %p606 = pneg %p200
      $region66: #{finet_forward.7} parent=55 // pred_check_branch
        %608 = sbr.rel (%p606) target = $region68
      $region67: #{finet_forward.7} parent=55 // pred_region
        %p609 = scmp.lt.s32.totalorder %s25, 1
        %s610 = scalar_select %p609, %s25, 1
        %p611 = scmp.lt.s32.totalorder %s26, 3
        %s612 = scalar_select %p611, %s26, 3
        %s613 = smul.addr %s610, 4
        %s614 = sadd.s32 %s612, %s613
        %s615 = scalar_lea.vmem %s5, %s614
      $region68: #{finet_forward.7} parent=55 // pred_fallthru
        _
    $region56: #{finet_forward.7} parent=5 // pred_fallthru
      _
  $region6: #{finet_forward.7} parent=0 // loop_footer
    %s16 = sadd.s32 1, %s12
  $region7: #{finet_forward.7} parent=0 // loop_footer_branch
    %11 = sbr.rel target = $region3
  $region8: #{finet_forward.7} parent=0 // loop_exit
    _

// kernel: finet_forward.8
$region0: #{finet_forward.8}
  #allocation0 [shape = 'u32[]', space=smem, size = 0x4, offset = 0x4, fixed_abs, tag = 'smem constant byte address 0x4 - core index']
  #allocation1 [shape = 'u32[144,128]{1,0:T(1,128)}', space=vmem, size = 0x12000, scoped, tag = 'internal scratch']
  %s0 = inlined_call_operand.vmem [shape: bf16[2,4,16,128], index: 0, kind: input, shape index: {}]
  %s1 = inlined_call_operand.vmem [shape: bf16[2,128,256], index: 1, kind: input, shape index: {}]
  %s2 = inlined_call_operand.vmem [shape: f32[2,4,1,256], index: 2, kind: input, shape index: {}]
  %s3 = inlined_call_operand.hbm [shape: bf16[2,256,512], index: 3, kind: input, shape index: {}]
  %s4 = inlined_call_operand.vmem [shape: bf16[2,4,16,256], index: 4, kind: output, shape index: {0}]
  %s5 = inlined_call_operand.vmem [shape: f32[2,4,1,256], index: 5, kind: output, shape index: {1}]
  %s6 = inlined_call_operand.vmem [shape: f32[2,4,1,512], index: 6, kind: output, shape index: {2}]
  %7 = xla_tuple %s4, %s5, %s6
  %s8 = sld [smem:[#allocation0]]
  $region77: #{finet_forward.8} parent=0
    _
  %s10 = ssub.s32 1, %s8
  %s11 = scalar_select 0, %s10, %s8
  $region1: #{finet_forward.8} parent=0
    #allocation2 [shape = 'u8[524288]{0}', space=vmem, size = 0x80000, scoped, tag = 'input window, operand 3']
    #allocation3 [shape = 's32[2]{0}', space=sflag, size = 0x8, scoped, tag = 'scoped memory for finet_forward.8']
    %12 = vsyncpa [#allocation3], 0
    %s13 = scalar_lea.sflag [#allocation3], 1
    %14 = vsyncpa %s13, 0
    loop: start=0, step=1, limit=10
    $region2: #{finet_forward.8} parent=1 // loop_pre_header
      _
    $region3: #{finet_forward.8} parent=1 // loop_header
      %s16 = sphi 0, %s20
      %p17 = scmp.ge.s32.totalorder %s16, 10
      %s23 = sphi 0, %s42
      %s24 = sphi 0, %s38
      %s25 = sphi 0, %s34
      %s26 = sphi 0, %s23
      %s27 = sphi 0, %s24
      %s28 = sphi 0, %s25
      %s29 = sphi 0, %s26
      %s30 = sphi 0, %s27
      %s31 = sphi 0, %s28
      %s49 = sphi 0, %s51
      %s52 = sphi 0, %s49
      %s53 = sphi 0, %s52
      %s69 = sphi 0, %s53
      %s75 = sphi 0, %s77
      %s78 = sphi 0, %s75
      %s79 = sphi 0, %s78
      %s95 = sphi 0, %s79
      %s103 = sphi 0, %s105
      %s106 = sphi 0, %s103
      %s107 = sphi 0, %s106
      %s123 = sphi 0, %s107
      %s129 = sphi 0, %s131
      %s132 = sphi 0, %s129
      %s133 = sphi 0, %s132
      %s149 = sphi 0, %s133
      %s159 = sphi 0, %s161
      %s162 = sphi 0, %s159
      %s163 = sphi 0, %s162
      %s179 = sphi 0, %s163
      %s187 = sphi 0, %s189
      %s190 = sphi 0, %s187
      %s191 = sphi 0, %s190
      %s207 = sphi 0, %s191
      %s215 = sphi 0, %s217
      %s218 = sphi 0, %s215
      %s219 = sphi 0, %s218
      %s235 = sphi 0, %s219
    $region4: #{finet_forward.8} parent=1 // loop_header_branch
      %19 = sbr.rel (%p17) target = $region8
    $region5: #{finet_forward.8} parent=1 // loop_body
      %s21 = ssub.s32 %s16, 1
      %s22 = ssub.s32 %s16, 2
      %s32 = sadd.s32 1, %s25
      %p33 = scmp.ge.s32.totalorder %s32, 1
      %s34 = scalar_select %p33, 0, %s32
      %s35 = sadd.s32 1, %s24
      %s36 = scalar_select %p33, %s35, %s24
      %p37 = scmp.ge.s32.totalorder %s36, 4
      %s38 = scalar_select %p37, 0, %s36
      %s39 = sadd.s32 1, %s23
      %s40 = scalar_select %p37, %s39, %s23
      %p41 = scmp.ge.s32.totalorder %s40, 2
      %s42 = scalar_select %p41, 0, %s40
      %s43 = ssub.s32 %s23, %s42
      %s44 = ssub.s32 %s24, %s38
      %s45 = sor.u32 %s43, %s44
      %s46 = ssub.s32 %s25, %s34
      %s47 = sor.u32 %s45, %s46
      %p48 = scmp.eq.s32.totalorder %s47, 0
      %s50 = sadd.s32 %s49, 1
      %s51 = scalar_select %p48, %s49, %s50
      %p54 = pneg %p48
      %p55 = scmp.eq.s32.totalorder %s16, 7
      %p56 = por %p54, %p55
      %p57 = scmp.ne.s32.totalorder %s49, %s52
      %p58 = scmp.eq.s32.totalorder %s16, 0
      %p59 = por %p57, %p58
      %p60 = scmp.ne.s32.totalorder %s49, %s52
      %p61 = scmp.eq.s32.totalorder %s21, 7
      %p62 = por %p60, %p61
      %p63 = scmp.ne.s32.totalorder %s52, %s53
      %p64 = scmp.eq.s32.totalorder %s21, 0
      %p65 = por %p63, %p64
      %p66 = scmp.ne.s32.totalorder %s52, %s53
      %p67 = scmp.eq.s32.totalorder %s22, 7
      %p68 = por %p66, %p67
      %p70 = scmp.ne.s32.totalorder %s53, %s69
      %p71 = scmp.eq.s32.totalorder %s22, 0
      %p72 = por %p70, %p71
      %s73 = ssub.s32 %s23, %s42
      %p74 = scmp.eq.s32.totalorder %s73, 0
      %s76 = sadd.s32 %s75, 1
      %s77 = scalar_select %p74, %s75, %s76
      %p80 = pneg %p74
      %p81 = scmp.eq.s32.totalorder %s16, 7
      %p82 = por %p80, %p81
      %p83 = scmp.ne.s32.totalorder %s75, %s78
      %p84 = scmp.eq.s32.totalorder %s16, 0
      %p85 = por %p83, %p84
      %p86 = scmp.ne.s32.totalorder %s75, %s78
      %p87 = scmp.eq.s32.totalorder %s21, 7
      %p88 = por %p86, %p87
      %p89 = scmp.ne.s32.totalorder %s78, %s79
      %p90 = scmp.eq.s32.totalorder %s21, 0
      %p91 = por %p89, %p90
      %p92 = scmp.ne.s32.totalorder %s78, %s79
      %p93 = scmp.eq.s32.totalorder %s22, 7
      %p94 = por %p92, %p93
      %p96 = scmp.ne.s32.totalorder %s79, %s95
      %p97 = scmp.eq.s32.totalorder %s22, 0
      %p98 = por %p96, %p97
      %s99 = ssub.s32 %s23, %s42
      %s100 = ssub.s32 %s24, %s38
      %s101 = sor.u32 %s99, %s100
      %p102 = scmp.eq.s32.totalorder %s101, 0
      %s104 = sadd.s32 %s103, 1
      %s105 = scalar_select %p102, %s103, %s104
      %p108 = pneg %p102
      %p109 = scmp.eq.s32.totalorder %s16, 7
      %p110 = por %p108, %p109
      %p111 = scmp.ne.s32.totalorder %s103, %s106
      %p112 = scmp.eq.s32.totalorder %s16, 0
      %p113 = por %p111, %p112
      %p114 = scmp.ne.s32.totalorder %s103, %s106
      %p115 = scmp.eq.s32.totalorder %s21, 7
      %p116 = por %p114, %p115
      %p117 = scmp.ne.s32.totalorder %s106, %s107
      %p118 = scmp.eq.s32.totalorder %s21, 0
      %p119 = por %p117, %p118
      %p120 = scmp.ne.s32.totalorder %s106, %s107
      %p121 = scmp.eq.s32.totalorder %s22, 7
      %p122 = por %p120, %p121
      %p124 = scmp.ne.s32.totalorder %s107, %s123
      %p125 = scmp.eq.s32.totalorder %s22, 0
      %p126 = por %p124, %p125
      %s127 = ssub.s32 %s23, %s42
      %p128 = scmp.eq.s32.totalorder %s127, 0
      %s130 = sadd.s32 %s129, 1
      %s131 = scalar_select %p128, %s129, %s130
      %p134 = pneg %p128
      %p135 = scmp.eq.s32.totalorder %s16, 7
      %p136 = por %p134, %p135
      %p137 = scmp.ne.s32.totalorder %s129, %s132
      %p138 = scmp.eq.s32.totalorder %s16, 0
      %p139 = por %p137, %p138
      %p140 = scmp.ne.s32.totalorder %s129, %s132
      %p141 = scmp.eq.s32.totalorder %s21, 7
      %p142 = por %p140, %p141
      %p143 = scmp.ne.s32.totalorder %s132, %s133
      %p144 = scmp.eq.s32.totalorder %s21, 0
      %p145 = por %p143, %p144
      %p146 = scmp.ne.s32.totalorder %s132, %s133
      %p147 = scmp.eq.s32.totalorder %s22, 7
      %p148 = por %p146, %p147
      %p150 = scmp.ne.s32.totalorder %s133, %s149
      %p151 = scmp.eq.s32.totalorder %s22, 0
      %p152 = por %p150, %p151
      %s153 = ssub.s32 %s23, %s42
      %s154 = ssub.s32 %s24, %s38
      %s155 = sor.u32 %s153, %s154
      %s156 = ssub.s32 %s25, %s34
      %s157 = sor.u32 %s155, %s156
      %p158 = scmp.eq.s32.totalorder %s157, 0
      %s160 = sadd.s32 %s159, 1
      %s161 = scalar_select %p158, %s159, %s160
      %p164 = pneg %p158
      %p165 = scmp.eq.s32.totalorder %s16, 7
      %p166 = por %p164, %p165
      %p167 = scmp.ne.s32.totalorder %s159, %s162
      %p168 = scmp.eq.s32.totalorder %s16, 0
      %p169 = por %p167, %p168
      %p170 = scmp.ne.s32.totalorder %s159, %s162
      %p171 = scmp.eq.s32.totalorder %s21, 7
      %p172 = por %p170, %p171
      %p173 = scmp.ne.s32.totalorder %s162, %s163
      %p174 = scmp.eq.s32.totalorder %s21, 0
      %p175 = por %p173, %p174
      %p176 = scmp.ne.s32.totalorder %s162, %s163
      %p177 = scmp.eq.s32.totalorder %s22, 7
      %p178 = por %p176, %p177
      %p180 = scmp.ne.s32.totalorder %s163, %s179
      %p181 = scmp.eq.s32.totalorder %s22, 0
      %p182 = por %p180, %p181
      %s183 = ssub.s32 %s23, %s42
      %s184 = ssub.s32 %s24, %s38
      %s185 = sor.u32 %s183, %s184
      %p186 = scmp.eq.s32.totalorder %s185, 0
      %s188 = sadd.s32 %s187, 1
      %s189 = scalar_select %p186, %s187, %s188
      %p192 = pneg %p186
      %p193 = scmp.eq.s32.totalorder %s16, 7
      %p194 = por %p192, %p193
      %p195 = scmp.ne.s32.totalorder %s187, %s190
      %p196 = scmp.eq.s32.totalorder %s16, 0
      %p197 = por %p195, %p196
      %p198 = scmp.ne.s32.totalorder %s187, %s190
      %p199 = scmp.eq.s32.totalorder %s21, 7
      %p200 = por %p198, %p199
      %p201 = scmp.ne.s32.totalorder %s190, %s191
      %p202 = scmp.eq.s32.totalorder %s21, 0
      %p203 = por %p201, %p202
      %p204 = scmp.ne.s32.totalorder %s190, %s191
      %p205 = scmp.eq.s32.totalorder %s22, 7
      %p206 = por %p204, %p205
      %p208 = scmp.ne.s32.totalorder %s191, %s207
      %p209 = scmp.eq.s32.totalorder %s22, 0
      %p210 = por %p208, %p209
      %s211 = ssub.s32 %s23, %s42
      %s212 = ssub.s32 %s24, %s38
      %s213 = sor.u32 %s211, %s212
      %p214 = scmp.eq.s32.totalorder %s213, 0
      %s216 = sadd.s32 %s215, 1
      %s217 = scalar_select %p214, %s215, %s216
      %p220 = pneg %p214
      %p221 = scmp.eq.s32.totalorder %s16, 7
      %p222 = por %p220, %p221
      %p223 = scmp.ne.s32.totalorder %s215, %s218
      %p224 = scmp.eq.s32.totalorder %s16, 0
      %p225 = por %p223, %p224
      %p226 = scmp.ne.s32.totalorder %s215, %s218
      %p227 = scmp.eq.s32.totalorder %s21, 7
      %p228 = por %p226, %p227
      %p229 = scmp.ne.s32.totalorder %s218, %s219
      %p230 = scmp.eq.s32.totalorder %s21, 0
      %p231 = por %p229, %p230
      %p232 = scmp.ne.s32.totalorder %s218, %s219
      %p233 = scmp.eq.s32.totalorder %s22, 7
      %p234 = por %p232, %p233
      %p236 = scmp.ne.s32.totalorder %s219, %s235
      %p237 = scmp.eq.s32.totalorder %s22, 0
      %p238 = por %p236, %p237
      %p239 = scmp.le.s32.totalorder 1, %s16
      %p240 = scmp.lt.s32.totalorder %s16, 9
      %p241 = pnand %p239, %p240
      %p242 = pneg %p241
      // Predicated region
      $region9: #{finet_forward.8} parent=5 // pred_check
        _
      $region10: #{finet_forward.8} parent=5 // pred_check_branch
        %244 = sbr.rel (%p241) target = $region12
      $region11: #{finet_forward.8} parent=5 // pred_region
        %s245 = ssub.s32 %s16, 1
      $region12: #{finet_forward.8} parent=5 // pred_fallthru
        _
      %p246 = scmp.lt.s32.totalorder %s16, 8
      // Predicated region
      $region13: #{finet_forward.8} parent=5 // pred_check
        %p247 = pneg %p246
      $region14: #{finet_forward.8} parent=5 // pred_check_branch
        %249 = sbr.rel (%p247) target = $region16
      $region15: #{finet_forward.8} parent=5 // pred_region
        // Predicated region
        $region17: #{finet_forward.8} parent=15 // pred_check
          %p250 = pneg %p59
        $region18: #{finet_forward.8} parent=15 // pred_check_branch
          %252 = sbr.rel (%p250) target = $region20
        $region19: #{finet_forward.8} parent=15 // pred_region
          %s253 = smul.u32 2, %s25
          %p254 = scmp.lt.s32.totalorder %s23, 1
          %s255 = scalar_select %p254, %s23, 1
          %p256 = scmp.lt.s32.totalorder %s24, 3
          %s257 = scalar_select %p256, %s24, 3
          %p258 = scmp.lt.s32.totalorder %s253, 1
          %s259 = scalar_select %p258, %s253, 1
          %s260 = smul.addr %s257, 2
          %s261 = sadd.s32 %s259, %s260
          %s262 = smul.addr %s255, 8
          %s263 = sadd.s32 %s261, %s262
          %s264 = smul.addr %s263, 4
          %s265 = scalar_lea.vmem %s0, %s264
          %s266 = smul.u32 2, %s25
        $region20: #{finet_forward.8} parent=15 // pred_fallthru
          _
        // Predicated region
        $region21: #{finet_forward.8} parent=15 // pred_check
          %p267 = pneg %p85
        $region22: #{finet_forward.8} parent=15 // pred_check_branch
          %269 = sbr.rel (%p267) target = $region24
        $region23: #{finet_forward.8} parent=15 // pred_region
          %p270 = scmp.lt.s32.totalorder %s23, 1
          %s271 = scalar_select %p270, %s23, 1
          %s272 = smul.addr %s271, 32
          %s273 = smul.addr %s272, 4
          %s274 = scalar_lea.vmem %s1, %s273
        $region24: #{finet_forward.8} parent=15 // pred_fallthru
          _
        // Predicated region
        $region25: #{finet_forward.8} parent=15 // pred_check
          %p275 = pneg %p113
        $region26: #{finet_forward.8} parent=15 // pred_check_branch
          %277 = sbr.rel (%p275) target = $region28
        $region27: #{finet_forward.8} parent=15 // pred_region
          %p278 = scmp.lt.s32.totalorder %s23, 1
          %s279 = scalar_select %p278, %s23, 1
          %p280 = scmp.lt.s32.totalorder %s24, 3
          %s281 = scalar_select %p280, %s24, 3
          %s282 = smul.addr %s281, 2
          %s283 = smul.addr %s279, 8
          %s284 = sadd.s32 %s282, %s283
          %s285 = scalar_lea.vmem %s2, %s284
        $region28: #{finet_forward.8} parent=15 // pred_fallthru
          _
        // Predicated region
        $region29: #{finet_forward.8} parent=15 // pred_check
          %p286 = pneg %p139
        $region30: #{finet_forward.8} parent=15 // pred_check_branch
          %288 = sbr.rel (%p286) target = $region32
        $region31: #{finet_forward.8} parent=15 // pred_region
          %s289 = sand.u32 %s129, 1
          %s290 = scalar_lea.sflag [#allocation3], %s289
          %s291 = sand.u32 %s129, 1
          %s292 = smul.addr %s291, 512
          %s293 = scalar_lea.vmem [#allocation2], %s292
          %s295 = ssub.s32 8192, 8192
          %296 = vsyncadd %s290, %s295
          %s297 = smul.addr %s23, 128
          %s298 = smul.addr %s297, 64
          %s299 = scalar_lea.hbm %s3, %s298
          %s300 = sshll.u32 %s293, 4
          %s301 = int_to_ptr.vmem [resolvable:$true] %s300
          %306 = dma.hbm_to_vmem [thread:$0]  %s299, 8192, %s301, %s290, 256, 256, 16
        $region32: #{finet_forward.8} parent=15 // pred_fallthru
          _
      $region16: #{finet_forward.8} parent=5 // pred_fallthru
        _
      %p307 = scmp.le.s32.totalorder 1, %s16
      %p308 = scmp.lt.s32.totalorder %s16, 9
      %p309 = pnand %p307, %p308
      %p310 = pneg %p309
      // Predicated region
      $region33: #{finet_forward.8} parent=5 // pred_check
        _
      $region34: #{finet_forward.8} parent=5 // pred_check_branch
        %312 = sbr.rel (%p309) target = $region36
      $region35: #{finet_forward.8} parent=5 // pred_region
        %s313 = ssub.s32 %s16, 1
        %s314 = sand.u32 %s132, 1
        %s315 = scalar_lea.sflag [#allocation3], %s314
        %s316 = sand.u32 %s132, 1
        %s317 = smul.addr %s316, 512
        %s318 = scalar_lea.vmem [#allocation2], %s317
        // Predicated region
        $region37: #{finet_forward.8} parent=35 // pred_check
          %p319 = pneg %p145
        $region38: #{finet_forward.8} parent=35 // pred_check_branch
          %321 = sbr.rel (%p319) target = $region40
        $region39: #{finet_forward.8} parent=35 // pred_region
          %322 = dma.done %s315, 8192
        $region40: #{finet_forward.8} parent=35 // pred_fallthru
          _
        %s323 = smul.u32 2, %s28
        %p324 = scmp.lt.s32.totalorder %s26, 1
        %s325 = scalar_select %p324, %s26, 1
        %p326 = scmp.lt.s32.totalorder %s27, 3
        %s327 = scalar_select %p326, %s27, 3
        %p328 = scmp.lt.s32.totalorder %s323, 1
        %s329 = scalar_select %p328, %s323, 1
        %s330 = smul.addr %s327, 2
        %s331 = sadd.s32 %s329, %s330
        %s332 = smul.addr %s325, 8
        %s333 = sadd.s32 %s331, %s332
        %s334 = smul.addr %s333, 4
        %s335 = scalar_lea.vmem %s0, %s334
        %p336 = pneg %p65
        %p337 = pneg %p62
        %p338 = scmp.lt.s32.totalorder %s26, 1
        %s339 = scalar_select %p338, %s26, 1
        %s340 = smul.addr %s339, 32
        %s341 = smul.addr %s340, 4
        %s342 = scalar_lea.vmem %s1, %s341
        %p343 = pneg %p91
        %p344 = pneg %p88
        %p345 = scmp.lt.s32.totalorder %s26, 1
        %s346 = scalar_select %p345, %s26, 1
        %p347 = scmp.lt.s32.totalorder %s27, 3
        %s348 = scalar_select %p347, %s27, 3
        %s349 = smul.addr %s348, 2
        %s350 = smul.addr %s346, 8
        %s351 = sadd.s32 %s349, %s350
        %s352 = scalar_lea.vmem %s2, %s351
        %p353 = pneg %p119
        %p354 = pneg %p116
        %s355 = sand.u32 %s132, 1
        %s356 = scalar_lea.sflag [#allocation3], %s355
        %s357 = sand.u32 %s132, 1
        %s358 = smul.addr %s357, 512
        %s359 = scalar_lea.vmem [#allocation2], %s358
        %p360 = pneg %p145
        %p361 = pneg %p142
        %p362 = pneg %p175
        %p363 = pneg %p172
        %s364 = smul.u32 2, %s28
        %p365 = scmp.lt.s32.totalorder %s26, 1
        %s366 = scalar_select %p365, %s26, 1
        %p367 = scmp.lt.s32.totalorder %s27, 3
        %s368 = scalar_select %p367, %s27, 3
        %p369 = scmp.lt.s32.totalorder %s364, 1
        %s370 = scalar_select %p369, %s364, 1
        %s371 = smul.addr %s370, 2
        %s372 = smul.addr %s368, 4
        %s373 = sadd.s32 %s371, %s372
        %s374 = smul.addr %s366, 16
        %s375 = sadd.s32 %s373, %s374
        %s376 = smul.addr %s375, 4
        %s377 = scalar_lea.vmem %s4, %s376
        %p378 = pneg %p203
        %p379 = pneg %p200
        %p380 = scmp.lt.s32.totalorder %s26, 1
        %s381 = scalar_select %p380, %s26, 1
        %p382 = scmp.lt.s32.totalorder %s27, 3
        %s383 = scalar_select %p382, %s27, 3
        %s384 = smul.addr %s383, 2
        %s385 = smul.addr %s381, 8
        %s386 = sadd.s32 %s384, %s385
        %s387 = scalar_lea.vmem %s5, %s386
        %p388 = pneg %p231
        %p389 = pneg %p228
        %p390 = scmp.lt.s32.totalorder %s26, 1
        %s391 = scalar_select %p390, %s26, 1
        %p392 = scmp.lt.s32.totalorder %s27, 3
        %s393 = scalar_select %p392, %s27, 3
        %s394 = smul.addr %s393, 4
        %s395 = smul.addr %s391, 16
        %s396 = sadd.s32 %s394, %s395
        %s397 = scalar_lea.vmem %s6, %s396
        %s398 = smul.u32 2, %s28
        %p399 = scmp.lt.s32.totalorder %s26, 1
        %s400 = scalar_select %p399, %s26, 1
        %p401 = scmp.lt.s32.totalorder %s27, 3
        %s402 = scalar_select %p401, %s27, 3
        %p403 = scmp.lt.s32.totalorder %s398, 1
        %s404 = scalar_select %p403, %s398, 1
        %s405 = smul.addr %s402, 2
        %s406 = sadd.s32 %s404, %s405
        %s407 = smul.addr %s400, 8
        %s408 = sadd.s32 %s406, %s407
        %s409 = smul.addr %s408, 4
        %s410 = scalar_lea.vmem %s0, %s409
        %s411 = smul.u32 2, %s28
        %p412 = scmp.lt.s32.totalorder %s26, 1
        %s413 = scalar_select %p412, %s26, 1
        %s414 = smul.addr %s413, 32
        %s415 = smul.addr %s414, 4
        %s416 = scalar_lea.vmem %s1, %s415
        %p417 = scmp.lt.s32.totalorder %s26, 1
        %s418 = scalar_select %p417, %s26, 1
        %p419 = scmp.lt.s32.totalorder %s27, 3
        %s420 = scalar_select %p419, %s27, 3
        %s421 = smul.addr %s420, 2
        %s422 = smul.addr %s418, 8
        %s423 = sadd.s32 %s421, %s422
        %s424 = scalar_lea.vmem %s2, %s423
        %s425 = smul.u32 2, %s28
        %p426 = scmp.lt.s32.totalorder %s26, 1
        %s427 = scalar_select %p426, %s26, 1
        %p428 = scmp.lt.s32.totalorder %s27, 3
        %s429 = scalar_select %p428, %s27, 3
        %p430 = scmp.lt.s32.totalorder %s425, 1
        %s431 = scalar_select %p430, %s425, 1
        %s432 = smul.addr %s431, 2
        %s433 = smul.addr %s429, 4
        %s434 = sadd.s32 %s432, %s433
        %s435 = smul.addr %s427, 16
        %s436 = sadd.s32 %s434, %s435
        %s437 = smul.addr %s436, 4
        %s438 = scalar_lea.vmem %s4, %s437
        %s439 = smul.u32 2, %s28
        %p440 = scmp.lt.s32.totalorder %s26, 1
        %s441 = scalar_select %p440, %s26, 1
        %p442 = scmp.lt.s32.totalorder %s27, 3
        %s443 = scalar_select %p442, %s27, 3
        %s444 = smul.addr %s443, 2
        %s445 = smul.addr %s441, 8
        %s446 = sadd.s32 %s444, %s445
        %s447 = scalar_lea.vmem %s5, %s446
        %p448 = scmp.lt.s32.totalorder %s26, 1
        %s449 = scalar_select %p448, %s26, 1
        %p450 = scmp.lt.s32.totalorder %s27, 3
        %s451 = scalar_select %p450, %s27, 3
        %s452 = smul.addr %s451, 4
        %s453 = smul.addr %s449, 16
        %s454 = sadd.s32 %s452, %s453
        %s455 = scalar_lea.vmem %s6, %s454
        %v457 = vld [vmem:[%s410] sm:$0xf]
        %v458 = vld [vmem:[%s410 + $0x4] sm:$0xf]
        %v459 = vld [vmem:[%s416] sm:$0xff]
        %v460 = vld [vmem:[%s416 + $0x8] sm:$0xff]
        %v461 = vld [vmem:[%s416 + $0x10] sm:$0xff]
        %v462 = vld [vmem:[%s416 + $0x18] sm:$0xff]
        %v463 = vld [vmem:[%s416 + $0x20] sm:$0xff]
        %v464 = vld [vmem:[%s416 + $0x28] sm:$0xff]
        %v465 = vld [vmem:[%s416 + $0x30] sm:$0xff]
        %v466 = vld [vmem:[%s416 + $0x38] sm:$0xff]
        %v467 = vld [vmem:[%s416 + $0x40] sm:$0xff]
        %v468 = vld [vmem:[%s416 + $0x48] sm:$0xff]
        %v469 = vld [vmem:[%s416 + $0x50] sm:$0xff]
        %v470 = vld [vmem:[%s416 + $0x58] sm:$0xff]
        %v471 = vld [vmem:[%s416 + $0x60] sm:$0xff]
        %v472 = vld [vmem:[%s416 + $0x68] sm:$0xff]
        %v473 = vld [vmem:[%s416 + $0x70] sm:$0xff]
        %v474 = vld [vmem:[%s416 + $0x78] sm:$0xff]
        %v475 = vld [vmem:[%s424] sm:$0x3]
        %v477 = vlaneseq
        %v478 = vshrl.u32 %v477, 7
        %v479 = vsub.s32 0, %v478
        %v480 = vrot.slane %v475, %v479
        %v481 = vlaneseq
        %v482 = vshrl.u32 %v481, 7
        %v483 = vsub.s32 1, %v482
        %v484 = vrot.slane %v475, %v483
        %v489 = vunpack.c.l.b16 %v457
        %v490 = vunpack.c.l.b16 %v458
        %v491 = vpack.c.b16 %v490, %v489
        %v509 = vunpack.c.l.b16 %v459
        %v510 = vunpack.c.h.b16 %v459
        %v511 = vunpack.c.l.b16 %v460
        %v512 = vunpack.c.h.b16 %v460
        %v513 = vunpack.c.l.b16 %v461
        %v514 = vunpack.c.h.b16 %v461
        %v515 = vunpack.c.l.b16 %v462
        %v516 = vunpack.c.h.b16 %v462
        %v517 = vunpack.c.l.b16 %v463
        %v518 = vunpack.c.h.b16 %v463
        %v519 = vunpack.c.l.b16 %v464
        %v520 = vunpack.c.h.b16 %v464
        %v521 = vunpack.c.l.b16 %v465
        %v522 = vunpack.c.h.b16 %v465
        %v523 = vunpack.c.l.b16 %v466
        %v524 = vunpack.c.h.b16 %v466
        %v525 = vunpack.c.l.b16 %v467
        %v526 = vunpack.c.h.b16 %v467
        %v527 = vunpack.c.l.b16 %v468
        %v528 = vunpack.c.h.b16 %v468
        %v529 = vunpack.c.l.b16 %v469
        %v530 = vunpack.c.h.b16 %v469
        %v531 = vunpack.c.l.b16 %v470
        %v532 = vunpack.c.h.b16 %v470
        %v533 = vunpack.c.l.b16 %v471
        %v534 = vunpack.c.h.b16 %v471
        %v535 = vunpack.c.l.b16 %v472
        %v536 = vunpack.c.h.b16 %v472
        %v537 = vunpack.c.l.b16 %v473
        %v538 = vunpack.c.h.b16 %v473
        %v539 = vunpack.c.l.b16 %v474
        %v540 = vunpack.c.h.b16 %v474
        %v541 = vpack.c.b16 %v511, %v509
        %v542 = vpack.c.b16 %v512, %v510
        %v543 = vpack.c.b16 %v515, %v513
        %v544 = vpack.c.b16 %v516, %v514
        %v545 = vpack.c.b16 %v519, %v517
        %v546 = vpack.c.b16 %v520, %v518
        %v547 = vpack.c.b16 %v523, %v521
        %v548 = vpack.c.b16 %v524, %v522
        %v549 = vpack.c.b16 %v527, %v525
        %v550 = vpack.c.b16 %v528, %v526
        %v551 = vpack.c.b16 %v531, %v529
        %v552 = vpack.c.b16 %v532, %v530
        %v553 = vpack.c.b16 %v535, %v533
        %v554 = vpack.c.b16 %v536, %v534
        %v555 = vpack.c.b16 %v539, %v537
        %v556 = vpack.c.b16 %v540, %v538
        %573 = vmatprep.subr.bf16.mxu0 %v542
        %574 = vmatpush1.bf16.msra.mxu0 %v541
        %575 = vmatprep.subr.bf16.mxu0 %v544
        %576 = vmatpush1.bf16.msra.mxu0 %v543
        %577 = vmatprep.subr.bf16.mxu0 %v546
        %578 = vmatpush1.bf16.msra.mxu0 %v545
        %579 = vmatprep.subr.bf16.mxu0 %v548
        %580 = vmatpush1.bf16.msra.mxu0 %v547
        %581 = vmatprep.subr.bf16.mxu0 %v550
        %582 = vmatpush1.bf16.msra.mxu0 %v549
        %583 = vmatprep.subr.bf16.mxu0 %v552
        %584 = vmatpush1.bf16.msra.mxu0 %v551
        %585 = vmatprep.subr.bf16.mxu0 %v554
        %586 = vmatpush1.bf16.msra.mxu0 %v553
        %587 = vmatprep.subr.bf16.mxu0 %v556
        %588 = vmatpush1.bf16.msra.mxu0 %v555
        %589 = vmatprep.subr.bf16.mxu0 0
        %590 = vmatpush1.bf16.msra.mxu0 0
        %591 = vmatprep.subr.bf16.mxu0 0
        %592 = vmatpush1.bf16.msra.mxu0 0
        %593 = vmatprep.subr.bf16.mxu0 0
        %594 = vmatpush1.bf16.msra.mxu0 0
        %595 = vmatprep.subr.bf16.mxu0 0
        %596 = vmatpush1.bf16.msra.mxu0 0
        %597 = vmatprep.subr.bf16.mxu0 0
        %598 = vmatpush1.bf16.msra.mxu0 0
        %599 = vmatprep.subr.bf16.mxu0 0
        %600 = vmatpush1.bf16.msra.mxu0 0
        %601 = vmatprep.subr.bf16.mxu0 0
        %602 = vmatpush1.bf16.msra.mxu0 0
        %603 = vmatprep.subr.bf16.mxu0 0
        %604 = vmatpush1.bf16.msra.mxu0 0
        %605 = vmatprep.mubr.bf16.mxu0 0
        %606 = vmatmul.mubr.bf16.gmra.mrb[0].mxu0 %v491
        %v607 = vpop.f32.mrb[0].mxu0
        %v608 = vadd.f32 %v480, %v607
        %v609 = vpop.f32.mrb[0].mxu0
        %v610 = vadd.f32 %v484, %v609
        %v611 = vpop.f32.mrb[0].mxu0
        %v612 = vadd.f32 %v480, %v611
        %v613 = vpop.f32.mrb[0].mxu0
        %v614 = vadd.f32 %v484, %v613
        %615 = vdwg.mxu0
        %v616 = vmax.f32 %v608, 0.0
        %v617 = vmax.f32 %v610, 0.0
        %v618 = vmax.f32 %v612, 0.0
        %v619 = vmax.f32 %v614, 0.0
        %v620 = vpack.c.bf16 %v618, %v616
        %v621 = vpack.c.bf16 %v619, %v617
        %v624 = vunpack.c.l.b16 %v620
        %v625 = vunpack.c.l.b16 %v621
        %v626 = vunpack.c.h.b16 %v620
        %v627 = vunpack.c.h.b16 %v621
        %v628 = vpack.c.b16 %v625, %v624
        %v629 = vpack.c.b16 %v627, %v626
        %632 = vst [vmem:[%s438] sm:$0xff] %v628
        %633 = vst [vmem:[%s438 + $0x8] sm:$0xff] %v629
        %v634 = vld [vmem:[%s318] sm:$0xff]
        %v635 = vld [vmem:[%s318 + $0x8] sm:$0xff]
        %v636 = vld [vmem:[%s318 + $0x10] sm:$0xff]
        %v637 = vld [vmem:[%s318 + $0x18] sm:$0xff]
        %v638 = vld [vmem:[%s318 + $0x20] sm:$0xff]
        %v639 = vld [vmem:[%s318 + $0x28] sm:$0xff]
        %v640 = vld [vmem:[%s318 + $0x30] sm:$0xff]
        %v641 = vld [vmem:[%s318 + $0x38] sm:$0xff]
        %v642 = vld [vmem:[%s318 + $0x40] sm:$0xff]
        %v643 = vld [vmem:[%s318 + $0x48] sm:$0xff]
        %v644 = vld [vmem:[%s318 + $0x50] sm:$0xff]
        %v645 = vld [vmem:[%s318 + $0x58] sm:$0xff]
        %v646 = vld [vmem:[%s318 + $0x60] sm:$0xff]
        %v647 = vld [vmem:[%s318 + $0x68] sm:$0xff]
        %v648 = vld [vmem:[%s318 + $0x70] sm:$0xff]
        %v649 = vld [vmem:[%s318 + $0x78] sm:$0xff]
        %v650 = vld [vmem:[%s318 + $0x80] sm:$0xff]
        %v651 = vld [vmem:[%s318 + $0x88] sm:$0xff]
        %v652 = vld [vmem:[%s318 + $0x90] sm:$0xff]
        %v653 = vld [vmem:[%s318 + $0x98] sm:$0xff]
        %v654 = vld [vmem:[%s318 + $0xa0] sm:$0xff]
        %v655 = vld [vmem:[%s318 + $0xa8] sm:$0xff]
        %v656 = vld [vmem:[%s318 + $0xb0] sm:$0xff]
        %v657 = vld [vmem:[%s318 + $0xb8] sm:$0xff]
        %v658 = vld [vmem:[%s318 + $0xc0] sm:$0xff]
        %v659 = vld [vmem:[%s318 + $0xc8] sm:$0xff]
        %v660 = vld [vmem:[%s318 + $0xd0] sm:$0xff]
        %v661 = vld [vmem:[%s318 + $0xd8] sm:$0xff]
        %v662 = vld [vmem:[%s318 + $0xe0] sm:$0xff]
        %v663 = vld [vmem:[%s318 + $0xe8] sm:$0xff]
        %v664 = vld [vmem:[%s318 + $0xf0] sm:$0xff]
        %v665 = vld [vmem:[%s318 + $0xf8] sm:$0xff]
        %v666 = vld [vmem:[%s318 + $0x100] sm:$0xff]
        %v667 = vld [vmem:[%s318 + $0x108] sm:$0xff]
        %v668 = vld [vmem:[%s318 + $0x110] sm:$0xff]
        %v669 = vld [vmem:[%s318 + $0x118] sm:$0xff]
        %v670 = vld [vmem:[%s318 + $0x120] sm:$0xff]
        %v671 = vld [vmem:[%s318 + $0x128] sm:$0xff]
        %v672 = vld [vmem:[%s318 + $0x130] sm:$0xff]
        %v673 = vld [vmem:[%s318 + $0x138] sm:$0xff]
        %v674 = vld [vmem:[%s318 + $0x140] sm:$0xff]
        %v675 = vld [vmem:[%s318 + $0x148] sm:$0xff]
        %v676 = vld [vmem:[%s318 + $0x150] sm:$0xff]
        %v677 = vld [vmem:[%s318 + $0x158] sm:$0xff]
        %v678 = vld [vmem:[%s318 + $0x160] sm:$0xff]
        %v679 = vld [vmem:[%s318 + $0x168] sm:$0xff]
        %v680 = vld [vmem:[%s318 + $0x170] sm:$0xff]
        %v681 = vld [vmem:[%s318 + $0x178] sm:$0xff]
        %v682 = vld [vmem:[%s318 + $0x180] sm:$0xff]
        %v683 = vld [vmem:[%s318 + $0x188] sm:$0xff]
        %v684 = vld [vmem:[%s318 + $0x190] sm:$0xff]
        %v685 = vld [vmem:[%s318 + $0x198] sm:$0xff]
        %v686 = vld [vmem:[%s318 + $0x1a0] sm:$0xff]
        %v687 = vld [vmem:[%s318 + $0x1a8] sm:$0xff]
        %v688 = vld [vmem:[%s318 + $0x1b0] sm:$0xff]
        %v689 = vld [vmem:[%s318 + $0x1b8] sm:$0xff]
        %v690 = vld [vmem:[%s318 + $0x1c0] sm:$0xff]
        %v691 = vld [vmem:[%s318 + $0x1c8] sm:$0xff]
        %v692 = vld [vmem:[%s318 + $0x1d0] sm:$0xff]
        %v693 = vld [vmem:[%s318 + $0x1d8] sm:$0xff]
        %v694 = vld [vmem:[%s318 + $0x1e0] sm:$0xff]
        %v695 = vld [vmem:[%s318 + $0x1e8] sm:$0xff]
        %v696 = vld [vmem:[%s318 + $0x1f0] sm:$0xff]
        %v697 = vld [vmem:[%s318 + $0x1f8] sm:$0xff]
        %v762 = vunpack.c.l.b16 %v634
        %v763 = vunpack.c.h.b16 %v634
        %v764 = vunpack.c.l.b16 %v635
        %v765 = vunpack.c.h.b16 %v635
        %v766 = vunpack.c.l.b16 %v636
        %v767 = vunpack.c.h.b16 %v636
        %v768 = vunpack.c.l.b16 %v637
        %v769 = vunpack.c.h.b16 %v637
        %v770 = vunpack.c.l.b16 %v638
        %v771 = vunpack.c.h.b16 %v638
        %v772 = vunpack.c.l.b16 %v639
        %v773 = vunpack.c.h.b16 %v639
        %v774 = vunpack.c.l.b16 %v640
        %v775 = vunpack.c.h.b16 %v640
        %v776 = vunpack.c.l.b16 %v641
        %v777 = vunpack.c.h.b16 %v641
        %v778 = vunpack.c.l.b16 %v642
        %v779 = vunpack.c.h.b16 %v642
        %v780 = vunpack.c.l.b16 %v643
        %v781 = vunpack.c.h.b16 %v643
        %v782 = vunpack.c.l.b16 %v644
        %v783 = vunpack.c.h.b16 %v644
        %v784 = vunpack.c.l.b16 %v645
        %v785 = vunpack.c.h.b16 %v645
        %v786 = vunpack.c.l.b16 %v646
        %v787 = vunpack.c.h.b16 %v646
        %v788 = vunpack.c.l.b16 %v647
        %v789 = vunpack.c.h.b16 %v647
        %v790 = vunpack.c.l.b16 %v648
        %v791 = vunpack.c.h.b16 %v648
        %v792 = vunpack.c.l.b16 %v649
        %v793 = vunpack.c.h.b16 %v649
        %v794 = vunpack.c.l.b16 %v650
        %v795 = vunpack.c.h.b16 %v650
        %v796 = vunpack.c.l.b16 %v651
        %v797 = vunpack.c.h.b16 %v651
        %v798 = vunpack.c.l.b16 %v652
        %v799 = vunpack.c.h.b16 %v652
        %v800 = vunpack.c.l.b16 %v653
        %v801 = vunpack.c.h.b16 %v653
        %v802 = vunpack.c.l.b16 %v654
        %v803 = vunpack.c.h.b16 %v654
        %v804 = vunpack.c.l.b16 %v655
        %v805 = vunpack.c.h.b16 %v655
        %v806 = vunpack.c.l.b16 %v656
        %v807 = vunpack.c.h.b16 %v656
        %v808 = vunpack.c.l.b16 %v657
        %v809 = vunpack.c.h.b16 %v657
        %v810 = vunpack.c.l.b16 %v658
        %v811 = vunpack.c.h.b16 %v658
        %v812 = vunpack.c.l.b16 %v659
        %v813 = vunpack.c.h.b16 %v659
        %v814 = vunpack.c.l.b16 %v660
        %v815 = vunpack.c.h.b16 %v660
        %v816 = vunpack.c.l.b16 %v661
        %v817 = vunpack.c.h.b16 %v661
        %v818 = vunpack.c.l.b16 %v662
        %v819 = vunpack.c.h.b16 %v662
        %v820 = vunpack.c.l.b16 %v663
        %v821 = vunpack.c.h.b16 %v663
        %v822 = vunpack.c.l.b16 %v664
        %v823 = vunpack.c.h.b16 %v664
        %v824 = vunpack.c.l.b16 %v665
        %v825 = vunpack.c.h.b16 %v665
        %v826 = vunpack.c.l.b16 %v666
        %v827 = vunpack.c.h.b16 %v666
        %v828 = vunpack.c.l.b16 %v667
        %v829 = vunpack.c.h.b16 %v667
        %v830 = vunpack.c.l.b16 %v668
        %v831 = vunpack.c.h.b16 %v668
        %v832 = vunpack.c.l.b16 %v669
        %v833 = vunpack.c.h.b16 %v669
        %v834 = vunpack.c.l.b16 %v670
        %v835 = vunpack.c.h.b16 %v670
        %v836 = vunpack.c.l.b16 %v671
        %v837 = vunpack.c.h.b16 %v671
        %v838 = vunpack.c.l.b16 %v672
        %v839 = vunpack.c.h.b16 %v672
        %v840 = vunpack.c.l.b16 %v673
        %v841 = vunpack.c.h.b16 %v673
        %v842 = vunpack.c.l.b16 %v674
        %v843 = vunpack.c.h.b16 %v674
        %v844 = vunpack.c.l.b16 %v675
        %v845 = vunpack.c.h.b16 %v675
        %v846 = vunpack.c.l.b16 %v676
        %v847 = vunpack.c.h.b16 %v676
        %v848 = vunpack.c.l.b16 %v677
        %v849 = vunpack.c.h.b16 %v677
        %v850 = vunpack.c.l.b16 %v678
        %v851 = vunpack.c.h.b16 %v678
        %v852 = vunpack.c.l.b16 %v679
        %v853 = vunpack.c.h.b16 %v679
        %v854 = vunpack.c.l.b16 %v680
        %v855 = vunpack.c.h.b16 %v680
        %v856 = vunpack.c.l.b16 %v681
        %v857 = vunpack.c.h.b16 %v681
        %v858 = vunpack.c.l.b16 %v682
        %v859 = vunpack.c.h.b16 %v682
        %v860 = vunpack.c.l.b16 %v683
        %v861 = vunpack.c.h.b16 %v683
        %v862 = vunpack.c.l.b16 %v684
        %v863 = vunpack.c.h.b16 %v684
        %v864 = vunpack.c.l.b16 %v685
        %v865 = vunpack.c.h.b16 %v685
        %v866 = vunpack.c.l.b16 %v686
        %v867 = vunpack.c.h.b16 %v686
        %v868 = vunpack.c.l.b16 %v687
        %v869 = vunpack.c.h.b16 %v687
        %v870 = vunpack.c.l.b16 %v688
        %v871 = vunpack.c.h.b16 %v688
        %v872 = vunpack.c.l.b16 %v689
        %v873 = vunpack.c.h.b16 %v689
        %v874 = vunpack.c.l.b16 %v690
        %v875 = vunpack.c.h.b16 %v690
        %v876 = vunpack.c.l.b16 %v691
        %v877 = vunpack.c.h.b16 %v691
        %v878 = vunpack.c.l.b16 %v692
        %v879 = vunpack.c.h.b16 %v692
        %v880 = vunpack.c.l.b16 %v693
        %v881 = vunpack.c.h.b16 %v693
        %v882 = vunpack.c.l.b16 %v694
        %v883 = vunpack.c.h.b16 %v694
        %v884 = vunpack.c.l.b16 %v695
        %v885 = vunpack.c.h.b16 %v695
        %v886 = vunpack.c.l.b16 %v696
        %v887 = vunpack.c.h.b16 %v696
        %v888 = vunpack.c.l.b16 %v697
        %v889 = vunpack.c.h.b16 %v697
        %v890 = vpack.c.b16 %v766, %v762
        %v891 = vpack.c.b16 %v767, %v763
        %v892 = vpack.c.b16 %v768, %v764
        %v893 = vpack.c.b16 %v769, %v765
        %v894 = vpack.c.b16 %v774, %v770
        %v895 = vpack.c.b16 %v775, %v771
        %v896 = vpack.c.b16 %v776, %v772
        %v897 = vpack.c.b16 %v777, %v773
        %v898 = vpack.c.b16 %v782, %v778
        %v899 = vpack.c.b16 %v783, %v779
        %v900 = vpack.c.b16 %v784, %v780
        %v901 = vpack.c.b16 %v785, %v781
        %v902 = vpack.c.b16 %v790, %v786
        %v903 = vpack.c.b16 %v791, %v787
        %v904 = vpack.c.b16 %v792, %v788
        %v905 = vpack.c.b16 %v793, %v789
        %v906 = vpack.c.b16 %v798, %v794
        %v907 = vpack.c.b16 %v799, %v795
        %v908 = vpack.c.b16 %v800, %v796
        %v909 = vpack.c.b16 %v801, %v797
        %v910 = vpack.c.b16 %v806, %v802
        %v911 = vpack.c.b16 %v807, %v803
        %v912 = vpack.c.b16 %v808, %v804
        %v913 = vpack.c.b16 %v809, %v805
        %v914 = vpack.c.b16 %v814, %v810
        %v915 = vpack.c.b16 %v815, %v811
        %v916 = vpack.c.b16 %v816, %v812
        %v917 = vpack.c.b16 %v817, %v813
        %v918 = vpack.c.b16 %v822, %v818
        %v919 = vpack.c.b16 %v823, %v819
        %v920 = vpack.c.b16 %v824, %v820
        %v921 = vpack.c.b16 %v825, %v821
        %v922 = vpack.c.b16 %v830, %v826
        %v923 = vpack.c.b16 %v831, %v827
        %v924 = vpack.c.b16 %v832, %v828
        %v925 = vpack.c.b16 %v833, %v829
        %v926 = vpack.c.b16 %v838, %v834
        %v927 = vpack.c.b16 %v839, %v835
        %v928 = vpack.c.b16 %v840, %v836
        %v929 = vpack.c.b16 %v841, %v837
        %v930 = vpack.c.b16 %v846, %v842
        %v931 = vpack.c.b16 %v847, %v843
        %v932 = vpack.c.b16 %v848, %v844
        %v933 = vpack.c.b16 %v849, %v845
        %v934 = vpack.c.b16 %v854, %v850
        %v935 = vpack.c.b16 %v855, %v851
        %v936 = vpack.c.b16 %v856, %v852
        %v937 = vpack.c.b16 %v857, %v853
        %v938 = vpack.c.b16 %v862, %v858
        %v939 = vpack.c.b16 %v863, %v859
        %v940 = vpack.c.b16 %v864, %v860
        %v941 = vpack.c.b16 %v865, %v861
        %v942 = vpack.c.b16 %v870, %v866
        %v943 = vpack.c.b16 %v871, %v867
        %v944 = vpack.c.b16 %v872, %v868
        %v945 = vpack.c.b16 %v873, %v869
        %v946 = vpack.c.b16 %v878, %v874
        %v947 = vpack.c.b16 %v879, %v875
        %v948 = vpack.c.b16 %v880, %v876
        %v949 = vpack.c.b16 %v881, %v877
        %v950 = vpack.c.b16 %v886, %v882
        %v951 = vpack.c.b16 %v887, %v883
        %v952 = vpack.c.b16 %v888, %v884
        %v953 = vpack.c.b16 %v889, %v885
        %1018 = vmatprep.subr.bf16.mxu0 %v891
        %1019 = vmatpush1.bf16.msra.mxu0 %v890
        %1020 = vmatprep.subr.bf16.mxu0 %v895
        %1021 = vmatpush1.bf16.msra.mxu0 %v894
        %1022 = vmatprep.subr.bf16.mxu0 %v899
        %1023 = vmatpush1.bf16.msra.mxu0 %v898
        %1024 = vmatprep.subr.bf16.mxu0 %v903
        %1025 = vmatpush1.bf16.msra.mxu0 %v902
        %1026 = vmatprep.subr.bf16.mxu0 %v907
        %1027 = vmatpush1.bf16.msra.mxu0 %v906
        %1028 = vmatprep.subr.bf16.mxu0 %v911
        %1029 = vmatpush1.bf16.msra.mxu0 %v910
        %1030 = vmatprep.subr.bf16.mxu0 %v915
        %1031 = vmatpush1.bf16.msra.mxu0 %v914
        %1032 = vmatprep.subr.bf16.mxu0 %v919
        %1033 = vmatpush1.bf16.msra.mxu0 %v918
        %1034 = vmatprep.subr.bf16.mxu0 %v923
        %1035 = vmatpush1.bf16.msra.mxu0 %v922
        %1036 = vmatprep.subr.bf16.mxu0 %v927
        %1037 = vmatpush1.bf16.msra.mxu0 %v926
        %1038 = vmatprep.subr.bf16.mxu0 %v931
        %1039 = vmatpush1.bf16.msra.mxu0 %v930
        %1040 = vmatprep.subr.bf16.mxu0 %v935
        %1041 = vmatpush1.bf16.msra.mxu0 %v934
        %1042 = vmatprep.subr.bf16.mxu0 %v939
        %1043 = vmatpush1.bf16.msra.mxu0 %v938
        %1044 = vmatprep.subr.bf16.mxu0 %v943
        %1045 = vmatpush1.bf16.msra.mxu0 %v942
        %1046 = vmatprep.subr.bf16.mxu0 %v947
        %1047 = vmatpush1.bf16.msra.mxu0 %v946
        %1048 = vmatprep.subr.bf16.mxu0 %v951
        %1049 = vmatpush1.bf16.msra.mxu0 %v950
        %1050 = vmatprep.mubr.bf16.mxu0 %v621
        %1051 = vmatmul.mubr.bf16.gmra.mrb[0].mxu0 %v620
        %v1052 = vpop.f32.mrb[0].mxu0
        %v1053 = vadd.f32 0.0, %v1052
        %v1054 = vpop.f32.mrb[0].mxu0
        %v1055 = vadd.f32 0.0, %v1054
        %v1056 = vpop.f32.mrb[0].mxu0
        %v1057 = vadd.f32 0.0, %v1056
        %v1058 = vpop.f32.mrb[0].mxu0
        %v1059 = vadd.f32 0.0, %v1058
        %1060 = vdwg.mxu0
        %1061 = vmatprep.subr.bf16.mxu0 %v893
        %1062 = vmatpush1.bf16.msra.mxu0 %v892
        %1063 = vmatprep.subr.bf16.mxu0 %v897
        %1064 = vmatpush1.bf16.msra.mxu0 %v896
        %1065 = vmatprep.subr.bf16.mxu0 %v901
        %1066 = vmatpush1.bf16.msra.mxu0 %v900
        %1067 = vmatprep.subr.bf16.mxu0 %v905
        %1068 = vmatpush1.bf16.msra.mxu0 %v904
        %1069 = vmatprep.subr.bf16.mxu0 %v909
        %1070 = vmatpush1.bf16.msra.mxu0 %v908
        %1071 = vmatprep.subr.bf16.mxu0 %v913
        %1072 = vmatpush1.bf16.msra.mxu0 %v912
        %1073 = vmatprep.subr.bf16.mxu0 %v917
        %1074 = vmatpush1.bf16.msra.mxu0 %v916
        %1075 = vmatprep.subr.bf16.mxu0 %v921
        %1076 = vmatpush1.bf16.msra.mxu0 %v920
        %1077 = vmatprep.subr.bf16.mxu0 %v925
        %1078 = vmatpush1.bf16.msra.mxu0 %v924
        %1079 = vmatprep.subr.bf16.mxu0 %v929
        %1080 = vmatpush1.bf16.msra.mxu0 %v928
        %1081 = vmatprep.subr.bf16.mxu0 %v933
        %1082 = vmatpush1.bf16.msra.mxu0 %v932
        %1083 = vmatprep.subr.bf16.mxu0 %v937
        %1084 = vmatpush1.bf16.msra.mxu0 %v936
        %1085 = vmatprep.subr.bf16.mxu0 %v941
        %1086 = vmatpush1.bf16.msra.mxu0 %v940
        %1087 = vmatprep.subr.bf16.mxu0 %v945
        %1088 = vmatpush1.bf16.msra.mxu0 %v944
        %1089 = vmatprep.subr.bf16.mxu0 %v949
        %1090 = vmatpush1.bf16.msra.mxu0 %v948
        %1091 = vmatprep.subr.bf16.mxu0 %v953
        %1092 = vmatpush1.bf16.msra.mxu0 %v952
        %1093 = vmatprep.mubr.bf16.mxu0 %v621
        %1094 = vmatmul.mubr.bf16.gmra.mrb[0].mxu0 %v620
        %v1095 = vpop.f32.mrb[0].mxu0
        %v1096 = vadd.f32 0.0, %v1095
        %v1097 = vpop.f32.mrb[0].mxu0
        %v1098 = vadd.f32 0.0, %v1097
        %v1099 = vpop.f32.mrb[0].mxu0
        %v1100 = vadd.f32 0.0, %v1099
        %v1101 = vpop.f32.mrb[0].mxu0
        %v1102 = vadd.f32 0.0, %v1101
        %1103 = vdwg.mxu0
        %v1104 = vmax.f32 %v1053, 0.0
        %v1105 = vmax.f32 %v1055, 0.0
        %v1106 = vmax.f32 %v1096, 0.0
        %v1107 = vmax.f32 %v1098, 0.0
        %v1108 = vmax.f32 %v1057, 0.0
        %v1109 = vmax.f32 %v1059, 0.0
        %v1110 = vmax.f32 %v1100, 0.0
        %v1111 = vmax.f32 %v1102, 0.0
        %v1112 = vmax.f32 %v616, %v618
        %v1113 = vrot.slane %v1112, 4
        %v1114 = vmax.f32 %v1112, %v1113
        %v1115 = vrot.slane %v1114, 2
        %v1116 = vmax.f32 %v1114, %v1115
        %v1117 = vrot.slane %v1116, 1
        %v1118 = vmax.f32 %v1116, %v1117
        %v1119 = vmax.f32 %v617, %v619
        %v1120 = vrot.slane %v1119, 4
        %v1121 = vmax.f32 %v1119, %v1120
        %v1122 = vrot.slane %v1121, 2
        %v1123 = vmax.f32 %v1121, %v1122
        %v1124 = vrot.slane %v1123, 1
        %v1125 = vmax.f32 %v1123, %v1124
        %v1126 = vmax.f32 %v1104, %v1108
        %v1127 = vrot.slane %v1126, 4
        %v1128 = vmax.f32 %v1126, %v1127
        %v1129 = vrot.slane %v1128, 2
        %v1130 = vmax.f32 %v1128, %v1129
        %v1131 = vrot.slane %v1130, 1
        %v1132 = vmax.f32 %v1130, %v1131
        %v1133 = vmax.f32 %v1105, %v1109
        %v1134 = vrot.slane %v1133, 4
        %v1135 = vmax.f32 %v1133, %v1134
        %v1136 = vrot.slane %v1135, 2
        %v1137 = vmax.f32 %v1135, %v1136
        %v1138 = vrot.slane %v1137, 1
        %v1139 = vmax.f32 %v1137, %v1138
        %v1140 = vmax.f32 %v1106, %v1110
        %v1141 = vrot.slane %v1140, 4
        %v1142 = vmax.f32 %v1140, %v1141
        %v1143 = vrot.slane %v1142, 2
        %v1144 = vmax.f32 %v1142, %v1143
        %v1145 = vrot.slane %v1144, 1
        %v1146 = vmax.f32 %v1144, %v1145
        %v1147 = vmax.f32 %v1107, %v1111
        %v1148 = vrot.slane %v1147, 4
        %v1149 = vmax.f32 %v1147, %v1148
        %v1150 = vrot.slane %v1149, 2
        %v1151 = vmax.f32 %v1149, %v1150
        %v1152 = vrot.slane %v1151, 1
        %v1153 = vmax.f32 %v1151, %v1152
        %p1154 = scmp.eq.s32.totalorder %s28, 0
        // Predicated region
        $region41: #{finet_forward.8} parent=35 // pred_check
          %p1155 = pneg %p1154
        $region42: #{finet_forward.8} parent=35 // pred_check_branch
          %1157 = sbr.rel (%p1155) target = $region44
        $region43: #{finet_forward.8} parent=35 // pred_region
          %v1160 = vcombine.low %v1118, %v1125
          %v1162 = vunpack.c.l.s4 1966171168
          %v1163 = vunpack.c.0.s8 %v1162
          %v1164 = vlaneseq
          %v1165 = vshrl.u32 %v1164, 7
          %v1166 = vsub.s32 %v1163, %v1165
          %v1167 = vrot.slane %v1160, %v1166
          %v1169 = vunpack.c.l.s4 1966171168
          %v1170 = vunpack.c.0.s8 %v1169
          %v1171 = vlaneseq
          %v1172 = vshrl.u32 %v1171, 7
          %v1173 = vsub.s32 %v1170, %v1172
          %v1174 = vrot.slane %v1167, %v1173
          %v1176 = vlaneseq
          %vm1177 = vcmp.ge.s32.totalorder %v1176, 0
          %vm1178 = vcmp.lt.s32.totalorder %v1176, 256
          %vm1179 = vmand %vm1177, %vm1178
          %1180 = vst.msk [vmem:[%s447] sm:$0x3] %vm1179, %v1174
          %v1185 = vcombine.low %v1132, %v1139
          %v1186 = vcombine.low %v1146, %v1153
          %v1188 = vunpack.c.l.s4 1966171168
          %v1189 = vunpack.c.0.s8 %v1188
          %v1190 = vlaneseq
          %v1191 = vshrl.u32 %v1190, 7
          %v1192 = vsub.s32 %v1189, %v1191
          %v1193 = vrot.slane %v1185, %v1192
          %v1195 = vunpack.c.l.s4 1966171168
          %v1196 = vunpack.c.0.s8 %v1195
          %v1197 = vlaneseq
          %v1198 = vshrl.u32 %v1197, 7
          %v1199 = vsub.s32 %v1196, %v1198
          %v1200 = vrot.slane %v1186, %v1199
          %v1201 = vcombine.low %v1193, %v1200
          %v1203 = vunpack.c.l.s4 1966171168
          %v1204 = vunpack.c.0.s8 %v1203
          %v1205 = vlaneseq
          %v1206 = vshrl.u32 %v1205, 7
          %v1207 = vsub.s32 %v1204, %v1206
          %v1208 = vrot.slane %v1201, %v1207
          %vm1210 = vcmp.lt.s32.totalorder %v1176, 512
          %vm1211 = vmand %vm1177, %vm1210
          %1212 = vst.msk [vmem:[%s455] sm:$0xf] %vm1211, %v1208
        $region44: #{finet_forward.8} parent=35 // pred_fallthru
          _
        %p1213 = scmp.gt.s32.totalorder %s28, 0
        // Predicated region
        $region45: #{finet_forward.8} parent=35 // pred_check
          %p1214 = pneg %p1213
        $region46: #{finet_forward.8} parent=35 // pred_check_branch
          %1216 = sbr.rel (%p1214) target = $region48
        $region47: #{finet_forward.8} parent=35 // pred_region
          %v1217 = vld [vmem:[%s447] sm:$0x3]
          %v1220 = vcombine.low %v1118, %v1125
          %v1222 = vunpack.c.l.s4 1966171168
          %v1223 = vunpack.c.0.s8 %v1222
          %v1224 = vlaneseq
          %v1225 = vshrl.u32 %v1224, 7
          %v1226 = vsub.s32 %v1223, %v1225
          %v1227 = vrot.slane %v1220, %v1226
          %v1229 = vunpack.c.l.s4 1966171168
          %v1230 = vunpack.c.0.s8 %v1229
          %v1231 = vlaneseq
          %v1232 = vshrl.u32 %v1231, 7
          %v1233 = vsub.s32 %v1230, %v1232
          %v1234 = vrot.slane %v1227, %v1233
          %v1236 = vmax.f32 %v1217, %v1234
          %v1237 = vlaneseq
          %vm1238 = vcmp.ge.s32.totalorder %v1237, 0
          %vm1239 = vcmp.lt.s32.totalorder %v1237, 256
          %vm1240 = vmand %vm1238, %vm1239
          %1241 = vst.msk [vmem:[%s447] sm:$0x3] %vm1240, %v1236
          %v1242 = vld [vmem:[%s455] sm:$0xf]
          %v1247 = vcombine.low %v1132, %v1139
          %v1248 = vcombine.low %v1146, %v1153
          %v1250 = vunpack.c.l.s4 1966171168
          %v1251 = vunpack.c.0.s8 %v1250
          %v1252 = vlaneseq
          %v1253 = vshrl.u32 %v1252, 7
          %v1254 = vsub.s32 %v1251, %v1253
          %v1255 = vrot.slane %v1247, %v1254
          %v1257 = vunpack.c.l.s4 1966171168
          %v1258 = vunpack.c.0.s8 %v1257
          %v1259 = vlaneseq
          %v1260 = vshrl.u32 %v1259, 7
          %v1261 = vsub.s32 %v1258, %v1260
          %v1262 = vrot.slane %v1248, %v1261
          %v1263 = vcombine.low %v1255, %v1262
          %v1265 = vunpack.c.l.s4 1966171168
          %v1266 = vunpack.c.0.s8 %v1265
          %v1267 = vlaneseq
          %v1268 = vshrl.u32 %v1267, 7
          %v1269 = vsub.s32 %v1266, %v1268
          %v1270 = vrot.slane %v1263, %v1269
          %v1272 = vmax.f32 %v1242, %v1270
          %vm1273 = vcmp.lt.s32.totalorder %v1237, 512
          %vm1274 = vmand %vm1238, %vm1273
          %1275 = vst.msk [vmem:[%s455] sm:$0xf] %vm1274, %v1272
        $region48: #{finet_forward.8} parent=35 // pred_fallthru
          _
        %s1276 = smul.u32 2, %s28
        %p1277 = scmp.lt.s32.totalorder %s26, 1
        %s1278 = scalar_select %p1277, %s26, 1
        %p1279 = scmp.lt.s32.totalorder %s27, 3
        %s1280 = scalar_select %p1279, %s27, 3
        %p1281 = scmp.lt.s32.totalorder %s1276, 1
        %s1282 = scalar_select %p1281, %s1276, 1
        %s1283 = smul.addr %s1282, 2
        %s1284 = smul.addr %s1280, 4
        %s1285 = sadd.s32 %s1283, %s1284
        %s1286 = smul.addr %s1278, 16
        %s1287 = sadd.s32 %s1285, %s1286
        %s1288 = smul.addr %s1287, 4
        %s1289 = scalar_lea.vmem %s4, %s1288
        %p1290 = scmp.lt.s32.totalorder %s26, 1
        %s1291 = scalar_select %p1290, %s26, 1
        %p1292 = scmp.lt.s32.totalorder %s27, 3
        %s1293 = scalar_select %p1292, %s27, 3
        %s1294 = smul.addr %s1293, 2
        %s1295 = smul.addr %s1291, 8
        %s1296 = sadd.s32 %s1294, %s1295
        %s1297 = scalar_lea.vmem %s5, %s1296
        %p1298 = scmp.lt.s32.totalorder %s26, 1
        %s1299 = scalar_select %p1298, %s26, 1
        %p1300 = scmp.lt.s32.totalorder %s27, 3
        %s1301 = scalar_select %p1300, %s27, 3
        %s1302 = smul.addr %s1301, 4
        %s1303 = smul.addr %s1299, 16
        %s1304 = sadd.s32 %s1302, %s1303
        %s1305 = scalar_lea.vmem %s6, %s1304
        // Predicated region
        $region49: #{finet_forward.8} parent=35 // pred_check
          %p1306 = pneg %p172
        $region50: #{finet_forward.8} parent=35 // pred_check_branch
          %1308 = sbr.rel (%p1306) target = $region52
        $region51: #{finet_forward.8} parent=35 // pred_region
          %s1309 = smul.u32 2, %s28
        $region52: #{finet_forward.8} parent=35 // pred_fallthru
          _
        // Predicated region
        $region53: #{finet_forward.8} parent=35 // pred_check
          %p1310 = pneg %p200
        $region54: #{finet_forward.8} parent=35 // pred_check_branch
          %1312 = sbr.rel (%p1310) target = $region56
        $region55: #{finet_forward.8} parent=35 // pred_region
          _
        $region56: #{finet_forward.8} parent=35 // pred_fallthru
          _
        // Predicated region
        $region57: #{finet_forward.8} parent=35 // pred_check
          %p1313 = pneg %p228
        $region58: #{finet_forward.8} parent=35 // pred_check_branch
          %1315 = sbr.rel (%p1313) target = $region60
        $region59: #{finet_forward.8} parent=35 // pred_region
          _
        $region60: #{finet_forward.8} parent=35 // pred_fallthru
          _
      $region36: #{finet_forward.8} parent=5 // pred_fallthru
        _
      %p1316 = scmp.le.s32.totalorder 2, %s16
      // Predicated region
      $region61: #{finet_forward.8} parent=5 // pred_check
        %p1317 = pneg %p1316
      $region62: #{finet_forward.8} parent=5 // pred_check_branch
        %1319 = sbr.rel (%p1317) target = $region64
      $region63: #{finet_forward.8} parent=5 // pred_region
        %s1320 = ssub.s32 %s16, 2
        // Predicated region
        $region65: #{finet_forward.8} parent=63 // pred_check
          %p1321 = pneg %p178
        $region66: #{finet_forward.8} parent=63 // pred_check_branch
          %1323 = sbr.rel (%p1321) target = $region68
        $region67: #{finet_forward.8} parent=63 // pred_region
          %s1324 = smul.u32 2, %s31
          %p1325 = scmp.lt.s32.totalorder %s29, 1
          %s1326 = scalar_select %p1325, %s29, 1
          %p1327 = scmp.lt.s32.totalorder %s30, 3
          %s1328 = scalar_select %p1327, %s30, 3
          %p1329 = scmp.lt.s32.totalorder %s1324, 1
          %s1330 = scalar_select %p1329, %s1324, 1
          %s1331 = smul.addr %s1330, 2
          %s1332 = smul.addr %s1328, 4
          %s1333 = sadd.s32 %s1331, %s1332
          %s1334 = smul.addr %s1326, 16
          %s1335 = sadd.s32 %s1333, %s1334
          %s1336 = smul.addr %s1335, 4
          %s1337 = scalar_lea.vmem %s4, %s1336
        $region68: #{finet_forward.8} parent=63 // pred_fallthru
          _
        // Predicated region
        $region69: #{finet_forward.8} parent=63 // pred_check
          %p1338 = pneg %p206
        $region70: #{finet_forward.8} parent=63 // pred_check_branch
          %1340 = sbr.rel (%p1338) target = $region72
        $region71: #{finet_forward.8} parent=63 // pred_region
          %p1341 = scmp.lt.s32.totalorder %s29, 1
          %s1342 = scalar_select %p1341, %s29, 1
          %p1343 = scmp.lt.s32.totalorder %s30, 3
          %s1344 = scalar_select %p1343, %s30, 3
          %s1345 = smul.addr %s1344, 2
          %s1346 = smul.addr %s1342, 8
          %s1347 = sadd.s32 %s1345, %s1346
          %s1348 = scalar_lea.vmem %s5, %s1347
        $region72: #{finet_forward.8} parent=63 // pred_fallthru
          _
        // Predicated region
        $region73: #{finet_forward.8} parent=63 // pred_check
          %p1349 = pneg %p234
        $region74: #{finet_forward.8} parent=63 // pred_check_branch
          %1351 = sbr.rel (%p1349) target = $region76
        $region75: #{finet_forward.8} parent=63 // pred_region
          %p1352 = scmp.lt.s32.totalorder %s29, 1
          %s1353 = scalar_select %p1352, %s29, 1
          %p1354 = scmp.lt.s32.totalorder %s30, 3
          %s1355 = scalar_select %p1354, %s30, 3
          %s1356 = smul.addr %s1355, 4
          %s1357 = smul.addr %s1353, 16
          %s1358 = sadd.s32 %s1356, %s1357
          %s1359 = scalar_lea.vmem %s6, %s1358
        $region76: #{finet_forward.8} parent=63 // pred_fallthru
          _
      $region64: #{finet_forward.8} parent=5 // pred_fallthru
        _
    $region6: #{finet_forward.8} parent=1 // loop_footer
      %s20 = sadd.s32 1, %s16
    $region7: #{finet_forward.8} parent=1 // loop_footer_branch
      %15 = sbr.rel target = $region3
    $region8: #{finet_forward.8} parent=1 // loop_exit
      _
    %1360 = vsyncpa [#allocation3], 1
    %s1361 = scalar_lea.sflag [#allocation3], 1
    %1362 = vsyncpa %s1361, 1

// kernel: finet_forward.9
$region0: #{finet_forward.9}
  #allocation0 [shape = 'u32[]', space=smem, size = 0x4, offset = 0x4, fixed_abs, tag = 'smem constant byte address 0x4 - core index']
  #allocation1 [shape = 'u32[144,128]{1,0:T(1,128)}', space=vmem, size = 0x12000, scoped, tag = 'internal scratch']
  %s0 = inlined_call_operand.vmem [shape: bf16[2,4,16,256], index: 0, kind: input, shape index: {}]
  %s1 = inlined_call_operand.vmem [shape: bf16[2,256,512], index: 1, kind: input, shape index: {}]
  %s2 = inlined_call_operand.vmem [shape: bf16[2,512,512], index: 2, kind: input, shape index: {}]
  %s3 = inlined_call_operand.vmem [shape: f32[2,4,1,512], index: 3, kind: input, shape index: {}]
  %s4 = inlined_call_operand.vmem [shape: f32[2,4,1,512], index: 4, kind: output, shape index: {}]
  %s5 = sld [smem:[#allocation0]]
  $region57: #{finet_forward.9} parent=0
    _
  %s7 = ssub.s32 1, %s5
  %s8 = scalar_select 0, %s7, %s5
  loop: start=0, step=1, limit=10
  $region2: #{finet_forward.9} parent=0 // loop_pre_header
    _
  $region3: #{finet_forward.9} parent=0 // loop_header
    %s10 = sphi 0, %s14
    %p11 = scmp.ge.s32.totalorder %s10, 10
    %s17 = sphi 0, %s36
    %s18 = sphi 0, %s32
    %s19 = sphi 0, %s28
    %s20 = sphi 0, %s17
    %s21 = sphi 0, %s18
    %s22 = sphi 0, %s19
    %s23 = sphi 0, %s20
    %s24 = sphi 0, %s21
    %s25 = sphi 0, %s22
    %s43 = sphi 0, %s45
    %s46 = sphi 0, %s43
    %s47 = sphi 0, %s46
    %s63 = sphi 0, %s47
    %s69 = sphi 0, %s71
    %s72 = sphi 0, %s69
    %s73 = sphi 0, %s72
    %s89 = sphi 0, %s73
    %s95 = sphi 0, %s97
    %s98 = sphi 0, %s95
    %s99 = sphi 0, %s98
    %s115 = sphi 0, %s99
    %s123 = sphi 0, %s125
    %s126 = sphi 0, %s123
    %s127 = sphi 0, %s126
    %s143 = sphi 0, %s127
    %s151 = sphi 0, %s153
    %s154 = sphi 0, %s151
    %s155 = sphi 0, %s154
    %s171 = sphi 0, %s155
  $region4: #{finet_forward.9} parent=0 // loop_header_branch
    %13 = sbr.rel (%p11) target = $region8
  $region5: #{finet_forward.9} parent=0 // loop_body
    %s15 = ssub.s32 %s10, 1
    %s16 = ssub.s32 %s10, 2
    %s26 = sadd.s32 1, %s19
    %p27 = scmp.ge.s32.totalorder %s26, 1
    %s28 = scalar_select %p27, 0, %s26
    %s29 = sadd.s32 1, %s18
    %s30 = scalar_select %p27, %s29, %s18
    %p31 = scmp.ge.s32.totalorder %s30, 4
    %s32 = scalar_select %p31, 0, %s30
    %s33 = sadd.s32 1, %s17
    %s34 = scalar_select %p31, %s33, %s17
    %p35 = scmp.ge.s32.totalorder %s34, 2
    %s36 = scalar_select %p35, 0, %s34
    %s37 = ssub.s32 %s17, %s36
    %s38 = ssub.s32 %s18, %s32
    %s39 = sor.u32 %s37, %s38
    %s40 = ssub.s32 %s19, %s28
    %s41 = sor.u32 %s39, %s40
    %p42 = scmp.eq.s32.totalorder %s41, 0
    %s44 = sadd.s32 %s43, 1
    %s45 = scalar_select %p42, %s43, %s44
    %p48 = pneg %p42
    %p49 = scmp.eq.s32.totalorder %s10, 7
    %p50 = por %p48, %p49
    %p51 = scmp.ne.s32.totalorder %s43, %s46
    %p52 = scmp.eq.s32.totalorder %s10, 0
    %p53 = por %p51, %p52
    %p54 = scmp.ne.s32.totalorder %s43, %s46
    %p55 = scmp.eq.s32.totalorder %s15, 7
    %p56 = por %p54, %p55
    %p57 = scmp.ne.s32.totalorder %s46, %s47
    %p58 = scmp.eq.s32.totalorder %s15, 0
    %p59 = por %p57, %p58
    %p60 = scmp.ne.s32.totalorder %s46, %s47
    %p61 = scmp.eq.s32.totalorder %s16, 7
    %p62 = por %p60, %p61
    %p64 = scmp.ne.s32.totalorder %s47, %s63
    %p65 = scmp.eq.s32.totalorder %s16, 0
    %p66 = por %p64, %p65
    %s67 = ssub.s32 %s17, %s36
    %p68 = scmp.eq.s32.totalorder %s67, 0
    %s70 = sadd.s32 %s69, 1
    %s71 = scalar_select %p68, %s69, %s70
    %p74 = pneg %p68
    %p75 = scmp.eq.s32.totalorder %s10, 7
    %p76 = por %p74, %p75
    %p77 = scmp.ne.s32.totalorder %s69, %s72
    %p78 = scmp.eq.s32.totalorder %s10, 0
    %p79 = por %p77, %p78
    %p80 = scmp.ne.s32.totalorder %s69, %s72
    %p81 = scmp.eq.s32.totalorder %s15, 7
    %p82 = por %p80, %p81
    %p83 = scmp.ne.s32.totalorder %s72, %s73
    %p84 = scmp.eq.s32.totalorder %s15, 0
    %p85 = por %p83, %p84
    %p86 = scmp.ne.s32.totalorder %s72, %s73
    %p87 = scmp.eq.s32.totalorder %s16, 7
    %p88 = por %p86, %p87
    %p90 = scmp.ne.s32.totalorder %s73, %s89
    %p91 = scmp.eq.s32.totalorder %s16, 0
    %p92 = por %p90, %p91
    %s93 = ssub.s32 %s17, %s36
    %p94 = scmp.eq.s32.totalorder %s93, 0
    %s96 = sadd.s32 %s95, 1
    %s97 = scalar_select %p94, %s95, %s96
    %p100 = pneg %p94
    %p101 = scmp.eq.s32.totalorder %s10, 7
    %p102 = por %p100, %p101
    %p103 = scmp.ne.s32.totalorder %s95, %s98
    %p104 = scmp.eq.s32.totalorder %s10, 0
    %p105 = por %p103, %p104
    %p106 = scmp.ne.s32.totalorder %s95, %s98
    %p107 = scmp.eq.s32.totalorder %s15, 7
    %p108 = por %p106, %p107
    %p109 = scmp.ne.s32.totalorder %s98, %s99
    %p110 = scmp.eq.s32.totalorder %s15, 0
    %p111 = por %p109, %p110
    %p112 = scmp.ne.s32.totalorder %s98, %s99
    %p113 = scmp.eq.s32.totalorder %s16, 7
    %p114 = por %p112, %p113
    %p116 = scmp.ne.s32.totalorder %s99, %s115
    %p117 = scmp.eq.s32.totalorder %s16, 0
    %p118 = por %p116, %p117
    %s119 = ssub.s32 %s17, %s36
    %s120 = ssub.s32 %s18, %s32
    %s121 = sor.u32 %s119, %s120
    %p122 = scmp.eq.s32.totalorder %s121, 0
    %s124 = sadd.s32 %s123, 1
    %s125 = scalar_select %p122, %s123, %s124
    %p128 = pneg %p122
    %p129 = scmp.eq.s32.totalorder %s10, 7
    %p130 = por %p128, %p129
    %p131 = scmp.ne.s32.totalorder %s123, %s126
    %p132 = scmp.eq.s32.totalorder %s10, 0
    %p133 = por %p131, %p132
    %p134 = scmp.ne.s32.totalorder %s123, %s126
    %p135 = scmp.eq.s32.totalorder %s15, 7
    %p136 = por %p134, %p135
    %p137 = scmp.ne.s32.totalorder %s126, %s127
    %p138 = scmp.eq.s32.totalorder %s15, 0
    %p139 = por %p137, %p138
    %p140 = scmp.ne.s32.totalorder %s126, %s127
    %p141 = scmp.eq.s32.totalorder %s16, 7
    %p142 = por %p140, %p141
    %p144 = scmp.ne.s32.totalorder %s127, %s143
    %p145 = scmp.eq.s32.totalorder %s16, 0
    %p146 = por %p144, %p145
    %s147 = ssub.s32 %s17, %s36
    %s148 = ssub.s32 %s18, %s32
    %s149 = sor.u32 %s147, %s148
    %p150 = scmp.eq.s32.totalorder %s149, 0
    %s152 = sadd.s32 %s151, 1
    %s153 = scalar_select %p150, %s151, %s152
    %p156 = pneg %p150
    %p157 = scmp.eq.s32.totalorder %s10, 7
    %p158 = por %p156, %p157
    %p159 = scmp.ne.s32.totalorder %s151, %s154
    %p160 = scmp.eq.s32.totalorder %s10, 0
    %p161 = por %p159, %p160
    %p162 = scmp.ne.s32.totalorder %s151, %s154
    %p163 = scmp.eq.s32.totalorder %s15, 7
    %p164 = por %p162, %p163
    %p165 = scmp.ne.s32.totalorder %s154, %s155
    %p166 = scmp.eq.s32.totalorder %s15, 0
    %p167 = por %p165, %p166
    %p168 = scmp.ne.s32.totalorder %s154, %s155
    %p169 = scmp.eq.s32.totalorder %s16, 7
    %p170 = por %p168, %p169
    %p172 = scmp.ne.s32.totalorder %s155, %s171
    %p173 = scmp.eq.s32.totalorder %s16, 0
    %p174 = por %p172, %p173
    %p175 = scmp.le.s32.totalorder 1, %s10
    %p176 = scmp.lt.s32.totalorder %s10, 9
    %p177 = pnand %p175, %p176
    %p178 = pneg %p177
    // Predicated region
    $region9: #{finet_forward.9} parent=5 // pred_check
      _
    $region10: #{finet_forward.9} parent=5 // pred_check_branch
      %180 = sbr.rel (%p177) target = $region12
    $region11: #{finet_forward.9} parent=5 // pred_region
      %s181 = ssub.s32 %s10, 1
    $region12: #{finet_forward.9} parent=5 // pred_fallthru
      _
    %p182 = scmp.lt.s32.totalorder %s10, 8
    // Predicated region
    $region13: #{finet_forward.9} parent=5 // pred_check
      %p183 = pneg %p182
    $region14: #{finet_forward.9} parent=5 // pred_check_branch
      %185 = sbr.rel (%p183) target = $region16
    $region15: #{finet_forward.9} parent=5 // pred_region
      // Predicated region
      $region17: #{finet_forward.9} parent=15 // pred_check
        %p186 = pneg %p53
      $region18: #{finet_forward.9} parent=15 // pred_check_branch
        %188 = sbr.rel (%p186) target = $region20
      $region19: #{finet_forward.9} parent=15 // pred_region
        %s189 = smul.u32 2, %s19
        %p190 = scmp.lt.s32.totalorder %s17, 1
        %s191 = scalar_select %p190, %s17, 1
        %p192 = scmp.lt.s32.totalorder %s18, 3
        %s193 = scalar_select %p192, %s18, 3
        %p194 = scmp.lt.s32.totalorder %s189, 1
        %s195 = scalar_select %p194, %s189, 1
        %s196 = smul.addr %s195, 2
        %s197 = smul.addr %s193, 4
        %s198 = sadd.s32 %s196, %s197
        %s199 = smul.addr %s191, 16
        %s200 = sadd.s32 %s198, %s199
        %s201 = smul.addr %s200, 4
        %s202 = scalar_lea.vmem %s0, %s201
        %s203 = smul.u32 2, %s19
      $region20: #{finet_forward.9} parent=15 // pred_fallthru
        _
      // Predicated region
      $region21: #{finet_forward.9} parent=15 // pred_check
        %p204 = pneg %p79
      $region22: #{finet_forward.9} parent=15 // pred_check_branch
        %206 = sbr.rel (%p204) target = $region24
      $region23: #{finet_forward.9} parent=15 // pred_region
        %p207 = scmp.lt.s32.totalorder %s17, 1
        %s208 = scalar_select %p207, %s17, 1
        %s209 = smul.addr %s208, 128
        %s210 = smul.addr %s209, 4
        %s211 = scalar_lea.vmem %s1, %s210
      $region24: #{finet_forward.9} parent=15 // pred_fallthru
        _
      // Predicated region
      $region25: #{finet_forward.9} parent=15 // pred_check
        %p212 = pneg %p105
      $region26: #{finet_forward.9} parent=15 // pred_check_branch
        %214 = sbr.rel (%p212) target = $region28
      $region27: #{finet_forward.9} parent=15 // pred_region
        %p215 = scmp.lt.s32.totalorder %s17, 1
        %s216 = scalar_select %p215, %s17, 1
        %s217 = smul.addr %s216, 256
        %s218 = smul.addr %s217, 4
        %s219 = scalar_lea.vmem %s2, %s218
      $region28: #{finet_forward.9} parent=15 // pred_fallthru
        _
      // Predicated region
      $region29: #{finet_forward.9} parent=15 // pred_check
        %p220 = pneg %p133
      $region30: #{finet_forward.9} parent=15 // pred_check_branch
        %222 = sbr.rel (%p220) target = $region32
      $region31: #{finet_forward.9} parent=15 // pred_region
        %p223 = scmp.lt.s32.totalorder %s17, 1
        %s224 = scalar_select %p223, %s17, 1
        %p225 = scmp.lt.s32.totalorder %s18, 3
        %s226 = scalar_select %p225, %s18, 3
        %s227 = smul.addr %s226, 4
        %s228 = smul.addr %s224, 16
        %s229 = sadd.s32 %s227, %s228
        %s230 = scalar_lea.vmem %s3, %s229
      $region32: #{finet_forward.9} parent=15 // pred_fallthru
        _
    $region16: #{finet_forward.9} parent=5 // pred_fallthru
      _
    %p231 = scmp.le.s32.totalorder 1, %s10
    %p232 = scmp.lt.s32.totalorder %s10, 9
    %p233 = pnand %p231, %p232
    %p234 = pneg %p233
    // Predicated region
    $region33: #{finet_forward.9} parent=5 // pred_check
      _
    $region34: #{finet_forward.9} parent=5 // pred_check_branch
      %236 = sbr.rel (%p233) target = $region36
    $region35: #{finet_forward.9} parent=5 // pred_region
      %s237 = ssub.s32 %s10, 1
      %s238 = smul.u32 2, %s22
      %p239 = scmp.lt.s32.totalorder %s20, 1
      %s240 = scalar_select %p239, %s20, 1
      %p241 = scmp.lt.s32.totalorder %s21, 3
      %s242 = scalar_select %p241, %s21, 3
      %p243 = scmp.lt.s32.totalorder %s238, 1
      %s244 = scalar_select %p243, %s238, 1
      %s245 = smul.addr %s244, 2
      %s246 = smul.addr %s242, 4
      %s247 = sadd.s32 %s245, %s246
      %s248 = smul.addr %s240, 16
      %s249 = sadd.s32 %s247, %s248
      %s250 = smul.addr %s249, 4
      %s251 = scalar_lea.vmem %s0, %s250
      %p252 = pneg %p59
      %p253 = pneg %p56
      %p254 = scmp.lt.s32.totalorder %s20, 1
      %s255 = scalar_select %p254, %s20, 1
      %s256 = smul.addr %s255, 128
      %s257 = smul.addr %s256, 4
      %s258 = scalar_lea.vmem %s1, %s257
      %p259 = pneg %p85
      %p260 = pneg %p82
      %p261 = scmp.lt.s32.totalorder %s20, 1
      %s262 = scalar_select %p261, %s20, 1
      %s263 = smul.addr %s262, 256
      %s264 = smul.addr %s263, 4
      %s265 = scalar_lea.vmem %s2, %s264
      %p266 = pneg %p111
      %p267 = pneg %p108
      %p268 = scmp.lt.s32.totalorder %s20, 1
      %s269 = scalar_select %p268, %s20, 1
      %p270 = scmp.lt.s32.totalorder %s21, 3
      %s271 = scalar_select %p270, %s21, 3
      %s272 = smul.addr %s271, 4
      %s273 = smul.addr %s269, 16
      %s274 = sadd.s32 %s272, %s273
      %s275 = scalar_lea.vmem %s3, %s274
      %p276 = pneg %p139
      %p277 = pneg %p136
      %p278 = pneg %p167
      %p279 = pneg %p164
      %p280 = scmp.lt.s32.totalorder %s20, 1
      %s281 = scalar_select %p280, %s20, 1
      %p282 = scmp.lt.s32.totalorder %s21, 3
      %s283 = scalar_select %p282, %s21, 3
      %s284 = smul.addr %s283, 4
      %s285 = smul.addr %s281, 16
      %s286 = sadd.s32 %s284, %s285
      %s287 = scalar_lea.vmem %s4, %s286
      %s288 = smul.u32 2, %s22
      %p289 = scmp.lt.s32.totalorder %s20, 1
      %s290 = scalar_select %p289, %s20, 1
      %p291 = scmp.lt.s32.totalorder %s21, 3
      %s292 = scalar_select %p291, %s21, 3
      %p293 = scmp.lt.s32.totalorder %s288, 1
      %s294 = scalar_select %p293, %s288, 1
      %s295 = smul.addr %s294, 2
      %s296 = smul.addr %s292, 4
      %s297 = sadd.s32 %s295, %s296
      %s298 = smul.addr %s290, 16
      %s299 = sadd.s32 %s297, %s298
      %s300 = smul.addr %s299, 4
      %s301 = scalar_lea.vmem %s0, %s300
      %s302 = smul.u32 2, %s22
      %p303 = scmp.lt.s32.totalorder %s20, 1
      %s304 = scalar_select %p303, %s20, 1
      %s305 = smul.addr %s304, 128
      %s306 = smul.addr %s305, 4
      %s307 = scalar_lea.vmem %s1, %s306
      %p308 = scmp.lt.s32.totalorder %s20, 1
      %s309 = scalar_select %p308, %s20, 1
      %s310 = smul.addr %s309, 256
      %s311 = smul.addr %s310, 4
      %s312 = scalar_lea.vmem %s2, %s311
      %p313 = scmp.lt.s32.totalorder %s20, 1
      %s314 = scalar_select %p313, %s20, 1
      %p315 = scmp.lt.s32.totalorder %s21, 3
      %s316 = scalar_select %p315, %s21, 3
      %s317 = smul.addr %s316, 4
      %s318 = smul.addr %s314, 16
      %s319 = sadd.s32 %s317, %s318
      %s320 = scalar_lea.vmem %s3, %s319
      %p321 = scmp.lt.s32.totalorder %s20, 1
      %s322 = scalar_select %p321, %s20, 1
      %p323 = scmp.lt.s32.totalorder %s21, 3
      %s324 = scalar_select %p323, %s21, 3
      %s325 = smul.addr %s324, 4
      %s326 = smul.addr %s322, 16
      %s327 = sadd.s32 %s325, %s326
      %s328 = scalar_lea.vmem %s4, %s327
      %v329 = vld [vmem:[%s301] sm:$0xff]
      %v330 = vld [vmem:[%s301 + $0x8] sm:$0xff]
      %v331 = vld [vmem:[%s307] sm:$0xff]
      %v332 = vld [vmem:[%s307 + $0x8] sm:$0xff]
      %v333 = vld [vmem:[%s307 + $0x10] sm:$0xff]
      %v334 = vld [vmem:[%s307 + $0x18] sm:$0xff]
      %v335 = vld [vmem:[%s307 + $0x20] sm:$0xff]
      %v336 = vld [vmem:[%s307 + $0x28] sm:$0xff]
      %v337 = vld [vmem:[%s307 + $0x30] sm:$0xff]
      %v338 = vld [vmem:[%s307 + $0x38] sm:$0xff]
      %v339 = vld [vmem:[%s307 + $0x40] sm:$0xff]
      %v340 = vld [vmem:[%s307 + $0x48] sm:$0xff]
      %v341 = vld [vmem:[%s307 + $0x50] sm:$0xff]
      %v342 = vld [vmem:[%s307 + $0x58] sm:$0xff]
      %v343 = vld [vmem:[%s307 + $0x60] sm:$0xff]
      %v344 = vld [vmem:[%s307 + $0x68] sm:$0xff]
      %v345 = vld [vmem:[%s307 + $0x70] sm:$0xff]
      %v346 = vld [vmem:[%s307 + $0x78] sm:$0xff]
      %v347 = vld [vmem:[%s307 + $0x80] sm:$0xff]
      %v348 = vld [vmem:[%s307 + $0x88] sm:$0xff]
      %v349 = vld [vmem:[%s307 + $0x90] sm:$0xff]
      %v350 = vld [vmem:[%s307 + $0x98] sm:$0xff]
      %v351 = vld [vmem:[%s307 + $0xa0] sm:$0xff]
      %v352 = vld [vmem:[%s307 + $0xa8] sm:$0xff]
      %v353 = vld [vmem:[%s307 + $0xb0] sm:$0xff]
      %v354 = vld [vmem:[%s307 + $0xb8] sm:$0xff]
      %v355 = vld [vmem:[%s307 + $0xc0] sm:$0xff]
      %v356 = vld [vmem:[%s307 + $0xc8] sm:$0xff]
      %v357 = vld [vmem:[%s307 + $0xd0] sm:$0xff]
      %v358 = vld [vmem:[%s307 + $0xd8] sm:$0xff]
      %v359 = vld [vmem:[%s307 + $0xe0] sm:$0xff]
      %v360 = vld [vmem:[%s307 + $0xe8] sm:$0xff]
      %v361 = vld [vmem:[%s307 + $0xf0] sm:$0xff]
      %v362 = vld [vmem:[%s307 + $0xf8] sm:$0xff]
      %v363 = vld [vmem:[%s307 + $0x100] sm:$0xff]
      %v364 = vld [vmem:[%s307 + $0x108] sm:$0xff]
      %v365 = vld [vmem:[%s307 + $0x110] sm:$0xff]
      %v366 = vld [vmem:[%s307 + $0x118] sm:$0xff]
      %v367 = vld [vmem:[%s307 + $0x120] sm:$0xff]
      %v368 = vld [vmem:[%s307 + $0x128] sm:$0xff]
      %v369 = vld [vmem:[%s307 + $0x130] sm:$0xff]
      %v370 = vld [vmem:[%s307 + $0x138] sm:$0xff]
      %v371 = vld [vmem:[%s307 + $0x140] sm:$0xff]
      %v372 = vld [vmem:[%s307 + $0x148] sm:$0xff]
      %v373 = vld [vmem:[%s307 + $0x150] sm:$0xff]
      %v374 = vld [vmem:[%s307 + $0x158] sm:$0xff]
      %v375 = vld [vmem:[%s307 + $0x160] sm:$0xff]
      %v376 = vld [vmem:[%s307 + $0x168] sm:$0xff]
      %v377 = vld [vmem:[%s307 + $0x170] sm:$0xff]
      %v378 = vld [vmem:[%s307 + $0x178] sm:$0xff]
      %v379 = vld [vmem:[%s307 + $0x180] sm:$0xff]
      %v380 = vld [vmem:[%s307 + $0x188] sm:$0xff]
      %v381 = vld [vmem:[%s307 + $0x190] sm:$0xff]
      %v382 = vld [vmem:[%s307 + $0x198] sm:$0xff]
      %v383 = vld [vmem:[%s307 + $0x1a0] sm:$0xff]
      %v384 = vld [vmem:[%s307 + $0x1a8] sm:$0xff]
      %v385 = vld [vmem:[%s307 + $0x1b0] sm:$0xff]
      %v386 = vld [vmem:[%s307 + $0x1b8] sm:$0xff]
      %v387 = vld [vmem:[%s307 + $0x1c0] sm:$0xff]
      %v388 = vld [vmem:[%s307 + $0x1c8] sm:$0xff]
      %v389 = vld [vmem:[%s307 + $0x1d0] sm:$0xff]
      %v390 = vld [vmem:[%s307 + $0x1d8] sm:$0xff]
      %v391 = vld [vmem:[%s307 + $0x1e0] sm:$0xff]
      %v392 = vld [vmem:[%s307 + $0x1e8] sm:$0xff]
      %v393 = vld [vmem:[%s307 + $0x1f0] sm:$0xff]
      %v394 = vld [vmem:[%s307 + $0x1f8] sm:$0xff]
      %v397 = vunpack.c.l.b16 %v329
      %v398 = vunpack.c.h.b16 %v329
      %v399 = vunpack.c.l.b16 %v330
      %v400 = vunpack.c.h.b16 %v330
      %v401 = vpack.c.b16 %v399, %v397
      %v402 = vpack.c.b16 %v400, %v398
      %v469 = vunpack.c.l.b16 %v331
      %v470 = vunpack.c.h.b16 %v331
      %v471 = vunpack.c.l.b16 %v332
      %v472 = vunpack.c.h.b16 %v332
      %v473 = vunpack.c.l.b16 %v333
      %v474 = vunpack.c.h.b16 %v333
      %v475 = vunpack.c.l.b16 %v334
      %v476 = vunpack.c.h.b16 %v334
      %v477 = vunpack.c.l.b16 %v335
      %v478 = vunpack.c.h.b16 %v335
      %v479 = vunpack.c.l.b16 %v336
      %v480 = vunpack.c.h.b16 %v336
      %v481 = vunpack.c.l.b16 %v337
      %v482 = vunpack.c.h.b16 %v337
      %v483 = vunpack.c.l.b16 %v338
      %v484 = vunpack.c.h.b16 %v338
      %v485 = vunpack.c.l.b16 %v339
      %v486 = vunpack.c.h.b16 %v339
      %v487 = vunpack.c.l.b16 %v340
      %v488 = vunpack.c.h.b16 %v340
      %v489 = vunpack.c.l.b16 %v341
      %v490 = vunpack.c.h.b16 %v341
      %v491 = vunpack.c.l.b16 %v342
      %v492 = vunpack.c.h.b16 %v342
      %v493 = vunpack.c.l.b16 %v343
      %v494 = vunpack.c.h.b16 %v343
      %v495 = vunpack.c.l.b16 %v344
      %v496 = vunpack.c.h.b16 %v344
      %v497 = vunpack.c.l.b16 %v345
      %v498 = vunpack.c.h.b16 %v345
      %v499 = vunpack.c.l.b16 %v346
      %v500 = vunpack.c.h.b16 %v346
      %v501 = vunpack.c.l.b16 %v347
      %v502 = vunpack.c.h.b16 %v347
      %v503 = vunpack.c.l.b16 %v348
      %v504 = vunpack.c.h.b16 %v348
      %v505 = vunpack.c.l.b16 %v349
      %v506 = vunpack.c.h.b16 %v349
      %v507 = vunpack.c.l.b16 %v350
      %v508 = vunpack.c.h.b16 %v350
      %v509 = vunpack.c.l.b16 %v351
      %v510 = vunpack.c.h.b16 %v351
      %v511 = vunpack.c.l.b16 %v352
      %v512 = vunpack.c.h.b16 %v352
      %v513 = vunpack.c.l.b16 %v353
      %v514 = vunpack.c.h.b16 %v353
      %v515 = vunpack.c.l.b16 %v354
      %v516 = vunpack.c.h.b16 %v354
      %v517 = vunpack.c.l.b16 %v355
      %v518 = vunpack.c.h.b16 %v355
      %v519 = vunpack.c.l.b16 %v356
      %v520 = vunpack.c.h.b16 %v356
      %v521 = vunpack.c.l.b16 %v357
      %v522 = vunpack.c.h.b16 %v357
      %v523 = vunpack.c.l.b16 %v358
      %v524 = vunpack.c.h.b16 %v358
      %v525 = vunpack.c.l.b16 %v359
      %v526 = vunpack.c.h.b16 %v359
      %v527 = vunpack.c.l.b16 %v360
      %v528 = vunpack.c.h.b16 %v360
      %v529 = vunpack.c.l.b16 %v361
      %v530 = vunpack.c.h.b16 %v361
      %v531 = vunpack.c.l.b16 %v362
      %v532 = vunpack.c.h.b16 %v362
      %v533 = vunpack.c.l.b16 %v363
      %v534 = vunpack.c.h.b16 %v363
      %v535 = vunpack.c.l.b16 %v364
      %v536 = vunpack.c.h.b16 %v364
      %v537 = vunpack.c.l.b16 %v365
      %v538 = vunpack.c.h.b16 %v365
      %v539 = vunpack.c.l.b16 %v366
      %v540 = vunpack.c.h.b16 %v366
      %v541 = vunpack.c.l.b16 %v367
      %v542 = vunpack.c.h.b16 %v367
      %v543 = vunpack.c.l.b16 %v368
      %v544 = vunpack.c.h.b16 %v368
      %v545 = vunpack.c.l.b16 %v369
      %v546 = vunpack.c.h.b16 %v369
      %v547 = vunpack.c.l.b16 %v370
      %v548 = vunpack.c.h.b16 %v370
      %v549 = vunpack.c.l.b16 %v371
      %v550 = vunpack.c.h.b16 %v371
      %v551 = vunpack.c.l.b16 %v372
      %v552 = vunpack.c.h.b16 %v372
      %v553 = vunpack.c.l.b16 %v373
      %v554 = vunpack.c.h.b16 %v373
      %v555 = vunpack.c.l.b16 %v374
      %v556 = vunpack.c.h.b16 %v374
      %v557 = vunpack.c.l.b16 %v375
      %v558 = vunpack.c.h.b16 %v375
      %v559 = vunpack.c.l.b16 %v376
      %v560 = vunpack.c.h.b16 %v376
      %v561 = vunpack.c.l.b16 %v377
      %v562 = vunpack.c.h.b16 %v377
      %v563 = vunpack.c.l.b16 %v378
      %v564 = vunpack.c.h.b16 %v378
      %v565 = vunpack.c.l.b16 %v379
      %v566 = vunpack.c.h.b16 %v379
      %v567 = vunpack.c.l.b16 %v380
      %v568 = vunpack.c.h.b16 %v380
      %v569 = vunpack.c.l.b16 %v381
      %v570 = vunpack.c.h.b16 %v381
      %v571 = vunpack.c.l.b16 %v382
      %v572 = vunpack.c.h.b16 %v382
      %v573 = vunpack.c.l.b16 %v383
      %v574 = vunpack.c.h.b16 %v383
      %v575 = vunpack.c.l.b16 %v384
      %v576 = vunpack.c.h.b16 %v384
      %v577 = vunpack.c.l.b16 %v385
      %v578 = vunpack.c.h.b16 %v385
      %v579 = vunpack.c.l.b16 %v386
      %v580 = vunpack.c.h.b16 %v386
      %v581 = vunpack.c.l.b16 %v387
      %v582 = vunpack.c.h.b16 %v387
      %v583 = vunpack.c.l.b16 %v388
      %v584 = vunpack.c.h.b16 %v388
      %v585 = vunpack.c.l.b16 %v389
      %v586 = vunpack.c.h.b16 %v389
      %v587 = vunpack.c.l.b16 %v390
      %v588 = vunpack.c.h.b16 %v390
      %v589 = vunpack.c.l.b16 %v391
      %v590 = vunpack.c.h.b16 %v391
      %v591 = vunpack.c.l.b16 %v392
      %v592 = vunpack.c.h.b16 %v392
      %v593 = vunpack.c.l.b16 %v393
      %v594 = vunpack.c.h.b16 %v393
      %v595 = vunpack.c.l.b16 %v394
      %v596 = vunpack.c.h.b16 %v394
      %v597 = vpack.c.b16 %v473, %v469
      %v598 = vpack.c.b16 %v474, %v470
      %v599 = vpack.c.b16 %v475, %v471
      %v600 = vpack.c.b16 %v476, %v472
      %v601 = vpack.c.b16 %v481, %v477
      %v602 = vpack.c.b16 %v482, %v478
      %v603 = vpack.c.b16 %v483, %v479
      %v604 = vpack.c.b16 %v484, %v480
      %v605 = vpack.c.b16 %v489, %v485
      %v606 = vpack.c.b16 %v490, %v486
      %v607 = vpack.c.b16 %v491, %v487
      %v608 = vpack.c.b16 %v492, %v488
      %v609 = vpack.c.b16 %v497, %v493
      %v610 = vpack.c.b16 %v498, %v494
      %v611 = vpack.c.b16 %v499, %v495
      %v612 = vpack.c.b16 %v500, %v496
      %v613 = vpack.c.b16 %v505, %v501
      %v614 = vpack.c.b16 %v506, %v502
      %v615 = vpack.c.b16 %v507, %v503
      %v616 = vpack.c.b16 %v508, %v504
      %v617 = vpack.c.b16 %v513, %v509
      %v618 = vpack.c.b16 %v514, %v510
      %v619 = vpack.c.b16 %v515, %v511
      %v620 = vpack.c.b16 %v516, %v512
      %v621 = vpack.c.b16 %v521, %v517
      %v622 = vpack.c.b16 %v522, %v518
      %v623 = vpack.c.b16 %v523, %v519
      %v624 = vpack.c.b16 %v524, %v520
      %v625 = vpack.c.b16 %v529, %v525
      %v626 = vpack.c.b16 %v530, %v526
      %v627 = vpack.c.b16 %v531, %v527
      %v628 = vpack.c.b16 %v532, %v528
      %v629 = vpack.c.b16 %v537, %v533
      %v630 = vpack.c.b16 %v538, %v534
      %v631 = vpack.c.b16 %v539, %v535
      %v632 = vpack.c.b16 %v540, %v536
      %v633 = vpack.c.b16 %v545, %v541
      %v634 = vpack.c.b16 %v546, %v542
      %v635 = vpack.c.b16 %v547, %v543
      %v636 = vpack.c.b16 %v548, %v544
      %v637 = vpack.c.b16 %v553, %v549
      %v638 = vpack.c.b16 %v554, %v550
      %v639 = vpack.c.b16 %v555, %v551
      %v640 = vpack.c.b16 %v556, %v552
      %v641 = vpack.c.b16 %v561, %v557
      %v642 = vpack.c.b16 %v562, %v558
      %v643 = vpack.c.b16 %v563, %v559
      %v644 = vpack.c.b16 %v564, %v560
      %v645 = vpack.c.b16 %v569, %v565
      %v646 = vpack.c.b16 %v570, %v566
      %v647 = vpack.c.b16 %v571, %v567
      %v648 = vpack.c.b16 %v572, %v568
      %v649 = vpack.c.b16 %v577, %v573
      %v650 = vpack.c.b16 %v578, %v574
      %v651 = vpack.c.b16 %v579, %v575
      %v652 = vpack.c.b16 %v580, %v576
      %v653 = vpack.c.b16 %v585, %v581
      %v654 = vpack.c.b16 %v586, %v582
      %v655 = vpack.c.b16 %v587, %v583
      %v656 = vpack.c.b16 %v588, %v584
      %v657 = vpack.c.b16 %v593, %v589
      %v658 = vpack.c.b16 %v594, %v590
      %v659 = vpack.c.b16 %v595, %v591
      %v660 = vpack.c.b16 %v596, %v592
      %725 = vmatprep.subr.bf16.mxu0 %v598
      %726 = vmatpush1.bf16.msra.mxu0 %v597
      %727 = vmatprep.subr.bf16.mxu0 %v602
      %728 = vmatpush1.bf16.msra.mxu0 %v601
      %729 = vmatprep.subr.bf16.mxu0 %v606
      %730 = vmatpush1.bf16.msra.mxu0 %v605
      %731 = vmatprep.subr.bf16.mxu0 %v610
      %732 = vmatpush1.bf16.msra.mxu0 %v609
      %733 = vmatprep.subr.bf16.mxu0 %v614
      %734 = vmatpush1.bf16.msra.mxu0 %v613
      %735 = vmatprep.subr.bf16.mxu0 %v618
      %736 = vmatpush1.bf16.msra.mxu0 %v617
      %737 = vmatprep.subr.bf16.mxu0 %v622
      %738 = vmatpush1.bf16.msra.mxu0 %v621
      %739 = vmatprep.subr.bf16.mxu0 %v626
      %740 = vmatpush1.bf16.msra.mxu0 %v625
      %741 = vmatprep.subr.bf16.mxu0 %v630
      %742 = vmatpush1.bf16.msra.mxu0 %v629
      %743 = vmatprep.subr.bf16.mxu0 %v634
      %744 = vmatpush1.bf16.msra.mxu0 %v633
      %745 = vmatprep.subr.bf16.mxu0 %v638
      %746 = vmatpush1.bf16.msra.mxu0 %v637
      %747 = vmatprep.subr.bf16.mxu0 %v642
      %748 = vmatpush1.bf16.msra.mxu0 %v641
      %749 = vmatprep.subr.bf16.mxu0 %v646
      %750 = vmatpush1.bf16.msra.mxu0 %v645
      %751 = vmatprep.subr.bf16.mxu0 %v650
      %752 = vmatpush1.bf16.msra.mxu0 %v649
      %753 = vmatprep.subr.bf16.mxu0 %v654
      %754 = vmatpush1.bf16.msra.mxu0 %v653
      %755 = vmatprep.subr.bf16.mxu0 %v658
      %756 = vmatpush1.bf16.msra.mxu0 %v657
      %757 = vmatprep.mubr.bf16.mxu0 %v402
      %758 = vmatmul.mubr.bf16.gmra.mrb[0].mxu0 %v401
      %v759 = vpop.f32.mrb[0].mxu0
      %v760 = vadd.f32 0.0, %v759
      %v761 = vpop.f32.mrb[0].mxu0
      %v762 = vadd.f32 0.0, %v761
      %v763 = vpop.f32.mrb[0].mxu0
      %v764 = vadd.f32 0.0, %v763
      %v765 = vpop.f32.mrb[0].mxu0
      %v766 = vadd.f32 0.0, %v765
      %767 = vdwg.mxu0
      %768 = vmatprep.subr.bf16.mxu0 %v600
      %769 = vmatpush1.bf16.msra.mxu0 %v599
      %770 = vmatprep.subr.bf16.mxu0 %v604
      %771 = vmatpush1.bf16.msra.mxu0 %v603
      %772 = vmatprep.subr.bf16.mxu0 %v608
      %773 = vmatpush1.bf16.msra.mxu0 %v607
      %774 = vmatprep.subr.bf16.mxu0 %v612
      %775 = vmatpush1.bf16.msra.mxu0 %v611
      %776 = vmatprep.subr.bf16.mxu0 %v616
      %777 = vmatpush1.bf16.msra.mxu0 %v615
      %778 = vmatprep.subr.bf16.mxu0 %v620
      %779 = vmatpush1.bf16.msra.mxu0 %v619
      %780 = vmatprep.subr.bf16.mxu0 %v624
      %781 = vmatpush1.bf16.msra.mxu0 %v623
      %782 = vmatprep.subr.bf16.mxu0 %v628
      %783 = vmatpush1.bf16.msra.mxu0 %v627
      %784 = vmatprep.subr.bf16.mxu0 %v632
      %785 = vmatpush1.bf16.msra.mxu0 %v631
      %786 = vmatprep.subr.bf16.mxu0 %v636
      %787 = vmatpush1.bf16.msra.mxu0 %v635
      %788 = vmatprep.subr.bf16.mxu0 %v640
      %789 = vmatpush1.bf16.msra.mxu0 %v639
      %790 = vmatprep.subr.bf16.mxu0 %v644
      %791 = vmatpush1.bf16.msra.mxu0 %v643
      %792 = vmatprep.subr.bf16.mxu0 %v648
      %793 = vmatpush1.bf16.msra.mxu0 %v647
      %794 = vmatprep.subr.bf16.mxu0 %v652
      %795 = vmatpush1.bf16.msra.mxu0 %v651
      %796 = vmatprep.subr.bf16.mxu0 %v656
      %797 = vmatpush1.bf16.msra.mxu0 %v655
      %798 = vmatprep.subr.bf16.mxu0 %v660
      %799 = vmatpush1.bf16.msra.mxu0 %v659
      %800 = vmatprep.mubr.bf16.mxu0 %v402
      %801 = vmatmul.mubr.bf16.gmra.mrb[0].mxu0 %v401
      %v802 = vpop.f32.mrb[0].mxu0
      %v803 = vadd.f32 0.0, %v802
      %v804 = vpop.f32.mrb[0].mxu0
      %v805 = vadd.f32 0.0, %v804
      %v806 = vpop.f32.mrb[0].mxu0
      %v807 = vadd.f32 0.0, %v806
      %v808 = vpop.f32.mrb[0].mxu0
      %v809 = vadd.f32 0.0, %v808
      %810 = vdwg.mxu0
      %v811 = vmax.f32 %v760, 0.0
      %v812 = vmax.f32 %v762, 0.0
      %v813 = vmax.f32 %v803, 0.0
      %v814 = vmax.f32 %v805, 0.0
      %v815 = vmax.f32 %v764, 0.0
      %v816 = vmax.f32 %v766, 0.0
      %v817 = vmax.f32 %v807, 0.0
      %v818 = vmax.f32 %v809, 0.0
      %v819 = vpack.c.bf16 %v815, %v811
      %v820 = vpack.c.bf16 %v816, %v812
      %v821 = vpack.c.bf16 %v817, %v813
      %v822 = vpack.c.bf16 %v818, %v814
      %v823 = vld [vmem:[%s312] sm:$0xff]
      %v824 = vld [vmem:[%s312 + $0x8] sm:$0xff]
      %v825 = vld [vmem:[%s312 + $0x10] sm:$0xff]
      %v826 = vld [vmem:[%s312 + $0x18] sm:$0xff]
      %v827 = vld [vmem:[%s312 + $0x20] sm:$0xff]
      %v828 = vld [vmem:[%s312 + $0x28] sm:$0xff]
      %v829 = vld [vmem:[%s312 + $0x30] sm:$0xff]
      %v830 = vld [vmem:[%s312 + $0x38] sm:$0xff]
      %v831 = vld [vmem:[%s312 + $0x40] sm:$0xff]
      %v832 = vld [vmem:[%s312 + $0x48] sm:$0xff]
      %v833 = vld [vmem:[%s312 + $0x50] sm:$0xff]
      %v834 = vld [vmem:[%s312 + $0x58] sm:$0xff]
      %v835 = vld [vmem:[%s312 + $0x60] sm:$0xff]
      %v836 = vld [vmem:[%s312 + $0x68] sm:$0xff]
      %v837 = vld [vmem:[%s312 + $0x70] sm:$0xff]
      %v838 = vld [vmem:[%s312 + $0x78] sm:$0xff]
      %v839 = vld [vmem:[%s312 + $0x80] sm:$0xff]
      %v840 = vld [vmem:[%s312 + $0x88] sm:$0xff]
      %v841 = vld [vmem:[%s312 + $0x90] sm:$0xff]
      %v842 = vld [vmem:[%s312 + $0x98] sm:$0xff]
      %v843 = vld [vmem:[%s312 + $0xa0] sm:$0xff]
      %v844 = vld [vmem:[%s312 + $0xa8] sm:$0xff]
      %v845 = vld [vmem:[%s312 + $0xb0] sm:$0xff]
      %v846 = vld [vmem:[%s312 + $0xb8] sm:$0xff]
      %v847 = vld [vmem:[%s312 + $0xc0] sm:$0xff]
      %v848 = vld [vmem:[%s312 + $0xc8] sm:$0xff]
      %v849 = vld [vmem:[%s312 + $0xd0] sm:$0xff]
      %v850 = vld [vmem:[%s312 + $0xd8] sm:$0xff]
      %v851 = vld [vmem:[%s312 + $0xe0] sm:$0xff]
      %v852 = vld [vmem:[%s312 + $0xe8] sm:$0xff]
      %v853 = vld [vmem:[%s312 + $0xf0] sm:$0xff]
      %v854 = vld [vmem:[%s312 + $0xf8] sm:$0xff]
      %v855 = vld [vmem:[%s312 + $0x100] sm:$0xff]
      %v856 = vld [vmem:[%s312 + $0x108] sm:$0xff]
      %v857 = vld [vmem:[%s312 + $0x110] sm:$0xff]
      %v858 = vld [vmem:[%s312 + $0x118] sm:$0xff]
      %v859 = vld [vmem:[%s312 + $0x120] sm:$0xff]
      %v860 = vld [vmem:[%s312 + $0x128] sm:$0xff]
      %v861 = vld [vmem:[%s312 + $0x130] sm:$0xff]
      %v862 = vld [vmem:[%s312 + $0x138] sm:$0xff]
      %v863 = vld [vmem:[%s312 + $0x140] sm:$0xff]
      %v864 = vld [vmem:[%s312 + $0x148] sm:$0xff]
      %v865 = vld [vmem:[%s312 + $0x150] sm:$0xff]
      %v866 = vld [vmem:[%s312 + $0x158] sm:$0xff]
      %v867 = vld [vmem:[%s312 + $0x160] sm:$0xff]
      %v868 = vld [vmem:[%s312 + $0x168] sm:$0xff]
      %v869 = vld [vmem:[%s312 + $0x170] sm:$0xff]
      %v870 = vld [vmem:[%s312 + $0x178] sm:$0xff]
      %v871 = vld [vmem:[%s312 + $0x180] sm:$0xff]
      %v872 = vld [vmem:[%s312 + $0x188] sm:$0xff]
      %v873 = vld [vmem:[%s312 + $0x190] sm:$0xff]
      %v874 = vld [vmem:[%s312 + $0x198] sm:$0xff]
      %v875 = vld [vmem:[%s312 + $0x1a0] sm:$0xff]
      %v876 = vld [vmem:[%s312 + $0x1a8] sm:$0xff]
      %v877 = vld [vmem:[%s312 + $0x1b0] sm:$0xff]
      %v878 = vld [vmem:[%s312 + $0x1b8] sm:$0xff]
      %v879 = vld [vmem:[%s312 + $0x1c0] sm:$0xff]
      %v880 = vld [vmem:[%s312 + $0x1c8] sm:$0xff]
      %v881 = vld [vmem:[%s312 + $0x1d0] sm:$0xff]
      %v882 = vld [vmem:[%s312 + $0x1d8] sm:$0xff]
      %v883 = vld [vmem:[%s312 + $0x1e0] sm:$0xff]
      %v884 = vld [vmem:[%s312 + $0x1e8] sm:$0xff]
      %v885 = vld [vmem:[%s312 + $0x1f0] sm:$0xff]
      %v886 = vld [vmem:[%s312 + $0x1f8] sm:$0xff]
      %v887 = vld [vmem:[%s312 + $0x200] sm:$0xff]
      %v888 = vld [vmem:[%s312 + $0x208] sm:$0xff]
      %v889 = vld [vmem:[%s312 + $0x210] sm:$0xff]
      %v890 = vld [vmem:[%s312 + $0x218] sm:$0xff]
      %v891 = vld [vmem:[%s312 + $0x220] sm:$0xff]
      %v892 = vld [vmem:[%s312 + $0x228] sm:$0xff]
      %v893 = vld [vmem:[%s312 + $0x230] sm:$0xff]
      %v894 = vld [vmem:[%s312 + $0x238] sm:$0xff]
      %v895 = vld [vmem:[%s312 + $0x240] sm:$0xff]
      %v896 = vld [vmem:[%s312 + $0x248] sm:$0xff]
      %v897 = vld [vmem:[%s312 + $0x250] sm:$0xff]
      %v898 = vld [vmem:[%s312 + $0x258] sm:$0xff]
      %v899 = vld [vmem:[%s312 + $0x260] sm:$0xff]
      %v900 = vld [vmem:[%s312 + $0x268] sm:$0xff]
      %v901 = vld [vmem:[%s312 + $0x270] sm:$0xff]
      %v902 = vld [vmem:[%s312 + $0x278] sm:$0xff]
      %v903 = vld [vmem:[%s312 + $0x280] sm:$0xff]
      %v904 = vld [vmem:[%s312 + $0x288] sm:$0xff]
      %v905 = vld [vmem:[%s312 + $0x290] sm:$0xff]
      %v906 = vld [vmem:[%s312 + $0x298] sm:$0xff]
      %v907 = vld [vmem:[%s312 + $0x2a0] sm:$0xff]
      %v908 = vld [vmem:[%s312 + $0x2a8] sm:$0xff]
      %v909 = vld [vmem:[%s312 + $0x2b0] sm:$0xff]
      %v910 = vld [vmem:[%s312 + $0x2b8] sm:$0xff]
      %v911 = vld [vmem:[%s312 + $0x2c0] sm:$0xff]
      %v912 = vld [vmem:[%s312 + $0x2c8] sm:$0xff]
      %v913 = vld [vmem:[%s312 + $0x2d0] sm:$0xff]
      %v914 = vld [vmem:[%s312 + $0x2d8] sm:$0xff]
      %v915 = vld [vmem:[%s312 + $0x2e0] sm:$0xff]
      %v916 = vld [vmem:[%s312 + $0x2e8] sm:$0xff]
      %v917 = vld [vmem:[%s312 + $0x2f0] sm:$0xff]
      %v918 = vld [vmem:[%s312 + $0x2f8] sm:$0xff]
      %v919 = vld [vmem:[%s312 + $0x300] sm:$0xff]
      %v920 = vld [vmem:[%s312 + $0x308] sm:$0xff]
      %v921 = vld [vmem:[%s312 + $0x310] sm:$0xff]
      %v922 = vld [vmem:[%s312 + $0x318] sm:$0xff]
      %v923 = vld [vmem:[%s312 + $0x320] sm:$0xff]
      %v924 = vld [vmem:[%s312 + $0x328] sm:$0xff]
      %v925 = vld [vmem:[%s312 + $0x330] sm:$0xff]
      %v926 = vld [vmem:[%s312 + $0x338] sm:$0xff]
      %v927 = vld [vmem:[%s312 + $0x340] sm:$0xff]
      %v928 = vld [vmem:[%s312 + $0x348] sm:$0xff]
      %v929 = vld [vmem:[%s312 + $0x350] sm:$0xff]
      %v930 = vld [vmem:[%s312 + $0x358] sm:$0xff]
      %v931 = vld [vmem:[%s312 + $0x360] sm:$0xff]
      %v932 = vld [vmem:[%s312 + $0x368] sm:$0xff]
      %v933 = vld [vmem:[%s312 + $0x370] sm:$0xff]
      %v934 = vld [vmem:[%s312 + $0x378] sm:$0xff]
      %v935 = vld [vmem:[%s312 + $0x380] sm:$0xff]
      %v936 = vld [vmem:[%s312 + $0x388] sm:$0xff]
      %v937 = vld [vmem:[%s312 + $0x390] sm:$0xff]
      %v938 = vld [vmem:[%s312 + $0x398] sm:$0xff]
      %v939 = vld [vmem:[%s312 + $0x3a0] sm:$0xff]
      %v940 = vld [vmem:[%s312 + $0x3a8] sm:$0xff]
      %v941 = vld [vmem:[%s312 + $0x3b0] sm:$0xff]
      %v942 = vld [vmem:[%s312 + $0x3b8] sm:$0xff]
      %v943 = vld [vmem:[%s312 + $0x3c0] sm:$0xff]
      %v944 = vld [vmem:[%s312 + $0x3c8] sm:$0xff]
      %v945 = vld [vmem:[%s312 + $0x3d0] sm:$0xff]
      %v946 = vld [vmem:[%s312 + $0x3d8] sm:$0xff]
      %v947 = vld [vmem:[%s312 + $0x3e0] sm:$0xff]
      %v948 = vld [vmem:[%s312 + $0x3e8] sm:$0xff]
      %v949 = vld [vmem:[%s312 + $0x3f0] sm:$0xff]
      %v950 = vld [vmem:[%s312 + $0x3f8] sm:$0xff]
      %v951 = vld [vmem:[%s320] sm:$0xf]
      %v953 = vlaneseq
      %v954 = vshrl.u32 %v953, 7
      %v955 = vsub.s32 0, %v954
      %v956 = vrot.slane %v951, %v955
      %v957 = vlaneseq
      %v958 = vshrl.u32 %v957, 7
      %v959 = vsub.s32 1, %v958
      %v960 = vrot.slane %v951, %v959
      %v961 = vlaneseq
      %v962 = vshrl.u32 %v961, 7
      %v963 = vsub.s32 2, %v962
      %v964 = vrot.slane %v951, %v963
      %v965 = vlaneseq
      %v966 = vshrl.u32 %v965, 7
      %v967 = vsub.s32 3, %v966
      %v968 = vrot.slane %v951, %v967
      %v1101 = vunpack.c.l.b16 %v823
      %v1102 = vunpack.c.h.b16 %v823
      %v1103 = vunpack.c.l.b16 %v824
      %v1104 = vunpack.c.h.b16 %v824
      %v1105 = vunpack.c.l.b16 %v825
      %v1106 = vunpack.c.h.b16 %v825
      %v1107 = vunpack.c.l.b16 %v826
      %v1108 = vunpack.c.h.b16 %v826
      %v1109 = vunpack.c.l.b16 %v827
      %v1110 = vunpack.c.h.b16 %v827
      %v1111 = vunpack.c.l.b16 %v828
      %v1112 = vunpack.c.h.b16 %v828
      %v1113 = vunpack.c.l.b16 %v829
      %v1114 = vunpack.c.h.b16 %v829
      %v1115 = vunpack.c.l.b16 %v830
      %v1116 = vunpack.c.h.b16 %v830
      %v1117 = vunpack.c.l.b16 %v831
      %v1118 = vunpack.c.h.b16 %v831
      %v1119 = vunpack.c.l.b16 %v832
      %v1120 = vunpack.c.h.b16 %v832
      %v1121 = vunpack.c.l.b16 %v833
      %v1122 = vunpack.c.h.b16 %v833
      %v1123 = vunpack.c.l.b16 %v834
      %v1124 = vunpack.c.h.b16 %v834
      %v1125 = vunpack.c.l.b16 %v835
      %v1126 = vunpack.c.h.b16 %v835
      %v1127 = vunpack.c.l.b16 %v836
      %v1128 = vunpack.c.h.b16 %v836
      %v1129 = vunpack.c.l.b16 %v837
      %v1130 = vunpack.c.h.b16 %v837
      %v1131 = vunpack.c.l.b16 %v838
      %v1132 = vunpack.c.h.b16 %v838
      %v1133 = vunpack.c.l.b16 %v839
      %v1134 = vunpack.c.h.b16 %v839
      %v1135 = vunpack.c.l.b16 %v840
      %v1136 = vunpack.c.h.b16 %v840
      %v1137 = vunpack.c.l.b16 %v841
      %v1138 = vunpack.c.h.b16 %v841
      %v1139 = vunpack.c.l.b16 %v842
      %v1140 = vunpack.c.h.b16 %v842
      %v1141 = vunpack.c.l.b16 %v843
      %v1142 = vunpack.c.h.b16 %v843
      %v1143 = vunpack.c.l.b16 %v844
      %v1144 = vunpack.c.h.b16 %v844
      %v1145 = vunpack.c.l.b16 %v845
      %v1146 = vunpack.c.h.b16 %v845
      %v1147 = vunpack.c.l.b16 %v846
      %v1148 = vunpack.c.h.b16 %v846
      %v1149 = vunpack.c.l.b16 %v847
      %v1150 = vunpack.c.h.b16 %v847
      %v1151 = vunpack.c.l.b16 %v848
      %v1152 = vunpack.c.h.b16 %v848
      %v1153 = vunpack.c.l.b16 %v849
      %v1154 = vunpack.c.h.b16 %v849
      %v1155 = vunpack.c.l.b16 %v850
      %v1156 = vunpack.c.h.b16 %v850
      %v1157 = vunpack.c.l.b16 %v851
      %v1158 = vunpack.c.h.b16 %v851
      %v1159 = vunpack.c.l.b16 %v852
      %v1160 = vunpack.c.h.b16 %v852
      %v1161 = vunpack.c.l.b16 %v853
      %v1162 = vunpack.c.h.b16 %v853
      %v1163 = vunpack.c.l.b16 %v854
      %v1164 = vunpack.c.h.b16 %v854
      %v1165 = vunpack.c.l.b16 %v855
      %v1166 = vunpack.c.h.b16 %v855
      %v1167 = vunpack.c.l.b16 %v856
      %v1168 = vunpack.c.h.b16 %v856
      %v1169 = vunpack.c.l.b16 %v857
      %v1170 = vunpack.c.h.b16 %v857
      %v1171 = vunpack.c.l.b16 %v858
      %v1172 = vunpack.c.h.b16 %v858
      %v1173 = vunpack.c.l.b16 %v859
      %v1174 = vunpack.c.h.b16 %v859
      %v1175 = vunpack.c.l.b16 %v860
      %v1176 = vunpack.c.h.b16 %v860
      %v1177 = vunpack.c.l.b16 %v861
      %v1178 = vunpack.c.h.b16 %v861
      %v1179 = vunpack.c.l.b16 %v862
      %v1180 = vunpack.c.h.b16 %v862
      %v1181 = vunpack.c.l.b16 %v863
      %v1182 = vunpack.c.h.b16 %v863
      %v1183 = vunpack.c.l.b16 %v864
      %v1184 = vunpack.c.h.b16 %v864
      %v1185 = vunpack.c.l.b16 %v865
      %v1186 = vunpack.c.h.b16 %v865
      %v1187 = vunpack.c.l.b16 %v866
      %v1188 = vunpack.c.h.b16 %v866
      %v1189 = vunpack.c.l.b16 %v867
      %v1190 = vunpack.c.h.b16 %v867
      %v1191 = vunpack.c.l.b16 %v868
      %v1192 = vunpack.c.h.b16 %v868
      %v1193 = vunpack.c.l.b16 %v869
      %v1194 = vunpack.c.h.b16 %v869
      %v1195 = vunpack.c.l.b16 %v870
      %v1196 = vunpack.c.h.b16 %v870
      %v1197 = vunpack.c.l.b16 %v871
      %v1198 = vunpack.c.h.b16 %v871
      %v1199 = vunpack.c.l.b16 %v872
      %v1200 = vunpack.c.h.b16 %v872
      %v1201 = vunpack.c.l.b16 %v873
      %v1202 = vunpack.c.h.b16 %v873
      %v1203 = vunpack.c.l.b16 %v874
      %v1204 = vunpack.c.h.b16 %v874
      %v1205 = vunpack.c.l.b16 %v875
      %v1206 = vunpack.c.h.b16 %v875
      %v1207 = vunpack.c.l.b16 %v876
      %v1208 = vunpack.c.h.b16 %v876
      %v1209 = vunpack.c.l.b16 %v877
      %v1210 = vunpack.c.h.b16 %v877
      %v1211 = vunpack.c.l.b16 %v878
      %v1212 = vunpack.c.h.b16 %v878
      %v1213 = vunpack.c.l.b16 %v879
      %v1214 = vunpack.c.h.b16 %v879
      %v1215 = vunpack.c.l.b16 %v880
      %v1216 = vunpack.c.h.b16 %v880
      %v1217 = vunpack.c.l.b16 %v881
      %v1218 = vunpack.c.h.b16 %v881
      %v1219 = vunpack.c.l.b16 %v882
      %v1220 = vunpack.c.h.b16 %v882
      %v1221 = vunpack.c.l.b16 %v883
      %v1222 = vunpack.c.h.b16 %v883
      %v1223 = vunpack.c.l.b16 %v884
      %v1224 = vunpack.c.h.b16 %v884
      %v1225 = vunpack.c.l.b16 %v885
      %v1226 = vunpack.c.h.b16 %v885
      %v1227 = vunpack.c.l.b16 %v886
      %v1228 = vunpack.c.h.b16 %v886
      %v1229 = vunpack.c.l.b16 %v887
      %v1230 = vunpack.c.h.b16 %v887
      %v1231 = vunpack.c.l.b16 %v888
      %v1232 = vunpack.c.h.b16 %v888
      %v1233 = vunpack.c.l.b16 %v889
      %v1234 = vunpack.c.h.b16 %v889
      %v1235 = vunpack.c.l.b16 %v890
      %v1236 = vunpack.c.h.b16 %v890
      %v1237 = vunpack.c.l.b16 %v891
      %v1238 = vunpack.c.h.b16 %v891
      %v1239 = vunpack.c.l.b16 %v892
      %v1240 = vunpack.c.h.b16 %v892
      %v1241 = vunpack.c.l.b16 %v893
      %v1242 = vunpack.c.h.b16 %v893
      %v1243 = vunpack.c.l.b16 %v894
      %v1244 = vunpack.c.h.b16 %v894
      %v1245 = vunpack.c.l.b16 %v895
      %v1246 = vunpack.c.h.b16 %v895
      %v1247 = vunpack.c.l.b16 %v896
      %v1248 = vunpack.c.h.b16 %v896
      %v1249 = vunpack.c.l.b16 %v897
      %v1250 = vunpack.c.h.b16 %v897
      %v1251 = vunpack.c.l.b16 %v898
      %v1252 = vunpack.c.h.b16 %v898
      %v1253 = vunpack.c.l.b16 %v899
      %v1254 = vunpack.c.h.b16 %v899
      %v1255 = vunpack.c.l.b16 %v900
      %v1256 = vunpack.c.h.b16 %v900
      %v1257 = vunpack.c.l.b16 %v901
      %v1258 = vunpack.c.h.b16 %v901
      %v1259 = vunpack.c.l.b16 %v902
      %v1260 = vunpack.c.h.b16 %v902
      %v1261 = vunpack.c.l.b16 %v903
      %v1262 = vunpack.c.h.b16 %v903
      %v1263 = vunpack.c.l.b16 %v904
      %v1264 = vunpack.c.h.b16 %v904
      %v1265 = vunpack.c.l.b16 %v905
      %v1266 = vunpack.c.h.b16 %v905
      %v1267 = vunpack.c.l.b16 %v906
      %v1268 = vunpack.c.h.b16 %v906
      %v1269 = vunpack.c.l.b16 %v907
      %v1270 = vunpack.c.h.b16 %v907
      %v1271 = vunpack.c.l.b16 %v908
      %v1272 = vunpack.c.h.b16 %v908
      %v1273 = vunpack.c.l.b16 %v909
      %v1274 = vunpack.c.h.b16 %v909
      %v1275 = vunpack.c.l.b16 %v910
      %v1276 = vunpack.c.h.b16 %v910
      %v1277 = vunpack.c.l.b16 %v911
      %v1278 = vunpack.c.h.b16 %v911
      %v1279 = vunpack.c.l.b16 %v912
      %v1280 = vunpack.c.h.b16 %v912
      %v1281 = vunpack.c.l.b16 %v913
      %v1282 = vunpack.c.h.b16 %v913
      %v1283 = vunpack.c.l.b16 %v914
      %v1284 = vunpack.c.h.b16 %v914
      %v1285 = vunpack.c.l.b16 %v915
      %v1286 = vunpack.c.h.b16 %v915
      %v1287 = vunpack.c.l.b16 %v916
      %v1288 = vunpack.c.h.b16 %v916
      %v1289 = vunpack.c.l.b16 %v917
      %v1290 = vunpack.c.h.b16 %v917
      %v1291 = vunpack.c.l.b16 %v918
      %v1292 = vunpack.c.h.b16 %v918
      %v1293 = vunpack.c.l.b16 %v919
      %v1294 = vunpack.c.h.b16 %v919
      %v1295 = vunpack.c.l.b16 %v920
      %v1296 = vunpack.c.h.b16 %v920
      %v1297 = vunpack.c.l.b16 %v921
      %v1298 = vunpack.c.h.b16 %v921
      %v1299 = vunpack.c.l.b16 %v922
      %v1300 = vunpack.c.h.b16 %v922
      %v1301 = vunpack.c.l.b16 %v923
      %v1302 = vunpack.c.h.b16 %v923
      %v1303 = vunpack.c.l.b16 %v924
      %v1304 = vunpack.c.h.b16 %v924
      %v1305 = vunpack.c.l.b16 %v925
      %v1306 = vunpack.c.h.b16 %v925
      %v1307 = vunpack.c.l.b16 %v926
      %v1308 = vunpack.c.h.b16 %v926
      %v1309 = vunpack.c.l.b16 %v927
      %v1310 = vunpack.c.h.b16 %v927
      %v1311 = vunpack.c.l.b16 %v928
      %v1312 = vunpack.c.h.b16 %v928
      %v1313 = vunpack.c.l.b16 %v929
      %v1314 = vunpack.c.h.b16 %v929
      %v1315 = vunpack.c.l.b16 %v930
      %v1316 = vunpack.c.h.b16 %v930
      %v1317 = vunpack.c.l.b16 %v931
      %v1318 = vunpack.c.h.b16 %v931
      %v1319 = vunpack.c.l.b16 %v932
      %v1320 = vunpack.c.h.b16 %v932
      %v1321 = vunpack.c.l.b16 %v933
      %v1322 = vunpack.c.h.b16 %v933
      %v1323 = vunpack.c.l.b16 %v934
      %v1324 = vunpack.c.h.b16 %v934
      %v1325 = vunpack.c.l.b16 %v935
      %v1326 = vunpack.c.h.b16 %v935
      %v1327 = vunpack.c.l.b16 %v936
      %v1328 = vunpack.c.h.b16 %v936
      %v1329 = vunpack.c.l.b16 %v937
      %v1330 = vunpack.c.h.b16 %v937
      %v1331 = vunpack.c.l.b16 %v938
      %v1332 = vunpack.c.h.b16 %v938
      %v1333 = vunpack.c.l.b16 %v939
      %v1334 = vunpack.c.h.b16 %v939
      %v1335 = vunpack.c.l.b16 %v940
      %v1336 = vunpack.c.h.b16 %v940
      %v1337 = vunpack.c.l.b16 %v941
      %v1338 = vunpack.c.h.b16 %v941
      %v1339 = vunpack.c.l.b16 %v942
      %v1340 = vunpack.c.h.b16 %v942
      %v1341 = vunpack.c.l.b16 %v943
      %v1342 = vunpack.c.h.b16 %v943
      %v1343 = vunpack.c.l.b16 %v944
      %v1344 = vunpack.c.h.b16 %v944
      %v1345 = vunpack.c.l.b16 %v945
      %v1346 = vunpack.c.h.b16 %v945
      %v1347 = vunpack.c.l.b16 %v946
      %v1348 = vunpack.c.h.b16 %v946
      %v1349 = vunpack.c.l.b16 %v947
      %v1350 = vunpack.c.h.b16 %v947
      %v1351 = vunpack.c.l.b16 %v948
      %v1352 = vunpack.c.h.b16 %v948
      %v1353 = vunpack.c.l.b16 %v949
      %v1354 = vunpack.c.h.b16 %v949
      %v1355 = vunpack.c.l.b16 %v950
      %v1356 = vunpack.c.h.b16 %v950
      %v1357 = vpack.c.b16 %v1105, %v1101
      %v1358 = vpack.c.b16 %v1106, %v1102
      %v1359 = vpack.c.b16 %v1107, %v1103
      %v1360 = vpack.c.b16 %v1108, %v1104
      %v1361 = vpack.c.b16 %v1113, %v1109
      %v1362 = vpack.c.b16 %v1114, %v1110
      %v1363 = vpack.c.b16 %v1115, %v1111
      %v1364 = vpack.c.b16 %v1116, %v1112
      %v1365 = vpack.c.b16 %v1121, %v1117
      %v1366 = vpack.c.b16 %v1122, %v1118
      %v1367 = vpack.c.b16 %v1123, %v1119
      %v1368 = vpack.c.b16 %v1124, %v1120
      %v1369 = vpack.c.b16 %v1129, %v1125
      %v1370 = vpack.c.b16 %v1130, %v1126
      %v1371 = vpack.c.b16 %v1131, %v1127
      %v1372 = vpack.c.b16 %v1132, %v1128
      %v1373 = vpack.c.b16 %v1137, %v1133
      %v1374 = vpack.c.b16 %v1138, %v1134
      %v1375 = vpack.c.b16 %v1139, %v1135
      %v1376 = vpack.c.b16 %v1140, %v1136
      %v1377 = vpack.c.b16 %v1145, %v1141
      %v1378 = vpack.c.b16 %v1146, %v1142
      %v1379 = vpack.c.b16 %v1147, %v1143
      %v1380 = vpack.c.b16 %v1148, %v1144
      %v1381 = vpack.c.b16 %v1153, %v1149
      %v1382 = vpack.c.b16 %v1154, %v1150
      %v1383 = vpack.c.b16 %v1155, %v1151
      %v1384 = vpack.c.b16 %v1156, %v1152
      %v1385 = vpack.c.b16 %v1161, %v1157
      %v1386 = vpack.c.b16 %v1162, %v1158
      %v1387 = vpack.c.b16 %v1163, %v1159
      %v1388 = vpack.c.b16 %v1164, %v1160
      %v1389 = vpack.c.b16 %v1169, %v1165
      %v1390 = vpack.c.b16 %v1170, %v1166
      %v1391 = vpack.c.b16 %v1171, %v1167
      %v1392 = vpack.c.b16 %v1172, %v1168
      %v1393 = vpack.c.b16 %v1177, %v1173
      %v1394 = vpack.c.b16 %v1178, %v1174
      %v1395 = vpack.c.b16 %v1179, %v1175
      %v1396 = vpack.c.b16 %v1180, %v1176
      %v1397 = vpack.c.b16 %v1185, %v1181
      %v1398 = vpack.c.b16 %v1186, %v1182
      %v1399 = vpack.c.b16 %v1187, %v1183
      %v1400 = vpack.c.b16 %v1188, %v1184
      %v1401 = vpack.c.b16 %v1193, %v1189
      %v1402 = vpack.c.b16 %v1194, %v1190
      %v1403 = vpack.c.b16 %v1195, %v1191
      %v1404 = vpack.c.b16 %v1196, %v1192
      %v1405 = vpack.c.b16 %v1201, %v1197
      %v1406 = vpack.c.b16 %v1202, %v1198
      %v1407 = vpack.c.b16 %v1203, %v1199
      %v1408 = vpack.c.b16 %v1204, %v1200
      %v1409 = vpack.c.b16 %v1209, %v1205
      %v1410 = vpack.c.b16 %v1210, %v1206
      %v1411 = vpack.c.b16 %v1211, %v1207
      %v1412 = vpack.c.b16 %v1212, %v1208
      %v1413 = vpack.c.b16 %v1217, %v1213
      %v1414 = vpack.c.b16 %v1218, %v1214
      %v1415 = vpack.c.b16 %v1219, %v1215
      %v1416 = vpack.c.b16 %v1220, %v1216
      %v1417 = vpack.c.b16 %v1225, %v1221
      %v1418 = vpack.c.b16 %v1226, %v1222
      %v1419 = vpack.c.b16 %v1227, %v1223
      %v1420 = vpack.c.b16 %v1228, %v1224
      %v1421 = vpack.c.b16 %v1233, %v1229
      %v1422 = vpack.c.b16 %v1234, %v1230
      %v1423 = vpack.c.b16 %v1235, %v1231
      %v1424 = vpack.c.b16 %v1236, %v1232
      %v1425 = vpack.c.b16 %v1241, %v1237
      %v1426 = vpack.c.b16 %v1242, %v1238
      %v1427 = vpack.c.b16 %v1243, %v1239
      %v1428 = vpack.c.b16 %v1244, %v1240
      %v1429 = vpack.c.b16 %v1249, %v1245
      %v1430 = vpack.c.b16 %v1250, %v1246
      %v1431 = vpack.c.b16 %v1251, %v1247
      %v1432 = vpack.c.b16 %v1252, %v1248
      %v1433 = vpack.c.b16 %v1257, %v1253
      %v1434 = vpack.c.b16 %v1258, %v1254
      %v1435 = vpack.c.b16 %v1259, %v1255
      %v1436 = vpack.c.b16 %v1260, %v1256
      %v1437 = vpack.c.b16 %v1265, %v1261
      %v1438 = vpack.c.b16 %v1266, %v1262
      %v1439 = vpack.c.b16 %v1267, %v1263
      %v1440 = vpack.c.b16 %v1268, %v1264
      %v1441 = vpack.c.b16 %v1273, %v1269
      %v1442 = vpack.c.b16 %v1274, %v1270
      %v1443 = vpack.c.b16 %v1275, %v1271
      %v1444 = vpack.c.b16 %v1276, %v1272
      %v1445 = vpack.c.b16 %v1281, %v1277
      %v1446 = vpack.c.b16 %v1282, %v1278
      %v1447 = vpack.c.b16 %v1283, %v1279
      %v1448 = vpack.c.b16 %v1284, %v1280
      %v1449 = vpack.c.b16 %v1289, %v1285
      %v1450 = vpack.c.b16 %v1290, %v1286
      %v1451 = vpack.c.b16 %v1291, %v1287
      %v1452 = vpack.c.b16 %v1292, %v1288
      %v1453 = vpack.c.b16 %v1297, %v1293
      %v1454 = vpack.c.b16 %v1298, %v1294
      %v1455 = vpack.c.b16 %v1299, %v1295
      %v1456 = vpack.c.b16 %v1300, %v1296
      %v1457 = vpack.c.b16 %v1305, %v1301
      %v1458 = vpack.c.b16 %v1306, %v1302
      %v1459 = vpack.c.b16 %v1307, %v1303
      %v1460 = vpack.c.b16 %v1308, %v1304
      %v1461 = vpack.c.b16 %v1313, %v1309
      %v1462 = vpack.c.b16 %v1314, %v1310
      %v1463 = vpack.c.b16 %v1315, %v1311
      %v1464 = vpack.c.b16 %v1316, %v1312
      %v1465 = vpack.c.b16 %v1321, %v1317
      %v1466 = vpack.c.b16 %v1322, %v1318
      %v1467 = vpack.c.b16 %v1323, %v1319
      %v1468 = vpack.c.b16 %v1324, %v1320
      %v1469 = vpack.c.b16 %v1329, %v1325
      %v1470 = vpack.c.b16 %v1330, %v1326
      %v1471 = vpack.c.b16 %v1331, %v1327
      %v1472 = vpack.c.b16 %v1332, %v1328
      %v1473 = vpack.c.b16 %v1337, %v1333
      %v1474 = vpack.c.b16 %v1338, %v1334
      %v1475 = vpack.c.b16 %v1339, %v1335
      %v1476 = vpack.c.b16 %v1340, %v1336
      %v1477 = vpack.c.b16 %v1345, %v1341
      %v1478 = vpack.c.b16 %v1346, %v1342
      %v1479 = vpack.c.b16 %v1347, %v1343
      %v1480 = vpack.c.b16 %v1348, %v1344
      %v1481 = vpack.c.b16 %v1353, %v1349
      %v1482 = vpack.c.b16 %v1354, %v1350
      %v1483 = vpack.c.b16 %v1355, %v1351
      %v1484 = vpack.c.b16 %v1356, %v1352
      %1613 = vmatprep.subr.bf16.mxu0 %v1358
      %1614 = vmatpush1.bf16.msra.mxu0 %v1357
      %1615 = vmatprep.subr.bf16.mxu0 %v1362
      %1616 = vmatpush1.bf16.msra.mxu0 %v1361
      %1617 = vmatprep.subr.bf16.mxu0 %v1366
      %1618 = vmatpush1.bf16.msra.mxu0 %v1365
      %1619 = vmatprep.subr.bf16.mxu0 %v1370
      %1620 = vmatpush1.bf16.msra.mxu0 %v1369
      %1621 = vmatprep.subr.bf16.mxu0 %v1374
      %1622 = vmatpush1.bf16.msra.mxu0 %v1373
      %1623 = vmatprep.subr.bf16.mxu0 %v1378
      %1624 = vmatpush1.bf16.msra.mxu0 %v1377
      %1625 = vmatprep.subr.bf16.mxu0 %v1382
      %1626 = vmatpush1.bf16.msra.mxu0 %v1381
      %1627 = vmatprep.subr.bf16.mxu0 %v1386
      %1628 = vmatpush1.bf16.msra.mxu0 %v1385
      %1629 = vmatprep.subr.bf16.mxu0 %v1390
      %1630 = vmatpush1.bf16.msra.mxu0 %v1389
      %1631 = vmatprep.subr.bf16.mxu0 %v1394
      %1632 = vmatpush1.bf16.msra.mxu0 %v1393
      %1633 = vmatprep.subr.bf16.mxu0 %v1398
      %1634 = vmatpush1.bf16.msra.mxu0 %v1397
      %1635 = vmatprep.subr.bf16.mxu0 %v1402
      %1636 = vmatpush1.bf16.msra.mxu0 %v1401
      %1637 = vmatprep.subr.bf16.mxu0 %v1406
      %1638 = vmatpush1.bf16.msra.mxu0 %v1405
      %1639 = vmatprep.subr.bf16.mxu0 %v1410
      %1640 = vmatpush1.bf16.msra.mxu0 %v1409
      %1641 = vmatprep.subr.bf16.mxu0 %v1414
      %1642 = vmatpush1.bf16.msra.mxu0 %v1413
      %1643 = vmatprep.subr.bf16.mxu0 %v1418
      %1644 = vmatpush1.bf16.msra.mxu0 %v1417
      %1645 = vmatprep.mubr.bf16.mxu0 %v820
      %1646 = vmatmul.mubr.bf16.gmra.mrb[0].mxu0 %v819
      %v1647 = vpop.f32.mrb[0].mxu0
      %v1648 = vadd.f32 %v956, %v1647
      %v1649 = vpop.f32.mrb[0].mxu0
      %v1650 = vadd.f32 %v960, %v1649
      %v1651 = vpop.f32.mrb[0].mxu0
      %v1652 = vadd.f32 %v956, %v1651
      %v1653 = vpop.f32.mrb[0].mxu0
      %v1654 = vadd.f32 %v960, %v1653
      %1655 = vdwg.mxu0
      %1656 = vmatprep.subr.bf16.mxu0 %v1422
      %1657 = vmatpush1.bf16.msra.mxu0 %v1421
      %1658 = vmatprep.subr.bf16.mxu0 %v1426
      %1659 = vmatpush1.bf16.msra.mxu0 %v1425
      %1660 = vmatprep.subr.bf16.mxu0 %v1430
      %1661 = vmatpush1.bf16.msra.mxu0 %v1429
      %1662 = vmatprep.subr.bf16.mxu0 %v1434
      %1663 = vmatpush1.bf16.msra.mxu0 %v1433
      %1664 = vmatprep.subr.bf16.mxu0 %v1438
      %1665 = vmatpush1.bf16.msra.mxu0 %v1437
      %1666 = vmatprep.subr.bf16.mxu0 %v1442
      %1667 = vmatpush1.bf16.msra.mxu0 %v1441
      %1668 = vmatprep.subr.bf16.mxu0 %v1446
      %1669 = vmatpush1.bf16.msra.mxu0 %v1445
      %1670 = vmatprep.subr.bf16.mxu0 %v1450
      %1671 = vmatpush1.bf16.msra.mxu0 %v1449
      %1672 = vmatprep.subr.bf16.mxu0 %v1454
      %1673 = vmatpush1.bf16.msra.mxu0 %v1453
      %1674 = vmatprep.subr.bf16.mxu0 %v1458
      %1675 = vmatpush1.bf16.msra.mxu0 %v1457
      %1676 = vmatprep.subr.bf16.mxu0 %v1462
      %1677 = vmatpush1.bf16.msra.mxu0 %v1461
      %1678 = vmatprep.subr.bf16.mxu0 %v1466
      %1679 = vmatpush1.bf16.msra.mxu0 %v1465
      %1680 = vmatprep.subr.bf16.mxu0 %v1470
      %1681 = vmatpush1.bf16.msra.mxu0 %v1469
      %1682 = vmatprep.subr.bf16.mxu0 %v1474
      %1683 = vmatpush1.bf16.msra.mxu0 %v1473
      %1684 = vmatprep.subr.bf16.mxu0 %v1478
      %1685 = vmatpush1.bf16.msra.mxu0 %v1477
      %1686 = vmatprep.subr.bf16.mxu0 %v1482
      %1687 = vmatpush1.bf16.msra.mxu0 %v1481
      %1688 = vmatprep.mubr.bf16.mxu0 %v822
      %1689 = vmatmul.mubr.bf16.gmra.mrb[0].mxu0 %v821
      %v1690 = vpop.f32.mrb[0].mxu0
      %v1691 = vadd.f32 %v1648, %v1690
      %v1692 = vpop.f32.mrb[0].mxu0
      %v1693 = vadd.f32 %v1650, %v1692
      %v1694 = vpop.f32.mrb[0].mxu0
      %v1695 = vadd.f32 %v1652, %v1694
      %v1696 = vpop.f32.mrb[0].mxu0
      %v1697 = vadd.f32 %v1654, %v1696
      %1698 = vdwg.mxu0
      %1699 = vmatprep.subr.bf16.mxu0 %v1360
      %1700 = vmatpush1.bf16.msra.mxu0 %v1359
      %1701 = vmatprep.subr.bf16.mxu0 %v1364
      %1702 = vmatpush1.bf16.msra.mxu0 %v1363
      %1703 = vmatprep.subr.bf16.mxu0 %v1368
      %1704 = vmatpush1.bf16.msra.mxu0 %v1367
      %1705 = vmatprep.subr.bf16.mxu0 %v1372
      %1706 = vmatpush1.bf16.msra.mxu0 %v1371
      %1707 = vmatprep.subr.bf16.mxu0 %v1376
      %1708 = vmatpush1.bf16.msra.mxu0 %v1375
      %1709 = vmatprep.subr.bf16.mxu0 %v1380
      %1710 = vmatpush1.bf16.msra.mxu0 %v1379
      %1711 = vmatprep.subr.bf16.mxu0 %v1384
      %1712 = vmatpush1.bf16.msra.mxu0 %v1383
      %1713 = vmatprep.subr.bf16.mxu0 %v1388
      %1714 = vmatpush1.bf16.msra.mxu0 %v1387
      %1715 = vmatprep.subr.bf16.mxu0 %v1392
      %1716 = vmatpush1.bf16.msra.mxu0 %v1391
      %1717 = vmatprep.subr.bf16.mxu0 %v1396
      %1718 = vmatpush1.bf16.msra.mxu0 %v1395
      %1719 = vmatprep.subr.bf16.mxu0 %v1400
      %1720 = vmatpush1.bf16.msra.mxu0 %v1399
      %1721 = vmatprep.subr.bf16.mxu0 %v1404
      %1722 = vmatpush1.bf16.msra.mxu0 %v1403
      %1723 = vmatprep.subr.bf16.mxu0 %v1408
      %1724 = vmatpush1.bf16.msra.mxu0 %v1407
      %1725 = vmatprep.subr.bf16.mxu0 %v1412
      %1726 = vmatpush1.bf16.msra.mxu0 %v1411
      %1727 = vmatprep.subr.bf16.mxu0 %v1416
      %1728 = vmatpush1.bf16.msra.mxu0 %v1415
      %1729 = vmatprep.subr.bf16.mxu0 %v1420
      %1730 = vmatpush1.bf16.msra.mxu0 %v1419
      %1731 = vmatprep.mubr.bf16.mxu0 %v820
      %1732 = vmatmul.mubr.bf16.gmra.mrb[0].mxu0 %v819
      %v1733 = vpop.f32.mrb[0].mxu0
      %v1734 = vadd.f32 %v964, %v1733
      %v1735 = vpop.f32.mrb[0].mxu0
      %v1736 = vadd.f32 %v968, %v1735
      %v1737 = vpop.f32.mrb[0].mxu0
      %v1738 = vadd.f32 %v964, %v1737
      %v1739 = vpop.f32.mrb[0].mxu0
      %v1740 = vadd.f32 %v968, %v1739
      %1741 = vdwg.mxu0
      %1742 = vmatprep.subr.bf16.mxu0 %v1424
      %1743 = vmatpush1.bf16.msra.mxu0 %v1423
      %1744 = vmatprep.subr.bf16.mxu0 %v1428
      %1745 = vmatpush1.bf16.msra.mxu0 %v1427
      %1746 = vmatprep.subr.bf16.mxu0 %v1432
      %1747 = vmatpush1.bf16.msra.mxu0 %v1431
      %1748 = vmatprep.subr.bf16.mxu0 %v1436
      %1749 = vmatpush1.bf16.msra.mxu0 %v1435
      %1750 = vmatprep.subr.bf16.mxu0 %v1440
      %1751 = vmatpush1.bf16.msra.mxu0 %v1439
      %1752 = vmatprep.subr.bf16.mxu0 %v1444
      %1753 = vmatpush1.bf16.msra.mxu0 %v1443
      %1754 = vmatprep.subr.bf16.mxu0 %v1448
      %1755 = vmatpush1.bf16.msra.mxu0 %v1447
      %1756 = vmatprep.subr.bf16.mxu0 %v1452
      %1757 = vmatpush1.bf16.msra.mxu0 %v1451
      %1758 = vmatprep.subr.bf16.mxu0 %v1456
      %1759 = vmatpush1.bf16.msra.mxu0 %v1455
      %1760 = vmatprep.subr.bf16.mxu0 %v1460
      %1761 = vmatpush1.bf16.msra.mxu0 %v1459
      %1762 = vmatprep.subr.bf16.mxu0 %v1464
      %1763 = vmatpush1.bf16.msra.mxu0 %v1463
      %1764 = vmatprep.subr.bf16.mxu0 %v1468
      %1765 = vmatpush1.bf16.msra.mxu0 %v1467
      %1766 = vmatprep.subr.bf16.mxu0 %v1472
      %1767 = vmatpush1.bf16.msra.mxu0 %v1471
      %1768 = vmatprep.subr.bf16.mxu0 %v1476
      %1769 = vmatpush1.bf16.msra.mxu0 %v1475
      %1770 = vmatprep.subr.bf16.mxu0 %v1480
      %1771 = vmatpush1.bf16.msra.mxu0 %v1479
      %1772 = vmatprep.subr.bf16.mxu0 %v1484
      %1773 = vmatpush1.bf16.msra.mxu0 %v1483
      %1774 = vmatprep.mubr.bf16.mxu0 %v822
      %1775 = vmatmul.mubr.bf16.gmra.mrb[0].mxu0 %v821
      %v1776 = vpop.f32.mrb[0].mxu0
      %v1777 = vadd.f32 %v1734, %v1776
      %v1778 = vpop.f32.mrb[0].mxu0
      %v1779 = vadd.f32 %v1736, %v1778
      %v1780 = vpop.f32.mrb[0].mxu0
      %v1781 = vadd.f32 %v1738, %v1780
      %v1782 = vpop.f32.mrb[0].mxu0
      %v1783 = vadd.f32 %v1740, %v1782
      %1784 = vdwg.mxu0
      %v1785 = vmax.f32 %v1691, 0.0
      %v1786 = vmax.f32 %v1693, 0.0
      %v1787 = vmax.f32 %v1777, 0.0
      %v1788 = vmax.f32 %v1779, 0.0
      %v1789 = vmax.f32 %v1695, 0.0
      %v1790 = vmax.f32 %v1697, 0.0
      %v1791 = vmax.f32 %v1781, 0.0
      %v1792 = vmax.f32 %v1783, 0.0
      %v1793 = vmax.f32 %v1785, %v1789
      %v1794 = vrot.slane %v1793, 4
      %v1795 = vmax.f32 %v1793, %v1794
      %v1796 = vrot.slane %v1795, 2
      %v1797 = vmax.f32 %v1795, %v1796
      %v1798 = vrot.slane %v1797, 1
      %v1799 = vmax.f32 %v1797, %v1798
      %v1800 = vmax.f32 %v1786, %v1790
      %v1801 = vrot.slane %v1800, 4
      %v1802 = vmax.f32 %v1800, %v1801
      %v1803 = vrot.slane %v1802, 2
      %v1804 = vmax.f32 %v1802, %v1803
      %v1805 = vrot.slane %v1804, 1
      %v1806 = vmax.f32 %v1804, %v1805
      %v1807 = vmax.f32 %v1787, %v1791
      %v1808 = vrot.slane %v1807, 4
      %v1809 = vmax.f32 %v1807, %v1808
      %v1810 = vrot.slane %v1809, 2
      %v1811 = vmax.f32 %v1809, %v1810
      %v1812 = vrot.slane %v1811, 1
      %v1813 = vmax.f32 %v1811, %v1812
      %v1814 = vmax.f32 %v1788, %v1792
      %v1815 = vrot.slane %v1814, 4
      %v1816 = vmax.f32 %v1814, %v1815
      %v1817 = vrot.slane %v1816, 2
      %v1818 = vmax.f32 %v1816, %v1817
      %v1819 = vrot.slane %v1818, 1
      %v1820 = vmax.f32 %v1818, %v1819
      %p1821 = scmp.eq.s32.totalorder %s22, 0
      // Predicated region
      $region37: #{finet_forward.9} parent=35 // pred_check
        %p1822 = pneg %p1821
      $region38: #{finet_forward.9} parent=35 // pred_check_branch
        %1824 = sbr.rel (%p1822) target = $region40
      $region39: #{finet_forward.9} parent=35 // pred_region
        %v1829 = vcombine.low %v1799, %v1806
        %v1830 = vcombine.low %v1813, %v1820
        %v1832 = vunpack.c.l.s4 1966171168
        %v1833 = vunpack.c.0.s8 %v1832
        %v1834 = vlaneseq
        %v1835 = vshrl.u32 %v1834, 7
        %v1836 = vsub.s32 %v1833, %v1835
        %v1837 = vrot.slane %v1829, %v1836
        %v1839 = vunpack.c.l.s4 1966171168
        %v1840 = vunpack.c.0.s8 %v1839
        %v1841 = vlaneseq
        %v1842 = vshrl.u32 %v1841, 7
        %v1843 = vsub.s32 %v1840, %v1842
        %v1844 = vrot.slane %v1830, %v1843
        %v1845 = vcombine.low %v1837, %v1844
        %v1847 = vunpack.c.l.s4 1966171168
        %v1848 = vunpack.c.0.s8 %v1847
        %v1849 = vlaneseq
        %v1850 = vshrl.u32 %v1849, 7
        %v1851 = vsub.s32 %v1848, %v1850
        %v1852 = vrot.slane %v1845, %v1851
        %v1854 = vlaneseq
        %vm1855 = vcmp.ge.s32.totalorder %v1854, 0
        %vm1856 = vcmp.lt.s32.totalorder %v1854, 512
        %vm1857 = vmand %vm1855, %vm1856
        %1858 = vst.msk [vmem:[%s328] sm:$0xf] %vm1857, %v1852
      $region40: #{finet_forward.9} parent=35 // pred_fallthru
        _
      %p1859 = scmp.gt.s32.totalorder %s22, 0
      // Predicated region
      $region41: #{finet_forward.9} parent=35 // pred_check
        %p1860 = pneg %p1859
      $region42: #{finet_forward.9} parent=35 // pred_check_branch
        %1862 = sbr.rel (%p1860) target = $region44
      $region43: #{finet_forward.9} parent=35 // pred_region
        %v1863 = vld [vmem:[%s328] sm:$0xf]
        %v1868 = vcombine.low %v1799, %v1806
        %v1869 = vcombine.low %v1813, %v1820
        %v1871 = vunpack.c.l.s4 1966171168
        %v1872 = vunpack.c.0.s8 %v1871
        %v1873 = vlaneseq
        %v1874 = vshrl.u32 %v1873, 7
        %v1875 = vsub.s32 %v1872, %v1874
        %v1876 = vrot.slane %v1868, %v1875
        %v1878 = vunpack.c.l.s4 1966171168
        %v1879 = vunpack.c.0.s8 %v1878
        %v1880 = vlaneseq
        %v1881 = vshrl.u32 %v1880, 7
        %v1882 = vsub.s32 %v1879, %v1881
        %v1883 = vrot.slane %v1869, %v1882
        %v1884 = vcombine.low %v1876, %v1883
        %v1886 = vunpack.c.l.s4 1966171168
        %v1887 = vunpack.c.0.s8 %v1886
        %v1888 = vlaneseq
        %v1889 = vshrl.u32 %v1888, 7
        %v1890 = vsub.s32 %v1887, %v1889
        %v1891 = vrot.slane %v1884, %v1890
        %v1893 = vmax.f32 %v1863, %v1891
        %v1894 = vlaneseq
        %vm1895 = vcmp.ge.s32.totalorder %v1894, 0
        %vm1896 = vcmp.lt.s32.totalorder %v1894, 512
        %vm1897 = vmand %vm1895, %vm1896
        %1898 = vst.msk [vmem:[%s328] sm:$0xf] %vm1897, %v1893
      $region44: #{finet_forward.9} parent=35 // pred_fallthru
        _
      %p1899 = scmp.lt.s32.totalorder %s20, 1
      %s1900 = scalar_select %p1899, %s20, 1
      %p1901 = scmp.lt.s32.totalorder %s21, 3
      %s1902 = scalar_select %p1901, %s21, 3
      %s1903 = smul.addr %s1902, 4
      %s1904 = smul.addr %s1900, 16
      %s1905 = sadd.s32 %s1903, %s1904
      %s1906 = scalar_lea.vmem %s4, %s1905
      // Predicated region
      $region45: #{finet_forward.9} parent=35 // pred_check
        %p1907 = pneg %p164
      $region46: #{finet_forward.9} parent=35 // pred_check_branch
        %1909 = sbr.rel (%p1907) target = $region48
      $region47: #{finet_forward.9} parent=35 // pred_region
        _
      $region48: #{finet_forward.9} parent=35 // pred_fallthru
        _
    $region36: #{finet_forward.9} parent=5 // pred_fallthru
      _
    %p1910 = scmp.le.s32.totalorder 2, %s10
    // Predicated region
    $region49: #{finet_forward.9} parent=5 // pred_check
      %p1911 = pneg %p1910
    $region50: #{finet_forward.9} parent=5 // pred_check_branch
      %1913 = sbr.rel (%p1911) target = $region52
    $region51: #{finet_forward.9} parent=5 // pred_region
      %s1914 = ssub.s32 %s10, 2
      // Predicated region
      $region53: #{finet_forward.9} parent=51 // pred_check
        %p1915 = pneg %p170
      $region54: #{finet_forward.9} parent=51 // pred_check_branch
        %1917 = sbr.rel (%p1915) target = $region56
      $region55: #{finet_forward.9} parent=51 // pred_region
        %p1918 = scmp.lt.s32.totalorder %s23, 1
        %s1919 = scalar_select %p1918, %s23, 1
        %p1920 = scmp.lt.s32.totalorder %s24, 3
        %s1921 = scalar_select %p1920, %s24, 3
        %s1922 = smul.addr %s1921, 4
        %s1923 = smul.addr %s1919, 16
        %s1924 = sadd.s32 %s1922, %s1923
        %s1925 = scalar_lea.vmem %s4, %s1924
      $region56: #{finet_forward.9} parent=51 // pred_fallthru
        _
    $region52: #{finet_forward.9} parent=5 // pred_fallthru
      _
  $region6: #{finet_forward.9} parent=0 // loop_footer
    %s14 = sadd.s32 1, %s10
  $region7: #{finet_forward.9} parent=0 // loop_footer_branch
    %9 = sbr.rel target = $region3
  $region8: #{finet_forward.9} parent=0 // loop_exit
    _

// kernel: finet_forward.13
$region0: #{finet_forward.13}
  #allocation0 [shape = 'u32[]', space=smem, size = 0x4, offset = 0x4, fixed_abs, tag = 'smem constant byte address 0x4 - core index']
  #allocation1 [shape = 'u32[144,128]{1,0:T(1,128)}', space=vmem, size = 0x12000, scoped, tag = 'internal scratch']
  %s0 = inlined_call_operand.vmem [shape: f32[4,768], index: 0, kind: input, shape index: {}]
  %s1 = inlined_call_operand.vmem [shape: bf16[768,32], index: 1, kind: input, shape index: {}]
  %s2 = inlined_call_operand.vmem [shape: bf16[32,64], index: 2, kind: input, shape index: {}]
  %s3 = inlined_call_operand.vmem [shape: bf16[64,128], index: 3, kind: input, shape index: {}]
  %s4 = inlined_call_operand.vmem [shape: bf16[128,3], index: 4, kind: input, shape index: {}]
  %s5 = inlined_call_operand.vmem [shape: f32[4,3], index: 5, kind: output, shape index: {}]
  %s6 = sld [smem:[#allocation0]]
  $region30: #{finet_forward.13} parent=0
    _
  %s8 = ssub.s32 1, %s6
  %s9 = scalar_select 0, %s8, %s6
  // Predicated region
  $region2: #{finet_forward.13} parent=0 // pred_check
    _
  $region3: #{finet_forward.13} parent=0 // pred_check_branch
    %11 = sbr.rel (0) target = $region5
  $region4: #{finet_forward.13} parent=0 // pred_region
    _
  $region5: #{finet_forward.13} parent=0 // pred_fallthru
    _
  // Predicated region
  $region6: #{finet_forward.13} parent=0 // pred_check
    _
  $region7: #{finet_forward.13} parent=0 // pred_check_branch
    %13 = sbr.rel (0) target = $region9
  $region8: #{finet_forward.13} parent=0 // pred_region
    _
  $region9: #{finet_forward.13} parent=0 // pred_fallthru
    _
  // Predicated region
  $region10: #{finet_forward.13} parent=0 // pred_check
    _
  $region11: #{finet_forward.13} parent=0 // pred_check_branch
    %15 = sbr.rel (0) target = $region13
  $region12: #{finet_forward.13} parent=0 // pred_region
    _
  $region13: #{finet_forward.13} parent=0 // pred_fallthru
    _
  // Predicated region
  $region14: #{finet_forward.13} parent=0 // pred_check
    _
  $region15: #{finet_forward.13} parent=0 // pred_check_branch
    %17 = sbr.rel (0) target = $region17
  $region16: #{finet_forward.13} parent=0 // pred_region
    _
  $region17: #{finet_forward.13} parent=0 // pred_fallthru
    _
  // Predicated region
  $region18: #{finet_forward.13} parent=0 // pred_check
    _
  $region19: #{finet_forward.13} parent=0 // pred_check_branch
    %19 = sbr.rel (0) target = $region21
  $region20: #{finet_forward.13} parent=0 // pred_region
    _
  $region21: #{finet_forward.13} parent=0 // pred_fallthru
    _
  %v21 = vld [vmem:[%s0] sm:$0xff]
  %v22 = vld [vmem:[%s0 + $0x8] sm:$0xff]
  %v23 = vld [vmem:[%s0 + $0x10] sm:$0xff]
  %v27 = vcombine.high %v21, %v21
  %v28 = vcombine.high %v22, %v22
  %v29 = vcombine.high %v23, %v23
  %v33 = vpack.c.bf16 %v21, %v21
  %v34 = vpack.c.bf16 %v27, %v27
  %v35 = vpack.c.bf16 %v22, %v22
  %v36 = vpack.c.bf16 %v28, %v28
  %v37 = vpack.c.bf16 %v23, %v23
  %v38 = vpack.c.bf16 %v29, %v29
  %v39 = vld [vmem:[%s1] sm:$0xf]
  %v40 = vld [vmem:[%s1 + $0x4] sm:$0xf]
  %v41 = vld [vmem:[%s1 + $0x8] sm:$0xf]
  %v42 = vld [vmem:[%s1 + $0xc] sm:$0xf]
  %v43 = vld [vmem:[%s1 + $0x10] sm:$0xf]
  %v44 = vld [vmem:[%s1 + $0x14] sm:$0xf]
  %v45 = vld [vmem:[%s1 + $0x18] sm:$0xf]
  %v46 = vld [vmem:[%s1 + $0x1c] sm:$0xf]
  %v47 = vld [vmem:[%s1 + $0x20] sm:$0xf]
  %v48 = vld [vmem:[%s1 + $0x24] sm:$0xf]
  %v49 = vld [vmem:[%s1 + $0x28] sm:$0xf]
  %v50 = vld [vmem:[%s1 + $0x2c] sm:$0xf]
  %v51 = vld [vmem:[%s1 + $0x30] sm:$0xf]
  %v52 = vld [vmem:[%s1 + $0x34] sm:$0xf]
  %v53 = vld [vmem:[%s1 + $0x38] sm:$0xf]
  %v54 = vld [vmem:[%s1 + $0x3c] sm:$0xf]
  %v55 = vld [vmem:[%s1 + $0x40] sm:$0xf]
  %v56 = vld [vmem:[%s1 + $0x44] sm:$0xf]
  %v57 = vld [vmem:[%s1 + $0x48] sm:$0xf]
  %v58 = vld [vmem:[%s1 + $0x4c] sm:$0xf]
  %v59 = vld [vmem:[%s1 + $0x50] sm:$0xf]
  %v60 = vld [vmem:[%s1 + $0x54] sm:$0xf]
  %v61 = vld [vmem:[%s1 + $0x58] sm:$0xf]
  %v62 = vld [vmem:[%s1 + $0x5c] sm:$0xf]
  %v63 = vld [vmem:[%s1 + $0x60] sm:$0xf]
  %v64 = vld [vmem:[%s1 + $0x64] sm:$0xf]
  %v65 = vld [vmem:[%s1 + $0x68] sm:$0xf]
  %v66 = vld [vmem:[%s1 + $0x6c] sm:$0xf]
  %v67 = vld [vmem:[%s1 + $0x70] sm:$0xf]
  %v68 = vld [vmem:[%s1 + $0x74] sm:$0xf]
  %v69 = vld [vmem:[%s1 + $0x78] sm:$0xf]
  %v70 = vld [vmem:[%s1 + $0x7c] sm:$0xf]
  %v71 = vld [vmem:[%s1 + $0x80] sm:$0xf]
  %v72 = vld [vmem:[%s1 + $0x84] sm:$0xf]
  %v73 = vld [vmem:[%s1 + $0x88] sm:$0xf]
  %v74 = vld [vmem:[%s1 + $0x8c] sm:$0xf]
  %v75 = vld [vmem:[%s1 + $0x90] sm:$0xf]
  %v76 = vld [vmem:[%s1 + $0x94] sm:$0xf]
  %v77 = vld [vmem:[%s1 + $0x98] sm:$0xf]
  %v78 = vld [vmem:[%s1 + $0x9c] sm:$0xf]
  %v79 = vld [vmem:[%s1 + $0xa0] sm:$0xf]
  %v80 = vld [vmem:[%s1 + $0xa4] sm:$0xf]
  %v81 = vld [vmem:[%s1 + $0xa8] sm:$0xf]
  %v82 = vld [vmem:[%s1 + $0xac] sm:$0xf]
  %v83 = vld [vmem:[%s1 + $0xb0] sm:$0xf]
  %v84 = vld [vmem:[%s1 + $0xb4] sm:$0xf]
  %v85 = vld [vmem:[%s1 + $0xb8] sm:$0xf]
  %v86 = vld [vmem:[%s1 + $0xbc] sm:$0xf]
  %v87 = vld [vmem:[%s1 + $0xc0] sm:$0xf]
  %v88 = vld [vmem:[%s1 + $0xc4] sm:$0xf]
  %v89 = vld [vmem:[%s1 + $0xc8] sm:$0xf]
  %v90 = vld [vmem:[%s1 + $0xcc] sm:$0xf]
  %v91 = vld [vmem:[%s1 + $0xd0] sm:$0xf]
  %v92 = vld [vmem:[%s1 + $0xd4] sm:$0xf]
  %v93 = vld [vmem:[%s1 + $0xd8] sm:$0xf]
  %v94 = vld [vmem:[%s1 + $0xdc] sm:$0xf]
  %v95 = vld [vmem:[%s1 + $0xe0] sm:$0xf]
  %v96 = vld [vmem:[%s1 + $0xe4] sm:$0xf]
  %v97 = vld [vmem:[%s1 + $0xe8] sm:$0xf]
  %v98 = vld [vmem:[%s1 + $0xec] sm:$0xf]
  %v99 = vld [vmem:[%s1 + $0xf0] sm:$0xf]
  %v100 = vld [vmem:[%s1 + $0xf4] sm:$0xf]
  %v101 = vld [vmem:[%s1 + $0xf8] sm:$0xf]
  %v102 = vld [vmem:[%s1 + $0xfc] sm:$0xf]
  %v103 = vld [vmem:[%s1 + $0x100] sm:$0xf]
  %v104 = vld [vmem:[%s1 + $0x104] sm:$0xf]
  %v105 = vld [vmem:[%s1 + $0x108] sm:$0xf]
  %v106 = vld [vmem:[%s1 + $0x10c] sm:$0xf]
  %v107 = vld [vmem:[%s1 + $0x110] sm:$0xf]
  %v108 = vld [vmem:[%s1 + $0x114] sm:$0xf]
  %v109 = vld [vmem:[%s1 + $0x118] sm:$0xf]
  %v110 = vld [vmem:[%s1 + $0x11c] sm:$0xf]
  %v111 = vld [vmem:[%s1 + $0x120] sm:$0xf]
  %v112 = vld [vmem:[%s1 + $0x124] sm:$0xf]
  %v113 = vld [vmem:[%s1 + $0x128] sm:$0xf]
  %v114 = vld [vmem:[%s1 + $0x12c] sm:$0xf]
  %v115 = vld [vmem:[%s1 + $0x130] sm:$0xf]
  %v116 = vld [vmem:[%s1 + $0x134] sm:$0xf]
  %v117 = vld [vmem:[%s1 + $0x138] sm:$0xf]
  %v118 = vld [vmem:[%s1 + $0x13c] sm:$0xf]
  %v119 = vld [vmem:[%s1 + $0x140] sm:$0xf]
  %v120 = vld [vmem:[%s1 + $0x144] sm:$0xf]
  %v121 = vld [vmem:[%s1 + $0x148] sm:$0xf]
  %v122 = vld [vmem:[%s1 + $0x14c] sm:$0xf]
  %v123 = vld [vmem:[%s1 + $0x150] sm:$0xf]
  %v124 = vld [vmem:[%s1 + $0x154] sm:$0xf]
  %v125 = vld [vmem:[%s1 + $0x158] sm:$0xf]
  %v126 = vld [vmem:[%s1 + $0x15c] sm:$0xf]
  %v127 = vld [vmem:[%s1 + $0x160] sm:$0xf]
  %v128 = vld [vmem:[%s1 + $0x164] sm:$0xf]
  %v129 = vld [vmem:[%s1 + $0x168] sm:$0xf]
  %v130 = vld [vmem:[%s1 + $0x16c] sm:$0xf]
  %v131 = vld [vmem:[%s1 + $0x170] sm:$0xf]
  %v132 = vld [vmem:[%s1 + $0x174] sm:$0xf]
  %v133 = vld [vmem:[%s1 + $0x178] sm:$0xf]
  %v134 = vld [vmem:[%s1 + $0x17c] sm:$0xf]
  %v231 = vunpack.c.l.b16 %v39
  %v232 = vunpack.c.l.b16 %v40
  %v233 = vunpack.c.l.b16 %v41
  %v234 = vunpack.c.l.b16 %v42
  %v235 = vunpack.c.l.b16 %v43
  %v236 = vunpack.c.l.b16 %v44
  %v237 = vunpack.c.l.b16 %v45
  %v238 = vunpack.c.l.b16 %v46
  %v239 = vunpack.c.l.b16 %v47
  %v240 = vunpack.c.l.b16 %v48
  %v241 = vunpack.c.l.b16 %v49
  %v242 = vunpack.c.l.b16 %v50
  %v243 = vunpack.c.l.b16 %v51
  %v244 = vunpack.c.l.b16 %v52
  %v245 = vunpack.c.l.b16 %v53
  %v246 = vunpack.c.l.b16 %v54
  %v247 = vunpack.c.l.b16 %v55
  %v248 = vunpack.c.l.b16 %v56
  %v249 = vunpack.c.l.b16 %v57
  %v250 = vunpack.c.l.b16 %v58
  %v251 = vunpack.c.l.b16 %v59
  %v252 = vunpack.c.l.b16 %v60
  %v253 = vunpack.c.l.b16 %v61
  %v254 = vunpack.c.l.b16 %v62
  %v255 = vunpack.c.l.b16 %v63
  %v256 = vunpack.c.l.b16 %v64
  %v257 = vunpack.c.l.b16 %v65
  %v258 = vunpack.c.l.b16 %v66
  %v259 = vunpack.c.l.b16 %v67
  %v260 = vunpack.c.l.b16 %v68
  %v261 = vunpack.c.l.b16 %v69
  %v262 = vunpack.c.l.b16 %v70
  %v263 = vunpack.c.l.b16 %v71
  %v264 = vunpack.c.l.b16 %v72
  %v265 = vunpack.c.l.b16 %v73
  %v266 = vunpack.c.l.b16 %v74
  %v267 = vunpack.c.l.b16 %v75
  %v268 = vunpack.c.l.b16 %v76
  %v269 = vunpack.c.l.b16 %v77
  %v270 = vunpack.c.l.b16 %v78
  %v271 = vunpack.c.l.b16 %v79
  %v272 = vunpack.c.l.b16 %v80
  %v273 = vunpack.c.l.b16 %v81
  %v274 = vunpack.c.l.b16 %v82
  %v275 = vunpack.c.l.b16 %v83
  %v276 = vunpack.c.l.b16 %v84
  %v277 = vunpack.c.l.b16 %v85
  %v278 = vunpack.c.l.b16 %v86
  %v279 = vunpack.c.l.b16 %v87
  %v280 = vunpack.c.l.b16 %v88
  %v281 = vunpack.c.l.b16 %v89
  %v282 = vunpack.c.l.b16 %v90
  %v283 = vunpack.c.l.b16 %v91
  %v284 = vunpack.c.l.b16 %v92
  %v285 = vunpack.c.l.b16 %v93
  %v286 = vunpack.c.l.b16 %v94
  %v287 = vunpack.c.l.b16 %v95
  %v288 = vunpack.c.l.b16 %v96
  %v289 = vunpack.c.l.b16 %v97
  %v290 = vunpack.c.l.b16 %v98
  %v291 = vunpack.c.l.b16 %v99
  %v292 = vunpack.c.l.b16 %v100
  %v293 = vunpack.c.l.b16 %v101
  %v294 = vunpack.c.l.b16 %v102
  %v295 = vunpack.c.l.b16 %v103
  %v296 = vunpack.c.l.b16 %v104
  %v297 = vunpack.c.l.b16 %v105
  %v298 = vunpack.c.l.b16 %v106
  %v299 = vunpack.c.l.b16 %v107
  %v300 = vunpack.c.l.b16 %v108
  %v301 = vunpack.c.l.b16 %v109
  %v302 = vunpack.c.l.b16 %v110
  %v303 = vunpack.c.l.b16 %v111
  %v304 = vunpack.c.l.b16 %v112
  %v305 = vunpack.c.l.b16 %v113
  %v306 = vunpack.c.l.b16 %v114
  %v307 = vunpack.c.l.b16 %v115
  %v308 = vunpack.c.l.b16 %v116
  %v309 = vunpack.c.l.b16 %v117
  %v310 = vunpack.c.l.b16 %v118
  %v311 = vunpack.c.l.b16 %v119
  %v312 = vunpack.c.l.b16 %v120
  %v313 = vunpack.c.l.b16 %v121
  %v314 = vunpack.c.l.b16 %v122
  %v315 = vunpack.c.l.b16 %v123
  %v316 = vunpack.c.l.b16 %v124
  %v317 = vunpack.c.l.b16 %v125
  %v318 = vunpack.c.l.b16 %v126
  %v319 = vunpack.c.l.b16 %v127
  %v320 = vunpack.c.l.b16 %v128
  %v321 = vunpack.c.l.b16 %v129
  %v322 = vunpack.c.l.b16 %v130
  %v323 = vunpack.c.l.b16 %v131
  %v324 = vunpack.c.l.b16 %v132
  %v325 = vunpack.c.l.b16 %v133
  %v326 = vunpack.c.l.b16 %v134
  %v327 = vpack.c.b16 %v232, %v231
  %v328 = vpack.c.b16 %v234, %v233
  %v329 = vpack.c.b16 %v236, %v235
  %v330 = vpack.c.b16 %v238, %v237
  %v331 = vpack.c.b16 %v240, %v239
  %v332 = vpack.c.b16 %v242, %v241
  %v333 = vpack.c.b16 %v244, %v243
  %v334 = vpack.c.b16 %v246, %v245
  %v335 = vpack.c.b16 %v248, %v247
  %v336 = vpack.c.b16 %v250, %v249
  %v337 = vpack.c.b16 %v252, %v251
  %v338 = vpack.c.b16 %v254, %v253
  %v339 = vpack.c.b16 %v256, %v255
  %v340 = vpack.c.b16 %v258, %v257
  %v341 = vpack.c.b16 %v260, %v259
  %v342 = vpack.c.b16 %v262, %v261
  %v343 = vpack.c.b16 %v264, %v263
  %v344 = vpack.c.b16 %v266, %v265
  %v345 = vpack.c.b16 %v268, %v267
  %v346 = vpack.c.b16 %v270, %v269
  %v347 = vpack.c.b16 %v272, %v271
  %v348 = vpack.c.b16 %v274, %v273
  %v349 = vpack.c.b16 %v276, %v275
  %v350 = vpack.c.b16 %v278, %v277
  %v351 = vpack.c.b16 %v280, %v279
  %v352 = vpack.c.b16 %v282, %v281
  %v353 = vpack.c.b16 %v284, %v283
  %v354 = vpack.c.b16 %v286, %v285
  %v355 = vpack.c.b16 %v288, %v287
  %v356 = vpack.c.b16 %v290, %v289
  %v357 = vpack.c.b16 %v292, %v291
  %v358 = vpack.c.b16 %v294, %v293
  %v359 = vpack.c.b16 %v296, %v295
  %v360 = vpack.c.b16 %v298, %v297
  %v361 = vpack.c.b16 %v300, %v299
  %v362 = vpack.c.b16 %v302, %v301
  %v363 = vpack.c.b16 %v304, %v303
  %v364 = vpack.c.b16 %v306, %v305
  %v365 = vpack.c.b16 %v308, %v307
  %v366 = vpack.c.b16 %v310, %v309
  %v367 = vpack.c.b16 %v312, %v311
  %v368 = vpack.c.b16 %v314, %v313
  %v369 = vpack.c.b16 %v316, %v315
  %v370 = vpack.c.b16 %v318, %v317
  %v371 = vpack.c.b16 %v320, %v319
  %v372 = vpack.c.b16 %v322, %v321
  %v373 = vpack.c.b16 %v324, %v323
  %v374 = vpack.c.b16 %v326, %v325
  %423 = vmatprep.subr.bf16.mxu0 0
  %424 = vmatpush1.bf16.msra.mxu0 %v327
  %425 = vmatprep.subr.bf16.mxu0 0
  %426 = vmatpush1.bf16.msra.mxu0 %v328
  %427 = vmatprep.subr.bf16.mxu0 0
  %428 = vmatpush1.bf16.msra.mxu0 %v329
  %429 = vmatprep.subr.bf16.mxu0 0
  %430 = vmatpush1.bf16.msra.mxu0 %v330
  %431 = vmatprep.subr.bf16.mxu0 0
  %432 = vmatpush1.bf16.msra.mxu0 %v331
  %433 = vmatprep.subr.bf16.mxu0 0
  %434 = vmatpush1.bf16.msra.mxu0 %v332
  %435 = vmatprep.subr.bf16.mxu0 0
  %436 = vmatpush1.bf16.msra.mxu0 %v333
  %437 = vmatprep.subr.bf16.mxu0 0
  %438 = vmatpush1.bf16.msra.mxu0 %v334
  %439 = vmatprep.subr.bf16.mxu0 0
  %440 = vmatpush1.bf16.msra.mxu0 %v335
  %441 = vmatprep.subr.bf16.mxu0 0
  %442 = vmatpush1.bf16.msra.mxu0 %v336
  %443 = vmatprep.subr.bf16.mxu0 0
  %444 = vmatpush1.bf16.msra.mxu0 %v337
  %445 = vmatprep.subr.bf16.mxu0 0
  %446 = vmatpush1.bf16.msra.mxu0 %v338
  %447 = vmatprep.subr.bf16.mxu0 0
  %448 = vmatpush1.bf16.msra.mxu0 %v339
  %449 = vmatprep.subr.bf16.mxu0 0
  %450 = vmatpush1.bf16.msra.mxu0 %v340
  %451 = vmatprep.subr.bf16.mxu0 0
  %452 = vmatpush1.bf16.msra.mxu0 %v341
  %453 = vmatprep.subr.bf16.mxu0 0
  %454 = vmatpush1.bf16.msra.mxu0 %v342
  %455 = vmatprep.mubr.bf16.mxu0 %v34
  %456 = vmatmul.mubr.bf16.gmra.mrb[0].mxu0 %v33
  %v457 = vpop.f32.mrb[0].mxu0
  %v458 = vadd.f32 0.0, %v457
  %v459 = vpop.f32.mrb[0].mxu0
  %v460 = vpop.f32.mrb[0].mxu0
  %v461 = vpop.f32.mrb[0].mxu0
  %462 = vdwg.mxu0
  %463 = vmatprep.subr.bf16.mxu0 0
  %464 = vmatpush1.bf16.msra.mxu0 %v343
  %465 = vmatprep.subr.bf16.mxu0 0
  %466 = vmatpush1.bf16.msra.mxu0 %v344
  %467 = vmatprep.subr.bf16.mxu0 0
  %468 = vmatpush1.bf16.msra.mxu0 %v345
  %469 = vmatprep.subr.bf16.mxu0 0
  %470 = vmatpush1.bf16.msra.mxu0 %v346
  %471 = vmatprep.subr.bf16.mxu0 0
  %472 = vmatpush1.bf16.msra.mxu0 %v347
  %473 = vmatprep.subr.bf16.mxu0 0
  %474 = vmatpush1.bf16.msra.mxu0 %v348
  %475 = vmatprep.subr.bf16.mxu0 0
  %476 = vmatpush1.bf16.msra.mxu0 %v349
  %477 = vmatprep.subr.bf16.mxu0 0
  %478 = vmatpush1.bf16.msra.mxu0 %v350
  %479 = vmatprep.subr.bf16.mxu0 0
  %480 = vmatpush1.bf16.msra.mxu0 %v351
  %481 = vmatprep.subr.bf16.mxu0 0
  %482 = vmatpush1.bf16.msra.mxu0 %v352
  %483 = vmatprep.subr.bf16.mxu0 0
  %484 = vmatpush1.bf16.msra.mxu0 %v353
  %485 = vmatprep.subr.bf16.mxu0 0
  %486 = vmatpush1.bf16.msra.mxu0 %v354
  %487 = vmatprep.subr.bf16.mxu0 0
  %488 = vmatpush1.bf16.msra.mxu0 %v355
  %489 = vmatprep.subr.bf16.mxu0 0
  %490 = vmatpush1.bf16.msra.mxu0 %v356
  %491 = vmatprep.subr.bf16.mxu0 0
  %492 = vmatpush1.bf16.msra.mxu0 %v357
  %493 = vmatprep.subr.bf16.mxu0 0
  %494 = vmatpush1.bf16.msra.mxu0 %v358
  %495 = vmatprep.mubr.bf16.mxu0 %v36
  %496 = vmatmul.mubr.bf16.gmra.mrb[0].mxu0 %v35
  %v497 = vpop.f32.mrb[0].mxu0
  %v498 = vadd.f32 %v458, %v497
  %v499 = vpop.f32.mrb[0].mxu0
  %v500 = vpop.f32.mrb[0].mxu0
  %v501 = vpop.f32.mrb[0].mxu0
  %502 = vdwg.mxu0
  %503 = vmatprep.subr.bf16.mxu0 0
  %504 = vmatpush1.bf16.msra.mxu0 %v359
  %505 = vmatprep.subr.bf16.mxu0 0
  %506 = vmatpush1.bf16.msra.mxu0 %v360
  %507 = vmatprep.subr.bf16.mxu0 0
  %508 = vmatpush1.bf16.msra.mxu0 %v361
  %509 = vmatprep.subr.bf16.mxu0 0
  %510 = vmatpush1.bf16.msra.mxu0 %v362
  %511 = vmatprep.subr.bf16.mxu0 0
  %512 = vmatpush1.bf16.msra.mxu0 %v363
  %513 = vmatprep.subr.bf16.mxu0 0
  %514 = vmatpush1.bf16.msra.mxu0 %v364
  %515 = vmatprep.subr.bf16.mxu0 0
  %516 = vmatpush1.bf16.msra.mxu0 %v365
  %517 = vmatprep.subr.bf16.mxu0 0
  %518 = vmatpush1.bf16.msra.mxu0 %v366
  %519 = vmatprep.subr.bf16.mxu0 0
  %520 = vmatpush1.bf16.msra.mxu0 %v367
  %521 = vmatprep.subr.bf16.mxu0 0
  %522 = vmatpush1.bf16.msra.mxu0 %v368
  %523 = vmatprep.subr.bf16.mxu0 0
  %524 = vmatpush1.bf16.msra.mxu0 %v369
  %525 = vmatprep.subr.bf16.mxu0 0
  %526 = vmatpush1.bf16.msra.mxu0 %v370
  %527 = vmatprep.subr.bf16.mxu0 0
  %528 = vmatpush1.bf16.msra.mxu0 %v371
  %529 = vmatprep.subr.bf16.mxu0 0
  %530 = vmatpush1.bf16.msra.mxu0 %v372
  %531 = vmatprep.subr.bf16.mxu0 0
  %532 = vmatpush1.bf16.msra.mxu0 %v373
  %533 = vmatprep.subr.bf16.mxu0 0
  %534 = vmatpush1.bf16.msra.mxu0 %v374
  %535 = vmatprep.mubr.bf16.mxu0 %v38
  %536 = vmatmul.mubr.bf16.gmra.mrb[0].mxu0 %v37
  %v537 = vpop.f32.mrb[0].mxu0
  %v538 = vadd.f32 %v498, %v537
  %v539 = vpop.f32.mrb[0].mxu0
  %v540 = vpop.f32.mrb[0].mxu0
  %v541 = vpop.f32.mrb[0].mxu0
  %542 = vdwg.mxu0
  %v543 = vmax.f32 %v538, 0.0
  %v544 = vpack.c.bf16 %v543, %v543
  %v545 = vld [vmem:[%s2] sm:$0xf]
  %v546 = vld [vmem:[%s2 + $0x4] sm:$0xf]
  %v547 = vld [vmem:[%s2 + $0x8] sm:$0xf]
  %v548 = vld [vmem:[%s2 + $0xc] sm:$0xf]
  %v553 = vunpack.c.l.b16 %v545
  %v554 = vunpack.c.l.b16 %v546
  %v555 = vunpack.c.l.b16 %v547
  %v556 = vunpack.c.l.b16 %v548
  %v557 = vpack.c.b16 %v554, %v553
  %v558 = vpack.c.b16 %v556, %v555
  %vm561 = vcmask 261120
  %v563 = vsel %vm561, %v544, 0
  %565 = vmatprep.subr.bf16.mxu0 0
  %566 = vmatpush1.bf16.msra.mxu0 %v557
  %567 = vmatprep.subr.bf16.mxu0 0
  %568 = vmatpush1.bf16.msra.mxu0 %v558
  %569 = vmatprep.subr.bf16.mxu0 0
  %570 = vmatpush1.bf16.msra.mxu0 0
  %571 = vmatprep.subr.bf16.mxu0 0
  %572 = vmatpush1.bf16.msra.mxu0 0
  %573 = vmatprep.subr.bf16.mxu0 0
  %574 = vmatpush1.bf16.msra.mxu0 0
  %575 = vmatprep.subr.bf16.mxu0 0
  %576 = vmatpush1.bf16.msra.mxu0 0
  %577 = vmatprep.subr.bf16.mxu0 0
  %578 = vmatpush1.bf16.msra.mxu0 0
  %579 = vmatprep.subr.bf16.mxu0 0
  %580 = vmatpush1.bf16.msra.mxu0 0
  %581 = vmatprep.subr.bf16.mxu0 0
  %582 = vmatpush1.bf16.msra.mxu0 0
  %583 = vmatprep.subr.bf16.mxu0 0
  %584 = vmatpush1.bf16.msra.mxu0 0
  %585 = vmatprep.subr.bf16.mxu0 0
  %586 = vmatpush1.bf16.msra.mxu0 0
  %587 = vmatprep.subr.bf16.mxu0 0
  %588 = vmatpush1.bf16.msra.mxu0 0
  %589 = vmatprep.subr.bf16.mxu0 0
  %590 = vmatpush1.bf16.msra.mxu0 0
  %591 = vmatprep.subr.bf16.mxu0 0
  %592 = vmatpush1.bf16.msra.mxu0 0
  %593 = vmatprep.subr.bf16.mxu0 0
  %594 = vmatpush1.bf16.msra.mxu0 0
  %595 = vmatprep.subr.bf16.mxu0 0
  %596 = vmatpush1.bf16.msra.mxu0 0
  %597 = vmatprep.mubr.bf16.mxu0 0
  %598 = vmatmul.mubr.bf16.gmra.mrb[0].mxu0 %v563
  %v599 = vpop.f32.mrb[0].mxu0
  %v600 = vadd.f32 0.0, %v599
  %v601 = vpop.f32.mrb[0].mxu0
  %v602 = vpop.f32.mrb[0].mxu0
  %v603 = vpop.f32.mrb[0].mxu0
  %604 = vdwg.mxu0
  %v605 = vmax.f32 %v600, 0.0
  %v606 = vpack.c.bf16 %v605, %v605
  %v607 = vld [vmem:[%s3] sm:$0xf]
  %v608 = vld [vmem:[%s3 + $0x4] sm:$0xf]
  %v609 = vld [vmem:[%s3 + $0x8] sm:$0xf]
  %v610 = vld [vmem:[%s3 + $0xc] sm:$0xf]
  %v611 = vld [vmem:[%s3 + $0x10] sm:$0xf]
  %v612 = vld [vmem:[%s3 + $0x14] sm:$0xf]
  %v613 = vld [vmem:[%s3 + $0x18] sm:$0xf]
  %v614 = vld [vmem:[%s3 + $0x1c] sm:$0xf]
  %v623 = vunpack.c.l.b16 %v607
  %v624 = vunpack.c.l.b16 %v608
  %v625 = vunpack.c.l.b16 %v609
  %v626 = vunpack.c.l.b16 %v610
  %v627 = vunpack.c.l.b16 %v611
  %v628 = vunpack.c.l.b16 %v612
  %v629 = vunpack.c.l.b16 %v613
  %v630 = vunpack.c.l.b16 %v614
  %v631 = vpack.c.b16 %v624, %v623
  %v632 = vpack.c.b16 %v626, %v625
  %v633 = vpack.c.b16 %v628, %v627
  %v634 = vpack.c.b16 %v630, %v629
  %vm639 = vcmask 523264
  %v641 = vsel %vm639, %v606, 0
  %643 = vmatprep.subr.bf16.mxu0 0
  %644 = vmatpush1.bf16.msra.mxu0 %v631
  %645 = vmatprep.subr.bf16.mxu0 0
  %646 = vmatpush1.bf16.msra.mxu0 %v632
  %647 = vmatprep.subr.bf16.mxu0 0
  %648 = vmatpush1.bf16.msra.mxu0 %v633
  %649 = vmatprep.subr.bf16.mxu0 0
  %650 = vmatpush1.bf16.msra.mxu0 %v634
  %651 = vmatprep.subr.bf16.mxu0 0
  %652 = vmatpush1.bf16.msra.mxu0 0
  %653 = vmatprep.subr.bf16.mxu0 0
  %654 = vmatpush1.bf16.msra.mxu0 0
  %655 = vmatprep.subr.bf16.mxu0 0
  %656 = vmatpush1.bf16.msra.mxu0 0
  %657 = vmatprep.subr.bf16.mxu0 0
  %658 = vmatpush1.bf16.msra.mxu0 0
  %659 = vmatprep.subr.bf16.mxu0 0
  %660 = vmatpush1.bf16.msra.mxu0 0
  %661 = vmatprep.subr.bf16.mxu0 0
  %662 = vmatpush1.bf16.msra.mxu0 0
  %663 = vmatprep.subr.bf16.mxu0 0
  %664 = vmatpush1.bf16.msra.mxu0 0
  %665 = vmatprep.subr.bf16.mxu0 0
  %666 = vmatpush1.bf16.msra.mxu0 0
  %667 = vmatprep.subr.bf16.mxu0 0
  %668 = vmatpush1.bf16.msra.mxu0 0
  %669 = vmatprep.subr.bf16.mxu0 0
  %670 = vmatpush1.bf16.msra.mxu0 0
  %671 = vmatprep.subr.bf16.mxu0 0
  %672 = vmatpush1.bf16.msra.mxu0 0
  %673 = vmatprep.subr.bf16.mxu0 0
  %674 = vmatpush1.bf16.msra.mxu0 0
  %675 = vmatprep.mubr.bf16.mxu0 0
  %676 = vmatmul.mubr.bf16.gmra.mrb[0].mxu0 %v641
  %v677 = vpop.f32.mrb[0].mxu0
  %v678 = vadd.f32 0.0, %v677
  %v679 = vpop.f32.mrb[0].mxu0
  %v680 = vpop.f32.mrb[0].mxu0
  %v681 = vpop.f32.mrb[0].mxu0
  %682 = vdwg.mxu0
  %v683 = vmax.f32 %v678, 0.0
  %v684 = vpack.c.bf16 %v683, %v683
  %v685 = vld [vmem:[%s4] sm:$0xf]
  %v686 = vld [vmem:[%s4 + $0x4] sm:$0xf]
  %v687 = vld [vmem:[%s4 + $0x8] sm:$0xf]
  %v688 = vld [vmem:[%s4 + $0xc] sm:$0xf]
  %v689 = vld [vmem:[%s4 + $0x10] sm:$0xf]
  %v690 = vld [vmem:[%s4 + $0x14] sm:$0xf]
  %v691 = vld [vmem:[%s4 + $0x18] sm:$0xf]
  %v692 = vld [vmem:[%s4 + $0x1c] sm:$0xf]
  %v693 = vld [vmem:[%s4 + $0x20] sm:$0xf]
  %v694 = vld [vmem:[%s4 + $0x24] sm:$0xf]
  %v695 = vld [vmem:[%s4 + $0x28] sm:$0xf]
  %v696 = vld [vmem:[%s4 + $0x2c] sm:$0xf]
  %v697 = vld [vmem:[%s4 + $0x30] sm:$0xf]
  %v698 = vld [vmem:[%s4 + $0x34] sm:$0xf]
  %v699 = vld [vmem:[%s4 + $0x38] sm:$0xf]
  %v700 = vld [vmem:[%s4 + $0x3c] sm:$0xf]
  %v717 = vunpack.c.l.b16 %v685
  %v718 = vunpack.c.l.b16 %v686
  %v719 = vunpack.c.l.b16 %v687
  %v720 = vunpack.c.l.b16 %v688
  %v721 = vunpack.c.l.b16 %v689
  %v722 = vunpack.c.l.b16 %v690
  %v723 = vunpack.c.l.b16 %v691
  %v724 = vunpack.c.l.b16 %v692
  %v725 = vunpack.c.l.b16 %v693
  %v726 = vunpack.c.l.b16 %v694
  %v727 = vunpack.c.l.b16 %v695
  %v728 = vunpack.c.l.b16 %v696
  %v729 = vunpack.c.l.b16 %v697
  %v730 = vunpack.c.l.b16 %v698
  %v731 = vunpack.c.l.b16 %v699
  %v732 = vunpack.c.l.b16 %v700
  %v733 = vpack.c.b16 %v718, %v717
  %v734 = vpack.c.b16 %v720, %v719
  %v735 = vpack.c.b16 %v722, %v721
  %v736 = vpack.c.b16 %v724, %v723
  %v737 = vpack.c.b16 %v726, %v725
  %v738 = vpack.c.b16 %v728, %v727
  %v739 = vpack.c.b16 %v730, %v729
  %v740 = vpack.c.b16 %v732, %v731
  %749 = vmatprep.subr.bf16.mxu0 0
  %750 = vmatpush1.bf16.msra.mxu0 %v733
  %751 = vmatprep.subr.bf16.mxu0 0
  %752 = vmatpush1.bf16.msra.mxu0 %v734
  %753 = vmatprep.subr.bf16.mxu0 0
  %754 = vmatpush1.bf16.msra.mxu0 %v735
  %755 = vmatprep.subr.bf16.mxu0 0
  %756 = vmatpush1.bf16.msra.mxu0 %v736
  %757 = vmatprep.subr.bf16.mxu0 0
  %758 = vmatpush1.bf16.msra.mxu0 %v737
  %759 = vmatprep.subr.bf16.mxu0 0
  %760 = vmatpush1.bf16.msra.mxu0 %v738
  %761 = vmatprep.subr.bf16.mxu0 0
  %762 = vmatpush1.bf16.msra.mxu0 %v739
  %763 = vmatprep.subr.bf16.mxu0 0
  %764 = vmatpush1.bf16.msra.mxu0 %v740
  %765 = vmatprep.subr.bf16.mxu0 0
  %766 = vmatpush1.bf16.msra.mxu0 0
  %767 = vmatprep.subr.bf16.mxu0 0
  %768 = vmatpush1.bf16.msra.mxu0 0
  %769 = vmatprep.subr.bf16.mxu0 0
  %770 = vmatpush1.bf16.msra.mxu0 0
  %771 = vmatprep.subr.bf16.mxu0 0
  %772 = vmatpush1.bf16.msra.mxu0 0
  %773 = vmatprep.subr.bf16.mxu0 0
  %774 = vmatpush1.bf16.msra.mxu0 0
  %775 = vmatprep.subr.bf16.mxu0 0
  %776 = vmatpush1.bf16.msra.mxu0 0
  %777 = vmatprep.subr.bf16.mxu0 0
  %778 = vmatpush1.bf16.msra.mxu0 0
  %779 = vmatprep.subr.bf16.mxu0 0
  %780 = vmatpush1.bf16.msra.mxu0 0
  %781 = vmatprep.mubr.bf16.mxu0 0
  %782 = vmatmul.mubr.bf16.gmra.mrb[0].mxu0 %v684
  %v783 = vpop.f32.mrb[0].mxu0
  %v784 = vadd.f32 0.0, %v783
  %v785 = vpop.f32.mrb[0].mxu0
  %v786 = vpop.f32.mrb[0].mxu0
  %v787 = vpop.f32.mrb[0].mxu0
  %788 = vdwg.mxu0
  %v789 = vmax.f32 %v784, 0.0
  %vm790 = vcmask 19456
  %791 = vst.msk [vmem:[%s5] sm:$0xf] %vm790, %v789
  // Predicated region
  $region22: #{finet_forward.13} parent=0 // pred_check
    _
  $region23: #{finet_forward.13} parent=0 // pred_check_branch
    %793 = sbr.rel (0) target = $region25
  $region24: #{finet_forward.13} parent=0 // pred_region
    _
  $region25: #{finet_forward.13} parent=0 // pred_fallthru
    _
  // Predicated region
  $region26: #{finet_forward.13} parent=0 // pred_check
    _
  $region27: #{finet_forward.13} parent=0 // pred_check_branch
    %795 = sbr.rel (0) target = $region29
  $region28: #{finet_forward.13} parent=0 // pred_region
    _
  $region29: #{finet_forward.13} parent=0 // pred_fallthru
    _

// kernel: finet_forward.10
$region0: #{finet_forward.10}
  #allocation0 [shape = 'u32[]', space=smem, size = 0x4, offset = 0x4, fixed_abs, tag = 'smem constant byte address 0x4 - core index']
  #allocation1 [shape = 'u32[144,128]{1,0:T(1,128)}', space=vmem, size = 0x12000, scoped, tag = 'internal scratch']
  %s0 = inlined_call_operand.vmem [shape: f32[4,2944], index: 0, kind: input, shape index: {}]
  %s1 = inlined_call_operand.vmem [shape: bf16[2944,128], index: 1, kind: input, shape index: {}]
  %s2 = inlined_call_operand.vmem [shape: bf16[128,128], index: 2, kind: input, shape index: {}]
  %s3 = inlined_call_operand.vmem [shape: bf16[128,256], index: 3, kind: input, shape index: {}]
  %s4 = inlined_call_operand.vmem [shape: f32[4,256], index: 4, kind: output, shape index: {}]
  %s5 = sld [smem:[#allocation0]]
  $region26: #{finet_forward.10} parent=0
    _
  %s7 = ssub.s32 1, %s5
  %s8 = scalar_select 0, %s7, %s5
  // Predicated region
  $region2: #{finet_forward.10} parent=0 // pred_check
    _
  $region3: #{finet_forward.10} parent=0 // pred_check_branch
    %10 = sbr.rel (0) target = $region5
  $region4: #{finet_forward.10} parent=0 // pred_region
    _
  $region5: #{finet_forward.10} parent=0 // pred_fallthru
    _
  // Predicated region
  $region6: #{finet_forward.10} parent=0 // pred_check
    _
  $region7: #{finet_forward.10} parent=0 // pred_check_branch
    %12 = sbr.rel (0) target = $region9
  $region8: #{finet_forward.10} parent=0 // pred_region
    _
  $region9: #{finet_forward.10} parent=0 // pred_fallthru
    _
  // Predicated region
  $region10: #{finet_forward.10} parent=0 // pred_check
    _
  $region11: #{finet_forward.10} parent=0 // pred_check_branch
    %14 = sbr.rel (0) target = $region13
  $region12: #{finet_forward.10} parent=0 // pred_region
    _
  $region13: #{finet_forward.10} parent=0 // pred_fallthru
    _
  // Predicated region
  $region14: #{finet_forward.10} parent=0 // pred_check
    _
  $region15: #{finet_forward.10} parent=0 // pred_check_branch
    %16 = sbr.rel (0) target = $region17
  $region16: #{finet_forward.10} parent=0 // pred_region
    _
  $region17: #{finet_forward.10} parent=0 // pred_fallthru
    _
  %v18 = vld [vmem:[%s0] sm:$0xff]
  %v19 = vld [vmem:[%s0 + $0x8] sm:$0xff]
  %v20 = vld [vmem:[%s0 + $0x10] sm:$0xff]
  %v21 = vld [vmem:[%s0 + $0x18] sm:$0xff]
  %v22 = vld [vmem:[%s0 + $0x20] sm:$0xff]
  %v23 = vld [vmem:[%s0 + $0x28] sm:$0xff]
  %v24 = vld [vmem:[%s0 + $0x30] sm:$0xff]
  %v25 = vld [vmem:[%s0 + $0x38] sm:$0xff]
  %v26 = vld [vmem:[%s0 + $0x40] sm:$0xff]
  %v27 = vld [vmem:[%s0 + $0x48] sm:$0xff]
  %v28 = vld [vmem:[%s0 + $0x50] sm:$0xff]
  %v29 = vld [vmem:[%s0 + $0x58] sm:$0xf]
  %v41 = vcombine.high %v18, %v18
  %v42 = vcombine.high %v19, %v19
  %v43 = vcombine.high %v20, %v20
  %v44 = vcombine.high %v21, %v21
  %v45 = vcombine.high %v22, %v22
  %v46 = vcombine.high %v23, %v23
  %v47 = vcombine.high %v24, %v24
  %v48 = vcombine.high %v25, %v25
  %v49 = vcombine.high %v26, %v26
  %v50 = vcombine.high %v27, %v27
  %v51 = vcombine.high %v28, %v28
  %v63 = vpack.c.bf16 %v18, %v18
  %v64 = vpack.c.bf16 %v41, %v41
  %v65 = vpack.c.bf16 %v19, %v19
  %v66 = vpack.c.bf16 %v42, %v42
  %v67 = vpack.c.bf16 %v20, %v20
  %v68 = vpack.c.bf16 %v43, %v43
  %v69 = vpack.c.bf16 %v21, %v21
  %v70 = vpack.c.bf16 %v44, %v44
  %v71 = vpack.c.bf16 %v22, %v22
  %v72 = vpack.c.bf16 %v45, %v45
  %v73 = vpack.c.bf16 %v23, %v23
  %v74 = vpack.c.bf16 %v46, %v46
  %v75 = vpack.c.bf16 %v24, %v24
  %v76 = vpack.c.bf16 %v47, %v47
  %v77 = vpack.c.bf16 %v25, %v25
  %v78 = vpack.c.bf16 %v48, %v48
  %v79 = vpack.c.bf16 %v26, %v26
  %v80 = vpack.c.bf16 %v49, %v49
  %v81 = vpack.c.bf16 %v27, %v27
  %v82 = vpack.c.bf16 %v50, %v50
  %v83 = vpack.c.bf16 %v28, %v28
  %v84 = vpack.c.bf16 %v51, %v51
  %v85 = vpack.c.bf16 %v29, %v29
  %v86 = vld [vmem:[%s1] sm:$0xf]
  %v87 = vld [vmem:[%s1 + $0x4] sm:$0xf]
  %v88 = vld [vmem:[%s1 + $0x8] sm:$0xf]
  %v89 = vld [vmem:[%s1 + $0xc] sm:$0xf]
  %v90 = vld [vmem:[%s1 + $0x10] sm:$0xf]
  %v91 = vld [vmem:[%s1 + $0x14] sm:$0xf]
  %v92 = vld [vmem:[%s1 + $0x18] sm:$0xf]
  %v93 = vld [vmem:[%s1 + $0x1c] sm:$0xf]
  %v94 = vld [vmem:[%s1 + $0x20] sm:$0xf]
  %v95 = vld [vmem:[%s1 + $0x24] sm:$0xf]
  %v96 = vld [vmem:[%s1 + $0x28] sm:$0xf]
  %v97 = vld [vmem:[%s1 + $0x2c] sm:$0xf]
  %v98 = vld [vmem:[%s1 + $0x30] sm:$0xf]
  %v99 = vld [vmem:[%s1 + $0x34] sm:$0xf]
  %v100 = vld [vmem:[%s1 + $0x38] sm:$0xf]
  %v101 = vld [vmem:[%s1 + $0x3c] sm:$0xf]
  %v102 = vld [vmem:[%s1 + $0x40] sm:$0xf]
  %v103 = vld [vmem:[%s1 + $0x44] sm:$0xf]
  %v104 = vld [vmem:[%s1 + $0x48] sm:$0xf]
  %v105 = vld [vmem:[%s1 + $0x4c] sm:$0xf]
  %v106 = vld [vmem:[%s1 + $0x50] sm:$0xf]
  %v107 = vld [vmem:[%s1 + $0x54] sm:$0xf]
  %v108 = vld [vmem:[%s1 + $0x58] sm:$0xf]
  %v109 = vld [vmem:[%s1 + $0x5c] sm:$0xf]
  %v110 = vld [vmem:[%s1 + $0x60] sm:$0xf]
  %v111 = vld [vmem:[%s1 + $0x64] sm:$0xf]
  %v112 = vld [vmem:[%s1 + $0x68] sm:$0xf]
  %v113 = vld [vmem:[%s1 + $0x6c] sm:$0xf]
  %v114 = vld [vmem:[%s1 + $0x70] sm:$0xf]
  %v115 = vld [vmem:[%s1 + $0x74] sm:$0xf]
  %v116 = vld [vmem:[%s1 + $0x78] sm:$0xf]
  %v117 = vld [vmem:[%s1 + $0x7c] sm:$0xf]
  %v118 = vld [vmem:[%s1 + $0x80] sm:$0xf]
  %v119 = vld [vmem:[%s1 + $0x84] sm:$0xf]
  %v120 = vld [vmem:[%s1 + $0x88] sm:$0xf]
  %v121 = vld [vmem:[%s1 + $0x8c] sm:$0xf]
  %v122 = vld [vmem:[%s1 + $0x90] sm:$0xf]
  %v123 = vld [vmem:[%s1 + $0x94] sm:$0xf]
  %v124 = vld [vmem:[%s1 + $0x98] sm:$0xf]
  %v125 = vld [vmem:[%s1 + $0x9c] sm:$0xf]
  %v126 = vld [vmem:[%s1 + $0xa0] sm:$0xf]
  %v127 = vld [vmem:[%s1 + $0xa4] sm:$0xf]
  %v128 = vld [vmem:[%s1 + $0xa8] sm:$0xf]
  %v129 = vld [vmem:[%s1 + $0xac] sm:$0xf]
  %v130 = vld [vmem:[%s1 + $0xb0] sm:$0xf]
  %v131 = vld [vmem:[%s1 + $0xb4] sm:$0xf]
  %v132 = vld [vmem:[%s1 + $0xb8] sm:$0xf]
  %v133 = vld [vmem:[%s1 + $0xbc] sm:$0xf]
  %v134 = vld [vmem:[%s1 + $0xc0] sm:$0xf]
  %v135 = vld [vmem:[%s1 + $0xc4] sm:$0xf]
  %v136 = vld [vmem:[%s1 + $0xc8] sm:$0xf]
  %v137 = vld [vmem:[%s1 + $0xcc] sm:$0xf]
  %v138 = vld [vmem:[%s1 + $0xd0] sm:$0xf]
  %v139 = vld [vmem:[%s1 + $0xd4] sm:$0xf]
  %v140 = vld [vmem:[%s1 + $0xd8] sm:$0xf]
  %v141 = vld [vmem:[%s1 + $0xdc] sm:$0xf]
  %v142 = vld [vmem:[%s1 + $0xe0] sm:$0xf]
  %v143 = vld [vmem:[%s1 + $0xe4] sm:$0xf]
  %v144 = vld [vmem:[%s1 + $0xe8] sm:$0xf]
  %v145 = vld [vmem:[%s1 + $0xec] sm:$0xf]
  %v146 = vld [vmem:[%s1 + $0xf0] sm:$0xf]
  %v147 = vld [vmem:[%s1 + $0xf4] sm:$0xf]
  %v148 = vld [vmem:[%s1 + $0xf8] sm:$0xf]
  %v149 = vld [vmem:[%s1 + $0xfc] sm:$0xf]
  %v150 = vld [vmem:[%s1 + $0x100] sm:$0xf]
  %v151 = vld [vmem:[%s1 + $0x104] sm:$0xf]
  %v152 = vld [vmem:[%s1 + $0x108] sm:$0xf]
  %v153 = vld [vmem:[%s1 + $0x10c] sm:$0xf]
  %v154 = vld [vmem:[%s1 + $0x110] sm:$0xf]
  %v155 = vld [vmem:[%s1 + $0x114] sm:$0xf]
  %v156 = vld [vmem:[%s1 + $0x118] sm:$0xf]
  %v157 = vld [vmem:[%s1 + $0x11c] sm:$0xf]
  %v158 = vld [vmem:[%s1 + $0x120] sm:$0xf]
  %v159 = vld [vmem:[%s1 + $0x124] sm:$0xf]
  %v160 = vld [vmem:[%s1 + $0x128] sm:$0xf]
  %v161 = vld [vmem:[%s1 + $0x12c] sm:$0xf]
  %v162 = vld [vmem:[%s1 + $0x130] sm:$0xf]
  %v163 = vld [vmem:[%s1 + $0x134] sm:$0xf]
  %v164 = vld [vmem:[%s1 + $0x138] sm:$0xf]
  %v165 = vld [vmem:[%s1 + $0x13c] sm:$0xf]
  %v166 = vld [vmem:[%s1 + $0x140] sm:$0xf]
  %v167 = vld [vmem:[%s1 + $0x144] sm:$0xf]
  %v168 = vld [vmem:[%s1 + $0x148] sm:$0xf]
  %v169 = vld [vmem:[%s1 + $0x14c] sm:$0xf]
  %v170 = vld [vmem:[%s1 + $0x150] sm:$0xf]
  %v171 = vld [vmem:[%s1 + $0x154] sm:$0xf]
  %v172 = vld [vmem:[%s1 + $0x158] sm:$0xf]
  %v173 = vld [vmem:[%s1 + $0x15c] sm:$0xf]
  %v174 = vld [vmem:[%s1 + $0x160] sm:$0xf]
  %v175 = vld [vmem:[%s1 + $0x164] sm:$0xf]
  %v176 = vld [vmem:[%s1 + $0x168] sm:$0xf]
  %v177 = vld [vmem:[%s1 + $0x16c] sm:$0xf]
  %v178 = vld [vmem:[%s1 + $0x170] sm:$0xf]
  %v179 = vld [vmem:[%s1 + $0x174] sm:$0xf]
  %v180 = vld [vmem:[%s1 + $0x178] sm:$0xf]
  %v181 = vld [vmem:[%s1 + $0x17c] sm:$0xf]
  %v182 = vld [vmem:[%s1 + $0x180] sm:$0xf]
  %v183 = vld [vmem:[%s1 + $0x184] sm:$0xf]
  %v184 = vld [vmem:[%s1 + $0x188] sm:$0xf]
  %v185 = vld [vmem:[%s1 + $0x18c] sm:$0xf]
  %v186 = vld [vmem:[%s1 + $0x190] sm:$0xf]
  %v187 = vld [vmem:[%s1 + $0x194] sm:$0xf]
  %v188 = vld [vmem:[%s1 + $0x198] sm:$0xf]
  %v189 = vld [vmem:[%s1 + $0x19c] sm:$0xf]
  %v190 = vld [vmem:[%s1 + $0x1a0] sm:$0xf]
  %v191 = vld [vmem:[%s1 + $0x1a4] sm:$0xf]
  %v192 = vld [vmem:[%s1 + $0x1a8] sm:$0xf]
  %v193 = vld [vmem:[%s1 + $0x1ac] sm:$0xf]
  %v194 = vld [vmem:[%s1 + $0x1b0] sm:$0xf]
  %v195 = vld [vmem:[%s1 + $0x1b4] sm:$0xf]
  %v196 = vld [vmem:[%s1 + $0x1b8] sm:$0xf]
  %v197 = vld [vmem:[%s1 + $0x1bc] sm:$0xf]
  %v198 = vld [vmem:[%s1 + $0x1c0] sm:$0xf]
  %v199 = vld [vmem:[%s1 + $0x1c4] sm:$0xf]
  %v200 = vld [vmem:[%s1 + $0x1c8] sm:$0xf]
  %v201 = vld [vmem:[%s1 + $0x1cc] sm:$0xf]
  %v202 = vld [vmem:[%s1 + $0x1d0] sm:$0xf]
  %v203 = vld [vmem:[%s1 + $0x1d4] sm:$0xf]
  %v204 = vld [vmem:[%s1 + $0x1d8] sm:$0xf]
  %v205 = vld [vmem:[%s1 + $0x1dc] sm:$0xf]
  %v206 = vld [vmem:[%s1 + $0x1e0] sm:$0xf]
  %v207 = vld [vmem:[%s1 + $0x1e4] sm:$0xf]
  %v208 = vld [vmem:[%s1 + $0x1e8] sm:$0xf]
  %v209 = vld [vmem:[%s1 + $0x1ec] sm:$0xf]
  %v210 = vld [vmem:[%s1 + $0x1f0] sm:$0xf]
  %v211 = vld [vmem:[%s1 + $0x1f4] sm:$0xf]
  %v212 = vld [vmem:[%s1 + $0x1f8] sm:$0xf]
  %v213 = vld [vmem:[%s1 + $0x1fc] sm:$0xf]
  %v214 = vld [vmem:[%s1 + $0x200] sm:$0xf]
  %v215 = vld [vmem:[%s1 + $0x204] sm:$0xf]
  %v216 = vld [vmem:[%s1 + $0x208] sm:$0xf]
  %v217 = vld [vmem:[%s1 + $0x20c] sm:$0xf]
  %v218 = vld [vmem:[%s1 + $0x210] sm:$0xf]
  %v219 = vld [vmem:[%s1 + $0x214] sm:$0xf]
  %v220 = vld [vmem:[%s1 + $0x218] sm:$0xf]
  %v221 = vld [vmem:[%s1 + $0x21c] sm:$0xf]
  %v222 = vld [vmem:[%s1 + $0x220] sm:$0xf]
  %v223 = vld [vmem:[%s1 + $0x224] sm:$0xf]
  %v224 = vld [vmem:[%s1 + $0x228] sm:$0xf]
  %v225 = vld [vmem:[%s1 + $0x22c] sm:$0xf]
  %v226 = vld [vmem:[%s1 + $0x230] sm:$0xf]
  %v227 = vld [vmem:[%s1 + $0x234] sm:$0xf]
  %v228 = vld [vmem:[%s1 + $0x238] sm:$0xf]
  %v229 = vld [vmem:[%s1 + $0x23c] sm:$0xf]
  %v230 = vld [vmem:[%s1 + $0x240] sm:$0xf]
  %v231 = vld [vmem:[%s1 + $0x244] sm:$0xf]
  %v232 = vld [vmem:[%s1 + $0x248] sm:$0xf]
  %v233 = vld [vmem:[%s1 + $0x24c] sm:$0xf]
  %v234 = vld [vmem:[%s1 + $0x250] sm:$0xf]
  %v235 = vld [vmem:[%s1 + $0x254] sm:$0xf]
  %v236 = vld [vmem:[%s1 + $0x258] sm:$0xf]
  %v237 = vld [vmem:[%s1 + $0x25c] sm:$0xf]
  %v238 = vld [vmem:[%s1 + $0x260] sm:$0xf]
  %v239 = vld [vmem:[%s1 + $0x264] sm:$0xf]
  %v240 = vld [vmem:[%s1 + $0x268] sm:$0xf]
  %v241 = vld [vmem:[%s1 + $0x26c] sm:$0xf]
  %v242 = vld [vmem:[%s1 + $0x270] sm:$0xf]
  %v243 = vld [vmem:[%s1 + $0x274] sm:$0xf]
  %v244 = vld [vmem:[%s1 + $0x278] sm:$0xf]
  %v245 = vld [vmem:[%s1 + $0x27c] sm:$0xf]
  %v246 = vld [vmem:[%s1 + $0x280] sm:$0xf]
  %v247 = vld [vmem:[%s1 + $0x284] sm:$0xf]
  %v248 = vld [vmem:[%s1 + $0x288] sm:$0xf]
  %v249 = vld [vmem:[%s1 + $0x28c] sm:$0xf]
  %v250 = vld [vmem:[%s1 + $0x290] sm:$0xf]
  %v251 = vld [vmem:[%s1 + $0x294] sm:$0xf]
  %v252 = vld [vmem:[%s1 + $0x298] sm:$0xf]
  %v253 = vld [vmem:[%s1 + $0x29c] sm:$0xf]
  %v254 = vld [vmem:[%s1 + $0x2a0] sm:$0xf]
  %v255 = vld [vmem:[%s1 + $0x2a4] sm:$0xf]
  %v256 = vld [vmem:[%s1 + $0x2a8] sm:$0xf]
  %v257 = vld [vmem:[%s1 + $0x2ac] sm:$0xf]
  %v258 = vld [vmem:[%s1 + $0x2b0] sm:$0xf]
  %v259 = vld [vmem:[%s1 + $0x2b4] sm:$0xf]
  %v260 = vld [vmem:[%s1 + $0x2b8] sm:$0xf]
  %v261 = vld [vmem:[%s1 + $0x2bc] sm:$0xf]
  %v262 = vld [vmem:[%s1 + $0x2c0] sm:$0xf]
  %v263 = vld [vmem:[%s1 + $0x2c4] sm:$0xf]
  %v264 = vld [vmem:[%s1 + $0x2c8] sm:$0xf]
  %v265 = vld [vmem:[%s1 + $0x2cc] sm:$0xf]
  %v266 = vld [vmem:[%s1 + $0x2d0] sm:$0xf]
  %v267 = vld [vmem:[%s1 + $0x2d4] sm:$0xf]
  %v268 = vld [vmem:[%s1 + $0x2d8] sm:$0xf]
  %v269 = vld [vmem:[%s1 + $0x2dc] sm:$0xf]
  %v270 = vld [vmem:[%s1 + $0x2e0] sm:$0xf]
  %v271 = vld [vmem:[%s1 + $0x2e4] sm:$0xf]
  %v272 = vld [vmem:[%s1 + $0x2e8] sm:$0xf]
  %v273 = vld [vmem:[%s1 + $0x2ec] sm:$0xf]
  %v274 = vld [vmem:[%s1 + $0x2f0] sm:$0xf]
  %v275 = vld [vmem:[%s1 + $0x2f4] sm:$0xf]
  %v276 = vld [vmem:[%s1 + $0x2f8] sm:$0xf]
  %v277 = vld [vmem:[%s1 + $0x2fc] sm:$0xf]
  %v278 = vld [vmem:[%s1 + $0x300] sm:$0xf]
  %v279 = vld [vmem:[%s1 + $0x304] sm:$0xf]
  %v280 = vld [vmem:[%s1 + $0x308] sm:$0xf]
  %v281 = vld [vmem:[%s1 + $0x30c] sm:$0xf]
  %v282 = vld [vmem:[%s1 + $0x310] sm:$0xf]
  %v283 = vld [vmem:[%s1 + $0x314] sm:$0xf]
  %v284 = vld [vmem:[%s1 + $0x318] sm:$0xf]
  %v285 = vld [vmem:[%s1 + $0x31c] sm:$0xf]
  %v286 = vld [vmem:[%s1 + $0x320] sm:$0xf]
  %v287 = vld [vmem:[%s1 + $0x324] sm:$0xf]
  %v288 = vld [vmem:[%s1 + $0x328] sm:$0xf]
  %v289 = vld [vmem:[%s1 + $0x32c] sm:$0xf]
  %v290 = vld [vmem:[%s1 + $0x330] sm:$0xf]
  %v291 = vld [vmem:[%s1 + $0x334] sm:$0xf]
  %v292 = vld [vmem:[%s1 + $0x338] sm:$0xf]
  %v293 = vld [vmem:[%s1 + $0x33c] sm:$0xf]
  %v294 = vld [vmem:[%s1 + $0x340] sm:$0xf]
  %v295 = vld [vmem:[%s1 + $0x344] sm:$0xf]
  %v296 = vld [vmem:[%s1 + $0x348] sm:$0xf]
  %v297 = vld [vmem:[%s1 + $0x34c] sm:$0xf]
  %v298 = vld [vmem:[%s1 + $0x350] sm:$0xf]
  %v299 = vld [vmem:[%s1 + $0x354] sm:$0xf]
  %v300 = vld [vmem:[%s1 + $0x358] sm:$0xf]
  %v301 = vld [vmem:[%s1 + $0x35c] sm:$0xf]
  %v302 = vld [vmem:[%s1 + $0x360] sm:$0xf]
  %v303 = vld [vmem:[%s1 + $0x364] sm:$0xf]
  %v304 = vld [vmem:[%s1 + $0x368] sm:$0xf]
  %v305 = vld [vmem:[%s1 + $0x36c] sm:$0xf]
  %v306 = vld [vmem:[%s1 + $0x370] sm:$0xf]
  %v307 = vld [vmem:[%s1 + $0x374] sm:$0xf]
  %v308 = vld [vmem:[%s1 + $0x378] sm:$0xf]
  %v309 = vld [vmem:[%s1 + $0x37c] sm:$0xf]
  %v310 = vld [vmem:[%s1 + $0x380] sm:$0xf]
  %v311 = vld [vmem:[%s1 + $0x384] sm:$0xf]
  %v312 = vld [vmem:[%s1 + $0x388] sm:$0xf]
  %v313 = vld [vmem:[%s1 + $0x38c] sm:$0xf]
  %v314 = vld [vmem:[%s1 + $0x390] sm:$0xf]
  %v315 = vld [vmem:[%s1 + $0x394] sm:$0xf]
  %v316 = vld [vmem:[%s1 + $0x398] sm:$0xf]
  %v317 = vld [vmem:[%s1 + $0x39c] sm:$0xf]
  %v318 = vld [vmem:[%s1 + $0x3a0] sm:$0xf]
  %v319 = vld [vmem:[%s1 + $0x3a4] sm:$0xf]
  %v320 = vld [vmem:[%s1 + $0x3a8] sm:$0xf]
  %v321 = vld [vmem:[%s1 + $0x3ac] sm:$0xf]
  %v322 = vld [vmem:[%s1 + $0x3b0] sm:$0xf]
  %v323 = vld [vmem:[%s1 + $0x3b4] sm:$0xf]
  %v324 = vld [vmem:[%s1 + $0x3b8] sm:$0xf]
  %v325 = vld [vmem:[%s1 + $0x3bc] sm:$0xf]
  %v326 = vld [vmem:[%s1 + $0x3c0] sm:$0xf]
  %v327 = vld [vmem:[%s1 + $0x3c4] sm:$0xf]
  %v328 = vld [vmem:[%s1 + $0x3c8] sm:$0xf]
  %v329 = vld [vmem:[%s1 + $0x3cc] sm:$0xf]
  %v330 = vld [vmem:[%s1 + $0x3d0] sm:$0xf]
  %v331 = vld [vmem:[%s1 + $0x3d4] sm:$0xf]
  %v332 = vld [vmem:[%s1 + $0x3d8] sm:$0xf]
  %v333 = vld [vmem:[%s1 + $0x3dc] sm:$0xf]
  %v334 = vld [vmem:[%s1 + $0x3e0] sm:$0xf]
  %v335 = vld [vmem:[%s1 + $0x3e4] sm:$0xf]
  %v336 = vld [vmem:[%s1 + $0x3e8] sm:$0xf]
  %v337 = vld [vmem:[%s1 + $0x3ec] sm:$0xf]
  %v338 = vld [vmem:[%s1 + $0x3f0] sm:$0xf]
  %v339 = vld [vmem:[%s1 + $0x3f4] sm:$0xf]
  %v340 = vld [vmem:[%s1 + $0x3f8] sm:$0xf]
  %v341 = vld [vmem:[%s1 + $0x3fc] sm:$0xf]
  %v342 = vld [vmem:[%s1 + $0x400] sm:$0xf]
  %v343 = vld [vmem:[%s1 + $0x404] sm:$0xf]
  %v344 = vld [vmem:[%s1 + $0x408] sm:$0xf]
  %v345 = vld [vmem:[%s1 + $0x40c] sm:$0xf]
  %v346 = vld [vmem:[%s1 + $0x410] sm:$0xf]
  %v347 = vld [vmem:[%s1 + $0x414] sm:$0xf]
  %v348 = vld [vmem:[%s1 + $0x418] sm:$0xf]
  %v349 = vld [vmem:[%s1 + $0x41c] sm:$0xf]
  %v350 = vld [vmem:[%s1 + $0x420] sm:$0xf]
  %v351 = vld [vmem:[%s1 + $0x424] sm:$0xf]
  %v352 = vld [vmem:[%s1 + $0x428] sm:$0xf]
  %v353 = vld [vmem:[%s1 + $0x42c] sm:$0xf]
  %v354 = vld [vmem:[%s1 + $0x430] sm:$0xf]
  %v355 = vld [vmem:[%s1 + $0x434] sm:$0xf]
  %v356 = vld [vmem:[%s1 + $0x438] sm:$0xf]
  %v357 = vld [vmem:[%s1 + $0x43c] sm:$0xf]
  %v358 = vld [vmem:[%s1 + $0x440] sm:$0xf]
  %v359 = vld [vmem:[%s1 + $0x444] sm:$0xf]
  %v360 = vld [vmem:[%s1 + $0x448] sm:$0xf]
  %v361 = vld [vmem:[%s1 + $0x44c] sm:$0xf]
  %v362 = vld [vmem:[%s1 + $0x450] sm:$0xf]
  %v363 = vld [vmem:[%s1 + $0x454] sm:$0xf]
  %v364 = vld [vmem:[%s1 + $0x458] sm:$0xf]
  %v365 = vld [vmem:[%s1 + $0x45c] sm:$0xf]
  %v366 = vld [vmem:[%s1 + $0x460] sm:$0xf]
  %v367 = vld [vmem:[%s1 + $0x464] sm:$0xf]
  %v368 = vld [vmem:[%s1 + $0x468] sm:$0xf]
  %v369 = vld [vmem:[%s1 + $0x46c] sm:$0xf]
  %v370 = vld [vmem:[%s1 + $0x470] sm:$0xf]
  %v371 = vld [vmem:[%s1 + $0x474] sm:$0xf]
  %v372 = vld [vmem:[%s1 + $0x478] sm:$0xf]
  %v373 = vld [vmem:[%s1 + $0x47c] sm:$0xf]
  %v374 = vld [vmem:[%s1 + $0x480] sm:$0xf]
  %v375 = vld [vmem:[%s1 + $0x484] sm:$0xf]
  %v376 = vld [vmem:[%s1 + $0x488] sm:$0xf]
  %v377 = vld [vmem:[%s1 + $0x48c] sm:$0xf]
  %v378 = vld [vmem:[%s1 + $0x490] sm:$0xf]
  %v379 = vld [vmem:[%s1 + $0x494] sm:$0xf]
  %v380 = vld [vmem:[%s1 + $0x498] sm:$0xf]
  %v381 = vld [vmem:[%s1 + $0x49c] sm:$0xf]
  %v382 = vld [vmem:[%s1 + $0x4a0] sm:$0xf]
  %v383 = vld [vmem:[%s1 + $0x4a4] sm:$0xf]
  %v384 = vld [vmem:[%s1 + $0x4a8] sm:$0xf]
  %v385 = vld [vmem:[%s1 + $0x4ac] sm:$0xf]
  %v386 = vld [vmem:[%s1 + $0x4b0] sm:$0xf]
  %v387 = vld [vmem:[%s1 + $0x4b4] sm:$0xf]
  %v388 = vld [vmem:[%s1 + $0x4b8] sm:$0xf]
  %v389 = vld [vmem:[%s1 + $0x4bc] sm:$0xf]
  %v390 = vld [vmem:[%s1 + $0x4c0] sm:$0xf]
  %v391 = vld [vmem:[%s1 + $0x4c4] sm:$0xf]
  %v392 = vld [vmem:[%s1 + $0x4c8] sm:$0xf]
  %v393 = vld [vmem:[%s1 + $0x4cc] sm:$0xf]
  %v394 = vld [vmem:[%s1 + $0x4d0] sm:$0xf]
  %v395 = vld [vmem:[%s1 + $0x4d4] sm:$0xf]
  %v396 = vld [vmem:[%s1 + $0x4d8] sm:$0xf]
  %v397 = vld [vmem:[%s1 + $0x4dc] sm:$0xf]
  %v398 = vld [vmem:[%s1 + $0x4e0] sm:$0xf]
  %v399 = vld [vmem:[%s1 + $0x4e4] sm:$0xf]
  %v400 = vld [vmem:[%s1 + $0x4e8] sm:$0xf]
  %v401 = vld [vmem:[%s1 + $0x4ec] sm:$0xf]
  %v402 = vld [vmem:[%s1 + $0x4f0] sm:$0xf]
  %v403 = vld [vmem:[%s1 + $0x4f4] sm:$0xf]
  %v404 = vld [vmem:[%s1 + $0x4f8] sm:$0xf]
  %v405 = vld [vmem:[%s1 + $0x4fc] sm:$0xf]
  %v406 = vld [vmem:[%s1 + $0x500] sm:$0xf]
  %v407 = vld [vmem:[%s1 + $0x504] sm:$0xf]
  %v408 = vld [vmem:[%s1 + $0x508] sm:$0xf]
  %v409 = vld [vmem:[%s1 + $0x50c] sm:$0xf]
  %v410 = vld [vmem:[%s1 + $0x510] sm:$0xf]
  %v411 = vld [vmem:[%s1 + $0x514] sm:$0xf]
  %v412 = vld [vmem:[%s1 + $0x518] sm:$0xf]
  %v413 = vld [vmem:[%s1 + $0x51c] sm:$0xf]
  %v414 = vld [vmem:[%s1 + $0x520] sm:$0xf]
  %v415 = vld [vmem:[%s1 + $0x524] sm:$0xf]
  %v416 = vld [vmem:[%s1 + $0x528] sm:$0xf]
  %v417 = vld [vmem:[%s1 + $0x52c] sm:$0xf]
  %v418 = vld [vmem:[%s1 + $0x530] sm:$0xf]
  %v419 = vld [vmem:[%s1 + $0x534] sm:$0xf]
  %v420 = vld [vmem:[%s1 + $0x538] sm:$0xf]
  %v421 = vld [vmem:[%s1 + $0x53c] sm:$0xf]
  %v422 = vld [vmem:[%s1 + $0x540] sm:$0xf]
  %v423 = vld [vmem:[%s1 + $0x544] sm:$0xf]
  %v424 = vld [vmem:[%s1 + $0x548] sm:$0xf]
  %v425 = vld [vmem:[%s1 + $0x54c] sm:$0xf]
  %v426 = vld [vmem:[%s1 + $0x550] sm:$0xf]
  %v427 = vld [vmem:[%s1 + $0x554] sm:$0xf]
  %v428 = vld [vmem:[%s1 + $0x558] sm:$0xf]
  %v429 = vld [vmem:[%s1 + $0x55c] sm:$0xf]
  %v430 = vld [vmem:[%s1 + $0x560] sm:$0xf]
  %v431 = vld [vmem:[%s1 + $0x564] sm:$0xf]
  %v432 = vld [vmem:[%s1 + $0x568] sm:$0xf]
  %v433 = vld [vmem:[%s1 + $0x56c] sm:$0xf]
  %v434 = vld [vmem:[%s1 + $0x570] sm:$0xf]
  %v435 = vld [vmem:[%s1 + $0x574] sm:$0xf]
  %v436 = vld [vmem:[%s1 + $0x578] sm:$0xf]
  %v437 = vld [vmem:[%s1 + $0x57c] sm:$0xf]
  %v438 = vld [vmem:[%s1 + $0x580] sm:$0xf]
  %v439 = vld [vmem:[%s1 + $0x584] sm:$0xf]
  %v440 = vld [vmem:[%s1 + $0x588] sm:$0xf]
  %v441 = vld [vmem:[%s1 + $0x58c] sm:$0xf]
  %v442 = vld [vmem:[%s1 + $0x590] sm:$0xf]
  %v443 = vld [vmem:[%s1 + $0x594] sm:$0xf]
  %v444 = vld [vmem:[%s1 + $0x598] sm:$0xf]
  %v445 = vld [vmem:[%s1 + $0x59c] sm:$0xf]
  %v446 = vld [vmem:[%s1 + $0x5a0] sm:$0xf]
  %v447 = vld [vmem:[%s1 + $0x5a4] sm:$0xf]
  %v448 = vld [vmem:[%s1 + $0x5a8] sm:$0xf]
  %v449 = vld [vmem:[%s1 + $0x5ac] sm:$0xf]
  %v450 = vld [vmem:[%s1 + $0x5b0] sm:$0xf]
  %v451 = vld [vmem:[%s1 + $0x5b4] sm:$0xf]
  %v452 = vld [vmem:[%s1 + $0x5b8] sm:$0xf]
  %v453 = vld [vmem:[%s1 + $0x5bc] sm:$0xf]
  %v822 = vunpack.c.l.b16 %v86
  %v823 = vunpack.c.l.b16 %v87
  %v824 = vunpack.c.l.b16 %v88
  %v825 = vunpack.c.l.b16 %v89
  %v826 = vunpack.c.l.b16 %v90
  %v827 = vunpack.c.l.b16 %v91
  %v828 = vunpack.c.l.b16 %v92
  %v829 = vunpack.c.l.b16 %v93
  %v830 = vunpack.c.l.b16 %v94
  %v831 = vunpack.c.l.b16 %v95
  %v832 = vunpack.c.l.b16 %v96
  %v833 = vunpack.c.l.b16 %v97
  %v834 = vunpack.c.l.b16 %v98
  %v835 = vunpack.c.l.b16 %v99
  %v836 = vunpack.c.l.b16 %v100
  %v837 = vunpack.c.l.b16 %v101
  %v838 = vunpack.c.l.b16 %v102
  %v839 = vunpack.c.l.b16 %v103
  %v840 = vunpack.c.l.b16 %v104
  %v841 = vunpack.c.l.b16 %v105
  %v842 = vunpack.c.l.b16 %v106
  %v843 = vunpack.c.l.b16 %v107
  %v844 = vunpack.c.l.b16 %v108
  %v845 = vunpack.c.l.b16 %v109
  %v846 = vunpack.c.l.b16 %v110
  %v847 = vunpack.c.l.b16 %v111
  %v848 = vunpack.c.l.b16 %v112
  %v849 = vunpack.c.l.b16 %v113
  %v850 = vunpack.c.l.b16 %v114
  %v851 = vunpack.c.l.b16 %v115
  %v852 = vunpack.c.l.b16 %v116
  %v853 = vunpack.c.l.b16 %v117
  %v854 = vunpack.c.l.b16 %v118
  %v855 = vunpack.c.l.b16 %v119
  %v856 = vunpack.c.l.b16 %v120
  %v857 = vunpack.c.l.b16 %v121
  %v858 = vunpack.c.l.b16 %v122
  %v859 = vunpack.c.l.b16 %v123
  %v860 = vunpack.c.l.b16 %v124
  %v861 = vunpack.c.l.b16 %v125
  %v862 = vunpack.c.l.b16 %v126
  %v863 = vunpack.c.l.b16 %v127
  %v864 = vunpack.c.l.b16 %v128
  %v865 = vunpack.c.l.b16 %v129
  %v866 = vunpack.c.l.b16 %v130
  %v867 = vunpack.c.l.b16 %v131
  %v868 = vunpack.c.l.b16 %v132
  %v869 = vunpack.c.l.b16 %v133
  %v870 = vunpack.c.l.b16 %v134
  %v871 = vunpack.c.l.b16 %v135
  %v872 = vunpack.c.l.b16 %v136
  %v873 = vunpack.c.l.b16 %v137
  %v874 = vunpack.c.l.b16 %v138
  %v875 = vunpack.c.l.b16 %v139
  %v876 = vunpack.c.l.b16 %v140
  %v877 = vunpack.c.l.b16 %v141
  %v878 = vunpack.c.l.b16 %v142
  %v879 = vunpack.c.l.b16 %v143
  %v880 = vunpack.c.l.b16 %v144
  %v881 = vunpack.c.l.b16 %v145
  %v882 = vunpack.c.l.b16 %v146
  %v883 = vunpack.c.l.b16 %v147
  %v884 = vunpack.c.l.b16 %v148
  %v885 = vunpack.c.l.b16 %v149
  %v886 = vunpack.c.l.b16 %v150
  %v887 = vunpack.c.l.b16 %v151
  %v888 = vunpack.c.l.b16 %v152
  %v889 = vunpack.c.l.b16 %v153
  %v890 = vunpack.c.l.b16 %v154
  %v891 = vunpack.c.l.b16 %v155
  %v892 = vunpack.c.l.b16 %v156
  %v893 = vunpack.c.l.b16 %v157
  %v894 = vunpack.c.l.b16 %v158
  %v895 = vunpack.c.l.b16 %v159
  %v896 = vunpack.c.l.b16 %v160
  %v897 = vunpack.c.l.b16 %v161
  %v898 = vunpack.c.l.b16 %v162
  %v899 = vunpack.c.l.b16 %v163
  %v900 = vunpack.c.l.b16 %v164
  %v901 = vunpack.c.l.b16 %v165
  %v902 = vunpack.c.l.b16 %v166
  %v903 = vunpack.c.l.b16 %v167
  %v904 = vunpack.c.l.b16 %v168
  %v905 = vunpack.c.l.b16 %v169
  %v906 = vunpack.c.l.b16 %v170
  %v907 = vunpack.c.l.b16 %v171
  %v908 = vunpack.c.l.b16 %v172
  %v909 = vunpack.c.l.b16 %v173
  %v910 = vunpack.c.l.b16 %v174
  %v911 = vunpack.c.l.b16 %v175
  %v912 = vunpack.c.l.b16 %v176
  %v913 = vunpack.c.l.b16 %v177
  %v914 = vunpack.c.l.b16 %v178
  %v915 = vunpack.c.l.b16 %v179
  %v916 = vunpack.c.l.b16 %v180
  %v917 = vunpack.c.l.b16 %v181
  %v918 = vunpack.c.l.b16 %v182
  %v919 = vunpack.c.l.b16 %v183
  %v920 = vunpack.c.l.b16 %v184
  %v921 = vunpack.c.l.b16 %v185
  %v922 = vunpack.c.l.b16 %v186
  %v923 = vunpack.c.l.b16 %v187
  %v924 = vunpack.c.l.b16 %v188
  %v925 = vunpack.c.l.b16 %v189
  %v926 = vunpack.c.l.b16 %v190
  %v927 = vunpack.c.l.b16 %v191
  %v928 = vunpack.c.l.b16 %v192
  %v929 = vunpack.c.l.b16 %v193
  %v930 = vunpack.c.l.b16 %v194
  %v931 = vunpack.c.l.b16 %v195
  %v932 = vunpack.c.l.b16 %v196
  %v933 = vunpack.c.l.b16 %v197
  %v934 = vunpack.c.l.b16 %v198
  %v935 = vunpack.c.l.b16 %v199
  %v936 = vunpack.c.l.b16 %v200
  %v937 = vunpack.c.l.b16 %v201
  %v938 = vunpack.c.l.b16 %v202
  %v939 = vunpack.c.l.b16 %v203
  %v940 = vunpack.c.l.b16 %v204
  %v941 = vunpack.c.l.b16 %v205
  %v942 = vunpack.c.l.b16 %v206
  %v943 = vunpack.c.l.b16 %v207
  %v944 = vunpack.c.l.b16 %v208
  %v945 = vunpack.c.l.b16 %v209
  %v946 = vunpack.c.l.b16 %v210
  %v947 = vunpack.c.l.b16 %v211
  %v948 = vunpack.c.l.b16 %v212
  %v949 = vunpack.c.l.b16 %v213
  %v950 = vunpack.c.l.b16 %v214
  %v951 = vunpack.c.l.b16 %v215
  %v952 = vunpack.c.l.b16 %v216
  %v953 = vunpack.c.l.b16 %v217
  %v954 = vunpack.c.l.b16 %v218
  %v955 = vunpack.c.l.b16 %v219
  %v956 = vunpack.c.l.b16 %v220
  %v957 = vunpack.c.l.b16 %v221
  %v958 = vunpack.c.l.b16 %v222
  %v959 = vunpack.c.l.b16 %v223
  %v960 = vunpack.c.l.b16 %v224
  %v961 = vunpack.c.l.b16 %v225
  %v962 = vunpack.c.l.b16 %v226
  %v963 = vunpack.c.l.b16 %v227
  %v964 = vunpack.c.l.b16 %v228
  %v965 = vunpack.c.l.b16 %v229
  %v966 = vunpack.c.l.b16 %v230
  %v967 = vunpack.c.l.b16 %v231
  %v968 = vunpack.c.l.b16 %v232
  %v969 = vunpack.c.l.b16 %v233
  %v970 = vunpack.c.l.b16 %v234
  %v971 = vunpack.c.l.b16 %v235
  %v972 = vunpack.c.l.b16 %v236
  %v973 = vunpack.c.l.b16 %v237
  %v974 = vunpack.c.l.b16 %v238
  %v975 = vunpack.c.l.b16 %v239
  %v976 = vunpack.c.l.b16 %v240
  %v977 = vunpack.c.l.b16 %v241
  %v978 = vunpack.c.l.b16 %v242
  %v979 = vunpack.c.l.b16 %v243
  %v980 = vunpack.c.l.b16 %v244
  %v981 = vunpack.c.l.b16 %v245
  %v982 = vunpack.c.l.b16 %v246
  %v983 = vunpack.c.l.b16 %v247
  %v984 = vunpack.c.l.b16 %v248
  %v985 = vunpack.c.l.b16 %v249
  %v986 = vunpack.c.l.b16 %v250
  %v987 = vunpack.c.l.b16 %v251
  %v988 = vunpack.c.l.b16 %v252
  %v989 = vunpack.c.l.b16 %v253
  %v990 = vunpack.c.l.b16 %v254
  %v991 = vunpack.c.l.b16 %v255
  %v992 = vunpack.c.l.b16 %v256
  %v993 = vunpack.c.l.b16 %v257
  %v994 = vunpack.c.l.b16 %v258
  %v995 = vunpack.c.l.b16 %v259
  %v996 = vunpack.c.l.b16 %v260
  %v997 = vunpack.c.l.b16 %v261
  %v998 = vunpack.c.l.b16 %v262
  %v999 = vunpack.c.l.b16 %v263
  %v1000 = vunpack.c.l.b16 %v264
  %v1001 = vunpack.c.l.b16 %v265
  %v1002 = vunpack.c.l.b16 %v266
  %v1003 = vunpack.c.l.b16 %v267
  %v1004 = vunpack.c.l.b16 %v268
  %v1005 = vunpack.c.l.b16 %v269
  %v1006 = vunpack.c.l.b16 %v270
  %v1007 = vunpack.c.l.b16 %v271
  %v1008 = vunpack.c.l.b16 %v272
  %v1009 = vunpack.c.l.b16 %v273
  %v1010 = vunpack.c.l.b16 %v274
  %v1011 = vunpack.c.l.b16 %v275
  %v1012 = vunpack.c.l.b16 %v276
  %v1013 = vunpack.c.l.b16 %v277
  %v1014 = vunpack.c.l.b16 %v278
  %v1015 = vunpack.c.l.b16 %v279
  %v1016 = vunpack.c.l.b16 %v280
  %v1017 = vunpack.c.l.b16 %v281
  %v1018 = vunpack.c.l.b16 %v282
  %v1019 = vunpack.c.l.b16 %v283
  %v1020 = vunpack.c.l.b16 %v284
  %v1021 = vunpack.c.l.b16 %v285
  %v1022 = vunpack.c.l.b16 %v286
  %v1023 = vunpack.c.l.b16 %v287
  %v1024 = vunpack.c.l.b16 %v288
  %v1025 = vunpack.c.l.b16 %v289
  %v1026 = vunpack.c.l.b16 %v290
  %v1027 = vunpack.c.l.b16 %v291
  %v1028 = vunpack.c.l.b16 %v292
  %v1029 = vunpack.c.l.b16 %v293
  %v1030 = vunpack.c.l.b16 %v294
  %v1031 = vunpack.c.l.b16 %v295
  %v1032 = vunpack.c.l.b16 %v296
  %v1033 = vunpack.c.l.b16 %v297
  %v1034 = vunpack.c.l.b16 %v298
  %v1035 = vunpack.c.l.b16 %v299
  %v1036 = vunpack.c.l.b16 %v300
  %v1037 = vunpack.c.l.b16 %v301
  %v1038 = vunpack.c.l.b16 %v302
  %v1039 = vunpack.c.l.b16 %v303
  %v1040 = vunpack.c.l.b16 %v304
  %v1041 = vunpack.c.l.b16 %v305
  %v1042 = vunpack.c.l.b16 %v306
  %v1043 = vunpack.c.l.b16 %v307
  %v1044 = vunpack.c.l.b16 %v308
  %v1045 = vunpack.c.l.b16 %v309
  %v1046 = vunpack.c.l.b16 %v310
  %v1047 = vunpack.c.l.b16 %v311
  %v1048 = vunpack.c.l.b16 %v312
  %v1049 = vunpack.c.l.b16 %v313
  %v1050 = vunpack.c.l.b16 %v314
  %v1051 = vunpack.c.l.b16 %v315
  %v1052 = vunpack.c.l.b16 %v316
  %v1053 = vunpack.c.l.b16 %v317
  %v1054 = vunpack.c.l.b16 %v318
  %v1055 = vunpack.c.l.b16 %v319
  %v1056 = vunpack.c.l.b16 %v320
  %v1057 = vunpack.c.l.b16 %v321
  %v1058 = vunpack.c.l.b16 %v322
  %v1059 = vunpack.c.l.b16 %v323
  %v1060 = vunpack.c.l.b16 %v324
  %v1061 = vunpack.c.l.b16 %v325
  %v1062 = vunpack.c.l.b16 %v326
  %v1063 = vunpack.c.l.b16 %v327
  %v1064 = vunpack.c.l.b16 %v328
  %v1065 = vunpack.c.l.b16 %v329
  %v1066 = vunpack.c.l.b16 %v330
  %v1067 = vunpack.c.l.b16 %v331
  %v1068 = vunpack.c.l.b16 %v332
  %v1069 = vunpack.c.l.b16 %v333
  %v1070 = vunpack.c.l.b16 %v334
  %v1071 = vunpack.c.l.b16 %v335
  %v1072 = vunpack.c.l.b16 %v336
  %v1073 = vunpack.c.l.b16 %v337
  %v1074 = vunpack.c.l.b16 %v338
  %v1075 = vunpack.c.l.b16 %v339
  %v1076 = vunpack.c.l.b16 %v340
  %v1077 = vunpack.c.l.b16 %v341
  %v1078 = vunpack.c.l.b16 %v342
  %v1079 = vunpack.c.l.b16 %v343
  %v1080 = vunpack.c.l.b16 %v344
  %v1081 = vunpack.c.l.b16 %v345
  %v1082 = vunpack.c.l.b16 %v346
  %v1083 = vunpack.c.l.b16 %v347
  %v1084 = vunpack.c.l.b16 %v348
  %v1085 = vunpack.c.l.b16 %v349
  %v1086 = vunpack.c.l.b16 %v350
  %v1087 = vunpack.c.l.b16 %v351
  %v1088 = vunpack.c.l.b16 %v352
  %v1089 = vunpack.c.l.b16 %v353
  %v1090 = vunpack.c.l.b16 %v354
  %v1091 = vunpack.c.l.b16 %v355
  %v1092 = vunpack.c.l.b16 %v356
  %v1093 = vunpack.c.l.b16 %v357
  %v1094 = vunpack.c.l.b16 %v358
  %v1095 = vunpack.c.l.b16 %v359
  %v1096 = vunpack.c.l.b16 %v360
  %v1097 = vunpack.c.l.b16 %v361
  %v1098 = vunpack.c.l.b16 %v362
  %v1099 = vunpack.c.l.b16 %v363
  %v1100 = vunpack.c.l.b16 %v364
  %v1101 = vunpack.c.l.b16 %v365
  %v1102 = vunpack.c.l.b16 %v366
  %v1103 = vunpack.c.l.b16 %v367
  %v1104 = vunpack.c.l.b16 %v368
  %v1105 = vunpack.c.l.b16 %v369
  %v1106 = vunpack.c.l.b16 %v370
  %v1107 = vunpack.c.l.b16 %v371
  %v1108 = vunpack.c.l.b16 %v372
  %v1109 = vunpack.c.l.b16 %v373
  %v1110 = vunpack.c.l.b16 %v374
  %v1111 = vunpack.c.l.b16 %v375
  %v1112 = vunpack.c.l.b16 %v376
  %v1113 = vunpack.c.l.b16 %v377
  %v1114 = vunpack.c.l.b16 %v378
  %v1115 = vunpack.c.l.b16 %v379
  %v1116 = vunpack.c.l.b16 %v380
  %v1117 = vunpack.c.l.b16 %v381
  %v1118 = vunpack.c.l.b16 %v382
  %v1119 = vunpack.c.l.b16 %v383
  %v1120 = vunpack.c.l.b16 %v384
  %v1121 = vunpack.c.l.b16 %v385
  %v1122 = vunpack.c.l.b16 %v386
  %v1123 = vunpack.c.l.b16 %v387
  %v1124 = vunpack.c.l.b16 %v388
  %v1125 = vunpack.c.l.b16 %v389
  %v1126 = vunpack.c.l.b16 %v390
  %v1127 = vunpack.c.l.b16 %v391
  %v1128 = vunpack.c.l.b16 %v392
  %v1129 = vunpack.c.l.b16 %v393
  %v1130 = vunpack.c.l.b16 %v394
  %v1131 = vunpack.c.l.b16 %v395
  %v1132 = vunpack.c.l.b16 %v396
  %v1133 = vunpack.c.l.b16 %v397
  %v1134 = vunpack.c.l.b16 %v398
  %v1135 = vunpack.c.l.b16 %v399
  %v1136 = vunpack.c.l.b16 %v400
  %v1137 = vunpack.c.l.b16 %v401
  %v1138 = vunpack.c.l.b16 %v402
  %v1139 = vunpack.c.l.b16 %v403
  %v1140 = vunpack.c.l.b16 %v404
  %v1141 = vunpack.c.l.b16 %v405
  %v1142 = vunpack.c.l.b16 %v406
  %v1143 = vunpack.c.l.b16 %v407
  %v1144 = vunpack.c.l.b16 %v408
  %v1145 = vunpack.c.l.b16 %v409
  %v1146 = vunpack.c.l.b16 %v410
  %v1147 = vunpack.c.l.b16 %v411
  %v1148 = vunpack.c.l.b16 %v412
  %v1149 = vunpack.c.l.b16 %v413
  %v1150 = vunpack.c.l.b16 %v414
  %v1151 = vunpack.c.l.b16 %v415
  %v1152 = vunpack.c.l.b16 %v416
  %v1153 = vunpack.c.l.b16 %v417
  %v1154 = vunpack.c.l.b16 %v418
  %v1155 = vunpack.c.l.b16 %v419
  %v1156 = vunpack.c.l.b16 %v420
  %v1157 = vunpack.c.l.b16 %v421
  %v1158 = vunpack.c.l.b16 %v422
  %v1159 = vunpack.c.l.b16 %v423
  %v1160 = vunpack.c.l.b16 %v424
  %v1161 = vunpack.c.l.b16 %v425
  %v1162 = vunpack.c.l.b16 %v426
  %v1163 = vunpack.c.l.b16 %v427
  %v1164 = vunpack.c.l.b16 %v428
  %v1165 = vunpack.c.l.b16 %v429
  %v1166 = vunpack.c.l.b16 %v430
  %v1167 = vunpack.c.l.b16 %v431
  %v1168 = vunpack.c.l.b16 %v432
  %v1169 = vunpack.c.l.b16 %v433
  %v1170 = vunpack.c.l.b16 %v434
  %v1171 = vunpack.c.l.b16 %v435
  %v1172 = vunpack.c.l.b16 %v436
  %v1173 = vunpack.c.l.b16 %v437
  %v1174 = vunpack.c.l.b16 %v438
  %v1175 = vunpack.c.l.b16 %v439
  %v1176 = vunpack.c.l.b16 %v440
  %v1177 = vunpack.c.l.b16 %v441
  %v1178 = vunpack.c.l.b16 %v442
  %v1179 = vunpack.c.l.b16 %v443
  %v1180 = vunpack.c.l.b16 %v444
  %v1181 = vunpack.c.l.b16 %v445
  %v1182 = vunpack.c.l.b16 %v446
  %v1183 = vunpack.c.l.b16 %v447
  %v1184 = vunpack.c.l.b16 %v448
  %v1185 = vunpack.c.l.b16 %v449
  %v1186 = vunpack.c.l.b16 %v450
  %v1187 = vunpack.c.l.b16 %v451
  %v1188 = vunpack.c.l.b16 %v452
  %v1189 = vunpack.c.l.b16 %v453
  %v1190 = vpack.c.b16 %v823, %v822
  %v1191 = vpack.c.b16 %v825, %v824
  %v1192 = vpack.c.b16 %v827, %v826
  %v1193 = vpack.c.b16 %v829, %v828
  %v1194 = vpack.c.b16 %v831, %v830
  %v1195 = vpack.c.b16 %v833, %v832
  %v1196 = vpack.c.b16 %v835, %v834
  %v1197 = vpack.c.b16 %v837, %v836
  %v1198 = vpack.c.b16 %v839, %v838
  %v1199 = vpack.c.b16 %v841, %v840
  %v1200 = vpack.c.b16 %v843, %v842
  %v1201 = vpack.c.b16 %v845, %v844
  %v1202 = vpack.c.b16 %v847, %v846
  %v1203 = vpack.c.b16 %v849, %v848
  %v1204 = vpack.c.b16 %v851, %v850
  %v1205 = vpack.c.b16 %v853, %v852
  %v1206 = vpack.c.b16 %v855, %v854
  %v1207 = vpack.c.b16 %v857, %v856
  %v1208 = vpack.c.b16 %v859, %v858
  %v1209 = vpack.c.b16 %v861, %v860
  %v1210 = vpack.c.b16 %v863, %v862
  %v1211 = vpack.c.b16 %v865, %v864
  %v1212 = vpack.c.b16 %v867, %v866
  %v1213 = vpack.c.b16 %v869, %v868
  %v1214 = vpack.c.b16 %v871, %v870
  %v1215 = vpack.c.b16 %v873, %v872
  %v1216 = vpack.c.b16 %v875, %v874
  %v1217 = vpack.c.b16 %v877, %v876
  %v1218 = vpack.c.b16 %v879, %v878
  %v1219 = vpack.c.b16 %v881, %v880
  %v1220 = vpack.c.b16 %v883, %v882
  %v1221 = vpack.c.b16 %v885, %v884
  %v1222 = vpack.c.b16 %v887, %v886
  %v1223 = vpack.c.b16 %v889, %v888
  %v1224 = vpack.c.b16 %v891, %v890
  %v1225 = vpack.c.b16 %v893, %v892
  %v1226 = vpack.c.b16 %v895, %v894
  %v1227 = vpack.c.b16 %v897, %v896
  %v1228 = vpack.c.b16 %v899, %v898
  %v1229 = vpack.c.b16 %v901, %v900
  %v1230 = vpack.c.b16 %v903, %v902
  %v1231 = vpack.c.b16 %v905, %v904
  %v1232 = vpack.c.b16 %v907, %v906
  %v1233 = vpack.c.b16 %v909, %v908
  %v1234 = vpack.c.b16 %v911, %v910
  %v1235 = vpack.c.b16 %v913, %v912
  %v1236 = vpack.c.b16 %v915, %v914
  %v1237 = vpack.c.b16 %v917, %v916
  %v1238 = vpack.c.b16 %v919, %v918
  %v1239 = vpack.c.b16 %v921, %v920
  %v1240 = vpack.c.b16 %v923, %v922
  %v1241 = vpack.c.b16 %v925, %v924
  %v1242 = vpack.c.b16 %v927, %v926
  %v1243 = vpack.c.b16 %v929, %v928
  %v1244 = vpack.c.b16 %v931, %v930
  %v1245 = vpack.c.b16 %v933, %v932
  %v1246 = vpack.c.b16 %v935, %v934
  %v1247 = vpack.c.b16 %v937, %v936
  %v1248 = vpack.c.b16 %v939, %v938
  %v1249 = vpack.c.b16 %v941, %v940
  %v1250 = vpack.c.b16 %v943, %v942
  %v1251 = vpack.c.b16 %v945, %v944
  %v1252 = vpack.c.b16 %v947, %v946
  %v1253 = vpack.c.b16 %v949, %v948
  %v1254 = vpack.c.b16 %v951, %v950
  %v1255 = vpack.c.b16 %v953, %v952
  %v1256 = vpack.c.b16 %v955, %v954
  %v1257 = vpack.c.b16 %v957, %v956
  %v1258 = vpack.c.b16 %v959, %v958
  %v1259 = vpack.c.b16 %v961, %v960
  %v1260 = vpack.c.b16 %v963, %v962
  %v1261 = vpack.c.b16 %v965, %v964
  %v1262 = vpack.c.b16 %v967, %v966
  %v1263 = vpack.c.b16 %v969, %v968
  %v1264 = vpack.c.b16 %v971, %v970
  %v1265 = vpack.c.b16 %v973, %v972
  %v1266 = vpack.c.b16 %v975, %v974
  %v1267 = vpack.c.b16 %v977, %v976
  %v1268 = vpack.c.b16 %v979, %v978
  %v1269 = vpack.c.b16 %v981, %v980
  %v1270 = vpack.c.b16 %v983, %v982
  %v1271 = vpack.c.b16 %v985, %v984
  %v1272 = vpack.c.b16 %v987, %v986
  %v1273 = vpack.c.b16 %v989, %v988
  %v1274 = vpack.c.b16 %v991, %v990
  %v1275 = vpack.c.b16 %v993, %v992
  %v1276 = vpack.c.b16 %v995, %v994
  %v1277 = vpack.c.b16 %v997, %v996
  %v1278 = vpack.c.b16 %v999, %v998
  %v1279 = vpack.c.b16 %v1001, %v1000
  %v1280 = vpack.c.b16 %v1003, %v1002
  %v1281 = vpack.c.b16 %v1005, %v1004
  %v1282 = vpack.c.b16 %v1007, %v1006
  %v1283 = vpack.c.b16 %v1009, %v1008
  %v1284 = vpack.c.b16 %v1011, %v1010
  %v1285 = vpack.c.b16 %v1013, %v1012
  %v1286 = vpack.c.b16 %v1015, %v1014
  %v1287 = vpack.c.b16 %v1017, %v1016
  %v1288 = vpack.c.b16 %v1019, %v1018
  %v1289 = vpack.c.b16 %v1021, %v1020
  %v1290 = vpack.c.b16 %v1023, %v1022
  %v1291 = vpack.c.b16 %v1025, %v1024
  %v1292 = vpack.c.b16 %v1027, %v1026
  %v1293 = vpack.c.b16 %v1029, %v1028
  %v1294 = vpack.c.b16 %v1031, %v1030
  %v1295 = vpack.c.b16 %v1033, %v1032
  %v1296 = vpack.c.b16 %v1035, %v1034
  %v1297 = vpack.c.b16 %v1037, %v1036
  %v1298 = vpack.c.b16 %v1039, %v1038
  %v1299 = vpack.c.b16 %v1041, %v1040
  %v1300 = vpack.c.b16 %v1043, %v1042
  %v1301 = vpack.c.b16 %v1045, %v1044
  %v1302 = vpack.c.b16 %v1047, %v1046
  %v1303 = vpack.c.b16 %v1049, %v1048
  %v1304 = vpack.c.b16 %v1051, %v1050
  %v1305 = vpack.c.b16 %v1053, %v1052
  %v1306 = vpack.c.b16 %v1055, %v1054
  %v1307 = vpack.c.b16 %v1057, %v1056
  %v1308 = vpack.c.b16 %v1059, %v1058
  %v1309 = vpack.c.b16 %v1061, %v1060
  %v1310 = vpack.c.b16 %v1063, %v1062
  %v1311 = vpack.c.b16 %v1065, %v1064
  %v1312 = vpack.c.b16 %v1067, %v1066
  %v1313 = vpack.c.b16 %v1069, %v1068
  %v1314 = vpack.c.b16 %v1071, %v1070
  %v1315 = vpack.c.b16 %v1073, %v1072
  %v1316 = vpack.c.b16 %v1075, %v1074
  %v1317 = vpack.c.b16 %v1077, %v1076
  %v1318 = vpack.c.b16 %v1079, %v1078
  %v1319 = vpack.c.b16 %v1081, %v1080
  %v1320 = vpack.c.b16 %v1083, %v1082
  %v1321 = vpack.c.b16 %v1085, %v1084
  %v1322 = vpack.c.b16 %v1087, %v1086
  %v1323 = vpack.c.b16 %v1089, %v1088
  %v1324 = vpack.c.b16 %v1091, %v1090
  %v1325 = vpack.c.b16 %v1093, %v1092
  %v1326 = vpack.c.b16 %v1095, %v1094
  %v1327 = vpack.c.b16 %v1097, %v1096
  %v1328 = vpack.c.b16 %v1099, %v1098
  %v1329 = vpack.c.b16 %v1101, %v1100
  %v1330 = vpack.c.b16 %v1103, %v1102
  %v1331 = vpack.c.b16 %v1105, %v1104
  %v1332 = vpack.c.b16 %v1107, %v1106
  %v1333 = vpack.c.b16 %v1109, %v1108
  %v1334 = vpack.c.b16 %v1111, %v1110
  %v1335 = vpack.c.b16 %v1113, %v1112
  %v1336 = vpack.c.b16 %v1115, %v1114
  %v1337 = vpack.c.b16 %v1117, %v1116
  %v1338 = vpack.c.b16 %v1119, %v1118
  %v1339 = vpack.c.b16 %v1121, %v1120
  %v1340 = vpack.c.b16 %v1123, %v1122
  %v1341 = vpack.c.b16 %v1125, %v1124
  %v1342 = vpack.c.b16 %v1127, %v1126
  %v1343 = vpack.c.b16 %v1129, %v1128
  %v1344 = vpack.c.b16 %v1131, %v1130
  %v1345 = vpack.c.b16 %v1133, %v1132
  %v1346 = vpack.c.b16 %v1135, %v1134
  %v1347 = vpack.c.b16 %v1137, %v1136
  %v1348 = vpack.c.b16 %v1139, %v1138
  %v1349 = vpack.c.b16 %v1141, %v1140
  %v1350 = vpack.c.b16 %v1143, %v1142
  %v1351 = vpack.c.b16 %v1145, %v1144
  %v1352 = vpack.c.b16 %v1147, %v1146
  %v1353 = vpack.c.b16 %v1149, %v1148
  %v1354 = vpack.c.b16 %v1151, %v1150
  %v1355 = vpack.c.b16 %v1153, %v1152
  %v1356 = vpack.c.b16 %v1155, %v1154
  %v1357 = vpack.c.b16 %v1157, %v1156
  %v1358 = vpack.c.b16 %v1159, %v1158
  %v1359 = vpack.c.b16 %v1161, %v1160
  %v1360 = vpack.c.b16 %v1163, %v1162
  %v1361 = vpack.c.b16 %v1165, %v1164
  %v1362 = vpack.c.b16 %v1167, %v1166
  %v1363 = vpack.c.b16 %v1169, %v1168
  %v1364 = vpack.c.b16 %v1171, %v1170
  %v1365 = vpack.c.b16 %v1173, %v1172
  %v1366 = vpack.c.b16 %v1175, %v1174
  %v1367 = vpack.c.b16 %v1177, %v1176
  %v1368 = vpack.c.b16 %v1179, %v1178
  %v1369 = vpack.c.b16 %v1181, %v1180
  %v1370 = vpack.c.b16 %v1183, %v1182
  %v1371 = vpack.c.b16 %v1185, %v1184
  %v1372 = vpack.c.b16 %v1187, %v1186
  %v1373 = vpack.c.b16 %v1189, %v1188
  %1558 = vmatprep.subr.bf16.mxu0 0
  %1559 = vmatpush1.bf16.msra.mxu0 %v1190
  %1560 = vmatprep.subr.bf16.mxu0 0
  %1561 = vmatpush1.bf16.msra.mxu0 %v1191
  %1562 = vmatprep.subr.bf16.mxu0 0
  %1563 = vmatpush1.bf16.msra.mxu0 %v1192
  %1564 = vmatprep.subr.bf16.mxu0 0
  %1565 = vmatpush1.bf16.msra.mxu0 %v1193
  %1566 = vmatprep.subr.bf16.mxu0 0
  %1567 = vmatpush1.bf16.msra.mxu0 %v1194
  %1568 = vmatprep.subr.bf16.mxu0 0
  %1569 = vmatpush1.bf16.msra.mxu0 %v1195
  %1570 = vmatprep.subr.bf16.mxu0 0
  %1571 = vmatpush1.bf16.msra.mxu0 %v1196
  %1572 = vmatprep.subr.bf16.mxu0 0
  %1573 = vmatpush1.bf16.msra.mxu0 %v1197
  %1574 = vmatprep.subr.bf16.mxu0 0
  %1575 = vmatpush1.bf16.msra.mxu0 %v1198
  %1576 = vmatprep.subr.bf16.mxu0 0
  %1577 = vmatpush1.bf16.msra.mxu0 %v1199
  %1578 = vmatprep.subr.bf16.mxu0 0
  %1579 = vmatpush1.bf16.msra.mxu0 %v1200
  %1580 = vmatprep.subr.bf16.mxu0 0
  %1581 = vmatpush1.bf16.msra.mxu0 %v1201
  %1582 = vmatprep.subr.bf16.mxu0 0
  %1583 = vmatpush1.bf16.msra.mxu0 %v1202
  %1584 = vmatprep.subr.bf16.mxu0 0
  %1585 = vmatpush1.bf16.msra.mxu0 %v1203
  %1586 = vmatprep.subr.bf16.mxu0 0
  %1587 = vmatpush1.bf16.msra.mxu0 %v1204
  %1588 = vmatprep.subr.bf16.mxu0 0
  %1589 = vmatpush1.bf16.msra.mxu0 %v1205
  %1590 = vmatprep.mubr.bf16.mxu0 %v64
  %1591 = vmatmul.mubr.bf16.gmra.mrb[0].mxu0 %v63
  %v1592 = vpop.f32.mrb[0].mxu0
  %v1593 = vadd.f32 0.0, %v1592
  %v1594 = vpop.f32.mrb[0].mxu0
  %v1595 = vpop.f32.mrb[0].mxu0
  %v1596 = vpop.f32.mrb[0].mxu0
  %1597 = vdwg.mxu0
  %1598 = vmatprep.subr.bf16.mxu0 0
  %1599 = vmatpush1.bf16.msra.mxu0 %v1206
  %1600 = vmatprep.subr.bf16.mxu0 0
  %1601 = vmatpush1.bf16.msra.mxu0 %v1207
  %1602 = vmatprep.subr.bf16.mxu0 0
  %1603 = vmatpush1.bf16.msra.mxu0 %v1208
  %1604 = vmatprep.subr.bf16.mxu0 0
  %1605 = vmatpush1.bf16.msra.mxu0 %v1209
  %1606 = vmatprep.subr.bf16.mxu0 0
  %1607 = vmatpush1.bf16.msra.mxu0 %v1210
  %1608 = vmatprep.subr.bf16.mxu0 0
  %1609 = vmatpush1.bf16.msra.mxu0 %v1211
  %1610 = vmatprep.subr.bf16.mxu0 0
  %1611 = vmatpush1.bf16.msra.mxu0 %v1212
  %1612 = vmatprep.subr.bf16.mxu0 0
  %1613 = vmatpush1.bf16.msra.mxu0 %v1213
  %1614 = vmatprep.subr.bf16.mxu0 0
  %1615 = vmatpush1.bf16.msra.mxu0 %v1214
  %1616 = vmatprep.subr.bf16.mxu0 0
  %1617 = vmatpush1.bf16.msra.mxu0 %v1215
  %1618 = vmatprep.subr.bf16.mxu0 0
  %1619 = vmatpush1.bf16.msra.mxu0 %v1216
  %1620 = vmatprep.subr.bf16.mxu0 0
  %1621 = vmatpush1.bf16.msra.mxu0 %v1217
  %1622 = vmatprep.subr.bf16.mxu0 0
  %1623 = vmatpush1.bf16.msra.mxu0 %v1218
  %1624 = vmatprep.subr.bf16.mxu0 0
  %1625 = vmatpush1.bf16.msra.mxu0 %v1219
  %1626 = vmatprep.subr.bf16.mxu0 0
  %1627 = vmatpush1.bf16.msra.mxu0 %v1220
  %1628 = vmatprep.subr.bf16.mxu0 0
  %1629 = vmatpush1.bf16.msra.mxu0 %v1221
  %1630 = vmatprep.mubr.bf16.mxu0 %v66
  %1631 = vmatmul.mubr.bf16.gmra.mrb[0].mxu0 %v65
  %v1632 = vpop.f32.mrb[0].mxu0
  %v1633 = vadd.f32 %v1593, %v1632
  %v1634 = vpop.f32.mrb[0].mxu0
  %v1635 = vpop.f32.mrb[0].mxu0
  %v1636 = vpop.f32.mrb[0].mxu0
  %1637 = vdwg.mxu0
  %1638 = vmatprep.subr.bf16.mxu0 0
  %1639 = vmatpush1.bf16.msra.mxu0 %v1222
  %1640 = vmatprep.subr.bf16.mxu0 0
  %1641 = vmatpush1.bf16.msra.mxu0 %v1223
  %1642 = vmatprep.subr.bf16.mxu0 0
  %1643 = vmatpush1.bf16.msra.mxu0 %v1224
  %1644 = vmatprep.subr.bf16.mxu0 0
  %1645 = vmatpush1.bf16.msra.mxu0 %v1225
  %1646 = vmatprep.subr.bf16.mxu0 0
  %1647 = vmatpush1.bf16.msra.mxu0 %v1226
  %1648 = vmatprep.subr.bf16.mxu0 0
  %1649 = vmatpush1.bf16.msra.mxu0 %v1227
  %1650 = vmatprep.subr.bf16.mxu0 0
  %1651 = vmatpush1.bf16.msra.mxu0 %v1228
  %1652 = vmatprep.subr.bf16.mxu0 0
  %1653 = vmatpush1.bf16.msra.mxu0 %v1229
  %1654 = vmatprep.subr.bf16.mxu0 0
  %1655 = vmatpush1.bf16.msra.mxu0 %v1230
  %1656 = vmatprep.subr.bf16.mxu0 0
  %1657 = vmatpush1.bf16.msra.mxu0 %v1231
  %1658 = vmatprep.subr.bf16.mxu0 0
  %1659 = vmatpush1.bf16.msra.mxu0 %v1232
  %1660 = vmatprep.subr.bf16.mxu0 0
  %1661 = vmatpush1.bf16.msra.mxu0 %v1233
  %1662 = vmatprep.subr.bf16.mxu0 0
  %1663 = vmatpush1.bf16.msra.mxu0 %v1234
  %1664 = vmatprep.subr.bf16.mxu0 0
  %1665 = vmatpush1.bf16.msra.mxu0 %v1235
  %1666 = vmatprep.subr.bf16.mxu0 0
  %1667 = vmatpush1.bf16.msra.mxu0 %v1236
  %1668 = vmatprep.subr.bf16.mxu0 0
  %1669 = vmatpush1.bf16.msra.mxu0 %v1237
  %1670 = vmatprep.mubr.bf16.mxu0 %v68
  %1671 = vmatmul.mubr.bf16.gmra.mrb[0].mxu0 %v67
  %v1672 = vpop.f32.mrb[0].mxu0
  %v1673 = vadd.f32 %v1633, %v1672
  %v1674 = vpop.f32.mrb[0].mxu0
  %v1675 = vpop.f32.mrb[0].mxu0
  %v1676 = vpop.f32.mrb[0].mxu0
  %1677 = vdwg.mxu0
  %1678 = vmatprep.subr.bf16.mxu0 0
  %1679 = vmatpush1.bf16.msra.mxu0 %v1238
  %1680 = vmatprep.subr.bf16.mxu0 0
  %1681 = vmatpush1.bf16.msra.mxu0 %v1239
  %1682 = vmatprep.subr.bf16.mxu0 0
  %1683 = vmatpush1.bf16.msra.mxu0 %v1240
  %1684 = vmatprep.subr.bf16.mxu0 0
  %1685 = vmatpush1.bf16.msra.mxu0 %v1241
  %1686 = vmatprep.subr.bf16.mxu0 0
  %1687 = vmatpush1.bf16.msra.mxu0 %v1242
  %1688 = vmatprep.subr.bf16.mxu0 0
  %1689 = vmatpush1.bf16.msra.mxu0 %v1243
  %1690 = vmatprep.subr.bf16.mxu0 0
  %1691 = vmatpush1.bf16.msra.mxu0 %v1244
  %1692 = vmatprep.subr.bf16.mxu0 0
  %1693 = vmatpush1.bf16.msra.mxu0 %v1245
  %1694 = vmatprep.subr.bf16.mxu0 0
  %1695 = vmatpush1.bf16.msra.mxu0 %v1246
  %1696 = vmatprep.subr.bf16.mxu0 0
  %1697 = vmatpush1.bf16.msra.mxu0 %v1247
  %1698 = vmatprep.subr.bf16.mxu0 0
  %1699 = vmatpush1.bf16.msra.mxu0 %v1248
  %1700 = vmatprep.subr.bf16.mxu0 0
  %1701 = vmatpush1.bf16.msra.mxu0 %v1249
  %1702 = vmatprep.subr.bf16.mxu0 0
  %1703 = vmatpush1.bf16.msra.mxu0 %v1250
  %1704 = vmatprep.subr.bf16.mxu0 0
  %1705 = vmatpush1.bf16.msra.mxu0 %v1251
  %1706 = vmatprep.subr.bf16.mxu0 0
  %1707 = vmatpush1.bf16.msra.mxu0 %v1252
  %1708 = vmatprep.subr.bf16.mxu0 0
  %1709 = vmatpush1.bf16.msra.mxu0 %v1253
  %1710 = vmatprep.mubr.bf16.mxu0 %v70
  %1711 = vmatmul.mubr.bf16.gmra.mrb[0].mxu0 %v69
  %v1712 = vpop.f32.mrb[0].mxu0
  %v1713 = vadd.f32 %v1673, %v1712
  %v1714 = vpop.f32.mrb[0].mxu0
  %v1715 = vpop.f32.mrb[0].mxu0
  %v1716 = vpop.f32.mrb[0].mxu0
  %1717 = vdwg.mxu0
  %1718 = vmatprep.subr.bf16.mxu0 0
  %1719 = vmatpush1.bf16.msra.mxu0 %v1254
  %1720 = vmatprep.subr.bf16.mxu0 0
  %1721 = vmatpush1.bf16.msra.mxu0 %v1255
  %1722 = vmatprep.subr.bf16.mxu0 0
  %1723 = vmatpush1.bf16.msra.mxu0 %v1256
  %1724 = vmatprep.subr.bf16.mxu0 0
  %1725 = vmatpush1.bf16.msra.mxu0 %v1257
  %1726 = vmatprep.subr.bf16.mxu0 0
  %1727 = vmatpush1.bf16.msra.mxu0 %v1258
  %1728 = vmatprep.subr.bf16.mxu0 0
  %1729 = vmatpush1.bf16.msra.mxu0 %v1259
  %1730 = vmatprep.subr.bf16.mxu0 0
  %1731 = vmatpush1.bf16.msra.mxu0 %v1260
  %1732 = vmatprep.subr.bf16.mxu0 0
  %1733 = vmatpush1.bf16.msra.mxu0 %v1261
  %1734 = vmatprep.subr.bf16.mxu0 0
  %1735 = vmatpush1.bf16.msra.mxu0 %v1262
  %1736 = vmatprep.subr.bf16.mxu0 0
  %1737 = vmatpush1.bf16.msra.mxu0 %v1263
  %1738 = vmatprep.subr.bf16.mxu0 0
  %1739 = vmatpush1.bf16.msra.mxu0 %v1264
  %1740 = vmatprep.subr.bf16.mxu0 0
  %1741 = vmatpush1.bf16.msra.mxu0 %v1265
  %1742 = vmatprep.subr.bf16.mxu0 0
  %1743 = vmatpush1.bf16.msra.mxu0 %v1266
  %1744 = vmatprep.subr.bf16.mxu0 0
  %1745 = vmatpush1.bf16.msra.mxu0 %v1267
  %1746 = vmatprep.subr.bf16.mxu0 0
  %1747 = vmatpush1.bf16.msra.mxu0 %v1268
  %1748 = vmatprep.subr.bf16.mxu0 0
  %1749 = vmatpush1.bf16.msra.mxu0 %v1269
  %1750 = vmatprep.mubr.bf16.mxu0 %v72
  %1751 = vmatmul.mubr.bf16.gmra.mrb[0].mxu0 %v71
  %v1752 = vpop.f32.mrb[0].mxu0
  %v1753 = vadd.f32 %v1713, %v1752
  %v1754 = vpop.f32.mrb[0].mxu0
  %v1755 = vpop.f32.mrb[0].mxu0
  %v1756 = vpop.f32.mrb[0].mxu0
  %1757 = vdwg.mxu0
  %1758 = vmatprep.subr.bf16.mxu0 0
  %1759 = vmatpush1.bf16.msra.mxu0 %v1270
  %1760 = vmatprep.subr.bf16.mxu0 0
  %1761 = vmatpush1.bf16.msra.mxu0 %v1271
  %1762 = vmatprep.subr.bf16.mxu0 0
  %1763 = vmatpush1.bf16.msra.mxu0 %v1272
  %1764 = vmatprep.subr.bf16.mxu0 0
  %1765 = vmatpush1.bf16.msra.mxu0 %v1273
  %1766 = vmatprep.subr.bf16.mxu0 0
  %1767 = vmatpush1.bf16.msra.mxu0 %v1274
  %1768 = vmatprep.subr.bf16.mxu0 0
  %1769 = vmatpush1.bf16.msra.mxu0 %v1275
  %1770 = vmatprep.subr.bf16.mxu0 0
  %1771 = vmatpush1.bf16.msra.mxu0 %v1276
  %1772 = vmatprep.subr.bf16.mxu0 0
  %1773 = vmatpush1.bf16.msra.mxu0 %v1277
  %1774 = vmatprep.subr.bf16.mxu0 0
  %1775 = vmatpush1.bf16.msra.mxu0 %v1278
  %1776 = vmatprep.subr.bf16.mxu0 0
  %1777 = vmatpush1.bf16.msra.mxu0 %v1279
  %1778 = vmatprep.subr.bf16.mxu0 0
  %1779 = vmatpush1.bf16.msra.mxu0 %v1280
  %1780 = vmatprep.subr.bf16.mxu0 0
  %1781 = vmatpush1.bf16.msra.mxu0 %v1281
  %1782 = vmatprep.subr.bf16.mxu0 0
  %1783 = vmatpush1.bf16.msra.mxu0 %v1282
  %1784 = vmatprep.subr.bf16.mxu0 0
  %1785 = vmatpush1.bf16.msra.mxu0 %v1283
  %1786 = vmatprep.subr.bf16.mxu0 0
  %1787 = vmatpush1.bf16.msra.mxu0 %v1284
  %1788 = vmatprep.subr.bf16.mxu0 0
  %1789 = vmatpush1.bf16.msra.mxu0 %v1285
  %1790 = vmatprep.mubr.bf16.mxu0 %v74
  %1791 = vmatmul.mubr.bf16.gmra.mrb[0].mxu0 %v73
  %v1792 = vpop.f32.mrb[0].mxu0
  %v1793 = vadd.f32 %v1753, %v1792
  %v1794 = vpop.f32.mrb[0].mxu0
  %v1795 = vpop.f32.mrb[0].mxu0
  %v1796 = vpop.f32.mrb[0].mxu0
  %1797 = vdwg.mxu0
  %1798 = vmatprep.subr.bf16.mxu0 0
  %1799 = vmatpush1.bf16.msra.mxu0 %v1286
  %1800 = vmatprep.subr.bf16.mxu0 0
  %1801 = vmatpush1.bf16.msra.mxu0 %v1287
  %1802 = vmatprep.subr.bf16.mxu0 0
  %1803 = vmatpush1.bf16.msra.mxu0 %v1288
  %1804 = vmatprep.subr.bf16.mxu0 0
  %1805 = vmatpush1.bf16.msra.mxu0 %v1289
  %1806 = vmatprep.subr.bf16.mxu0 0
  %1807 = vmatpush1.bf16.msra.mxu0 %v1290
  %1808 = vmatprep.subr.bf16.mxu0 0
  %1809 = vmatpush1.bf16.msra.mxu0 %v1291
  %1810 = vmatprep.subr.bf16.mxu0 0
  %1811 = vmatpush1.bf16.msra.mxu0 %v1292
  %1812 = vmatprep.subr.bf16.mxu0 0
  %1813 = vmatpush1.bf16.msra.mxu0 %v1293
  %1814 = vmatprep.subr.bf16.mxu0 0
  %1815 = vmatpush1.bf16.msra.mxu0 %v1294
  %1816 = vmatprep.subr.bf16.mxu0 0
  %1817 = vmatpush1.bf16.msra.mxu0 %v1295
  %1818 = vmatprep.subr.bf16.mxu0 0
  %1819 = vmatpush1.bf16.msra.mxu0 %v1296
  %1820 = vmatprep.subr.bf16.mxu0 0
  %1821 = vmatpush1.bf16.msra.mxu0 %v1297
  %1822 = vmatprep.subr.bf16.mxu0 0
  %1823 = vmatpush1.bf16.msra.mxu0 %v1298
  %1824 = vmatprep.subr.bf16.mxu0 0
  %1825 = vmatpush1.bf16.msra.mxu0 %v1299
  %1826 = vmatprep.subr.bf16.mxu0 0
  %1827 = vmatpush1.bf16.msra.mxu0 %v1300
  %1828 = vmatprep.subr.bf16.mxu0 0
  %1829 = vmatpush1.bf16.msra.mxu0 %v1301
  %1830 = vmatprep.mubr.bf16.mxu0 %v76
  %1831 = vmatmul.mubr.bf16.gmra.mrb[0].mxu0 %v75
  %v1832 = vpop.f32.mrb[0].mxu0
  %v1833 = vadd.f32 %v1793, %v1832
  %v1834 = vpop.f32.mrb[0].mxu0
  %v1835 = vpop.f32.mrb[0].mxu0
  %v1836 = vpop.f32.mrb[0].mxu0
  %1837 = vdwg.mxu0
  %1838 = vmatprep.subr.bf16.mxu0 0
  %1839 = vmatpush1.bf16.msra.mxu0 %v1302
  %1840 = vmatprep.subr.bf16.mxu0 0
  %1841 = vmatpush1.bf16.msra.mxu0 %v1303
  %1842 = vmatprep.subr.bf16.mxu0 0
  %1843 = vmatpush1.bf16.msra.mxu0 %v1304
  %1844 = vmatprep.subr.bf16.mxu0 0
  %1845 = vmatpush1.bf16.msra.mxu0 %v1305
  %1846 = vmatprep.subr.bf16.mxu0 0
  %1847 = vmatpush1.bf16.msra.mxu0 %v1306
  %1848 = vmatprep.subr.bf16.mxu0 0
  %1849 = vmatpush1.bf16.msra.mxu0 %v1307
  %1850 = vmatprep.subr.bf16.mxu0 0
  %1851 = vmatpush1.bf16.msra.mxu0 %v1308
  %1852 = vmatprep.subr.bf16.mxu0 0
  %1853 = vmatpush1.bf16.msra.mxu0 %v1309
  %1854 = vmatprep.subr.bf16.mxu0 0
  %1855 = vmatpush1.bf16.msra.mxu0 %v1310
  %1856 = vmatprep.subr.bf16.mxu0 0
  %1857 = vmatpush1.bf16.msra.mxu0 %v1311
  %1858 = vmatprep.subr.bf16.mxu0 0
  %1859 = vmatpush1.bf16.msra.mxu0 %v1312
  %1860 = vmatprep.subr.bf16.mxu0 0
  %1861 = vmatpush1.bf16.msra.mxu0 %v1313
  %1862 = vmatprep.subr.bf16.mxu0 0
  %1863 = vmatpush1.bf16.msra.mxu0 %v1314
  %1864 = vmatprep.subr.bf16.mxu0 0
  %1865 = vmatpush1.bf16.msra.mxu0 %v1315
  %1866 = vmatprep.subr.bf16.mxu0 0
  %1867 = vmatpush1.bf16.msra.mxu0 %v1316
  %1868 = vmatprep.subr.bf16.mxu0 0
  %1869 = vmatpush1.bf16.msra.mxu0 %v1317
  %1870 = vmatprep.mubr.bf16.mxu0 %v78
  %1871 = vmatmul.mubr.bf16.gmra.mrb[0].mxu0 %v77
  %v1872 = vpop.f32.mrb[0].mxu0
  %v1873 = vadd.f32 %v1833, %v1872
  %v1874 = vpop.f32.mrb[0].mxu0
  %v1875 = vpop.f32.mrb[0].mxu0
  %v1876 = vpop.f32.mrb[0].mxu0
  %1877 = vdwg.mxu0
  %1878 = vmatprep.subr.bf16.mxu0 0
  %1879 = vmatpush1.bf16.msra.mxu0 %v1318
  %1880 = vmatprep.subr.bf16.mxu0 0
  %1881 = vmatpush1.bf16.msra.mxu0 %v1319
  %1882 = vmatprep.subr.bf16.mxu0 0
  %1883 = vmatpush1.bf16.msra.mxu0 %v1320
  %1884 = vmatprep.subr.bf16.mxu0 0
  %1885 = vmatpush1.bf16.msra.mxu0 %v1321
  %1886 = vmatprep.subr.bf16.mxu0 0
  %1887 = vmatpush1.bf16.msra.mxu0 %v1322
  %1888 = vmatprep.subr.bf16.mxu0 0
  %1889 = vmatpush1.bf16.msra.mxu0 %v1323
  %1890 = vmatprep.subr.bf16.mxu0 0
  %1891 = vmatpush1.bf16.msra.mxu0 %v1324
  %1892 = vmatprep.subr.bf16.mxu0 0
  %1893 = vmatpush1.bf16.msra.mxu0 %v1325
  %1894 = vmatprep.subr.bf16.mxu0 0
  %1895 = vmatpush1.bf16.msra.mxu0 %v1326
  %1896 = vmatprep.subr.bf16.mxu0 0
  %1897 = vmatpush1.bf16.msra.mxu0 %v1327
  %1898 = vmatprep.subr.bf16.mxu0 0
  %1899 = vmatpush1.bf16.msra.mxu0 %v1328
  %1900 = vmatprep.subr.bf16.mxu0 0
  %1901 = vmatpush1.bf16.msra.mxu0 %v1329
  %1902 = vmatprep.subr.bf16.mxu0 0
  %1903 = vmatpush1.bf16.msra.mxu0 %v1330
  %1904 = vmatprep.subr.bf16.mxu0 0
  %1905 = vmatpush1.bf16.msra.mxu0 %v1331
  %1906 = vmatprep.subr.bf16.mxu0 0
  %1907 = vmatpush1.bf16.msra.mxu0 %v1332
  %1908 = vmatprep.subr.bf16.mxu0 0
  %1909 = vmatpush1.bf16.msra.mxu0 %v1333
  %1910 = vmatprep.mubr.bf16.mxu0 %v80
  %1911 = vmatmul.mubr.bf16.gmra.mrb[0].mxu0 %v79
  %v1912 = vpop.f32.mrb[0].mxu0
  %v1913 = vadd.f32 %v1873, %v1912
  %v1914 = vpop.f32.mrb[0].mxu0
  %v1915 = vpop.f32.mrb[0].mxu0
  %v1916 = vpop.f32.mrb[0].mxu0
  %1917 = vdwg.mxu0
  %1918 = vmatprep.subr.bf16.mxu0 0
  %1919 = vmatpush1.bf16.msra.mxu0 %v1334
  %1920 = vmatprep.subr.bf16.mxu0 0
  %1921 = vmatpush1.bf16.msra.mxu0 %v1335
  %1922 = vmatprep.subr.bf16.mxu0 0
  %1923 = vmatpush1.bf16.msra.mxu0 %v1336
  %1924 = vmatprep.subr.bf16.mxu0 0
  %1925 = vmatpush1.bf16.msra.mxu0 %v1337
  %1926 = vmatprep.subr.bf16.mxu0 0
  %1927 = vmatpush1.bf16.msra.mxu0 %v1338
  %1928 = vmatprep.subr.bf16.mxu0 0
  %1929 = vmatpush1.bf16.msra.mxu0 %v1339
  %1930 = vmatprep.subr.bf16.mxu0 0
  %1931 = vmatpush1.bf16.msra.mxu0 %v1340
  %1932 = vmatprep.subr.bf16.mxu0 0
  %1933 = vmatpush1.bf16.msra.mxu0 %v1341
  %1934 = vmatprep.subr.bf16.mxu0 0
  %1935 = vmatpush1.bf16.msra.mxu0 %v1342
  %1936 = vmatprep.subr.bf16.mxu0 0
  %1937 = vmatpush1.bf16.msra.mxu0 %v1343
  %1938 = vmatprep.subr.bf16.mxu0 0
  %1939 = vmatpush1.bf16.msra.mxu0 %v1344
  %1940 = vmatprep.subr.bf16.mxu0 0
  %1941 = vmatpush1.bf16.msra.mxu0 %v1345
  %1942 = vmatprep.subr.bf16.mxu0 0
  %1943 = vmatpush1.bf16.msra.mxu0 %v1346
  %1944 = vmatprep.subr.bf16.mxu0 0
  %1945 = vmatpush1.bf16.msra.mxu0 %v1347
  %1946 = vmatprep.subr.bf16.mxu0 0
  %1947 = vmatpush1.bf16.msra.mxu0 %v1348
  %1948 = vmatprep.subr.bf16.mxu0 0
  %1949 = vmatpush1.bf16.msra.mxu0 %v1349
  %1950 = vmatprep.mubr.bf16.mxu0 %v82
  %1951 = vmatmul.mubr.bf16.gmra.mrb[0].mxu0 %v81
  %v1952 = vpop.f32.mrb[0].mxu0
  %v1953 = vadd.f32 %v1913, %v1952
  %v1954 = vpop.f32.mrb[0].mxu0
  %v1955 = vpop.f32.mrb[0].mxu0
  %v1956 = vpop.f32.mrb[0].mxu0
  %1957 = vdwg.mxu0
  %1958 = vmatprep.subr.bf16.mxu0 0
  %1959 = vmatpush1.bf16.msra.mxu0 %v1350
  %1960 = vmatprep.subr.bf16.mxu0 0
  %1961 = vmatpush1.bf16.msra.mxu0 %v1351
  %1962 = vmatprep.subr.bf16.mxu0 0
  %1963 = vmatpush1.bf16.msra.mxu0 %v1352
  %1964 = vmatprep.subr.bf16.mxu0 0
  %1965 = vmatpush1.bf16.msra.mxu0 %v1353
  %1966 = vmatprep.subr.bf16.mxu0 0
  %1967 = vmatpush1.bf16.msra.mxu0 %v1354
  %1968 = vmatprep.subr.bf16.mxu0 0
  %1969 = vmatpush1.bf16.msra.mxu0 %v1355
  %1970 = vmatprep.subr.bf16.mxu0 0
  %1971 = vmatpush1.bf16.msra.mxu0 %v1356
  %1972 = vmatprep.subr.bf16.mxu0 0
  %1973 = vmatpush1.bf16.msra.mxu0 %v1357
  %1974 = vmatprep.subr.bf16.mxu0 0
  %1975 = vmatpush1.bf16.msra.mxu0 %v1358
  %1976 = vmatprep.subr.bf16.mxu0 0
  %1977 = vmatpush1.bf16.msra.mxu0 %v1359
  %1978 = vmatprep.subr.bf16.mxu0 0
  %1979 = vmatpush1.bf16.msra.mxu0 %v1360
  %1980 = vmatprep.subr.bf16.mxu0 0
  %1981 = vmatpush1.bf16.msra.mxu0 %v1361
  %1982 = vmatprep.subr.bf16.mxu0 0
  %1983 = vmatpush1.bf16.msra.mxu0 %v1362
  %1984 = vmatprep.subr.bf16.mxu0 0
  %1985 = vmatpush1.bf16.msra.mxu0 %v1363
  %1986 = vmatprep.subr.bf16.mxu0 0
  %1987 = vmatpush1.bf16.msra.mxu0 %v1364
  %1988 = vmatprep.subr.bf16.mxu0 0
  %1989 = vmatpush1.bf16.msra.mxu0 %v1365
  %1990 = vmatprep.mubr.bf16.mxu0 %v84
  %1991 = vmatmul.mubr.bf16.gmra.mrb[0].mxu0 %v83
  %v1992 = vpop.f32.mrb[0].mxu0
  %v1993 = vadd.f32 %v1953, %v1992
  %v1994 = vpop.f32.mrb[0].mxu0
  %v1995 = vpop.f32.mrb[0].mxu0
  %v1996 = vpop.f32.mrb[0].mxu0
  %1997 = vdwg.mxu0
  %1998 = vmatprep.subr.bf16.mxu0 0
  %1999 = vmatpush1.bf16.msra.mxu0 %v1366
  %2000 = vmatprep.subr.bf16.mxu0 0
  %2001 = vmatpush1.bf16.msra.mxu0 %v1367
  %2002 = vmatprep.subr.bf16.mxu0 0
  %2003 = vmatpush1.bf16.msra.mxu0 %v1368
  %2004 = vmatprep.subr.bf16.mxu0 0
  %2005 = vmatpush1.bf16.msra.mxu0 %v1369
  %2006 = vmatprep.subr.bf16.mxu0 0
  %2007 = vmatpush1.bf16.msra.mxu0 %v1370
  %2008 = vmatprep.subr.bf16.mxu0 0
  %2009 = vmatpush1.bf16.msra.mxu0 %v1371
  %2010 = vmatprep.subr.bf16.mxu0 0
  %2011 = vmatpush1.bf16.msra.mxu0 %v1372
  %2012 = vmatprep.subr.bf16.mxu0 0
  %2013 = vmatpush1.bf16.msra.mxu0 %v1373
  %2014 = vmatprep.subr.bf16.mxu0 0
  %2015 = vmatpush1.bf16.msra.mxu0 0
  %2016 = vmatprep.subr.bf16.mxu0 0
  %2017 = vmatpush1.bf16.msra.mxu0 0
  %2018 = vmatprep.subr.bf16.mxu0 0
  %2019 = vmatpush1.bf16.msra.mxu0 0
  %2020 = vmatprep.subr.bf16.mxu0 0
  %2021 = vmatpush1.bf16.msra.mxu0 0
  %2022 = vmatprep.subr.bf16.mxu0 0
  %2023 = vmatpush1.bf16.msra.mxu0 0
  %2024 = vmatprep.subr.bf16.mxu0 0
  %2025 = vmatpush1.bf16.msra.mxu0 0
  %2026 = vmatprep.subr.bf16.mxu0 0
  %2027 = vmatpush1.bf16.msra.mxu0 0
  %2028 = vmatprep.subr.bf16.mxu0 0
  %2029 = vmatpush1.bf16.msra.mxu0 0
  %2030 = vmatprep.mubr.bf16.mxu0 0
  %2031 = vmatmul.mubr.bf16.gmra.mrb[0].mxu0 %v85
  %v2032 = vpop.f32.mrb[0].mxu0
  %v2033 = vadd.f32 %v1993, %v2032
  %v2034 = vpop.f32.mrb[0].mxu0
  %v2035 = vpop.f32.mrb[0].mxu0
  %v2036 = vpop.f32.mrb[0].mxu0
  %2037 = vdwg.mxu0
  %v2038 = vmax.f32 %v2033, 0.0
  %v2039 = vpack.c.bf16 %v2038, %v2038
  %v2040 = vld [vmem:[%s2] sm:$0xf]
  %v2041 = vld [vmem:[%s2 + $0x4] sm:$0xf]
  %v2042 = vld [vmem:[%s2 + $0x8] sm:$0xf]
  %v2043 = vld [vmem:[%s2 + $0xc] sm:$0xf]
  %v2044 = vld [vmem:[%s2 + $0x10] sm:$0xf]
  %v2045 = vld [vmem:[%s2 + $0x14] sm:$0xf]
  %v2046 = vld [vmem:[%s2 + $0x18] sm:$0xf]
  %v2047 = vld [vmem:[%s2 + $0x1c] sm:$0xf]
  %v2048 = vld [vmem:[%s2 + $0x20] sm:$0xf]
  %v2049 = vld [vmem:[%s2 + $0x24] sm:$0xf]
  %v2050 = vld [vmem:[%s2 + $0x28] sm:$0xf]
  %v2051 = vld [vmem:[%s2 + $0x2c] sm:$0xf]
  %v2052 = vld [vmem:[%s2 + $0x30] sm:$0xf]
  %v2053 = vld [vmem:[%s2 + $0x34] sm:$0xf]
  %v2054 = vld [vmem:[%s2 + $0x38] sm:$0xf]
  %v2055 = vld [vmem:[%s2 + $0x3c] sm:$0xf]
  %v2072 = vunpack.c.l.b16 %v2040
  %v2073 = vunpack.c.l.b16 %v2041
  %v2074 = vunpack.c.l.b16 %v2042
  %v2075 = vunpack.c.l.b16 %v2043
  %v2076 = vunpack.c.l.b16 %v2044
  %v2077 = vunpack.c.l.b16 %v2045
  %v2078 = vunpack.c.l.b16 %v2046
  %v2079 = vunpack.c.l.b16 %v2047
  %v2080 = vunpack.c.l.b16 %v2048
  %v2081 = vunpack.c.l.b16 %v2049
  %v2082 = vunpack.c.l.b16 %v2050
  %v2083 = vunpack.c.l.b16 %v2051
  %v2084 = vunpack.c.l.b16 %v2052
  %v2085 = vunpack.c.l.b16 %v2053
  %v2086 = vunpack.c.l.b16 %v2054
  %v2087 = vunpack.c.l.b16 %v2055
  %v2088 = vpack.c.b16 %v2073, %v2072
  %v2089 = vpack.c.b16 %v2075, %v2074
  %v2090 = vpack.c.b16 %v2077, %v2076
  %v2091 = vpack.c.b16 %v2079, %v2078
  %v2092 = vpack.c.b16 %v2081, %v2080
  %v2093 = vpack.c.b16 %v2083, %v2082
  %v2094 = vpack.c.b16 %v2085, %v2084
  %v2095 = vpack.c.b16 %v2087, %v2086
  %2104 = vmatprep.subr.bf16.mxu0 0
  %2105 = vmatpush1.bf16.msra.mxu0 %v2088
  %2106 = vmatprep.subr.bf16.mxu0 0
  %2107 = vmatpush1.bf16.msra.mxu0 %v2089
  %2108 = vmatprep.subr.bf16.mxu0 0
  %2109 = vmatpush1.bf16.msra.mxu0 %v2090
  %2110 = vmatprep.subr.bf16.mxu0 0
  %2111 = vmatpush1.bf16.msra.mxu0 %v2091
  %2112 = vmatprep.subr.bf16.mxu0 0
  %2113 = vmatpush1.bf16.msra.mxu0 %v2092
  %2114 = vmatprep.subr.bf16.mxu0 0
  %2115 = vmatpush1.bf16.msra.mxu0 %v2093
  %2116 = vmatprep.subr.bf16.mxu0 0
  %2117 = vmatpush1.bf16.msra.mxu0 %v2094
  %2118 = vmatprep.subr.bf16.mxu0 0
  %2119 = vmatpush1.bf16.msra.mxu0 %v2095
  %2120 = vmatprep.subr.bf16.mxu0 0
  %2121 = vmatpush1.bf16.msra.mxu0 0
  %2122 = vmatprep.subr.bf16.mxu0 0
  %2123 = vmatpush1.bf16.msra.mxu0 0
  %2124 = vmatprep.subr.bf16.mxu0 0
  %2125 = vmatpush1.bf16.msra.mxu0 0
  %2126 = vmatprep.subr.bf16.mxu0 0
  %2127 = vmatpush1.bf16.msra.mxu0 0
  %2128 = vmatprep.subr.bf16.mxu0 0
  %2129 = vmatpush1.bf16.msra.mxu0 0
  %2130 = vmatprep.subr.bf16.mxu0 0
  %2131 = vmatpush1.bf16.msra.mxu0 0
  %2132 = vmatprep.subr.bf16.mxu0 0
  %2133 = vmatpush1.bf16.msra.mxu0 0
  %2134 = vmatprep.subr.bf16.mxu0 0
  %2135 = vmatpush1.bf16.msra.mxu0 0
  %2136 = vmatprep.mubr.bf16.mxu0 0
  %2137 = vmatmul.mubr.bf16.gmra.mrb[0].mxu0 %v2039
  %v2138 = vpop.f32.mrb[0].mxu0
  %v2139 = vadd.f32 0.0, %v2138
  %v2140 = vpop.f32.mrb[0].mxu0
  %v2141 = vpop.f32.mrb[0].mxu0
  %v2142 = vpop.f32.mrb[0].mxu0
  %2143 = vdwg.mxu0
  %v2144 = vmax.f32 %v2139, 0.0
  %v2145 = vpack.c.bf16 %v2144, %v2144
  %v2146 = vld [vmem:[%s3] sm:$0xff]
  %v2147 = vld [vmem:[%s3 + $0x8] sm:$0xff]
  %v2148 = vld [vmem:[%s3 + $0x10] sm:$0xff]
  %v2149 = vld [vmem:[%s3 + $0x18] sm:$0xff]
  %v2150 = vld [vmem:[%s3 + $0x20] sm:$0xff]
  %v2151 = vld [vmem:[%s3 + $0x28] sm:$0xff]
  %v2152 = vld [vmem:[%s3 + $0x30] sm:$0xff]
  %v2153 = vld [vmem:[%s3 + $0x38] sm:$0xff]
  %v2154 = vld [vmem:[%s3 + $0x40] sm:$0xff]
  %v2155 = vld [vmem:[%s3 + $0x48] sm:$0xff]
  %v2156 = vld [vmem:[%s3 + $0x50] sm:$0xff]
  %v2157 = vld [vmem:[%s3 + $0x58] sm:$0xff]
  %v2158 = vld [vmem:[%s3 + $0x60] sm:$0xff]
  %v2159 = vld [vmem:[%s3 + $0x68] sm:$0xff]
  %v2160 = vld [vmem:[%s3 + $0x70] sm:$0xff]
  %v2161 = vld [vmem:[%s3 + $0x78] sm:$0xff]
  %v2178 = vunpack.c.l.b16 %v2146
  %v2179 = vunpack.c.h.b16 %v2146
  %v2180 = vunpack.c.l.b16 %v2147
  %v2181 = vunpack.c.h.b16 %v2147
  %v2182 = vunpack.c.l.b16 %v2148
  %v2183 = vunpack.c.h.b16 %v2148
  %v2184 = vunpack.c.l.b16 %v2149
  %v2185 = vunpack.c.h.b16 %v2149
  %v2186 = vunpack.c.l.b16 %v2150
  %v2187 = vunpack.c.h.b16 %v2150
  %v2188 = vunpack.c.l.b16 %v2151
  %v2189 = vunpack.c.h.b16 %v2151
  %v2190 = vunpack.c.l.b16 %v2152
  %v2191 = vunpack.c.h.b16 %v2152
  %v2192 = vunpack.c.l.b16 %v2153
  %v2193 = vunpack.c.h.b16 %v2153
  %v2194 = vunpack.c.l.b16 %v2154
  %v2195 = vunpack.c.h.b16 %v2154
  %v2196 = vunpack.c.l.b16 %v2155
  %v2197 = vunpack.c.h.b16 %v2155
  %v2198 = vunpack.c.l.b16 %v2156
  %v2199 = vunpack.c.h.b16 %v2156
  %v2200 = vunpack.c.l.b16 %v2157
  %v2201 = vunpack.c.h.b16 %v2157
  %v2202 = vunpack.c.l.b16 %v2158
  %v2203 = vunpack.c.h.b16 %v2158
  %v2204 = vunpack.c.l.b16 %v2159
  %v2205 = vunpack.c.h.b16 %v2159
  %v2206 = vunpack.c.l.b16 %v2160
  %v2207 = vunpack.c.h.b16 %v2160
  %v2208 = vunpack.c.l.b16 %v2161
  %v2209 = vunpack.c.h.b16 %v2161
  %v2210 = vpack.c.b16 %v2180, %v2178
  %v2211 = vpack.c.b16 %v2181, %v2179
  %v2212 = vpack.c.b16 %v2184, %v2182
  %v2213 = vpack.c.b16 %v2185, %v2183
  %v2214 = vpack.c.b16 %v2188, %v2186
  %v2215 = vpack.c.b16 %v2189, %v2187
  %v2216 = vpack.c.b16 %v2192, %v2190
  %v2217 = vpack.c.b16 %v2193, %v2191
  %v2218 = vpack.c.b16 %v2196, %v2194
  %v2219 = vpack.c.b16 %v2197, %v2195
  %v2220 = vpack.c.b16 %v2200, %v2198
  %v2221 = vpack.c.b16 %v2201, %v2199
  %v2222 = vpack.c.b16 %v2204, %v2202
  %v2223 = vpack.c.b16 %v2205, %v2203
  %v2224 = vpack.c.b16 %v2208, %v2206
  %v2225 = vpack.c.b16 %v2209, %v2207
  %2242 = vmatprep.subr.bf16.mxu0 %v2211
  %2243 = vmatpush1.bf16.msra.mxu0 %v2210
  %2244 = vmatprep.subr.bf16.mxu0 %v2213
  %2245 = vmatpush1.bf16.msra.mxu0 %v2212
  %2246 = vmatprep.subr.bf16.mxu0 %v2215
  %2247 = vmatpush1.bf16.msra.mxu0 %v2214
  %2248 = vmatprep.subr.bf16.mxu0 %v2217
  %2249 = vmatpush1.bf16.msra.mxu0 %v2216
  %2250 = vmatprep.subr.bf16.mxu0 %v2219
  %2251 = vmatpush1.bf16.msra.mxu0 %v2218
  %2252 = vmatprep.subr.bf16.mxu0 %v2221
  %2253 = vmatpush1.bf16.msra.mxu0 %v2220
  %2254 = vmatprep.subr.bf16.mxu0 %v2223
  %2255 = vmatpush1.bf16.msra.mxu0 %v2222
  %2256 = vmatprep.subr.bf16.mxu0 %v2225
  %2257 = vmatpush1.bf16.msra.mxu0 %v2224
  %2258 = vmatprep.subr.bf16.mxu0 0
  %2259 = vmatpush1.bf16.msra.mxu0 0
  %2260 = vmatprep.subr.bf16.mxu0 0
  %2261 = vmatpush1.bf16.msra.mxu0 0
  %2262 = vmatprep.subr.bf16.mxu0 0
  %2263 = vmatpush1.bf16.msra.mxu0 0
  %2264 = vmatprep.subr.bf16.mxu0 0
  %2265 = vmatpush1.bf16.msra.mxu0 0
  %2266 = vmatprep.subr.bf16.mxu0 0
  %2267 = vmatpush1.bf16.msra.mxu0 0
  %2268 = vmatprep.subr.bf16.mxu0 0
  %2269 = vmatpush1.bf16.msra.mxu0 0
  %2270 = vmatprep.subr.bf16.mxu0 0
  %2271 = vmatpush1.bf16.msra.mxu0 0
  %2272 = vmatprep.subr.bf16.mxu0 0
  %2273 = vmatpush1.bf16.msra.mxu0 0
  %2274 = vmatprep.mubr.bf16.mxu0 0
  %2275 = vmatmul.mubr.bf16.gmra.mrb[0].mxu0 %v2145
  %v2276 = vpop.f32.mrb[0].mxu0
  %v2277 = vadd.f32 0.0, %v2276
  %v2278 = vpop.f32.mrb[0].mxu0
  %v2279 = vadd.f32 0.0, %v2278
  %v2280 = vpop.f32.mrb[0].mxu0
  %v2281 = vpop.f32.mrb[0].mxu0
  %2282 = vdwg.mxu0
  %v2283 = vmax.f32 %v2277, 0.0
  %v2284 = vmax.f32 %v2279, 0.0
  %v2287 = vcombine.low %v2283, %v2284
  %2289 = vst [vmem:[%s4] sm:$0xff] %v2287
  // Predicated region
  $region18: #{finet_forward.10} parent=0 // pred_check
    _
  $region19: #{finet_forward.10} parent=0 // pred_check_branch
    %2291 = sbr.rel (0) target = $region21
  $region20: #{finet_forward.10} parent=0 // pred_region
    _
  $region21: #{finet_forward.10} parent=0 // pred_fallthru
    _
  // Predicated region
  $region22: #{finet_forward.10} parent=0 // pred_check
    _
  $region23: #{finet_forward.10} parent=0 // pred_check_branch
    %2293 = sbr.rel (0) target = $region25
  $region24: #{finet_forward.10} parent=0 // pred_region
    _
  $region25: #{finet_forward.10} parent=0 // pred_fallthru
    _

// kernel: finet_forward.12
$region0: #{finet_forward.12}
  #allocation0 [shape = 'u32[]', space=smem, size = 0x4, offset = 0x4, fixed_abs, tag = 'smem constant byte address 0x4 - core index']
  #allocation1 [shape = 'u32[144,128]{1,0:T(1,128)}', space=vmem, size = 0x12000, scoped, tag = 'internal scratch']
  %s0 = inlined_call_operand.vmem [shape: f32[2,1024], index: 0, kind: input, shape index: {}]
  %s1 = inlined_call_operand.vmem [shape: bf16[1024,32], index: 1, kind: input, shape index: {}]
  %s2 = inlined_call_operand.vmem [shape: bf16[32,64], index: 2, kind: input, shape index: {}]
  %s3 = inlined_call_operand.vmem [shape: bf16[64,128], index: 3, kind: input, shape index: {}]
  %s4 = inlined_call_operand.vmem [shape: bf16[128,4], index: 4, kind: input, shape index: {}]
  %s5 = inlined_call_operand.vmem [shape: f32[2,4], index: 5, kind: output, shape index: {}]
  %s6 = sld [smem:[#allocation0]]
  $region30: #{finet_forward.12} parent=0
    _
  %s8 = ssub.s32 1, %s6
  %s9 = scalar_select 0, %s8, %s6
  // Predicated region
  $region2: #{finet_forward.12} parent=0 // pred_check
    _
  $region3: #{finet_forward.12} parent=0 // pred_check_branch
    %11 = sbr.rel (0) target = $region5
  $region4: #{finet_forward.12} parent=0 // pred_region
    _
  $region5: #{finet_forward.12} parent=0 // pred_fallthru
    _
  // Predicated region
  $region6: #{finet_forward.12} parent=0 // pred_check
    _
  $region7: #{finet_forward.12} parent=0 // pred_check_branch
    %13 = sbr.rel (0) target = $region9
  $region8: #{finet_forward.12} parent=0 // pred_region
    _
  $region9: #{finet_forward.12} parent=0 // pred_fallthru
    _
  // Predicated region
  $region10: #{finet_forward.12} parent=0 // pred_check
    _
  $region11: #{finet_forward.12} parent=0 // pred_check_branch
    %15 = sbr.rel (0) target = $region13
  $region12: #{finet_forward.12} parent=0 // pred_region
    _
  $region13: #{finet_forward.12} parent=0 // pred_fallthru
    _
  // Predicated region
  $region14: #{finet_forward.12} parent=0 // pred_check
    _
  $region15: #{finet_forward.12} parent=0 // pred_check_branch
    %17 = sbr.rel (0) target = $region17
  $region16: #{finet_forward.12} parent=0 // pred_region
    _
  $region17: #{finet_forward.12} parent=0 // pred_fallthru
    _
  // Predicated region
  $region18: #{finet_forward.12} parent=0 // pred_check
    _
  $region19: #{finet_forward.12} parent=0 // pred_check_branch
    %19 = sbr.rel (0) target = $region21
  $region20: #{finet_forward.12} parent=0 // pred_region
    _
  $region21: #{finet_forward.12} parent=0 // pred_fallthru
    _
  %v21 = vld [vmem:[%s0] sm:$0xff]
  %v22 = vld [vmem:[%s0 + $0x8] sm:$0xff]
  %v25 = vcombine.high %v21, %v21
  %v27 = vunpack.c.l.s4 1983009808
  %v28 = vunpack.c.0.s8 %v27
  %v29 = vlaneseq
  %v30 = vshrl.u32 %v29, 7
  %v31 = vsub.s32 %v28, %v30
  %v32 = vrot.slane %v21, %v31
  %v34 = vunpack.c.l.s4 1983009808
  %v35 = vunpack.c.0.s8 %v34
  %v36 = vlaneseq
  %v37 = vshrl.u32 %v36, 7
  %v38 = vsub.s32 %v35, %v37
  %v39 = vrot.slane %v25, %v38
  %v40 = vcombine.high %v32, %v32
  %v41 = vcombine.high %v39, %v39
  %v42 = vcombine.high %v22, %v22
  %v44 = vunpack.c.l.s4 1983009808
  %v45 = vunpack.c.0.s8 %v44
  %v46 = vlaneseq
  %v47 = vshrl.u32 %v46, 7
  %v48 = vsub.s32 %v45, %v47
  %v49 = vrot.slane %v22, %v48
  %v51 = vunpack.c.l.s4 1983009808
  %v52 = vunpack.c.0.s8 %v51
  %v53 = vlaneseq
  %v54 = vshrl.u32 %v53, 7
  %v55 = vsub.s32 %v52, %v54
  %v56 = vrot.slane %v42, %v55
  %v57 = vcombine.high %v49, %v49
  %v58 = vcombine.high %v56, %v56
  %v67 = vpack.c.bf16 %v32, %v32
  %v68 = vpack.c.bf16 %v40, %v40
  %v69 = vpack.c.bf16 %v39, %v39
  %v70 = vpack.c.bf16 %v41, %v41
  %v71 = vpack.c.bf16 %v49, %v49
  %v72 = vpack.c.bf16 %v57, %v57
  %v73 = vpack.c.bf16 %v56, %v56
  %v74 = vpack.c.bf16 %v58, %v58
  %v75 = vld [vmem:[%s1] sm:$0xf]
  %v76 = vld [vmem:[%s1 + $0x4] sm:$0xf]
  %v77 = vld [vmem:[%s1 + $0x8] sm:$0xf]
  %v78 = vld [vmem:[%s1 + $0xc] sm:$0xf]
  %v79 = vld [vmem:[%s1 + $0x10] sm:$0xf]
  %v80 = vld [vmem:[%s1 + $0x14] sm:$0xf]
  %v81 = vld [vmem:[%s1 + $0x18] sm:$0xf]
  %v82 = vld [vmem:[%s1 + $0x1c] sm:$0xf]
  %v83 = vld [vmem:[%s1 + $0x20] sm:$0xf]
  %v84 = vld [vmem:[%s1 + $0x24] sm:$0xf]
  %v85 = vld [vmem:[%s1 + $0x28] sm:$0xf]
  %v86 = vld [vmem:[%s1 + $0x2c] sm:$0xf]
  %v87 = vld [vmem:[%s1 + $0x30] sm:$0xf]
  %v88 = vld [vmem:[%s1 + $0x34] sm:$0xf]
  %v89 = vld [vmem:[%s1 + $0x38] sm:$0xf]
  %v90 = vld [vmem:[%s1 + $0x3c] sm:$0xf]
  %v91 = vld [vmem:[%s1 + $0x40] sm:$0xf]
  %v92 = vld [vmem:[%s1 + $0x44] sm:$0xf]
  %v93 = vld [vmem:[%s1 + $0x48] sm:$0xf]
  %v94 = vld [vmem:[%s1 + $0x4c] sm:$0xf]
  %v95 = vld [vmem:[%s1 + $0x50] sm:$0xf]
  %v96 = vld [vmem:[%s1 + $0x54] sm:$0xf]
  %v97 = vld [vmem:[%s1 + $0x58] sm:$0xf]
  %v98 = vld [vmem:[%s1 + $0x5c] sm:$0xf]
  %v99 = vld [vmem:[%s1 + $0x60] sm:$0xf]
  %v100 = vld [vmem:[%s1 + $0x64] sm:$0xf]
  %v101 = vld [vmem:[%s1 + $0x68] sm:$0xf]
  %v102 = vld [vmem:[%s1 + $0x6c] sm:$0xf]
  %v103 = vld [vmem:[%s1 + $0x70] sm:$0xf]
  %v104 = vld [vmem:[%s1 + $0x74] sm:$0xf]
  %v105 = vld [vmem:[%s1 + $0x78] sm:$0xf]
  %v106 = vld [vmem:[%s1 + $0x7c] sm:$0xf]
  %v107 = vld [vmem:[%s1 + $0x80] sm:$0xf]
  %v108 = vld [vmem:[%s1 + $0x84] sm:$0xf]
  %v109 = vld [vmem:[%s1 + $0x88] sm:$0xf]
  %v110 = vld [vmem:[%s1 + $0x8c] sm:$0xf]
  %v111 = vld [vmem:[%s1 + $0x90] sm:$0xf]
  %v112 = vld [vmem:[%s1 + $0x94] sm:$0xf]
  %v113 = vld [vmem:[%s1 + $0x98] sm:$0xf]
  %v114 = vld [vmem:[%s1 + $0x9c] sm:$0xf]
  %v115 = vld [vmem:[%s1 + $0xa0] sm:$0xf]
  %v116 = vld [vmem:[%s1 + $0xa4] sm:$0xf]
  %v117 = vld [vmem:[%s1 + $0xa8] sm:$0xf]
  %v118 = vld [vmem:[%s1 + $0xac] sm:$0xf]
  %v119 = vld [vmem:[%s1 + $0xb0] sm:$0xf]
  %v120 = vld [vmem:[%s1 + $0xb4] sm:$0xf]
  %v121 = vld [vmem:[%s1 + $0xb8] sm:$0xf]
  %v122 = vld [vmem:[%s1 + $0xbc] sm:$0xf]
  %v123 = vld [vmem:[%s1 + $0xc0] sm:$0xf]
  %v124 = vld [vmem:[%s1 + $0xc4] sm:$0xf]
  %v125 = vld [vmem:[%s1 + $0xc8] sm:$0xf]
  %v126 = vld [vmem:[%s1 + $0xcc] sm:$0xf]
  %v127 = vld [vmem:[%s1 + $0xd0] sm:$0xf]
  %v128 = vld [vmem:[%s1 + $0xd4] sm:$0xf]
  %v129 = vld [vmem:[%s1 + $0xd8] sm:$0xf]
  %v130 = vld [vmem:[%s1 + $0xdc] sm:$0xf]
  %v131 = vld [vmem:[%s1 + $0xe0] sm:$0xf]
  %v132 = vld [vmem:[%s1 + $0xe4] sm:$0xf]
  %v133 = vld [vmem:[%s1 + $0xe8] sm:$0xf]
  %v134 = vld [vmem:[%s1 + $0xec] sm:$0xf]
  %v135 = vld [vmem:[%s1 + $0xf0] sm:$0xf]
  %v136 = vld [vmem:[%s1 + $0xf4] sm:$0xf]
  %v137 = vld [vmem:[%s1 + $0xf8] sm:$0xf]
  %v138 = vld [vmem:[%s1 + $0xfc] sm:$0xf]
  %v139 = vld [vmem:[%s1 + $0x100] sm:$0xf]
  %v140 = vld [vmem:[%s1 + $0x104] sm:$0xf]
  %v141 = vld [vmem:[%s1 + $0x108] sm:$0xf]
  %v142 = vld [vmem:[%s1 + $0x10c] sm:$0xf]
  %v143 = vld [vmem:[%s1 + $0x110] sm:$0xf]
  %v144 = vld [vmem:[%s1 + $0x114] sm:$0xf]
  %v145 = vld [vmem:[%s1 + $0x118] sm:$0xf]
  %v146 = vld [vmem:[%s1 + $0x11c] sm:$0xf]
  %v147 = vld [vmem:[%s1 + $0x120] sm:$0xf]
  %v148 = vld [vmem:[%s1 + $0x124] sm:$0xf]
  %v149 = vld [vmem:[%s1 + $0x128] sm:$0xf]
  %v150 = vld [vmem:[%s1 + $0x12c] sm:$0xf]
  %v151 = vld [vmem:[%s1 + $0x130] sm:$0xf]
  %v152 = vld [vmem:[%s1 + $0x134] sm:$0xf]
  %v153 = vld [vmem:[%s1 + $0x138] sm:$0xf]
  %v154 = vld [vmem:[%s1 + $0x13c] sm:$0xf]
  %v155 = vld [vmem:[%s1 + $0x140] sm:$0xf]
  %v156 = vld [vmem:[%s1 + $0x144] sm:$0xf]
  %v157 = vld [vmem:[%s1 + $0x148] sm:$0xf]
  %v158 = vld [vmem:[%s1 + $0x14c] sm:$0xf]
  %v159 = vld [vmem:[%s1 + $0x150] sm:$0xf]
  %v160 = vld [vmem:[%s1 + $0x154] sm:$0xf]
  %v161 = vld [vmem:[%s1 + $0x158] sm:$0xf]
  %v162 = vld [vmem:[%s1 + $0x15c] sm:$0xf]
  %v163 = vld [vmem:[%s1 + $0x160] sm:$0xf]
  %v164 = vld [vmem:[%s1 + $0x164] sm:$0xf]
  %v165 = vld [vmem:[%s1 + $0x168] sm:$0xf]
  %v166 = vld [vmem:[%s1 + $0x16c] sm:$0xf]
  %v167 = vld [vmem:[%s1 + $0x170] sm:$0xf]
  %v168 = vld [vmem:[%s1 + $0x174] sm:$0xf]
  %v169 = vld [vmem:[%s1 + $0x178] sm:$0xf]
  %v170 = vld [vmem:[%s1 + $0x17c] sm:$0xf]
  %v171 = vld [vmem:[%s1 + $0x180] sm:$0xf]
  %v172 = vld [vmem:[%s1 + $0x184] sm:$0xf]
  %v173 = vld [vmem:[%s1 + $0x188] sm:$0xf]
  %v174 = vld [vmem:[%s1 + $0x18c] sm:$0xf]
  %v175 = vld [vmem:[%s1 + $0x190] sm:$0xf]
  %v176 = vld [vmem:[%s1 + $0x194] sm:$0xf]
  %v177 = vld [vmem:[%s1 + $0x198] sm:$0xf]
  %v178 = vld [vmem:[%s1 + $0x19c] sm:$0xf]
  %v179 = vld [vmem:[%s1 + $0x1a0] sm:$0xf]
  %v180 = vld [vmem:[%s1 + $0x1a4] sm:$0xf]
  %v181 = vld [vmem:[%s1 + $0x1a8] sm:$0xf]
  %v182 = vld [vmem:[%s1 + $0x1ac] sm:$0xf]
  %v183 = vld [vmem:[%s1 + $0x1b0] sm:$0xf]
  %v184 = vld [vmem:[%s1 + $0x1b4] sm:$0xf]
  %v185 = vld [vmem:[%s1 + $0x1b8] sm:$0xf]
  %v186 = vld [vmem:[%s1 + $0x1bc] sm:$0xf]
  %v187 = vld [vmem:[%s1 + $0x1c0] sm:$0xf]
  %v188 = vld [vmem:[%s1 + $0x1c4] sm:$0xf]
  %v189 = vld [vmem:[%s1 + $0x1c8] sm:$0xf]
  %v190 = vld [vmem:[%s1 + $0x1cc] sm:$0xf]
  %v191 = vld [vmem:[%s1 + $0x1d0] sm:$0xf]
  %v192 = vld [vmem:[%s1 + $0x1d4] sm:$0xf]
  %v193 = vld [vmem:[%s1 + $0x1d8] sm:$0xf]
  %v194 = vld [vmem:[%s1 + $0x1dc] sm:$0xf]
  %v195 = vld [vmem:[%s1 + $0x1e0] sm:$0xf]
  %v196 = vld [vmem:[%s1 + $0x1e4] sm:$0xf]
  %v197 = vld [vmem:[%s1 + $0x1e8] sm:$0xf]
  %v198 = vld [vmem:[%s1 + $0x1ec] sm:$0xf]
  %v199 = vld [vmem:[%s1 + $0x1f0] sm:$0xf]
  %v200 = vld [vmem:[%s1 + $0x1f4] sm:$0xf]
  %v201 = vld [vmem:[%s1 + $0x1f8] sm:$0xf]
  %v202 = vld [vmem:[%s1 + $0x1fc] sm:$0xf]
  %v331 = vunpack.c.l.b16 %v75
  %v332 = vunpack.c.l.b16 %v76
  %v333 = vunpack.c.l.b16 %v77
  %v334 = vunpack.c.l.b16 %v78
  %v335 = vunpack.c.l.b16 %v79
  %v336 = vunpack.c.l.b16 %v80
  %v337 = vunpack.c.l.b16 %v81
  %v338 = vunpack.c.l.b16 %v82
  %v339 = vunpack.c.l.b16 %v83
  %v340 = vunpack.c.l.b16 %v84
  %v341 = vunpack.c.l.b16 %v85
  %v342 = vunpack.c.l.b16 %v86
  %v343 = vunpack.c.l.b16 %v87
  %v344 = vunpack.c.l.b16 %v88
  %v345 = vunpack.c.l.b16 %v89
  %v346 = vunpack.c.l.b16 %v90
  %v347 = vunpack.c.l.b16 %v91
  %v348 = vunpack.c.l.b16 %v92
  %v349 = vunpack.c.l.b16 %v93
  %v350 = vunpack.c.l.b16 %v94
  %v351 = vunpack.c.l.b16 %v95
  %v352 = vunpack.c.l.b16 %v96
  %v353 = vunpack.c.l.b16 %v97
  %v354 = vunpack.c.l.b16 %v98
  %v355 = vunpack.c.l.b16 %v99
  %v356 = vunpack.c.l.b16 %v100
  %v357 = vunpack.c.l.b16 %v101
  %v358 = vunpack.c.l.b16 %v102
  %v359 = vunpack.c.l.b16 %v103
  %v360 = vunpack.c.l.b16 %v104
  %v361 = vunpack.c.l.b16 %v105
  %v362 = vunpack.c.l.b16 %v106
  %v363 = vunpack.c.l.b16 %v107
  %v364 = vunpack.c.l.b16 %v108
  %v365 = vunpack.c.l.b16 %v109
  %v366 = vunpack.c.l.b16 %v110
  %v367 = vunpack.c.l.b16 %v111
  %v368 = vunpack.c.l.b16 %v112
  %v369 = vunpack.c.l.b16 %v113
  %v370 = vunpack.c.l.b16 %v114
  %v371 = vunpack.c.l.b16 %v115
  %v372 = vunpack.c.l.b16 %v116
  %v373 = vunpack.c.l.b16 %v117
  %v374 = vunpack.c.l.b16 %v118
  %v375 = vunpack.c.l.b16 %v119
  %v376 = vunpack.c.l.b16 %v120
  %v377 = vunpack.c.l.b16 %v121
  %v378 = vunpack.c.l.b16 %v122
  %v379 = vunpack.c.l.b16 %v123
  %v380 = vunpack.c.l.b16 %v124
  %v381 = vunpack.c.l.b16 %v125
  %v382 = vunpack.c.l.b16 %v126
  %v383 = vunpack.c.l.b16 %v127
  %v384 = vunpack.c.l.b16 %v128
  %v385 = vunpack.c.l.b16 %v129
  %v386 = vunpack.c.l.b16 %v130
  %v387 = vunpack.c.l.b16 %v131
  %v388 = vunpack.c.l.b16 %v132
  %v389 = vunpack.c.l.b16 %v133
  %v390 = vunpack.c.l.b16 %v134
  %v391 = vunpack.c.l.b16 %v135
  %v392 = vunpack.c.l.b16 %v136
  %v393 = vunpack.c.l.b16 %v137
  %v394 = vunpack.c.l.b16 %v138
  %v395 = vunpack.c.l.b16 %v139
  %v396 = vunpack.c.l.b16 %v140
  %v397 = vunpack.c.l.b16 %v141
  %v398 = vunpack.c.l.b16 %v142
  %v399 = vunpack.c.l.b16 %v143
  %v400 = vunpack.c.l.b16 %v144
  %v401 = vunpack.c.l.b16 %v145
  %v402 = vunpack.c.l.b16 %v146
  %v403 = vunpack.c.l.b16 %v147
  %v404 = vunpack.c.l.b16 %v148
  %v405 = vunpack.c.l.b16 %v149
  %v406 = vunpack.c.l.b16 %v150
  %v407 = vunpack.c.l.b16 %v151
  %v408 = vunpack.c.l.b16 %v152
  %v409 = vunpack.c.l.b16 %v153
  %v410 = vunpack.c.l.b16 %v154
  %v411 = vunpack.c.l.b16 %v155
  %v412 = vunpack.c.l.b16 %v156
  %v413 = vunpack.c.l.b16 %v157
  %v414 = vunpack.c.l.b16 %v158
  %v415 = vunpack.c.l.b16 %v159
  %v416 = vunpack.c.l.b16 %v160
  %v417 = vunpack.c.l.b16 %v161
  %v418 = vunpack.c.l.b16 %v162
  %v419 = vunpack.c.l.b16 %v163
  %v420 = vunpack.c.l.b16 %v164
  %v421 = vunpack.c.l.b16 %v165
  %v422 = vunpack.c.l.b16 %v166
  %v423 = vunpack.c.l.b16 %v167
  %v424 = vunpack.c.l.b16 %v168
  %v425 = vunpack.c.l.b16 %v169
  %v426 = vunpack.c.l.b16 %v170
  %v427 = vunpack.c.l.b16 %v171
  %v428 = vunpack.c.l.b16 %v172
  %v429 = vunpack.c.l.b16 %v173
  %v430 = vunpack.c.l.b16 %v174
  %v431 = vunpack.c.l.b16 %v175
  %v432 = vunpack.c.l.b16 %v176
  %v433 = vunpack.c.l.b16 %v177
  %v434 = vunpack.c.l.b16 %v178
  %v435 = vunpack.c.l.b16 %v179
  %v436 = vunpack.c.l.b16 %v180
  %v437 = vunpack.c.l.b16 %v181
  %v438 = vunpack.c.l.b16 %v182
  %v439 = vunpack.c.l.b16 %v183
  %v440 = vunpack.c.l.b16 %v184
  %v441 = vunpack.c.l.b16 %v185
  %v442 = vunpack.c.l.b16 %v186
  %v443 = vunpack.c.l.b16 %v187
  %v444 = vunpack.c.l.b16 %v188
  %v445 = vunpack.c.l.b16 %v189
  %v446 = vunpack.c.l.b16 %v190
  %v447 = vunpack.c.l.b16 %v191
  %v448 = vunpack.c.l.b16 %v192
  %v449 = vunpack.c.l.b16 %v193
  %v450 = vunpack.c.l.b16 %v194
  %v451 = vunpack.c.l.b16 %v195
  %v452 = vunpack.c.l.b16 %v196
  %v453 = vunpack.c.l.b16 %v197
  %v454 = vunpack.c.l.b16 %v198
  %v455 = vunpack.c.l.b16 %v199
  %v456 = vunpack.c.l.b16 %v200
  %v457 = vunpack.c.l.b16 %v201
  %v458 = vunpack.c.l.b16 %v202
  %v459 = vpack.c.b16 %v332, %v331
  %v460 = vpack.c.b16 %v334, %v333
  %v461 = vpack.c.b16 %v336, %v335
  %v462 = vpack.c.b16 %v338, %v337
  %v463 = vpack.c.b16 %v340, %v339
  %v464 = vpack.c.b16 %v342, %v341
  %v465 = vpack.c.b16 %v344, %v343
  %v466 = vpack.c.b16 %v346, %v345
  %v467 = vpack.c.b16 %v348, %v347
  %v468 = vpack.c.b16 %v350, %v349
  %v469 = vpack.c.b16 %v352, %v351
  %v470 = vpack.c.b16 %v354, %v353
  %v471 = vpack.c.b16 %v356, %v355
  %v472 = vpack.c.b16 %v358, %v357
  %v473 = vpack.c.b16 %v360, %v359
  %v474 = vpack.c.b16 %v362, %v361
  %v475 = vpack.c.b16 %v364, %v363
  %v476 = vpack.c.b16 %v366, %v365
  %v477 = vpack.c.b16 %v368, %v367
  %v478 = vpack.c.b16 %v370, %v369
  %v479 = vpack.c.b16 %v372, %v371
  %v480 = vpack.c.b16 %v374, %v373
  %v481 = vpack.c.b16 %v376, %v375
  %v482 = vpack.c.b16 %v378, %v377
  %v483 = vpack.c.b16 %v380, %v379
  %v484 = vpack.c.b16 %v382, %v381
  %v485 = vpack.c.b16 %v384, %v383
  %v486 = vpack.c.b16 %v386, %v385
  %v487 = vpack.c.b16 %v388, %v387
  %v488 = vpack.c.b16 %v390, %v389
  %v489 = vpack.c.b16 %v392, %v391
  %v490 = vpack.c.b16 %v394, %v393
  %v491 = vpack.c.b16 %v396, %v395
  %v492 = vpack.c.b16 %v398, %v397
  %v493 = vpack.c.b16 %v400, %v399
  %v494 = vpack.c.b16 %v402, %v401
  %v495 = vpack.c.b16 %v404, %v403
  %v496 = vpack.c.b16 %v406, %v405
  %v497 = vpack.c.b16 %v408, %v407
  %v498 = vpack.c.b16 %v410, %v409
  %v499 = vpack.c.b16 %v412, %v411
  %v500 = vpack.c.b16 %v414, %v413
  %v501 = vpack.c.b16 %v416, %v415
  %v502 = vpack.c.b16 %v418, %v417
  %v503 = vpack.c.b16 %v420, %v419
  %v504 = vpack.c.b16 %v422, %v421
  %v505 = vpack.c.b16 %v424, %v423
  %v506 = vpack.c.b16 %v426, %v425
  %v507 = vpack.c.b16 %v428, %v427
  %v508 = vpack.c.b16 %v430, %v429
  %v509 = vpack.c.b16 %v432, %v431
  %v510 = vpack.c.b16 %v434, %v433
  %v511 = vpack.c.b16 %v436, %v435
  %v512 = vpack.c.b16 %v438, %v437
  %v513 = vpack.c.b16 %v440, %v439
  %v514 = vpack.c.b16 %v442, %v441
  %v515 = vpack.c.b16 %v444, %v443
  %v516 = vpack.c.b16 %v446, %v445
  %v517 = vpack.c.b16 %v448, %v447
  %v518 = vpack.c.b16 %v450, %v449
  %v519 = vpack.c.b16 %v452, %v451
  %v520 = vpack.c.b16 %v454, %v453
  %v521 = vpack.c.b16 %v456, %v455
  %v522 = vpack.c.b16 %v458, %v457
  %587 = vmatprep.subr.bf16.mxu0 0
  %588 = vmatpush1.bf16.msra.mxu0 %v459
  %589 = vmatprep.subr.bf16.mxu0 0
  %590 = vmatpush1.bf16.msra.mxu0 %v460
  %591 = vmatprep.subr.bf16.mxu0 0
  %592 = vmatpush1.bf16.msra.mxu0 %v461
  %593 = vmatprep.subr.bf16.mxu0 0
  %594 = vmatpush1.bf16.msra.mxu0 %v462
  %595 = vmatprep.subr.bf16.mxu0 0
  %596 = vmatpush1.bf16.msra.mxu0 %v463
  %597 = vmatprep.subr.bf16.mxu0 0
  %598 = vmatpush1.bf16.msra.mxu0 %v464
  %599 = vmatprep.subr.bf16.mxu0 0
  %600 = vmatpush1.bf16.msra.mxu0 %v465
  %601 = vmatprep.subr.bf16.mxu0 0
  %602 = vmatpush1.bf16.msra.mxu0 %v466
  %603 = vmatprep.subr.bf16.mxu0 0
  %604 = vmatpush1.bf16.msra.mxu0 %v467
  %605 = vmatprep.subr.bf16.mxu0 0
  %606 = vmatpush1.bf16.msra.mxu0 %v468
  %607 = vmatprep.subr.bf16.mxu0 0
  %608 = vmatpush1.bf16.msra.mxu0 %v469
  %609 = vmatprep.subr.bf16.mxu0 0
  %610 = vmatpush1.bf16.msra.mxu0 %v470
  %611 = vmatprep.subr.bf16.mxu0 0
  %612 = vmatpush1.bf16.msra.mxu0 %v471
  %613 = vmatprep.subr.bf16.mxu0 0
  %614 = vmatpush1.bf16.msra.mxu0 %v472
  %615 = vmatprep.subr.bf16.mxu0 0
  %616 = vmatpush1.bf16.msra.mxu0 %v473
  %617 = vmatprep.subr.bf16.mxu0 0
  %618 = vmatpush1.bf16.msra.mxu0 %v474
  %619 = vmatprep.mubr.bf16.mxu0 %v68
  %620 = vmatmul.mubr.bf16.gmra.mrb[0].mxu0 %v67
  %v621 = vpop.f32.mrb[0].mxu0
  %v622 = vadd.f32 0.0, %v621
  %v623 = vpop.f32.mrb[0].mxu0
  %v624 = vpop.f32.mrb[0].mxu0
  %v625 = vpop.f32.mrb[0].mxu0
  %626 = vdwg.mxu0
  %627 = vmatprep.subr.bf16.mxu0 0
  %628 = vmatpush1.bf16.msra.mxu0 %v475
  %629 = vmatprep.subr.bf16.mxu0 0
  %630 = vmatpush1.bf16.msra.mxu0 %v476
  %631 = vmatprep.subr.bf16.mxu0 0
  %632 = vmatpush1.bf16.msra.mxu0 %v477
  %633 = vmatprep.subr.bf16.mxu0 0
  %634 = vmatpush1.bf16.msra.mxu0 %v478
  %635 = vmatprep.subr.bf16.mxu0 0
  %636 = vmatpush1.bf16.msra.mxu0 %v479
  %637 = vmatprep.subr.bf16.mxu0 0
  %638 = vmatpush1.bf16.msra.mxu0 %v480
  %639 = vmatprep.subr.bf16.mxu0 0
  %640 = vmatpush1.bf16.msra.mxu0 %v481
  %641 = vmatprep.subr.bf16.mxu0 0
  %642 = vmatpush1.bf16.msra.mxu0 %v482
  %643 = vmatprep.subr.bf16.mxu0 0
  %644 = vmatpush1.bf16.msra.mxu0 %v483
  %645 = vmatprep.subr.bf16.mxu0 0
  %646 = vmatpush1.bf16.msra.mxu0 %v484
  %647 = vmatprep.subr.bf16.mxu0 0
  %648 = vmatpush1.bf16.msra.mxu0 %v485
  %649 = vmatprep.subr.bf16.mxu0 0
  %650 = vmatpush1.bf16.msra.mxu0 %v486
  %651 = vmatprep.subr.bf16.mxu0 0
  %652 = vmatpush1.bf16.msra.mxu0 %v487
  %653 = vmatprep.subr.bf16.mxu0 0
  %654 = vmatpush1.bf16.msra.mxu0 %v488
  %655 = vmatprep.subr.bf16.mxu0 0
  %656 = vmatpush1.bf16.msra.mxu0 %v489
  %657 = vmatprep.subr.bf16.mxu0 0
  %658 = vmatpush1.bf16.msra.mxu0 %v490
  %659 = vmatprep.mubr.bf16.mxu0 %v70
  %660 = vmatmul.mubr.bf16.gmra.mrb[0].mxu0 %v69
  %v661 = vpop.f32.mrb[0].mxu0
  %v662 = vadd.f32 %v622, %v661
  %v663 = vpop.f32.mrb[0].mxu0
  %v664 = vpop.f32.mrb[0].mxu0
  %v665 = vpop.f32.mrb[0].mxu0
  %666 = vdwg.mxu0
  %667 = vmatprep.subr.bf16.mxu0 0
  %668 = vmatpush1.bf16.msra.mxu0 %v491
  %669 = vmatprep.subr.bf16.mxu0 0
  %670 = vmatpush1.bf16.msra.mxu0 %v492
  %671 = vmatprep.subr.bf16.mxu0 0
  %672 = vmatpush1.bf16.msra.mxu0 %v493
  %673 = vmatprep.subr.bf16.mxu0 0
  %674 = vmatpush1.bf16.msra.mxu0 %v494
  %675 = vmatprep.subr.bf16.mxu0 0
  %676 = vmatpush1.bf16.msra.mxu0 %v495
  %677 = vmatprep.subr.bf16.mxu0 0
  %678 = vmatpush1.bf16.msra.mxu0 %v496
  %679 = vmatprep.subr.bf16.mxu0 0
  %680 = vmatpush1.bf16.msra.mxu0 %v497
  %681 = vmatprep.subr.bf16.mxu0 0
  %682 = vmatpush1.bf16.msra.mxu0 %v498
  %683 = vmatprep.subr.bf16.mxu0 0
  %684 = vmatpush1.bf16.msra.mxu0 %v499
  %685 = vmatprep.subr.bf16.mxu0 0
  %686 = vmatpush1.bf16.msra.mxu0 %v500
  %687 = vmatprep.subr.bf16.mxu0 0
  %688 = vmatpush1.bf16.msra.mxu0 %v501
  %689 = vmatprep.subr.bf16.mxu0 0
  %690 = vmatpush1.bf16.msra.mxu0 %v502
  %691 = vmatprep.subr.bf16.mxu0 0
  %692 = vmatpush1.bf16.msra.mxu0 %v503
  %693 = vmatprep.subr.bf16.mxu0 0
  %694 = vmatpush1.bf16.msra.mxu0 %v504
  %695 = vmatprep.subr.bf16.mxu0 0
  %696 = vmatpush1.bf16.msra.mxu0 %v505
  %697 = vmatprep.subr.bf16.mxu0 0
  %698 = vmatpush1.bf16.msra.mxu0 %v506
  %699 = vmatprep.mubr.bf16.mxu0 %v72
  %700 = vmatmul.mubr.bf16.gmra.mrb[0].mxu0 %v71
  %v701 = vpop.f32.mrb[0].mxu0
  %v702 = vadd.f32 %v662, %v701
  %v703 = vpop.f32.mrb[0].mxu0
  %v704 = vpop.f32.mrb[0].mxu0
  %v705 = vpop.f32.mrb[0].mxu0
  %706 = vdwg.mxu0
  %707 = vmatprep.subr.bf16.mxu0 0
  %708 = vmatpush1.bf16.msra.mxu0 %v507
  %709 = vmatprep.subr.bf16.mxu0 0
  %710 = vmatpush1.bf16.msra.mxu0 %v508
  %711 = vmatprep.subr.bf16.mxu0 0
  %712 = vmatpush1.bf16.msra.mxu0 %v509
  %713 = vmatprep.subr.bf16.mxu0 0
  %714 = vmatpush1.bf16.msra.mxu0 %v510
  %715 = vmatprep.subr.bf16.mxu0 0
  %716 = vmatpush1.bf16.msra.mxu0 %v511
  %717 = vmatprep.subr.bf16.mxu0 0
  %718 = vmatpush1.bf16.msra.mxu0 %v512
  %719 = vmatprep.subr.bf16.mxu0 0
  %720 = vmatpush1.bf16.msra.mxu0 %v513
  %721 = vmatprep.subr.bf16.mxu0 0
  %722 = vmatpush1.bf16.msra.mxu0 %v514
  %723 = vmatprep.subr.bf16.mxu0 0
  %724 = vmatpush1.bf16.msra.mxu0 %v515
  %725 = vmatprep.subr.bf16.mxu0 0
  %726 = vmatpush1.bf16.msra.mxu0 %v516
  %727 = vmatprep.subr.bf16.mxu0 0
  %728 = vmatpush1.bf16.msra.mxu0 %v517
  %729 = vmatprep.subr.bf16.mxu0 0
  %730 = vmatpush1.bf16.msra.mxu0 %v518
  %731 = vmatprep.subr.bf16.mxu0 0
  %732 = vmatpush1.bf16.msra.mxu0 %v519
  %733 = vmatprep.subr.bf16.mxu0 0
  %734 = vmatpush1.bf16.msra.mxu0 %v520
  %735 = vmatprep.subr.bf16.mxu0 0
  %736 = vmatpush1.bf16.msra.mxu0 %v521
  %737 = vmatprep.subr.bf16.mxu0 0
  %738 = vmatpush1.bf16.msra.mxu0 %v522
  %739 = vmatprep.mubr.bf16.mxu0 %v74
  %740 = vmatmul.mubr.bf16.gmra.mrb[0].mxu0 %v73
  %v741 = vpop.f32.mrb[0].mxu0
  %v742 = vadd.f32 %v702, %v741
  %v743 = vpop.f32.mrb[0].mxu0
  %v744 = vpop.f32.mrb[0].mxu0
  %v745 = vpop.f32.mrb[0].mxu0
  %746 = vdwg.mxu0
  %v747 = vmax.f32 %v742, 0.0
  %v748 = vpack.c.bf16 %v747, %v747
  %v749 = vld [vmem:[%s2] sm:$0xf]
  %v750 = vld [vmem:[%s2 + $0x4] sm:$0xf]
  %v751 = vld [vmem:[%s2 + $0x8] sm:$0xf]
  %v752 = vld [vmem:[%s2 + $0xc] sm:$0xf]
  %v757 = vunpack.c.l.b16 %v749
  %v758 = vunpack.c.l.b16 %v750
  %v759 = vunpack.c.l.b16 %v751
  %v760 = vunpack.c.l.b16 %v752
  %v761 = vpack.c.b16 %v758, %v757
  %v762 = vpack.c.b16 %v760, %v759
  %vm765 = vcmask 261120
  %v767 = vsel %vm765, %v748, 0
  %769 = vmatprep.subr.bf16.mxu0 0
  %770 = vmatpush1.bf16.msra.mxu0 %v761
  %771 = vmatprep.subr.bf16.mxu0 0
  %772 = vmatpush1.bf16.msra.mxu0 %v762
  %773 = vmatprep.subr.bf16.mxu0 0
  %774 = vmatpush1.bf16.msra.mxu0 0
  %775 = vmatprep.subr.bf16.mxu0 0
  %776 = vmatpush1.bf16.msra.mxu0 0
  %777 = vmatprep.subr.bf16.mxu0 0
  %778 = vmatpush1.bf16.msra.mxu0 0
  %779 = vmatprep.subr.bf16.mxu0 0
  %780 = vmatpush1.bf16.msra.mxu0 0
  %781 = vmatprep.subr.bf16.mxu0 0
  %782 = vmatpush1.bf16.msra.mxu0 0
  %783 = vmatprep.subr.bf16.mxu0 0
  %784 = vmatpush1.bf16.msra.mxu0 0
  %785 = vmatprep.subr.bf16.mxu0 0
  %786 = vmatpush1.bf16.msra.mxu0 0
  %787 = vmatprep.subr.bf16.mxu0 0
  %788 = vmatpush1.bf16.msra.mxu0 0
  %789 = vmatprep.subr.bf16.mxu0 0
  %790 = vmatpush1.bf16.msra.mxu0 0
  %791 = vmatprep.subr.bf16.mxu0 0
  %792 = vmatpush1.bf16.msra.mxu0 0
  %793 = vmatprep.subr.bf16.mxu0 0
  %794 = vmatpush1.bf16.msra.mxu0 0
  %795 = vmatprep.subr.bf16.mxu0 0
  %796 = vmatpush1.bf16.msra.mxu0 0
  %797 = vmatprep.subr.bf16.mxu0 0
  %798 = vmatpush1.bf16.msra.mxu0 0
  %799 = vmatprep.subr.bf16.mxu0 0
  %800 = vmatpush1.bf16.msra.mxu0 0
  %801 = vmatprep.mubr.bf16.mxu0 0
  %802 = vmatmul.mubr.bf16.gmra.mrb[0].mxu0 %v767
  %v803 = vpop.f32.mrb[0].mxu0
  %v804 = vadd.f32 0.0, %v803
  %v805 = vpop.f32.mrb[0].mxu0
  %v806 = vpop.f32.mrb[0].mxu0
  %v807 = vpop.f32.mrb[0].mxu0
  %808 = vdwg.mxu0
  %v809 = vmax.f32 %v804, 0.0
  %v810 = vpack.c.bf16 %v809, %v809
  %v811 = vld [vmem:[%s3] sm:$0xf]
  %v812 = vld [vmem:[%s3 + $0x4] sm:$0xf]
  %v813 = vld [vmem:[%s3 + $0x8] sm:$0xf]
  %v814 = vld [vmem:[%s3 + $0xc] sm:$0xf]
  %v815 = vld [vmem:[%s3 + $0x10] sm:$0xf]
  %v816 = vld [vmem:[%s3 + $0x14] sm:$0xf]
  %v817 = vld [vmem:[%s3 + $0x18] sm:$0xf]
  %v818 = vld [vmem:[%s3 + $0x1c] sm:$0xf]
  %v827 = vunpack.c.l.b16 %v811
  %v828 = vunpack.c.l.b16 %v812
  %v829 = vunpack.c.l.b16 %v813
  %v830 = vunpack.c.l.b16 %v814
  %v831 = vunpack.c.l.b16 %v815
  %v832 = vunpack.c.l.b16 %v816
  %v833 = vunpack.c.l.b16 %v817
  %v834 = vunpack.c.l.b16 %v818
  %v835 = vpack.c.b16 %v828, %v827
  %v836 = vpack.c.b16 %v830, %v829
  %v837 = vpack.c.b16 %v832, %v831
  %v838 = vpack.c.b16 %v834, %v833
  %vm843 = vcmask 523264
  %v845 = vsel %vm843, %v810, 0
  %847 = vmatprep.subr.bf16.mxu0 0
  %848 = vmatpush1.bf16.msra.mxu0 %v835
  %849 = vmatprep.subr.bf16.mxu0 0
  %850 = vmatpush1.bf16.msra.mxu0 %v836
  %851 = vmatprep.subr.bf16.mxu0 0
  %852 = vmatpush1.bf16.msra.mxu0 %v837
  %853 = vmatprep.subr.bf16.mxu0 0
  %854 = vmatpush1.bf16.msra.mxu0 %v838
  %855 = vmatprep.subr.bf16.mxu0 0
  %856 = vmatpush1.bf16.msra.mxu0 0
  %857 = vmatprep.subr.bf16.mxu0 0
  %858 = vmatpush1.bf16.msra.mxu0 0
  %859 = vmatprep.subr.bf16.mxu0 0
  %860 = vmatpush1.bf16.msra.mxu0 0
  %861 = vmatprep.subr.bf16.mxu0 0
  %862 = vmatpush1.bf16.msra.mxu0 0
  %863 = vmatprep.subr.bf16.mxu0 0
  %864 = vmatpush1.bf16.msra.mxu0 0
  %865 = vmatprep.subr.bf16.mxu0 0
  %866 = vmatpush1.bf16.msra.mxu0 0
  %867 = vmatprep.subr.bf16.mxu0 0
  %868 = vmatpush1.bf16.msra.mxu0 0
  %869 = vmatprep.subr.bf16.mxu0 0
  %870 = vmatpush1.bf16.msra.mxu0 0
  %871 = vmatprep.subr.bf16.mxu0 0
  %872 = vmatpush1.bf16.msra.mxu0 0
  %873 = vmatprep.subr.bf16.mxu0 0
  %874 = vmatpush1.bf16.msra.mxu0 0
  %875 = vmatprep.subr.bf16.mxu0 0
  %876 = vmatpush1.bf16.msra.mxu0 0
  %877 = vmatprep.subr.bf16.mxu0 0
  %878 = vmatpush1.bf16.msra.mxu0 0
  %879 = vmatprep.mubr.bf16.mxu0 0
  %880 = vmatmul.mubr.bf16.gmra.mrb[0].mxu0 %v845
  %v881 = vpop.f32.mrb[0].mxu0
  %v882 = vadd.f32 0.0, %v881
  %v883 = vpop.f32.mrb[0].mxu0
  %v884 = vpop.f32.mrb[0].mxu0
  %v885 = vpop.f32.mrb[0].mxu0
  %886 = vdwg.mxu0
  %v887 = vmax.f32 %v882, 0.0
  %v888 = vpack.c.bf16 %v887, %v887
  %v889 = vld [vmem:[%s4] sm:$0xf]
  %v890 = vld [vmem:[%s4 + $0x4] sm:$0xf]
  %v891 = vld [vmem:[%s4 + $0x8] sm:$0xf]
  %v892 = vld [vmem:[%s4 + $0xc] sm:$0xf]
  %v893 = vld [vmem:[%s4 + $0x10] sm:$0xf]
  %v894 = vld [vmem:[%s4 + $0x14] sm:$0xf]
  %v895 = vld [vmem:[%s4 + $0x18] sm:$0xf]
  %v896 = vld [vmem:[%s4 + $0x1c] sm:$0xf]
  %v897 = vld [vmem:[%s4 + $0x20] sm:$0xf]
  %v898 = vld [vmem:[%s4 + $0x24] sm:$0xf]
  %v899 = vld [vmem:[%s4 + $0x28] sm:$0xf]
  %v900 = vld [vmem:[%s4 + $0x2c] sm:$0xf]
  %v901 = vld [vmem:[%s4 + $0x30] sm:$0xf]
  %v902 = vld [vmem:[%s4 + $0x34] sm:$0xf]
  %v903 = vld [vmem:[%s4 + $0x38] sm:$0xf]
  %v904 = vld [vmem:[%s4 + $0x3c] sm:$0xf]
  %v921 = vunpack.c.l.b16 %v889
  %v922 = vunpack.c.l.b16 %v890
  %v923 = vunpack.c.l.b16 %v891
  %v924 = vunpack.c.l.b16 %v892
  %v925 = vunpack.c.l.b16 %v893
  %v926 = vunpack.c.l.b16 %v894
  %v927 = vunpack.c.l.b16 %v895
  %v928 = vunpack.c.l.b16 %v896
  %v929 = vunpack.c.l.b16 %v897
  %v930 = vunpack.c.l.b16 %v898
  %v931 = vunpack.c.l.b16 %v899
  %v932 = vunpack.c.l.b16 %v900
  %v933 = vunpack.c.l.b16 %v901
  %v934 = vunpack.c.l.b16 %v902
  %v935 = vunpack.c.l.b16 %v903
  %v936 = vunpack.c.l.b16 %v904
  %v937 = vpack.c.b16 %v922, %v921
  %v938 = vpack.c.b16 %v924, %v923
  %v939 = vpack.c.b16 %v926, %v925
  %v940 = vpack.c.b16 %v928, %v927
  %v941 = vpack.c.b16 %v930, %v929
  %v942 = vpack.c.b16 %v932, %v931
  %v943 = vpack.c.b16 %v934, %v933
  %v944 = vpack.c.b16 %v936, %v935
  %953 = vmatprep.subr.bf16.mxu0 0
  %954 = vmatpush1.bf16.msra.mxu0 %v937
  %955 = vmatprep.subr.bf16.mxu0 0
  %956 = vmatpush1.bf16.msra.mxu0 %v938
  %957 = vmatprep.subr.bf16.mxu0 0
  %958 = vmatpush1.bf16.msra.mxu0 %v939
  %959 = vmatprep.subr.bf16.mxu0 0
  %960 = vmatpush1.bf16.msra.mxu0 %v940
  %961 = vmatprep.subr.bf16.mxu0 0
  %962 = vmatpush1.bf16.msra.mxu0 %v941
  %963 = vmatprep.subr.bf16.mxu0 0
  %964 = vmatpush1.bf16.msra.mxu0 %v942
  %965 = vmatprep.subr.bf16.mxu0 0
  %966 = vmatpush1.bf16.msra.mxu0 %v943
  %967 = vmatprep.subr.bf16.mxu0 0
  %968 = vmatpush1.bf16.msra.mxu0 %v944
  %969 = vmatprep.subr.bf16.mxu0 0
  %970 = vmatpush1.bf16.msra.mxu0 0
  %971 = vmatprep.subr.bf16.mxu0 0
  %972 = vmatpush1.bf16.msra.mxu0 0
  %973 = vmatprep.subr.bf16.mxu0 0
  %974 = vmatpush1.bf16.msra.mxu0 0
  %975 = vmatprep.subr.bf16.mxu0 0
  %976 = vmatpush1.bf16.msra.mxu0 0
  %977 = vmatprep.subr.bf16.mxu0 0
  %978 = vmatpush1.bf16.msra.mxu0 0
  %979 = vmatprep.subr.bf16.mxu0 0
  %980 = vmatpush1.bf16.msra.mxu0 0
  %981 = vmatprep.subr.bf16.mxu0 0
  %982 = vmatpush1.bf16.msra.mxu0 0
  %983 = vmatprep.subr.bf16.mxu0 0
  %984 = vmatpush1.bf16.msra.mxu0 0
  %985 = vmatprep.mubr.bf16.mxu0 0
  %986 = vmatmul.mubr.bf16.gmra.mrb[0].mxu0 %v888
  %v987 = vpop.f32.mrb[0].mxu0
  %v988 = vadd.f32 0.0, %v987
  %v989 = vpop.f32.mrb[0].mxu0
  %v990 = vpop.f32.mrb[0].mxu0
  %v991 = vpop.f32.mrb[0].mxu0
  %992 = vdwg.mxu0
  %v993 = vmax.f32 %v988, 0.0
  %vm994 = vcmask 25600
  %995 = vst.msk [vmem:[%s5] sm:$0x3] %vm994, %v993
  // Predicated region
  $region22: #{finet_forward.12} parent=0 // pred_check
    _
  $region23: #{finet_forward.12} parent=0 // pred_check_branch
    %997 = sbr.rel (0) target = $region25
  $region24: #{finet_forward.12} parent=0 // pred_region
    _
  $region25: #{finet_forward.12} parent=0 // pred_fallthru
    _
  // Predicated region
  $region26: #{finet_forward.12} parent=0 // pred_check
    _
  $region27: #{finet_forward.12} parent=0 // pred_check_branch
    %999 = sbr.rel (0) target = $region29
  $region28: #{finet_forward.12} parent=0 // pred_region
    _
  $region29: #{finet_forward.12} parent=0 // pred_fallthru
    _

</llo_original>
